<compile_context>
chip_gen: v6e
topology: v6e:2x2x1
jax: 0.10.0
libtpu: 0.0.40
codegen_flags: <defaults>
</compile_context>

<pallas_src>
import functools

import jax
import jax.numpy as jnp
from jax.experimental import pallas as pl
from jax.experimental.pallas import tpu as pltpu


# ---------------------------------------------------------------------------
# helpers
# ---------------------------------------------------------------------------
def _pick_tile(dim, candidates):
    """Largest candidate tile that divides `dim`, else the full extent."""
    for c in candidates:
        if dim % c == 0:
            return c
    return dim


def _round_up(x, m):
    return ((x + m - 1) // m) * m


# ---------------------------------------------------------------------------
# Tiled GEMM with fused input-activation, bias and output-activation epilogue
# ---------------------------------------------------------------------------
def _make_gemm_kernel(in_act, out_act):
    def kernel(a_ref, b_ref, bias_ref, o_ref, acc_ref):
        @pl.when(pl.program_id(2) == 0)
        def _():
            acc_ref[...] = jnp.zeros_like(acc_ref)

        a = a_ref[...].astype(jnp.float32)
        if in_act == "lrelu":
            a = jnp.where(a > 0.0, a, 0.2 * a)
        elif in_act == "relu":
            a = jnp.maximum(a, 0.0)
        acc_ref[...] += jnp.dot(a.astype(jnp.bfloat16), b_ref[...],
                                preferred_element_type=jnp.float32)

        @pl.when(pl.program_id(2) == pl.num_programs(2) - 1)
        def _():
            v = acc_ref[...] + bias_ref[...]
            if out_act == "tanh":
                v = jnp.tanh(v)
            o_ref[...] = v.astype(o_ref.dtype)

    return kernel


def pallas_gemm(a, b, bias, *, in_act="none", out_act="none"):
    """a: (M, K) bf16 im2col matrix, b: (K, N) bf16 weights, bias: (N,) f32.

    Returns out_act(in_act(a) @ b + bias) as (M, N) f32.
    """
    M0, K = a.shape
    _, N = b.shape
    # Keep the sublane (row) extent a multiple of 8; only the tiny bottleneck
    # tensors (M < 8) are ever padded, so the extra copy is negligible.
    M = _round_up(M0, 8)
    if M != M0:
        a = jnp.pad(a, ((0, M - M0), (0, 0)))

    tm = _pick_tile(M, (256, 128, 64, 32, 16, 8))
    tn = _pick_tile(N, (256, 128))
    tk = _pick_tile(K, (512, 256, 128))
    grid = (M // tm, N // tn, K // tk)

    bias2 = bias.reshape(1, N).astype(jnp.float32)

    cost = pl.CostEstimate(
        flops=2 * M * K * N,
        transcendentals=M * N if out_act == "tanh" else 0,
        bytes_accessed=a.size * 2 + b.size * 2 + M * N * 4 + N * 4,
    )

    out = pl.pallas_call(
        _make_gemm_kernel(in_act, out_act),
        out_shape=jax.ShapeDtypeStruct((M, N), jnp.float32),
        grid_spec=pltpu.PrefetchScalarGridSpec(
            num_scalar_prefetch=0,
            grid=grid,
            in_specs=[
                pl.BlockSpec((tm, tk), lambda i, j, k: (i, k)),
                pl.BlockSpec((tk, tn), lambda i, j, k: (k, j)),
                pl.BlockSpec((1, tn), lambda i, j, k: (0, j)),
            ],
            out_specs=pl.BlockSpec((tm, tn), lambda i, j, k: (i, j)),
            scratch_shapes=[pltpu.VMEM((tm, tn), jnp.float32)],
        ),
        compiler_params=pltpu.CompilerParams(
            dimension_semantics=("parallel", "parallel", "arbitrary"),
            vmem_limit_bytes=32 * 1024 * 1024,
        ),
        cost_estimate=cost,
    )(a, b, bias2)
    return out[:M0] if M != M0 else out


# ---------------------------------------------------------------------------
# BatchNorm: row-gridded channel statistics + row-gridded affine apply
# ---------------------------------------------------------------------------
def _stats_kernel(x_ref, sum_ref, sq_ref):
    @pl.when(pl.program_id(0) == 0)
    def _():
        sum_ref[...] = jnp.zeros_like(sum_ref)
        sq_ref[...] = jnp.zeros_like(sq_ref)

    x = x_ref[...]
    sum_ref[...] += jnp.sum(x, axis=0, keepdims=True)
    sq_ref[...] += jnp.sum(x * x, axis=0, keepdims=True)


def pallas_channel_stats(x2):
    """x2: (M, C) f32 -> per-channel (sum, sum_of_squares), each (C,)."""
    M, C = x2.shape
    tm = _pick_tile(M, (1024, 512, 256, 128, 64, 32, 16, 8))
    s, q = pl.pallas_call(
        _stats_kernel,
        out_shape=(jax.ShapeDtypeStruct((1, C), jnp.float32),
                   jax.ShapeDtypeStruct((1, C), jnp.float32)),
        grid_spec=pltpu.PrefetchScalarGridSpec(
            num_scalar_prefetch=0,
            grid=(M // tm,),
            in_specs=[pl.BlockSpec((tm, C), lambda i: (i, 0))],
            out_specs=(pl.BlockSpec((1, C), lambda i: (0, 0)),
                       pl.BlockSpec((1, C), lambda i: (0, 0))),
        ),
        compiler_params=pltpu.CompilerParams(
            dimension_semantics=("arbitrary",)),
        cost_estimate=pl.CostEstimate(
            flops=3 * M * C, transcendentals=0, bytes_accessed=M * C * 4),
    )(x2)
    return s[0], q[0]


def _affine_kernel(x_ref, s_ref, t_ref, o_ref):
    o_ref[...] = x_ref[...] * s_ref[...] + t_ref[...]


def pallas_affine(x2, scale, shift):
    """y = x2 * scale + shift, scale/shift broadcast per channel."""
    M, C = x2.shape
    tm = _pick_tile(M, (1024, 512, 256, 128, 64, 32, 16, 8))
    return pl.pallas_call(
        _affine_kernel,
        out_shape=jax.ShapeDtypeStruct((M, C), jnp.float32),
        grid_spec=pltpu.PrefetchScalarGridSpec(
            num_scalar_prefetch=0,
            grid=(M // tm,),
            in_specs=[pl.BlockSpec((tm, C), lambda i: (i, 0)),
                      pl.BlockSpec((1, C), lambda i: (0, 0)),
                      pl.BlockSpec((1, C), lambda i: (0, 0))],
            out_specs=pl.BlockSpec((tm, C), lambda i: (i, 0)),
        ),
        compiler_params=pltpu.CompilerParams(
            dimension_semantics=("parallel",)),
        cost_estimate=pl.CostEstimate(
            flops=2 * M * C, transcendentals=0, bytes_accessed=2 * M * C * 4),
    )(x2, scale.reshape(1, C).astype(jnp.float32),
      shift.reshape(1, C).astype(jnp.float32))


def batchnorm(x, gamma, beta, eps=1e-5):
    """PyTorch BatchNorm2d training-mode forward (batch stats, biased var) on NHWC."""
    N, H, W, C = x.shape
    M = N * H * W
    x2 = x.reshape(M, C)
    s, q = pallas_channel_stats(x2)
    mean = s / M                       # divide by the TRUE row count
    # TODO(synk): E[x^2]-E[x]^2 is cancellation-prone for large activations;
    # a centered second pass / Welford accumulation would be more robust.
    var = jnp.maximum(q / M - mean * mean, 0.0)
    scale = gamma / jnp.sqrt(var + eps)
    shift = beta - mean * scale
    return pallas_affine(x2, scale, shift).reshape(N, H, W, C)


# ---------------------------------------------------------------------------
# Conv2d(k=4, s=2, p=1) and ConvTranspose2d(k=4, s=2, p=1), NHWC
# ---------------------------------------------------------------------------
def conv_down(x, w, bias, *, in_act="none", out_act="none"):
    """Conv2d(4, stride 2, pad 1) via im2col GEMM.

    x: (N, H, W, C_in) f32;  w: (C_out, C_in, 4, 4) (PyTorch layout).
    The preceding activation (`in_act`) is fused into the GEMM A-load
    (valid because conv zero-padding satisfies act(0) == 0).
    """
    N, H, W, C = x.shape
    C_out = w.shape[0]
    Ho, Wo = H // 2, W // 2
    xp = jnp.pad(x, ((0, 0), (1, 1), (1, 1), (0, 0)))
    # TODO(synk): stream the (kh,kw) patch loop through the Pallas K-grid
    # (Element-offset BlockSpecs) instead of materializing the 16-patch stack.
    cols = [xp[:, kh:kh + 2 * Ho:2, kw:kw + 2 * Wo:2, :]
            for kh in range(4) for kw in range(4)]
    a = jnp.concatenate(cols, axis=-1).reshape(N * Ho * Wo, 16 * C)
    wm = jnp.transpose(w, (2, 3, 1, 0)).reshape(16 * C, C_out)
    b = bias if bias is not None else jnp.zeros((C_out,), jnp.float32)
    y = pallas_gemm(a.astype(jnp.bfloat16), wm.astype(jnp.bfloat16), b,
                    in_act=in_act, out_act=out_act)
    return y.reshape(N, Ho, Wo, C_out)


# Sub-pixel decomposition of ConvTranspose2d(k=4, s=2, p=1):
# output pixel (2q+r, 2p+c) only receives contributions from a 2x2 input
# window; the kernel taps are fixed by the parities (r, c).
_ROW_TAPS = {0: ((0, 3), (1, 1)),   # r==0: input rows q-1 (kh=3), q   (kh=1)
             1: ((0, 2), (1, 0))}   # r==1: input rows q   (kh=2), q+1 (kh=0)


def conv_transpose_up(x, w, bias, *, in_act="none", out_act="none"):
    """ConvTranspose2d(4, stride 2, pad 1) as 4 dense parity GEMMs.

    x: (N, H, W, C_in) f32;  w: (C_in, C_out, 4, 4) (PyTorch layout).
    Output: (N, 2H, 2W, C_out) f32.
    """
    N, H, W, C = x.shape
    C_out = w.shape[1]
    xp = jnp.pad(x, ((0, 0), (1, 1), (1, 1), (0, 0)))
    b = bias if bias is not None else jnp.zeros((C_out,), jnp.float32)

    rows = []
    for r in (0, 1):
        cols_out = []
        for c in (0, 1):
            patches, wrows = [], []
            for dh, kh in _ROW_TAPS[r]:
                hoff = dh + (0 if r == 0 else 1)
                for dw, kw in _ROW_TAPS[c]:
                    woff = dw + (0 if c == 0 else 1)
                    patches.append(xp[:, hoff:hoff + H, woff:woff + W, :])
                    wrows.append(w[:, :, kh, kw])            # (C_in, C_out)
            a = jnp.concatenate(patches, axis=-1).reshape(N * H * W, 4 * C)
            wm = jnp.concatenate(wrows, axis=0)              # (4*C_in, C_out)
            y = pallas_gemm(a.astype(jnp.bfloat16), wm.astype(jnp.bfloat16),
                            b, in_act=in_act, out_act=out_act)
            cols_out.append(y.reshape(N, H, W, C_out))
        rows.append(jnp.stack(cols_out, axis=3))             # (N, H, W, 2, C)
    out = jnp.stack(rows, axis=2)                            # (N, H, 2, W, 2, C)
    return out.reshape(N, 2 * H, 2 * W, C_out)


# ---------------------------------------------------------------------------
# UnetSkipConnectionBlock / UnetGenerator (BatchNorm -> conv bias=False)
# ---------------------------------------------------------------------------
def init_block(key, input_nc, inner_nc, outer_nc, outermost, innermost):
    k = jax.random.split(key, 3)
    p = {"outermost": outermost, "innermost": innermost}
    p["w_down"] = 0.05 * jax.random.normal(k[0], (inner_nc, input_nc, 4, 4), jnp.float32)
    if (not outermost) and (not innermost):
        p["down_gamma"] = jnp.ones((inner_nc,), jnp.float32)
        p["down_beta"] = jnp.zeros((inner_nc,), jnp.float32)
    up_in = inner_nc if innermost else inner_nc * 2
    p["w_up"] = 0.05 * jax.random.normal(k[1], (up_in, outer_nc, 4, 4), jnp.float32)
    # BatchNorm => use_bias=False everywhere except the outermost ConvTranspose2d.
    p["b_up"] = (0.05 * jax.random.normal(k[2], (outer_nc,), jnp.float32)
                 if outermost else None)
    if not outermost:
        p["up_gamma"] = jnp.ones((outer_nc,), jnp.float32)
        p["up_beta"] = jnp.zeros((outer_nc,), jnp.float32)
    return p


def init_unet(key, input_nc, output_nc, num_downs, ngf):
    keys = jax.random.split(key, num_downs + 1)
    blocks = []   # innermost -> outermost
    ki = 0
    blocks.append(init_block(keys[ki], ngf * 8, ngf * 8, ngf * 8, False, True)); ki += 1
    for _ in range(num_downs - 5):
        blocks.append(init_block(keys[ki], ngf * 8, ngf * 8, ngf * 8, False, False)); ki += 1
    blocks.append(init_block(keys[ki], ngf * 4, ngf * 8, ngf * 4, False, False)); ki += 1
    blocks.append(init_block(keys[ki], ngf * 2, ngf * 4, ngf * 2, False, False)); ki += 1
    blocks.append(init_block(keys[ki], ngf * 1, ngf * 2, ngf * 1, False, False)); ki += 1
    blocks.append(init_block(keys[ki], input_nc, ngf, output_nc, True, False)); ki += 1
    return blocks


def unet_forward(blocks, x_nchw):
    x = jnp.transpose(x_nchw, (0, 2, 3, 1)).astype(jnp.float32)   # NCHW -> NHWC

    def run(idx, x):
        p = blocks[idx]
        if p["outermost"]:
            h = conv_down(x, p["w_down"], None, in_act="none")
            h = run(idx - 1, h)
            # ReLU fused into the GEMM A-load, Tanh fused into the epilogue.
            return conv_transpose_up(h, p["w_up"], p["b_up"],
                                     in_act="relu", out_act="tanh")
        elif p["innermost"]:
            h = conv_down(x, p["w_down"], None, in_act="lrelu")
            h = conv_transpose_up(h, p["w_up"], None, in_act="relu")
            h = batchnorm(h, p["up_gamma"], p["up_beta"])
            return jnp.concatenate([x, h], axis=-1)
        else:
            h = conv_down(x, p["w_down"], None, in_act="lrelu")
            h = batchnorm(h, p["down_gamma"], p["down_beta"])
            h = run(idx - 1, h)
            h = conv_transpose_up(h, p["w_up"], None, in_act="relu")
            h = batchnorm(h, p["up_gamma"], p["up_beta"])
            return jnp.concatenate([x, h], axis=-1)

    y = run(len(blocks) - 1, x)
    return jnp.transpose(y, (0, 3, 1, 2))    # NHWC -> NCHW


# ---------------------------------------------------------------------------
if __name__ == "__main__":
    # num_downs=5 => 32x32 input reaches a 1x1 bottleneck.
    input_nc, output_nc, num_downs, ngf = 3, 3, 5, 8
    N, H, W = 2, 32, 32

    key = jax.random.PRNGKey(0)
    k_param, k_x = jax.random.split(key)
    blocks = init_unet(k_param, input_nc, output_nc, num_downs, ngf)
    x = jax.random.normal(k_x, (N, input_nc, H, W), jnp.float32)

    fwd = jax.jit(functools.partial(unet_forward, blocks))
    y = jax.block_until_ready(fwd(x))

    assert y.shape == (N, output_nc, H, W), y.shape
    assert bool(jnp.all(jnp.isfinite(y)))
    assert bool(jnp.all(jnp.abs(y) <= 1.0 + 1e-6))   # tanh output range
    print("KERNEL_OK")
</pallas_src>

<mosaic_0001>
module attributes {stable_mosaic.version = 11 : i64} {
  func.func @kernel(%arg0: i32, %arg1: i32, %arg2: i32, %arg3: memref<256x48xbf16, #tpu.memory_space<vmem>>, %arg4: memref<48x8xbf16, #tpu.memory_space<vmem>>, %arg5: memref<1x8xf32, #tpu.memory_space<vmem>>, %arg6: memref<256x8xf32, #tpu.memory_space<vmem>>, %arg7: memref<256x8xf32, #tpu.memory_space<vmem>>) attributes {dimension_semantics = [#tpu.dimension_semantics<parallel>, #tpu.dimension_semantics<parallel>, #tpu.dimension_semantics<arbitrary>], iteration_bounds = array<i64: 2, 1, 1>, scalar_prefetch = 0 : i64, scratch_operands = 1 : i64, tpu.core_type = #tpu.core_type<tc>, window_params = [{transform_indices = @transform_0, window_bounds = array<i64: 256, 48>}, {transform_indices = @transform_1, window_bounds = array<i64: 48, 8>}, {transform_indices = @transform_2, window_bounds = array<i64: 1, 8>}, {transform_indices = @transform_3, window_bounds = array<i64: 256, 8>}]} {
    %c0_i32 = arith.constant 0 : i32
    %0 = arith.cmpi eq, %arg2, %c0_i32 : i32
    %1 = arith.extui %0 : i1 to i32
    %c0_i32_0 = arith.constant 0 : i32
    %2 = arith.cmpi ne, %1, %c0_i32_0 : i32
    scf.if %2 {
      %cst_10 = arith.constant 0.000000e+00 : f32
      %14 = vector.broadcast %cst_10 : f32 to vector<256x8xf32>
      %c0_11 = arith.constant 0 : index
      %c0_12 = arith.constant 0 : index
      %15 = vector.load %arg7[%c0_11, %c0_12] : memref<256x8xf32, #tpu.memory_space<vmem>>, vector<256x8xf32>
      tpu.vector_store %arg7[%c0_11, %c0_12], %14 {strides = array<i32>} : memref<256x8xf32, #tpu.memory_space<vmem>>, vector<256x8xf32>,
    } else {
    }
    %c0 = arith.constant 0 : index
    %c0_1 = arith.constant 0 : index
    %3 = vector.load %arg3[%c0, %c0_1] : memref<256x48xbf16, #tpu.memory_space<vmem>>, vector<256x48xbf16>
    %4 = arith.extf %3 : vector<256x48xbf16> to vector<256x48xf32>
    %c0_2 = arith.constant 0 : index
    %c0_3 = arith.constant 0 : index
    %5 = vector.load %arg7[%c0_2, %c0_3] : memref<256x8xf32, #tpu.memory_space<vmem>>, vector<256x8xf32>
    %6 = arith.truncf %4 : vector<256x48xf32> to vector<256x48xbf16>
    %c0_4 = arith.constant 0 : index
    %c0_5 = arith.constant 0 : index
    %7 = vector.load %arg4[%c0_4, %c0_5] : memref<48x8xbf16, #tpu.memory_space<vmem>>, vector<48x8xbf16>
    %cst = arith.constant dense<0.000000e+00> : vector<256x8xf32>
    %8 = tpu.matmul %6, %7, %cst {dimension_numbers = #tpu.dot_dimension_numbers<[1], [0], [0], [1], [0, 0, 1, 1], [], []>} : vector<256x48xbf16>, vector<48x8xbf16>, vector<256x8xf32> -> vector<256x8xf32>
    %9 = arith.addf %5, %8 : vector<256x8xf32>
    %c0_6 = arith.constant 0 : index
    %c0_7 = arith.constant 0 : index
    %10 = vector.load %arg7[%c0_6, %c0_7] : memref<256x8xf32, #tpu.memory_space<vmem>>, vector<256x8xf32>
    tpu.vector_store %arg7[%c0_6, %c0_7], %9 {strides = array<i32>} : memref<256x8xf32, #tpu.memory_space<vmem>>, vector<256x8xf32>,
    %c0_i32_8 = arith.constant 0 : i32
    %11 = arith.cmpi eq, %arg2, %c0_i32_8 : i32
    %12 = arith.extui %11 : i1 to i32
    %c0_i32_9 = arith.constant 0 : i32
    %13 = arith.cmpi ne, %12, %c0_i32_9 : i32
    scf.if %13 {
      %c0_10 = arith.constant 0 : index
      %c0_11 = arith.constant 0 : index
      %14 = vector.load %arg7[%c0_10, %c0_11] : memref<256x8xf32, #tpu.memory_space<vmem>>, vector<256x8xf32>
      %c0_12 = arith.constant 0 : index
      %c0_13 = arith.constant 0 : index
      %15 = vector.load %arg5[%c0_12, %c0_13] : memref<1x8xf32, #tpu.memory_space<vmem>>, vector<1x8xf32>
      %16 = vector.broadcast %15 : vector<1x8xf32> to vector<256x8xf32>
      %17 = arith.addf %14, %16 : vector<256x8xf32>
      %c0_14 = arith.constant 0 : index
      %c0_15 = arith.constant 0 : index
      %18 = vector.load %arg6[%c0_14, %c0_15] : memref<256x8xf32, #tpu.memory_space<vmem>>, vector<256x8xf32>
      tpu.vector_store %arg6[%c0_14, %c0_15], %17 {strides = array<i32>} : memref<256x8xf32, #tpu.memory_space<vmem>>, vector<256x8xf32>,
    } else {
    }
    return
  }
  func.func @transform_0(%arg0: i32, %arg1: i32, %arg2: i32) -> (i32, i32) {
    %c0_i32 = arith.constant 0 : i32
    return %arg0, %arg2 : i32, i32
  }
  func.func @transform_1(%arg0: i32, %arg1: i32, %arg2: i32) -> (i32, i32) {
    %c0_i32 = arith.constant 0 : i32
    return %arg2, %arg1 : i32, i32
  }
  func.func @transform_2(%arg0: i32, %arg1: i32, %arg2: i32) -> (i32, i32) {
    %c0_i32 = arith.constant 0 : i32
    %c0_i32_0 = arith.constant 0 : i32
    return %c0_i32, %arg1 : i32, i32
  }
  func.func @transform_3(%arg0: i32, %arg1: i32, %arg2: i32) -> (i32, i32) {
    %c0_i32 = arith.constant 0 : i32
    return %arg0, %arg1 : i32, i32
  }
}

module attributes {stable_mosaic.version = 11 : i64} {
  func.func @kernel(%arg0: i32, %arg1: i32, %arg2: i32, %arg3: memref<128x128xbf16, #tpu.memory_space<vmem>>, %arg4: memref<128x16xbf16, #tpu.memory_space<vmem>>, %arg5: memref<1x16xf32, #tpu.memory_space<vmem>>, %arg6: memref<128x16xf32, #tpu.memory_space<vmem>>, %arg7: memref<128x16xf32, #tpu.memory_space<vmem>>) attributes {dimension_semantics = [#tpu.dimension_semantics<parallel>, #tpu.dimension_semantics<parallel>, #tpu.dimension_semantics<arbitrary>], iteration_bounds = array<i64: 1, 1, 1>, scalar_prefetch = 0 : i64, scratch_operands = 1 : i64, tpu.core_type = #tpu.core_type<tc>, window_params = [{transform_indices = @transform_0, window_bounds = array<i64: 128, 128>}, {transform_indices = @transform_1, window_bounds = array<i64: 128, 16>}, {transform_indices = @transform_2, window_bounds = array<i64: 1, 16>}, {transform_indices = @transform_3, window_bounds = array<i64: 128, 16>}]} {
    %c0_i32 = arith.constant 0 : i32
    %0 = arith.cmpi eq, %arg2, %c0_i32 : i32
    %1 = arith.extui %0 : i1 to i32
    %c0_i32_0 = arith.constant 0 : i32
    %2 = arith.cmpi ne, %1, %c0_i32_0 : i32
    scf.if %2 {
      %cst_12 = arith.constant 0.000000e+00 : f32
      %19 = vector.broadcast %cst_12 : f32 to vector<128x16xf32>
      %c0_13 = arith.constant 0 : index
      %c0_14 = arith.constant 0 : index
      %20 = vector.load %arg7[%c0_13, %c0_14] : memref<128x16xf32, #tpu.memory_space<vmem>>, vector<128x16xf32>
      tpu.vector_store %arg7[%c0_13, %c0_14], %19 {strides = array<i32>} : memref<128x16xf32, #tpu.memory_space<vmem>>, vector<128x16xf32>,
    } else {
    }
    %c0 = arith.constant 0 : index
    %c0_1 = arith.constant 0 : index
    %3 = vector.load %arg3[%c0, %c0_1] : memref<128x128xbf16, #tpu.memory_space<vmem>>, vector<128x128xbf16>
    %4 = arith.extf %3 : vector<128x128xbf16> to vector<128x128xf32>
    %cst = arith.constant 0.000000e+00 : f32
    %5 = vector.broadcast %cst : f32 to vector<128x128xf32>
    %6 = arith.cmpf ogt, %4, %5 : vector<128x128xf32>
    %cst_2 = arith.constant 2.000000e-01 : f32
    %7 = vector.broadcast %cst_2 : f32 to vector<128x128xf32>
    %8 = arith.mulf %7, %4 : vector<128x128xf32>
    %9 = arith.select %6, %4, %8 : vector<128x128xi1>, vector<128x128xf32>
    %c0_3 = arith.constant 0 : index
    %c0_4 = arith.constant 0 : index
    %10 = vector.load %arg7[%c0_3, %c0_4] : memref<128x16xf32, #tpu.memory_space<vmem>>, vector<128x16xf32>
    %11 = arith.truncf %9 : vector<128x128xf32> to vector<128x128xbf16>
    %c0_5 = arith.constant 0 : index
    %c0_6 = arith.constant 0 : index
    %12 = vector.load %arg4[%c0_5, %c0_6] : memref<128x16xbf16, #tpu.memory_space<vmem>>, vector<128x16xbf16>
    %cst_7 = arith.constant dense<0.000000e+00> : vector<128x16xf32>
    %13 = tpu.matmul %11, %12, %cst_7 {dimension_numbers = #tpu.dot_dimension_numbers<[1], [0], [0], [1], [0, 0, 1, 1], [], []>} : vector<128x128xbf16>, vector<128x16xbf16>, vector<128x16xf32> -> vector<128x16xf32>
    %14 = arith.addf %10, %13 : vector<128x16xf32>
    %c0_8 = arith.constant 0 : index
    %c0_9 = arith.constant 0 : index
    %15 = vector.load %arg7[%c0_8, %c0_9] : memref<128x16xf32, #tpu.memory_space<vmem>>, vector<128x16xf32>
    tpu.vector_store %arg7[%c0_8, %c0_9], %14 {strides = array<i32>} : memref<128x16xf32, #tpu.memory_space<vmem>>, vector<128x16xf32>,
    %c0_i32_10 = arith.constant 0 : i32
    %16 = arith.cmpi eq, %arg2, %c0_i32_10 : i32
    %17 = arith.extui %16 : i1 to i32
    %c0_i32_11 = arith.constant 0 : i32
    %18 = arith.cmpi ne, %17, %c0_i32_11 : i32
    scf.if %18 {
      %c0_12 = arith.constant 0 : index
      %c0_13 = arith.constant 0 : index
      %19 = vector.load %arg7[%c0_12, %c0_13] : memref<128x16xf32, #tpu.memory_space<vmem>>, vector<128x16xf32>
      %c0_14 = arith.constant 0 : index
      %c0_15 = arith.constant 0 : index
      %20 = vector.load %arg5[%c0_14, %c0_15] : memref<1x16xf32, #tpu.memory_space<vmem>>, vector<1x16xf32>
      %21 = vector.broadcast %20 : vector<1x16xf32> to vector<128x16xf32>
      %22 = arith.addf %19, %21 : vector<128x16xf32>
      %c0_16 = arith.constant 0 : index
      %c0_17 = arith.constant 0 : index
      %23 = vector.load %arg6[%c0_16, %c0_17] : memref<128x16xf32, #tpu.memory_space<vmem>>, vector<128x16xf32>
      tpu.vector_store %arg6[%c0_16, %c0_17], %22 {strides = array<i32>} : memref<128x16xf32, #tpu.memory_space<vmem>>, vector<128x16xf32>,
    } else {
    }
    return
  }
  func.func @transform_0(%arg0: i32, %arg1: i32, %arg2: i32) -> (i32, i32) {
    %c0_i32 = arith.constant 0 : i32
    return %arg0, %arg2 : i32, i32
  }
  func.func @transform_1(%arg0: i32, %arg1: i32, %arg2: i32) -> (i32, i32) {
    %c0_i32 = arith.constant 0 : i32
    return %arg2, %arg1 : i32, i32
  }
  func.func @transform_2(%arg0: i32, %arg1: i32, %arg2: i32) -> (i32, i32) {
    %c0_i32 = arith.constant 0 : i32
    %c0_i32_0 = arith.constant 0 : i32
    return %c0_i32, %arg1 : i32, i32
  }
  func.func @transform_3(%arg0: i32, %arg1: i32, %arg2: i32) -> (i32, i32) {
    %c0_i32 = arith.constant 0 : i32
    return %arg0, %arg1 : i32, i32
  }
}

module attributes {stable_mosaic.version = 11 : i64} {
  func.func @_stats_kernel(%arg0: i32, %arg1: memref<128x16xf32, #tpu.memory_space<vmem>>, %arg2: memref<1x16xf32, #tpu.memory_space<vmem>>, %arg3: memref<1x16xf32, #tpu.memory_space<vmem>>) attributes {dimension_semantics = [#tpu.dimension_semantics<arbitrary>], iteration_bounds = array<i64: 1>, scalar_prefetch = 0 : i64, scratch_operands = 0 : i64, tpu.core_type = #tpu.core_type<tc>, window_params = [{transform_indices = @transform_0, window_bounds = array<i64: 128, 16>}, {pipeline_mode = #tpu.pipeline_mode<synchronous>, transform_indices = @transform_1, window_bounds = array<i64: 1, 16>}, {pipeline_mode = #tpu.pipeline_mode<synchronous>, transform_indices = @transform_2, window_bounds = array<i64: 1, 16>}]} {
    %c0_i32 = arith.constant 0 : i32
    %0 = arith.cmpi eq, %arg0, %c0_i32 : i32
    %1 = arith.extui %0 : i1 to i32
    %c0_i32_0 = arith.constant 0 : i32
    %2 = arith.cmpi ne, %1, %c0_i32_0 : i32
    scf.if %2 {
      %cst_11 = arith.constant 0.000000e+00 : f32
      %15 = vector.broadcast %cst_11 : f32 to vector<1x16xf32>
      %c0_12 = arith.constant 0 : index
      %c0_13 = arith.constant 0 : index
      %16 = vector.load %arg2[%c0_12, %c0_13] : memref<1x16xf32, #tpu.memory_space<vmem>>, vector<1x16xf32>
      tpu.vector_store %arg2[%c0_12, %c0_13], %15 {strides = array<i32>} : memref<1x16xf32, #tpu.memory_space<vmem>>, vector<1x16xf32>,
      %cst_14 = arith.constant 0.000000e+00 : f32
      %17 = vector.broadcast %cst_14 : f32 to vector<1x16xf32>
      %c0_15 = arith.constant 0 : index
      %c0_16 = arith.constant 0 : index
      %18 = vector.load %arg3[%c0_15, %c0_16] : memref<1x16xf32, #tpu.memory_space<vmem>>, vector<1x16xf32>
      tpu.vector_store %arg3[%c0_15, %c0_16], %17 {strides = array<i32>} : memref<1x16xf32, #tpu.memory_space<vmem>>, vector<1x16xf32>,
    } else {
    }
    %c0 = arith.constant 0 : index
    %c0_1 = arith.constant 0 : index
    %3 = vector.load %arg1[%c0, %c0_1] : memref<128x16xf32, #tpu.memory_space<vmem>>, vector<128x16xf32>
    %c0_2 = arith.constant 0 : index
    %c0_3 = arith.constant 0 : index
    %4 = vector.load %arg2[%c0_2, %c0_3] : memref<1x16xf32, #tpu.memory_space<vmem>>, vector<1x16xf32>
    %cst = arith.constant dense<0.000000e+00> : vector<16xf32>
    %5 = vector.multi_reduction <add>, %3, %cst [0] : vector<128x16xf32> to vector<16xf32>
    %6 = vector.shape_cast %5 : vector<16xf32> to vector<1x16xf32>
    %7 = arith.addf %4, %6 : vector<1x16xf32>
    %c0_4 = arith.constant 0 : index
    %c0_5 = arith.constant 0 : index
    %8 = vector.load %arg2[%c0_4, %c0_5] : memref<1x16xf32, #tpu.memory_space<vmem>>, vector<1x16xf32>
    tpu.vector_store %arg2[%c0_4, %c0_5], %7 {strides = array<i32>} : memref<1x16xf32, #tpu.memory_space<vmem>>, vector<1x16xf32>,
    %c0_6 = arith.constant 0 : index
    %c0_7 = arith.constant 0 : index
    %9 = vector.load %arg3[%c0_6, %c0_7] : memref<1x16xf32, #tpu.memory_space<vmem>>, vector<1x16xf32>
    %10 = arith.mulf %3, %3 : vector<128x16xf32>
    %cst_8 = arith.constant dense<0.000000e+00> : vector<16xf32>
    %11 = vector.multi_reduction <add>, %10, %cst_8 [0] : vector<128x16xf32> to vector<16xf32>
    %12 = vector.shape_cast %11 : vector<16xf32> to vector<1x16xf32>
    %13 = arith.addf %9, %12 : vector<1x16xf32>
    %c0_9 = arith.constant 0 : index
    %c0_10 = arith.constant 0 : index
    %14 = vector.load %arg3[%c0_9, %c0_10] : memref<1x16xf32, #tpu.memory_space<vmem>>, vector<1x16xf32>
    tpu.vector_store %arg3[%c0_9, %c0_10], %13 {strides = array<i32>} : memref<1x16xf32, #tpu.memory_space<vmem>>, vector<1x16xf32>,
    return
  }
  func.func @transform_0(%arg0: i32) -> (i32, i32) {
    %c0_i32 = arith.constant 0 : i32
    %c0_i32_0 = arith.constant 0 : i32
    return %arg0, %c0_i32 : i32, i32
  }
  func.func @transform_1(%arg0: i32) -> (i32, i32) {
    %c0_i32 = arith.constant 0 : i32
    %c0_i32_0 = arith.constant 0 : i32
    %c0_i32_1 = arith.constant 0 : i32
    return %c0_i32, %c0_i32_0 : i32, i32
  }
  func.func @transform_2(%arg0: i32) -> (i32, i32) {
    %c0_i32 = arith.constant 0 : i32
    %c0_i32_0 = arith.constant 0 : i32
    %c0_i32_1 = arith.constant 0 : i32
    return %c0_i32, %c0_i32_0 : i32, i32
  }
}

module attributes {stable_mosaic.version = 11 : i64} {
  func.func @_affine_kernel(%arg0: i32, %arg1: memref<128x16xf32, #tpu.memory_space<vmem>>, %arg2: memref<1x16xf32, #tpu.memory_space<vmem>>, %arg3: memref<1x16xf32, #tpu.memory_space<vmem>>, %arg4: memref<128x16xf32, #tpu.memory_space<vmem>>) attributes {dimension_semantics = [#tpu.dimension_semantics<parallel>], iteration_bounds = array<i64: 1>, scalar_prefetch = 0 : i64, scratch_operands = 0 : i64, tpu.core_type = #tpu.core_type<tc>, window_params = [{transform_indices = @transform_0, window_bounds = array<i64: 128, 16>}, {pipeline_mode = #tpu.pipeline_mode<synchronous>, transform_indices = @transform_1, window_bounds = array<i64: 1, 16>}, {pipeline_mode = #tpu.pipeline_mode<synchronous>, transform_indices = @transform_2, window_bounds = array<i64: 1, 16>}, {transform_indices = @transform_3, window_bounds = array<i64: 128, 16>}]} {
    %c0 = arith.constant 0 : index
    %c0_0 = arith.constant 0 : index
    %0 = vector.load %arg1[%c0, %c0_0] : memref<128x16xf32, #tpu.memory_space<vmem>>, vector<128x16xf32>
    %c0_1 = arith.constant 0 : index
    %c0_2 = arith.constant 0 : index
    %1 = vector.load %arg2[%c0_1, %c0_2] : memref<1x16xf32, #tpu.memory_space<vmem>>, vector<1x16xf32>
    %2 = vector.broadcast %1 : vector<1x16xf32> to vector<128x16xf32>
    %3 = arith.mulf %0, %2 : vector<128x16xf32>
    %c0_3 = arith.constant 0 : index
    %c0_4 = arith.constant 0 : index
    %4 = vector.load %arg3[%c0_3, %c0_4] : memref<1x16xf32, #tpu.memory_space<vmem>>, vector<1x16xf32>
    %5 = vector.broadcast %4 : vector<1x16xf32> to vector<128x16xf32>
    %6 = arith.addf %3, %5 : vector<128x16xf32>
    %c0_5 = arith.constant 0 : index
    %c0_6 = arith.constant 0 : index
    %7 = vector.load %arg4[%c0_5, %c0_6] : memref<128x16xf32, #tpu.memory_space<vmem>>, vector<128x16xf32>
    tpu.vector_store %arg4[%c0_5, %c0_6], %6 {strides = array<i32>} : memref<128x16xf32, #tpu.memory_space<vmem>>, vector<128x16xf32>,
    return
  }
  func.func @transform_0(%arg0: i32) -> (i32, i32) {
    %c0_i32 = arith.constant 0 : i32
    %c0_i32_0 = arith.constant 0 : i32
    return %arg0, %c0_i32 : i32, i32
  }
  func.func @transform_1(%arg0: i32) -> (i32, i32) {
    %c0_i32 = arith.constant 0 : i32
    %c0_i32_0 = arith.constant 0 : i32
    %c0_i32_1 = arith.constant 0 : i32
    return %c0_i32, %c0_i32_0 : i32, i32
  }
  func.func @transform_2(%arg0: i32) -> (i32, i32) {
    %c0_i32 = arith.constant 0 : i32
    %c0_i32_0 = arith.constant 0 : i32
    %c0_i32_1 = arith.constant 0 : i32
    return %c0_i32, %c0_i32_0 : i32, i32
  }
  func.func @transform_3(%arg0: i32) -> (i32, i32) {
    %c0_i32 = arith.constant 0 : i32
    %c0_i32_0 = arith.constant 0 : i32
    return %arg0, %c0_i32 : i32, i32
  }
}

module attributes {stable_mosaic.version = 11 : i64} {
  func.func @kernel(%arg0: i32, %arg1: i32, %arg2: i32, %arg3: memref<32x256xbf16, #tpu.memory_space<vmem>>, %arg4: memref<256x32xbf16, #tpu.memory_space<vmem>>, %arg5: memref<1x32xf32, #tpu.memory_space<vmem>>, %arg6: memref<32x32xf32, #tpu.memory_space<vmem>>, %arg7: memref<32x32xf32, #tpu.memory_space<vmem>>) attributes {dimension_semantics = [#tpu.dimension_semantics<parallel>, #tpu.dimension_semantics<parallel>, #tpu.dimension_semantics<arbitrary>], iteration_bounds = array<i64: 1, 1, 1>, scalar_prefetch = 0 : i64, scratch_operands = 1 : i64, tpu.core_type = #tpu.core_type<tc>, window_params = [{transform_indices = @transform_0, window_bounds = array<i64: 32, 256>}, {transform_indices = @transform_1, window_bounds = array<i64: 256, 32>}, {transform_indices = @transform_2, window_bounds = array<i64: 1, 32>}, {transform_indices = @transform_3, window_bounds = array<i64: 32, 32>}]} {
    %c0_i32 = arith.constant 0 : i32
    %0 = arith.cmpi eq, %arg2, %c0_i32 : i32
    %1 = arith.extui %0 : i1 to i32
    %c0_i32_0 = arith.constant 0 : i32
    %2 = arith.cmpi ne, %1, %c0_i32_0 : i32
    scf.if %2 {
      %cst_12 = arith.constant 0.000000e+00 : f32
      %19 = vector.broadcast %cst_12 : f32 to vector<32x32xf32>
      %c0_13 = arith.constant 0 : index
      %c0_14 = arith.constant 0 : index
      %20 = vector.load %arg7[%c0_13, %c0_14] : memref<32x32xf32, #tpu.memory_space<vmem>>, vector<32x32xf32>
      tpu.vector_store %arg7[%c0_13, %c0_14], %19 {strides = array<i32>} : memref<32x32xf32, #tpu.memory_space<vmem>>, vector<32x32xf32>,
    } else {
    }
    %c0 = arith.constant 0 : index
    %c0_1 = arith.constant 0 : index
    %3 = vector.load %arg3[%c0, %c0_1] : memref<32x256xbf16, #tpu.memory_space<vmem>>, vector<32x256xbf16>
    %4 = arith.extf %3 : vector<32x256xbf16> to vector<32x256xf32>
    %cst = arith.constant 0.000000e+00 : f32
    %5 = vector.broadcast %cst : f32 to vector<32x256xf32>
    %6 = arith.cmpf ogt, %4, %5 : vector<32x256xf32>
    %cst_2 = arith.constant 2.000000e-01 : f32
    %7 = vector.broadcast %cst_2 : f32 to vector<32x256xf32>
    %8 = arith.mulf %7, %4 : vector<32x256xf32>
    %9 = arith.select %6, %4, %8 : vector<32x256xi1>, vector<32x256xf32>
    %c0_3 = arith.constant 0 : index
    %c0_4 = arith.constant 0 : index
    %10 = vector.load %arg7[%c0_3, %c0_4] : memref<32x32xf32, #tpu.memory_space<vmem>>, vector<32x32xf32>
    %11 = arith.truncf %9 : vector<32x256xf32> to vector<32x256xbf16>
    %c0_5 = arith.constant 0 : index
    %c0_6 = arith.constant 0 : index
    %12 = vector.load %arg4[%c0_5, %c0_6] : memref<256x32xbf16, #tpu.memory_space<vmem>>, vector<256x32xbf16>
    %cst_7 = arith.constant dense<0.000000e+00> : vector<32x32xf32>
    %13 = tpu.matmul %11, %12, %cst_7 {dimension_numbers = #tpu.dot_dimension_numbers<[1], [0], [0], [1], [0, 0, 1, 1], [], []>} : vector<32x256xbf16>, vector<256x32xbf16>, vector<32x32xf32> -> vector<32x32xf32>
    %14 = arith.addf %10, %13 : vector<32x32xf32>
    %c0_8 = arith.constant 0 : index
    %c0_9 = arith.constant 0 : index
    %15 = vector.load %arg7[%c0_8, %c0_9] : memref<32x32xf32, #tpu.memory_space<vmem>>, vector<32x32xf32>
    tpu.vector_store %arg7[%c0_8, %c0_9], %14 {strides = array<i32>} : memref<32x32xf32, #tpu.memory_space<vmem>>, vector<32x32xf32>,
    %c0_i32_10 = arith.constant 0 : i32
    %16 = arith.cmpi eq, %arg2, %c0_i32_10 : i32
    %17 = arith.extui %16 : i1 to i32
    %c0_i32_11 = arith.constant 0 : i32
    %18 = arith.cmpi ne, %17, %c0_i32_11 : i32
    scf.if %18 {
      %c0_12 = arith.constant 0 : index
      %c0_13 = arith.constant 0 : index
      %19 = vector.load %arg7[%c0_12, %c0_13] : memref<32x32xf32, #tpu.memory_space<vmem>>, vector<32x32xf32>
      %c0_14 = arith.constant 0 : index
      %c0_15 = arith.constant 0 : index
      %20 = vector.load %arg5[%c0_14, %c0_15] : memref<1x32xf32, #tpu.memory_space<vmem>>, vector<1x32xf32>
      %21 = vector.broadcast %20 : vector<1x32xf32> to vector<32x32xf32>
      %22 = arith.addf %19, %21 : vector<32x32xf32>
      %c0_16 = arith.constant 0 : index
      %c0_17 = arith.constant 0 : index
      %23 = vector.load %arg6[%c0_16, %c0_17] : memref<32x32xf32, #tpu.memory_space<vmem>>, vector<32x32xf32>
      tpu.vector_store %arg6[%c0_16, %c0_17], %22 {strides = array<i32>} : memref<32x32xf32, #tpu.memory_space<vmem>>, vector<32x32xf32>,
    } else {
    }
    return
  }
  func.func @transform_0(%arg0: i32, %arg1: i32, %arg2: i32) -> (i32, i32) {
    %c0_i32 = arith.constant 0 : i32
    return %arg0, %arg2 : i32, i32
  }
  func.func @transform_1(%arg0: i32, %arg1: i32, %arg2: i32) -> (i32, i32) {
    %c0_i32 = arith.constant 0 : i32
    return %arg2, %arg1 : i32, i32
  }
  func.func @transform_2(%arg0: i32, %arg1: i32, %arg2: i32) -> (i32, i32) {
    %c0_i32 = arith.constant 0 : i32
    %c0_i32_0 = arith.constant 0 : i32
    return %c0_i32, %arg1 : i32, i32
  }
  func.func @transform_3(%arg0: i32, %arg1: i32, %arg2: i32) -> (i32, i32) {
    %c0_i32 = arith.constant 0 : i32
    return %arg0, %arg1 : i32, i32
  }
}

module attributes {stable_mosaic.version = 11 : i64} {
  func.func @_affine_kernel(%arg0: i32, %arg1: memref<32x32xf32, #tpu.memory_space<vmem>>, %arg2: memref<1x32xf32, #tpu.memory_space<vmem>>, %arg3: memref<1x32xf32, #tpu.memory_space<vmem>>, %arg4: memref<32x32xf32, #tpu.memory_space<vmem>>) attributes {dimension_semantics = [#tpu.dimension_semantics<parallel>], iteration_bounds = array<i64: 1>, scalar_prefetch = 0 : i64, scratch_operands = 0 : i64, tpu.core_type = #tpu.core_type<tc>, window_params = [{transform_indices = @transform_0, window_bounds = array<i64: 32, 32>}, {pipeline_mode = #tpu.pipeline_mode<synchronous>, transform_indices = @transform_1, window_bounds = array<i64: 1, 32>}, {pipeline_mode = #tpu.pipeline_mode<synchronous>, transform_indices = @transform_2, window_bounds = array<i64: 1, 32>}, {transform_indices = @transform_3, window_bounds = array<i64: 32, 32>}]} {
    %c0 = arith.constant 0 : index
    %c0_0 = arith.constant 0 : index
    %0 = vector.load %arg1[%c0, %c0_0] : memref<32x32xf32, #tpu.memory_space<vmem>>, vector<32x32xf32>
    %c0_1 = arith.constant 0 : index
    %c0_2 = arith.constant 0 : index
    %1 = vector.load %arg2[%c0_1, %c0_2] : memref<1x32xf32, #tpu.memory_space<vmem>>, vector<1x32xf32>
    %2 = vector.broadcast %1 : vector<1x32xf32> to vector<32x32xf32>
    %3 = arith.mulf %0, %2 : vector<32x32xf32>
    %c0_3 = arith.constant 0 : index
    %c0_4 = arith.constant 0 : index
    %4 = vector.load %arg3[%c0_3, %c0_4] : memref<1x32xf32, #tpu.memory_space<vmem>>, vector<1x32xf32>
    %5 = vector.broadcast %4 : vector<1x32xf32> to vector<32x32xf32>
    %6 = arith.addf %3, %5 : vector<32x32xf32>
    %c0_5 = arith.constant 0 : index
    %c0_6 = arith.constant 0 : index
    %7 = vector.load %arg4[%c0_5, %c0_6] : memref<32x32xf32, #tpu.memory_space<vmem>>, vector<32x32xf32>
    tpu.vector_store %arg4[%c0_5, %c0_6], %6 {strides = array<i32>} : memref<32x32xf32, #tpu.memory_space<vmem>>, vector<32x32xf32>,
    return
  }
  func.func @transform_0(%arg0: i32) -> (i32, i32) {
    %c0_i32 = arith.constant 0 : i32
    %c0_i32_0 = arith.constant 0 : i32
    return %arg0, %c0_i32 : i32, i32
  }
  func.func @transform_1(%arg0: i32) -> (i32, i32) {
    %c0_i32 = arith.constant 0 : i32
    %c0_i32_0 = arith.constant 0 : i32
    %c0_i32_1 = arith.constant 0 : i32
    return %c0_i32, %c0_i32_0 : i32, i32
  }
  func.func @transform_2(%arg0: i32) -> (i32, i32) {
    %c0_i32 = arith.constant 0 : i32
    %c0_i32_0 = arith.constant 0 : i32
    %c0_i32_1 = arith.constant 0 : i32
    return %c0_i32, %c0_i32_0 : i32, i32
  }
  func.func @transform_3(%arg0: i32) -> (i32, i32) {
    %c0_i32 = arith.constant 0 : i32
    %c0_i32_0 = arith.constant 0 : i32
    return %arg0, %c0_i32 : i32, i32
  }
}

module attributes {stable_mosaic.version = 11 : i64} {
  func.func @_stats_kernel(%arg0: i32, %arg1: memref<32x32xf32, #tpu.memory_space<vmem>>, %arg2: memref<1x32xf32, #tpu.memory_space<vmem>>, %arg3: memref<1x32xf32, #tpu.memory_space<vmem>>) attributes {dimension_semantics = [#tpu.dimension_semantics<arbitrary>], iteration_bounds = array<i64: 1>, scalar_prefetch = 0 : i64, scratch_operands = 0 : i64, tpu.core_type = #tpu.core_type<tc>, window_params = [{transform_indices = @transform_0, window_bounds = array<i64: 32, 32>}, {pipeline_mode = #tpu.pipeline_mode<synchronous>, transform_indices = @transform_1, window_bounds = array<i64: 1, 32>}, {pipeline_mode = #tpu.pipeline_mode<synchronous>, transform_indices = @transform_2, window_bounds = array<i64: 1, 32>}]} {
    %c0_i32 = arith.constant 0 : i32
    %0 = arith.cmpi eq, %arg0, %c0_i32 : i32
    %1 = arith.extui %0 : i1 to i32
    %c0_i32_0 = arith.constant 0 : i32
    %2 = arith.cmpi ne, %1, %c0_i32_0 : i32
    scf.if %2 {
      %cst_11 = arith.constant 0.000000e+00 : f32
      %15 = vector.broadcast %cst_11 : f32 to vector<1x32xf32>
      %c0_12 = arith.constant 0 : index
      %c0_13 = arith.constant 0 : index
      %16 = vector.load %arg2[%c0_12, %c0_13] : memref<1x32xf32, #tpu.memory_space<vmem>>, vector<1x32xf32>
      tpu.vector_store %arg2[%c0_12, %c0_13], %15 {strides = array<i32>} : memref<1x32xf32, #tpu.memory_space<vmem>>, vector<1x32xf32>,
      %cst_14 = arith.constant 0.000000e+00 : f32
      %17 = vector.broadcast %cst_14 : f32 to vector<1x32xf32>
      %c0_15 = arith.constant 0 : index
      %c0_16 = arith.constant 0 : index
      %18 = vector.load %arg3[%c0_15, %c0_16] : memref<1x32xf32, #tpu.memory_space<vmem>>, vector<1x32xf32>
      tpu.vector_store %arg3[%c0_15, %c0_16], %17 {strides = array<i32>} : memref<1x32xf32, #tpu.memory_space<vmem>>, vector<1x32xf32>,
    } else {
    }
    %c0 = arith.constant 0 : index
    %c0_1 = arith.constant 0 : index
    %3 = vector.load %arg1[%c0, %c0_1] : memref<32x32xf32, #tpu.memory_space<vmem>>, vector<32x32xf32>
    %c0_2 = arith.constant 0 : index
    %c0_3 = arith.constant 0 : index
    %4 = vector.load %arg2[%c0_2, %c0_3] : memref<1x32xf32, #tpu.memory_space<vmem>>, vector<1x32xf32>
    %cst = arith.constant dense<0.000000e+00> : vector<32xf32>
    %5 = vector.multi_reduction <add>, %3, %cst [0] : vector<32x32xf32> to vector<32xf32>
    %6 = vector.shape_cast %5 : vector<32xf32> to vector<1x32xf32>
    %7 = arith.addf %4, %6 : vector<1x32xf32>
    %c0_4 = arith.constant 0 : index
    %c0_5 = arith.constant 0 : index
    %8 = vector.load %arg2[%c0_4, %c0_5] : memref<1x32xf32, #tpu.memory_space<vmem>>, vector<1x32xf32>
    tpu.vector_store %arg2[%c0_4, %c0_5], %7 {strides = array<i32>} : memref<1x32xf32, #tpu.memory_space<vmem>>, vector<1x32xf32>,
    %c0_6 = arith.constant 0 : index
    %c0_7 = arith.constant 0 : index
    %9 = vector.load %arg3[%c0_6, %c0_7] : memref<1x32xf32, #tpu.memory_space<vmem>>, vector<1x32xf32>
    %10 = arith.mulf %3, %3 : vector<32x32xf32>
    %cst_8 = arith.constant dense<0.000000e+00> : vector<32xf32>
    %11 = vector.multi_reduction <add>, %10, %cst_8 [0] : vector<32x32xf32> to vector<32xf32>
    %12 = vector.shape_cast %11 : vector<32xf32> to vector<1x32xf32>
    %13 = arith.addf %9, %12 : vector<1x32xf32>
    %c0_9 = arith.constant 0 : index
    %c0_10 = arith.constant 0 : index
    %14 = vector.load %arg3[%c0_9, %c0_10] : memref<1x32xf32, #tpu.memory_space<vmem>>, vector<1x32xf32>
    tpu.vector_store %arg3[%c0_9, %c0_10], %13 {strides = array<i32>} : memref<1x32xf32, #tpu.memory_space<vmem>>, vector<1x32xf32>,
    return
  }
  func.func @transform_0(%arg0: i32) -> (i32, i32) {
    %c0_i32 = arith.constant 0 : i32
    %c0_i32_0 = arith.constant 0 : i32
    return %arg0, %c0_i32 : i32, i32
  }
  func.func @transform_1(%arg0: i32) -> (i32, i32) {
    %c0_i32 = arith.constant 0 : i32
    %c0_i32_0 = arith.constant 0 : i32
    %c0_i32_1 = arith.constant 0 : i32
    return %c0_i32, %c0_i32_0 : i32, i32
  }
  func.func @transform_2(%arg0: i32) -> (i32, i32) {
    %c0_i32 = arith.constant 0 : i32
    %c0_i32_0 = arith.constant 0 : i32
    %c0_i32_1 = arith.constant 0 : i32
    return %c0_i32, %c0_i32_0 : i32, i32
  }
}

module attributes {stable_mosaic.version = 11 : i64} {
  func.func @_stats_kernel(%arg0: i32, %arg1: memref<8x64xf32, #tpu.memory_space<vmem>>, %arg2: memref<1x64xf32, #tpu.memory_space<vmem>>, %arg3: memref<1x64xf32, #tpu.memory_space<vmem>>) attributes {dimension_semantics = [#tpu.dimension_semantics<arbitrary>], iteration_bounds = array<i64: 1>, scalar_prefetch = 0 : i64, scratch_operands = 0 : i64, tpu.core_type = #tpu.core_type<tc>, window_params = [{transform_indices = @transform_0, window_bounds = array<i64: 8, 64>}, {pipeline_mode = #tpu.pipeline_mode<synchronous>, transform_indices = @transform_1, window_bounds = array<i64: 1, 64>}, {pipeline_mode = #tpu.pipeline_mode<synchronous>, transform_indices = @transform_2, window_bounds = array<i64: 1, 64>}]} {
    %c0_i32 = arith.constant 0 : i32
    %0 = arith.cmpi eq, %arg0, %c0_i32 : i32
    %1 = arith.extui %0 : i1 to i32
    %c0_i32_0 = arith.constant 0 : i32
    %2 = arith.cmpi ne, %1, %c0_i32_0 : i32
    scf.if %2 {
      %cst_11 = arith.constant 0.000000e+00 : f32
      %15 = vector.broadcast %cst_11 : f32 to vector<1x64xf32>
      %c0_12 = arith.constant 0 : index
      %c0_13 = arith.constant 0 : index
      %16 = vector.load %arg2[%c0_12, %c0_13] : memref<1x64xf32, #tpu.memory_space<vmem>>, vector<1x64xf32>
      tpu.vector_store %arg2[%c0_12, %c0_13], %15 {strides = array<i32>} : memref<1x64xf32, #tpu.memory_space<vmem>>, vector<1x64xf32>,
      %cst_14 = arith.constant 0.000000e+00 : f32
      %17 = vector.broadcast %cst_14 : f32 to vector<1x64xf32>
      %c0_15 = arith.constant 0 : index
      %c0_16 = arith.constant 0 : index
      %18 = vector.load %arg3[%c0_15, %c0_16] : memref<1x64xf32, #tpu.memory_space<vmem>>, vector<1x64xf32>
      tpu.vector_store %arg3[%c0_15, %c0_16], %17 {strides = array<i32>} : memref<1x64xf32, #tpu.memory_space<vmem>>, vector<1x64xf32>,
    } else {
    }
    %c0 = arith.constant 0 : index
    %c0_1 = arith.constant 0 : index
    %3 = vector.load %arg1[%c0, %c0_1] : memref<8x64xf32, #tpu.memory_space<vmem>>, vector<8x64xf32>
    %c0_2 = arith.constant 0 : index
    %c0_3 = arith.constant 0 : index
    %4 = vector.load %arg2[%c0_2, %c0_3] : memref<1x64xf32, #tpu.memory_space<vmem>>, vector<1x64xf32>
    %cst = arith.constant dense<0.000000e+00> : vector<64xf32>
    %5 = vector.multi_reduction <add>, %3, %cst [0] : vector<8x64xf32> to vector<64xf32>
    %6 = vector.shape_cast %5 : vector<64xf32> to vector<1x64xf32>
    %7 = arith.addf %4, %6 : vector<1x64xf32>
    %c0_4 = arith.constant 0 : index
    %c0_5 = arith.constant 0 : index
    %8 = vector.load %arg2[%c0_4, %c0_5] : memref<1x64xf32, #tpu.memory_space<vmem>>, vector<1x64xf32>
    tpu.vector_store %arg2[%c0_4, %c0_5], %7 {strides = array<i32>} : memref<1x64xf32, #tpu.memory_space<vmem>>, vector<1x64xf32>,
    %c0_6 = arith.constant 0 : index
    %c0_7 = arith.constant 0 : index
    %9 = vector.load %arg3[%c0_6, %c0_7] : memref<1x64xf32, #tpu.memory_space<vmem>>, vector<1x64xf32>
    %10 = arith.mulf %3, %3 : vector<8x64xf32>
    %cst_8 = arith.constant dense<0.000000e+00> : vector<64xf32>
    %11 = vector.multi_reduction <add>, %10, %cst_8 [0] : vector<8x64xf32> to vector<64xf32>
    %12 = vector.shape_cast %11 : vector<64xf32> to vector<1x64xf32>
    %13 = arith.addf %9, %12 : vector<1x64xf32>
    %c0_9 = arith.constant 0 : index
    %c0_10 = arith.constant 0 : index
    %14 = vector.load %arg3[%c0_9, %c0_10] : memref<1x64xf32, #tpu.memory_space<vmem>>, vector<1x64xf32>
    tpu.vector_store %arg3[%c0_9, %c0_10], %13 {strides = array<i32>} : memref<1x64xf32, #tpu.memory_space<vmem>>, vector<1x64xf32>,
    return
  }
  func.func @transform_0(%arg0: i32) -> (i32, i32) {
    %c0_i32 = arith.constant 0 : i32
    %c0_i32_0 = arith.constant 0 : i32
    return %arg0, %c0_i32 : i32, i32
  }
  func.func @transform_1(%arg0: i32) -> (i32, i32) {
    %c0_i32 = arith.constant 0 : i32
    %c0_i32_0 = arith.constant 0 : i32
    %c0_i32_1 = arith.constant 0 : i32
    return %c0_i32, %c0_i32_0 : i32, i32
  }
  func.func @transform_2(%arg0: i32) -> (i32, i32) {
    %c0_i32 = arith.constant 0 : i32
    %c0_i32_0 = arith.constant 0 : i32
    %c0_i32_1 = arith.constant 0 : i32
    return %c0_i32, %c0_i32_0 : i32, i32
  }
}

module attributes {stable_mosaic.version = 11 : i64} {
  func.func @kernel(%arg0: i32, %arg1: i32, %arg2: i32, %arg3: memref<8x512xbf16, #tpu.memory_space<vmem>>, %arg4: memref<512x64xbf16, #tpu.memory_space<vmem>>, %arg5: memref<1x64xf32, #tpu.memory_space<vmem>>, %arg6: memref<8x64xf32, #tpu.memory_space<vmem>>, %arg7: memref<8x64xf32, #tpu.memory_space<vmem>>) attributes {dimension_semantics = [#tpu.dimension_semantics<parallel>, #tpu.dimension_semantics<parallel>, #tpu.dimension_semantics<arbitrary>], iteration_bounds = array<i64: 1, 1, 1>, scalar_prefetch = 0 : i64, scratch_operands = 1 : i64, tpu.core_type = #tpu.core_type<tc>, window_params = [{transform_indices = @transform_0, window_bounds = array<i64: 8, 512>}, {transform_indices = @transform_1, window_bounds = array<i64: 512, 64>}, {transform_indices = @transform_2, window_bounds = array<i64: 1, 64>}, {transform_indices = @transform_3, window_bounds = array<i64: 8, 64>}]} {
    %c0_i32 = arith.constant 0 : i32
    %0 = arith.cmpi eq, %arg2, %c0_i32 : i32
    %1 = arith.extui %0 : i1 to i32
    %c0_i32_0 = arith.constant 0 : i32
    %2 = arith.cmpi ne, %1, %c0_i32_0 : i32
    scf.if %2 {
      %cst_12 = arith.constant 0.000000e+00 : f32
      %19 = vector.broadcast %cst_12 : f32 to vector<8x64xf32>
      %c0_13 = arith.constant 0 : index
      %c0_14 = arith.constant 0 : index
      %20 = vector.load %arg7[%c0_13, %c0_14] : memref<8x64xf32, #tpu.memory_space<vmem>>, vector<8x64xf32>
      tpu.vector_store %arg7[%c0_13, %c0_14], %19 {strides = array<i32>} : memref<8x64xf32, #tpu.memory_space<vmem>>, vector<8x64xf32>,
    } else {
    }
    %c0 = arith.constant 0 : index
    %c0_1 = arith.constant 0 : index
    %3 = vector.load %arg3[%c0, %c0_1] : memref<8x512xbf16, #tpu.memory_space<vmem>>, vector<8x512xbf16>
    %4 = arith.extf %3 : vector<8x512xbf16> to vector<8x512xf32>
    %cst = arith.constant 0.000000e+00 : f32
    %5 = vector.broadcast %cst : f32 to vector<8x512xf32>
    %6 = arith.cmpf ogt, %4, %5 : vector<8x512xf32>
    %cst_2 = arith.constant 2.000000e-01 : f32
    %7 = vector.broadcast %cst_2 : f32 to vector<8x512xf32>
    %8 = arith.mulf %7, %4 : vector<8x512xf32>
    %9 = arith.select %6, %4, %8 : vector<8x512xi1>, vector<8x512xf32>
    %c0_3 = arith.constant 0 : index
    %c0_4 = arith.constant 0 : index
    %10 = vector.load %arg7[%c0_3, %c0_4] : memref<8x64xf32, #tpu.memory_space<vmem>>, vector<8x64xf32>
    %11 = arith.truncf %9 : vector<8x512xf32> to vector<8x512xbf16>
    %c0_5 = arith.constant 0 : index
    %c0_6 = arith.constant 0 : index
    %12 = vector.load %arg4[%c0_5, %c0_6] : memref<512x64xbf16, #tpu.memory_space<vmem>>, vector<512x64xbf16>
    %cst_7 = arith.constant dense<0.000000e+00> : vector<8x64xf32>
    %13 = tpu.matmul %11, %12, %cst_7 {dimension_numbers = #tpu.dot_dimension_numbers<[1], [0], [0], [1], [0, 0, 1, 1], [], []>} : vector<8x512xbf16>, vector<512x64xbf16>, vector<8x64xf32> -> vector<8x64xf32>
    %14 = arith.addf %10, %13 : vector<8x64xf32>
    %c0_8 = arith.constant 0 : index
    %c0_9 = arith.constant 0 : index
    %15 = vector.load %arg7[%c0_8, %c0_9] : memref<8x64xf32, #tpu.memory_space<vmem>>, vector<8x64xf32>
    tpu.vector_store %arg7[%c0_8, %c0_9], %14 {strides = array<i32>} : memref<8x64xf32, #tpu.memory_space<vmem>>, vector<8x64xf32>,
    %c0_i32_10 = arith.constant 0 : i32
    %16 = arith.cmpi eq, %arg2, %c0_i32_10 : i32
    %17 = arith.extui %16 : i1 to i32
    %c0_i32_11 = arith.constant 0 : i32
    %18 = arith.cmpi ne, %17, %c0_i32_11 : i32
    scf.if %18 {
      %c0_12 = arith.constant 0 : index
      %c0_13 = arith.constant 0 : index
      %19 = vector.load %arg7[%c0_12, %c0_13] : memref<8x64xf32, #tpu.memory_space<vmem>>, vector<8x64xf32>
      %c0_14 = arith.constant 0 : index
      %c0_15 = arith.constant 0 : index
      %20 = vector.load %arg5[%c0_14, %c0_15] : memref<1x64xf32, #tpu.memory_space<vmem>>, vector<1x64xf32>
      %21 = vector.broadcast %20 : vector<1x64xf32> to vector<8x64xf32>
      %22 = arith.addf %19, %21 : vector<8x64xf32>
      %c0_16 = arith.constant 0 : index
      %c0_17 = arith.constant 0 : index
      %23 = vector.load %arg6[%c0_16, %c0_17] : memref<8x64xf32, #tpu.memory_space<vmem>>, vector<8x64xf32>
      tpu.vector_store %arg6[%c0_16, %c0_17], %22 {strides = array<i32>} : memref<8x64xf32, #tpu.memory_space<vmem>>, vector<8x64xf32>,
    } else {
    }
    return
  }
  func.func @transform_0(%arg0: i32, %arg1: i32, %arg2: i32) -> (i32, i32) {
    %c0_i32 = arith.constant 0 : i32
    return %arg0, %arg2 : i32, i32
  }
  func.func @transform_1(%arg0: i32, %arg1: i32, %arg2: i32) -> (i32, i32) {
    %c0_i32 = arith.constant 0 : i32
    return %arg2, %arg1 : i32, i32
  }
  func.func @transform_2(%arg0: i32, %arg1: i32, %arg2: i32) -> (i32, i32) {
    %c0_i32 = arith.constant 0 : i32
    %c0_i32_0 = arith.constant 0 : i32
    return %c0_i32, %arg1 : i32, i32
  }
  func.func @transform_3(%arg0: i32, %arg1: i32, %arg2: i32) -> (i32, i32) {
    %c0_i32 = arith.constant 0 : i32
    return %arg0, %arg1 : i32, i32
  }
}

module attributes {stable_mosaic.version = 11 : i64} {
  func.func @_affine_kernel(%arg0: i32, %arg1: memref<8x64xf32, #tpu.memory_space<vmem>>, %arg2: memref<1x64xf32, #tpu.memory_space<vmem>>, %arg3: memref<1x64xf32, #tpu.memory_space<vmem>>, %arg4: memref<8x64xf32, #tpu.memory_space<vmem>>) attributes {dimension_semantics = [#tpu.dimension_semantics<parallel>], iteration_bounds = array<i64: 1>, scalar_prefetch = 0 : i64, scratch_operands = 0 : i64, tpu.core_type = #tpu.core_type<tc>, window_params = [{transform_indices = @transform_0, window_bounds = array<i64: 8, 64>}, {pipeline_mode = #tpu.pipeline_mode<synchronous>, transform_indices = @transform_1, window_bounds = array<i64: 1, 64>}, {pipeline_mode = #tpu.pipeline_mode<synchronous>, transform_indices = @transform_2, window_bounds = array<i64: 1, 64>}, {transform_indices = @transform_3, window_bounds = array<i64: 8, 64>}]} {
    %c0 = arith.constant 0 : index
    %c0_0 = arith.constant 0 : index
    %0 = vector.load %arg1[%c0, %c0_0] : memref<8x64xf32, #tpu.memory_space<vmem>>, vector<8x64xf32>
    %c0_1 = arith.constant 0 : index
    %c0_2 = arith.constant 0 : index
    %1 = vector.load %arg2[%c0_1, %c0_2] : memref<1x64xf32, #tpu.memory_space<vmem>>, vector<1x64xf32>
    %2 = vector.broadcast %1 : vector<1x64xf32> to vector<8x64xf32>
    %3 = arith.mulf %0, %2 : vector<8x64xf32>
    %c0_3 = arith.constant 0 : index
    %c0_4 = arith.constant 0 : index
    %4 = vector.load %arg3[%c0_3, %c0_4] : memref<1x64xf32, #tpu.memory_space<vmem>>, vector<1x64xf32>
    %5 = vector.broadcast %4 : vector<1x64xf32> to vector<8x64xf32>
    %6 = arith.addf %3, %5 : vector<8x64xf32>
    %c0_5 = arith.constant 0 : index
    %c0_6 = arith.constant 0 : index
    %7 = vector.load %arg4[%c0_5, %c0_6] : memref<8x64xf32, #tpu.memory_space<vmem>>, vector<8x64xf32>
    tpu.vector_store %arg4[%c0_5, %c0_6], %6 {strides = array<i32>} : memref<8x64xf32, #tpu.memory_space<vmem>>, vector<8x64xf32>,
    return
  }
  func.func @transform_0(%arg0: i32) -> (i32, i32) {
    %c0_i32 = arith.constant 0 : i32
    %c0_i32_0 = arith.constant 0 : i32
    return %arg0, %c0_i32 : i32, i32
  }
  func.func @transform_1(%arg0: i32) -> (i32, i32) {
    %c0_i32 = arith.constant 0 : i32
    %c0_i32_0 = arith.constant 0 : i32
    %c0_i32_1 = arith.constant 0 : i32
    return %c0_i32, %c0_i32_0 : i32, i32
  }
  func.func @transform_2(%arg0: i32) -> (i32, i32) {
    %c0_i32 = arith.constant 0 : i32
    %c0_i32_0 = arith.constant 0 : i32
    %c0_i32_1 = arith.constant 0 : i32
    return %c0_i32, %c0_i32_0 : i32, i32
  }
  func.func @transform_3(%arg0: i32) -> (i32, i32) {
    %c0_i32 = arith.constant 0 : i32
    %c0_i32_0 = arith.constant 0 : i32
    return %arg0, %c0_i32 : i32, i32
  }
}

module attributes {stable_mosaic.version = 11 : i64} {
  func.func @kernel(%arg0: i32, %arg1: i32, %arg2: i32, %arg3: memref<8x512xbf16, #tpu.memory_space<vmem>>, %arg4: memref<512x64xbf16, #tpu.memory_space<vmem>>, %arg5: memref<1x64xf32, #tpu.memory_space<vmem>>, %arg6: memref<8x64xf32, #tpu.memory_space<vmem>>, %arg7: memref<8x64xf32, #tpu.memory_space<vmem>>) attributes {dimension_semantics = [#tpu.dimension_semantics<parallel>, #tpu.dimension_semantics<parallel>, #tpu.dimension_semantics<arbitrary>], iteration_bounds = array<i64: 1, 1, 2>, scalar_prefetch = 0 : i64, scratch_operands = 1 : i64, tpu.core_type = #tpu.core_type<tc>, window_params = [{transform_indices = @transform_0, window_bounds = array<i64: 8, 512>}, {transform_indices = @transform_1, window_bounds = array<i64: 512, 64>}, {transform_indices = @transform_2, window_bounds = array<i64: 1, 64>}, {transform_indices = @transform_3, window_bounds = array<i64: 8, 64>}]} {
    %c0_i32 = arith.constant 0 : i32
    %0 = arith.cmpi eq, %arg2, %c0_i32 : i32
    %1 = arith.extui %0 : i1 to i32
    %c0_i32_0 = arith.constant 0 : i32
    %2 = arith.cmpi ne, %1, %c0_i32_0 : i32
    scf.if %2 {
      %cst_11 = arith.constant 0.000000e+00 : f32
      %19 = vector.broadcast %cst_11 : f32 to vector<8x64xf32>
      %c0_12 = arith.constant 0 : index
      %c0_13 = arith.constant 0 : index
      %20 = vector.load %arg7[%c0_12, %c0_13] : memref<8x64xf32, #tpu.memory_space<vmem>>, vector<8x64xf32>
      tpu.vector_store %arg7[%c0_12, %c0_13], %19 {strides = array<i32>} : memref<8x64xf32, #tpu.memory_space<vmem>>, vector<8x64xf32>,
    } else {
    }
    %c0 = arith.constant 0 : index
    %c0_1 = arith.constant 0 : index
    %3 = vector.load %arg3[%c0, %c0_1] : memref<8x512xbf16, #tpu.memory_space<vmem>>, vector<8x512xbf16>
    %4 = arith.extf %3 : vector<8x512xbf16> to vector<8x512xf32>
    %cst = arith.constant 0.000000e+00 : f32
    %5 = vector.broadcast %cst : f32 to vector<8x512xf32>
    %6 = arith.cmpf ogt, %4, %5 : vector<8x512xf32>
    %cst_2 = arith.constant 2.000000e-01 : f32
    %7 = vector.broadcast %cst_2 : f32 to vector<8x512xf32>
    %8 = arith.mulf %7, %4 : vector<8x512xf32>
    %9 = arith.select %6, %4, %8 : vector<8x512xi1>, vector<8x512xf32>
    %c0_3 = arith.constant 0 : index
    %c0_4 = arith.constant 0 : index
    %10 = vector.load %arg7[%c0_3, %c0_4] : memref<8x64xf32, #tpu.memory_space<vmem>>, vector<8x64xf32>
    %11 = arith.truncf %9 : vector<8x512xf32> to vector<8x512xbf16>
    %c0_5 = arith.constant 0 : index
    %c0_6 = arith.constant 0 : index
    %12 = vector.load %arg4[%c0_5, %c0_6] : memref<512x64xbf16, #tpu.memory_space<vmem>>, vector<512x64xbf16>
    %cst_7 = arith.constant dense<0.000000e+00> : vector<8x64xf32>
    %13 = tpu.matmul %11, %12, %cst_7 {dimension_numbers = #tpu.dot_dimension_numbers<[1], [0], [0], [1], [0, 0, 1, 1], [], []>} : vector<8x512xbf16>, vector<512x64xbf16>, vector<8x64xf32> -> vector<8x64xf32>
    %14 = arith.addf %10, %13 : vector<8x64xf32>
    %c0_8 = arith.constant 0 : index
    %c0_9 = arith.constant 0 : index
    %15 = vector.load %arg7[%c0_8, %c0_9] : memref<8x64xf32, #tpu.memory_space<vmem>>, vector<8x64xf32>
    tpu.vector_store %arg7[%c0_8, %c0_9], %14 {strides = array<i32>} : memref<8x64xf32, #tpu.memory_space<vmem>>, vector<8x64xf32>,
    %c1_i32 = arith.constant 1 : i32
    %16 = arith.cmpi eq, %arg2, %c1_i32 : i32
    %17 = arith.extui %16 : i1 to i32
    %c0_i32_10 = arith.constant 0 : i32
    %18 = arith.cmpi ne, %17, %c0_i32_10 : i32
    scf.if %18 {
      %c0_11 = arith.constant 0 : index
      %c0_12 = arith.constant 0 : index
      %19 = vector.load %arg7[%c0_11, %c0_12] : memref<8x64xf32, #tpu.memory_space<vmem>>, vector<8x64xf32>
      %c0_13 = arith.constant 0 : index
      %c0_14 = arith.constant 0 : index
      %20 = vector.load %arg5[%c0_13, %c0_14] : memref<1x64xf32, #tpu.memory_space<vmem>>, vector<1x64xf32>
      %21 = vector.broadcast %20 : vector<1x64xf32> to vector<8x64xf32>
      %22 = arith.addf %19, %21 : vector<8x64xf32>
      %c0_15 = arith.constant 0 : index
      %c0_16 = arith.constant 0 : index
      %23 = vector.load %arg6[%c0_15, %c0_16] : memref<8x64xf32, #tpu.memory_space<vmem>>, vector<8x64xf32>
      tpu.vector_store %arg6[%c0_15, %c0_16], %22 {strides = array<i32>} : memref<8x64xf32, #tpu.memory_space<vmem>>, vector<8x64xf32>,
    } else {
    }
    return
  }
  func.func @transform_0(%arg0: i32, %arg1: i32, %arg2: i32) -> (i32, i32) {
    %c0_i32 = arith.constant 0 : i32
    return %arg0, %arg2 : i32, i32
  }
  func.func @transform_1(%arg0: i32, %arg1: i32, %arg2: i32) -> (i32, i32) {
    %c0_i32 = arith.constant 0 : i32
    return %arg2, %arg1 : i32, i32
  }
  func.func @transform_2(%arg0: i32, %arg1: i32, %arg2: i32) -> (i32, i32) {
    %c0_i32 = arith.constant 0 : i32
    %c0_i32_0 = arith.constant 0 : i32
    return %c0_i32, %arg1 : i32, i32
  }
  func.func @transform_3(%arg0: i32, %arg1: i32, %arg2: i32) -> (i32, i32) {
    %c0_i32 = arith.constant 0 : i32
    return %arg0, %arg1 : i32, i32
  }
}

module attributes {stable_mosaic.version = 11 : i64} {
  func.func @kernel(%arg0: i32, %arg1: i32, %arg2: i32, %arg3: memref<8x256xbf16, #tpu.memory_space<vmem>>, %arg4: memref<256x64xbf16, #tpu.memory_space<vmem>>, %arg5: memref<1x64xf32, #tpu.memory_space<vmem>>, %arg6: memref<8x64xf32, #tpu.memory_space<vmem>>, %arg7: memref<8x64xf32, #tpu.memory_space<vmem>>) attributes {dimension_semantics = [#tpu.dimension_semantics<parallel>, #tpu.dimension_semantics<parallel>, #tpu.dimension_semantics<arbitrary>], iteration_bounds = array<i64: 1, 1, 1>, scalar_prefetch = 0 : i64, scratch_operands = 1 : i64, tpu.core_type = #tpu.core_type<tc>, window_params = [{transform_indices = @transform_0, window_bounds = array<i64: 8, 256>}, {transform_indices = @transform_1, window_bounds = array<i64: 256, 64>}, {transform_indices = @transform_2, window_bounds = array<i64: 1, 64>}, {transform_indices = @transform_3, window_bounds = array<i64: 8, 64>}]} {
    %c0_i32 = arith.constant 0 : i32
    %0 = arith.cmpi eq, %arg2, %c0_i32 : i32
    %1 = arith.extui %0 : i1 to i32
    %c0_i32_0 = arith.constant 0 : i32
    %2 = arith.cmpi ne, %1, %c0_i32_0 : i32
    scf.if %2 {
      %cst_11 = arith.constant 0.000000e+00 : f32
      %16 = vector.broadcast %cst_11 : f32 to vector<8x64xf32>
      %c0_12 = arith.constant 0 : index
      %c0_13 = arith.constant 0 : index
      %17 = vector.load %arg7[%c0_12, %c0_13] : memref<8x64xf32, #tpu.memory_space<vmem>>, vector<8x64xf32>
      tpu.vector_store %arg7[%c0_12, %c0_13], %16 {strides = array<i32>} : memref<8x64xf32, #tpu.memory_space<vmem>>, vector<8x64xf32>,
    } else {
    }
    %c0 = arith.constant 0 : index
    %c0_1 = arith.constant 0 : index
    %3 = vector.load %arg3[%c0, %c0_1] : memref<8x256xbf16, #tpu.memory_space<vmem>>, vector<8x256xbf16>
    %4 = arith.extf %3 : vector<8x256xbf16> to vector<8x256xf32>
    %cst = arith.constant 0.000000e+00 : f32
    %5 = vector.broadcast %cst : f32 to vector<8x256xf32>
    %6 = arith.maximumf %4, %5 : vector<8x256xf32>
    %c0_2 = arith.constant 0 : index
    %c0_3 = arith.constant 0 : index
    %7 = vector.load %arg7[%c0_2, %c0_3] : memref<8x64xf32, #tpu.memory_space<vmem>>, vector<8x64xf32>
    %8 = arith.truncf %6 : vector<8x256xf32> to vector<8x256xbf16>
    %c0_4 = arith.constant 0 : index
    %c0_5 = arith.constant 0 : index
    %9 = vector.load %arg4[%c0_4, %c0_5] : memref<256x64xbf16, #tpu.memory_space<vmem>>, vector<256x64xbf16>
    %cst_6 = arith.constant dense<0.000000e+00> : vector<8x64xf32>
    %10 = tpu.matmul %8, %9, %cst_6 {dimension_numbers = #tpu.dot_dimension_numbers<[1], [0], [0], [1], [0, 0, 1, 1], [], []>} : vector<8x256xbf16>, vector<256x64xbf16>, vector<8x64xf32> -> vector<8x64xf32>
    %11 = arith.addf %7, %10 : vector<8x64xf32>
    %c0_7 = arith.constant 0 : index
    %c0_8 = arith.constant 0 : index
    %12 = vector.load %arg7[%c0_7, %c0_8] : memref<8x64xf32, #tpu.memory_space<vmem>>, vector<8x64xf32>
    tpu.vector_store %arg7[%c0_7, %c0_8], %11 {strides = array<i32>} : memref<8x64xf32, #tpu.memory_space<vmem>>, vector<8x64xf32>,
    %c0_i32_9 = arith.constant 0 : i32
    %13 = arith.cmpi eq, %arg2, %c0_i32_9 : i32
    %14 = arith.extui %13 : i1 to i32
    %c0_i32_10 = arith.constant 0 : i32
    %15 = arith.cmpi ne, %14, %c0_i32_10 : i32
    scf.if %15 {
      %c0_11 = arith.constant 0 : index
      %c0_12 = arith.constant 0 : index
      %16 = vector.load %arg7[%c0_11, %c0_12] : memref<8x64xf32, #tpu.memory_space<vmem>>, vector<8x64xf32>
      %c0_13 = arith.constant 0 : index
      %c0_14 = arith.constant 0 : index
      %17 = vector.load %arg5[%c0_13, %c0_14] : memref<1x64xf32, #tpu.memory_space<vmem>>, vector<1x64xf32>
      %18 = vector.broadcast %17 : vector<1x64xf32> to vector<8x64xf32>
      %19 = arith.addf %16, %18 : vector<8x64xf32>
      %c0_15 = arith.constant 0 : index
      %c0_16 = arith.constant 0 : index
      %20 = vector.load %arg6[%c0_15, %c0_16] : memref<8x64xf32, #tpu.memory_space<vmem>>, vector<8x64xf32>
      tpu.vector_store %arg6[%c0_15, %c0_16], %19 {strides = array<i32>} : memref<8x64xf32, #tpu.memory_space<vmem>>, vector<8x64xf32>,
    } else {
    }
    return
  }
  func.func @transform_0(%arg0: i32, %arg1: i32, %arg2: i32) -> (i32, i32) {
    %c0_i32 = arith.constant 0 : i32
    return %arg0, %arg2 : i32, i32
  }
  func.func @transform_1(%arg0: i32, %arg1: i32, %arg2: i32) -> (i32, i32) {
    %c0_i32 = arith.constant 0 : i32
    return %arg2, %arg1 : i32, i32
  }
  func.func @transform_2(%arg0: i32, %arg1: i32, %arg2: i32) -> (i32, i32) {
    %c0_i32 = arith.constant 0 : i32
    %c0_i32_0 = arith.constant 0 : i32
    return %c0_i32, %arg1 : i32, i32
  }
  func.func @transform_3(%arg0: i32, %arg1: i32, %arg2: i32) -> (i32, i32) {
    %c0_i32 = arith.constant 0 : i32
    return %arg0, %arg1 : i32, i32
  }
}

module attributes {stable_mosaic.version = 11 : i64} {
  func.func @kernel(%arg0: i32, %arg1: i32, %arg2: i32, %arg3: memref<8x512xbf16, #tpu.memory_space<vmem>>, %arg4: memref<512x32xbf16, #tpu.memory_space<vmem>>, %arg5: memref<1x32xf32, #tpu.memory_space<vmem>>, %arg6: memref<8x32xf32, #tpu.memory_space<vmem>>, %arg7: memref<8x32xf32, #tpu.memory_space<vmem>>) attributes {dimension_semantics = [#tpu.dimension_semantics<parallel>, #tpu.dimension_semantics<parallel>, #tpu.dimension_semantics<arbitrary>], iteration_bounds = array<i64: 1, 1, 1>, scalar_prefetch = 0 : i64, scratch_operands = 1 : i64, tpu.core_type = #tpu.core_type<tc>, window_params = [{transform_indices = @transform_0, window_bounds = array<i64: 8, 512>}, {transform_indices = @transform_1, window_bounds = array<i64: 512, 32>}, {transform_indices = @transform_2, window_bounds = array<i64: 1, 32>}, {transform_indices = @transform_3, window_bounds = array<i64: 8, 32>}]} {
    %c0_i32 = arith.constant 0 : i32
    %0 = arith.cmpi eq, %arg2, %c0_i32 : i32
    %1 = arith.extui %0 : i1 to i32
    %c0_i32_0 = arith.constant 0 : i32
    %2 = arith.cmpi ne, %1, %c0_i32_0 : i32
    scf.if %2 {
      %cst_11 = arith.constant 0.000000e+00 : f32
      %16 = vector.broadcast %cst_11 : f32 to vector<8x32xf32>
      %c0_12 = arith.constant 0 : index
      %c0_13 = arith.constant 0 : index
      %17 = vector.load %arg7[%c0_12, %c0_13] : memref<8x32xf32, #tpu.memory_space<vmem>>, vector<8x32xf32>
      tpu.vector_store %arg7[%c0_12, %c0_13], %16 {strides = array<i32>} : memref<8x32xf32, #tpu.memory_space<vmem>>, vector<8x32xf32>,
    } else {
    }
    %c0 = arith.constant 0 : index
    %c0_1 = arith.constant 0 : index
    %3 = vector.load %arg3[%c0, %c0_1] : memref<8x512xbf16, #tpu.memory_space<vmem>>, vector<8x512xbf16>
    %4 = arith.extf %3 : vector<8x512xbf16> to vector<8x512xf32>
    %cst = arith.constant 0.000000e+00 : f32
    %5 = vector.broadcast %cst : f32 to vector<8x512xf32>
    %6 = arith.maximumf %4, %5 : vector<8x512xf32>
    %c0_2 = arith.constant 0 : index
    %c0_3 = arith.constant 0 : index
    %7 = vector.load %arg7[%c0_2, %c0_3] : memref<8x32xf32, #tpu.memory_space<vmem>>, vector<8x32xf32>
    %8 = arith.truncf %6 : vector<8x512xf32> to vector<8x512xbf16>
    %c0_4 = arith.constant 0 : index
    %c0_5 = arith.constant 0 : index
    %9 = vector.load %arg4[%c0_4, %c0_5] : memref<512x32xbf16, #tpu.memory_space<vmem>>, vector<512x32xbf16>
    %cst_6 = arith.constant dense<0.000000e+00> : vector<8x32xf32>
    %10 = tpu.matmul %8, %9, %cst_6 {dimension_numbers = #tpu.dot_dimension_numbers<[1], [0], [0], [1], [0, 0, 1, 1], [], []>} : vector<8x512xbf16>, vector<512x32xbf16>, vector<8x32xf32> -> vector<8x32xf32>
    %11 = arith.addf %7, %10 : vector<8x32xf32>
    %c0_7 = arith.constant 0 : index
    %c0_8 = arith.constant 0 : index
    %12 = vector.load %arg7[%c0_7, %c0_8] : memref<8x32xf32, #tpu.memory_space<vmem>>, vector<8x32xf32>
    tpu.vector_store %arg7[%c0_7, %c0_8], %11 {strides = array<i32>} : memref<8x32xf32, #tpu.memory_space<vmem>>, vector<8x32xf32>,
    %c0_i32_9 = arith.constant 0 : i32
    %13 = arith.cmpi eq, %arg2, %c0_i32_9 : i32
    %14 = arith.extui %13 : i1 to i32
    %c0_i32_10 = arith.constant 0 : i32
    %15 = arith.cmpi ne, %14, %c0_i32_10 : i32
    scf.if %15 {
      %c0_11 = arith.constant 0 : index
      %c0_12 = arith.constant 0 : index
      %16 = vector.load %arg7[%c0_11, %c0_12] : memref<8x32xf32, #tpu.memory_space<vmem>>, vector<8x32xf32>
      %c0_13 = arith.constant 0 : index
      %c0_14 = arith.constant 0 : index
      %17 = vector.load %arg5[%c0_13, %c0_14] : memref<1x32xf32, #tpu.memory_space<vmem>>, vector<1x32xf32>
      %18 = vector.broadcast %17 : vector<1x32xf32> to vector<8x32xf32>
      %19 = arith.addf %16, %18 : vector<8x32xf32>
      %c0_15 = arith.constant 0 : index
      %c0_16 = arith.constant 0 : index
      %20 = vector.load %arg6[%c0_15, %c0_16] : memref<8x32xf32, #tpu.memory_space<vmem>>, vector<8x32xf32>
      tpu.vector_store %arg6[%c0_15, %c0_16], %19 {strides = array<i32>} : memref<8x32xf32, #tpu.memory_space<vmem>>, vector<8x32xf32>,
    } else {
    }
    return
  }
  func.func @transform_0(%arg0: i32, %arg1: i32, %arg2: i32) -> (i32, i32) {
    %c0_i32 = arith.constant 0 : i32
    return %arg0, %arg2 : i32, i32
  }
  func.func @transform_1(%arg0: i32, %arg1: i32, %arg2: i32) -> (i32, i32) {
    %c0_i32 = arith.constant 0 : i32
    return %arg2, %arg1 : i32, i32
  }
  func.func @transform_2(%arg0: i32, %arg1: i32, %arg2: i32) -> (i32, i32) {
    %c0_i32 = arith.constant 0 : i32
    %c0_i32_0 = arith.constant 0 : i32
    return %c0_i32, %arg1 : i32, i32
  }
  func.func @transform_3(%arg0: i32, %arg1: i32, %arg2: i32) -> (i32, i32) {
    %c0_i32 = arith.constant 0 : i32
    return %arg0, %arg1 : i32, i32
  }
}

module attributes {stable_mosaic.version = 11 : i64} {
  func.func @kernel(%arg0: i32, %arg1: i32, %arg2: i32, %arg3: memref<32x256xbf16, #tpu.memory_space<vmem>>, %arg4: memref<256x16xbf16, #tpu.memory_space<vmem>>, %arg5: memref<1x16xf32, #tpu.memory_space<vmem>>, %arg6: memref<32x16xf32, #tpu.memory_space<vmem>>, %arg7: memref<32x16xf32, #tpu.memory_space<vmem>>) attributes {dimension_semantics = [#tpu.dimension_semantics<parallel>, #tpu.dimension_semantics<parallel>, #tpu.dimension_semantics<arbitrary>], iteration_bounds = array<i64: 1, 1, 1>, scalar_prefetch = 0 : i64, scratch_operands = 1 : i64, tpu.core_type = #tpu.core_type<tc>, window_params = [{transform_indices = @transform_0, window_bounds = array<i64: 32, 256>}, {transform_indices = @transform_1, window_bounds = array<i64: 256, 16>}, {transform_indices = @transform_2, window_bounds = array<i64: 1, 16>}, {transform_indices = @transform_3, window_bounds = array<i64: 32, 16>}]} {
    %c0_i32 = arith.constant 0 : i32
    %0 = arith.cmpi eq, %arg2, %c0_i32 : i32
    %1 = arith.extui %0 : i1 to i32
    %c0_i32_0 = arith.constant 0 : i32
    %2 = arith.cmpi ne, %1, %c0_i32_0 : i32
    scf.if %2 {
      %cst_11 = arith.constant 0.000000e+00 : f32
      %16 = vector.broadcast %cst_11 : f32 to vector<32x16xf32>
      %c0_12 = arith.constant 0 : index
      %c0_13 = arith.constant 0 : index
      %17 = vector.load %arg7[%c0_12, %c0_13] : memref<32x16xf32, #tpu.memory_space<vmem>>, vector<32x16xf32>
      tpu.vector_store %arg7[%c0_12, %c0_13], %16 {strides = array<i32>} : memref<32x16xf32, #tpu.memory_space<vmem>>, vector<32x16xf32>,
    } else {
    }
    %c0 = arith.constant 0 : index
    %c0_1 = arith.constant 0 : index
    %3 = vector.load %arg3[%c0, %c0_1] : memref<32x256xbf16, #tpu.memory_space<vmem>>, vector<32x256xbf16>
    %4 = arith.extf %3 : vector<32x256xbf16> to vector<32x256xf32>
    %cst = arith.constant 0.000000e+00 : f32
    %5 = vector.broadcast %cst : f32 to vector<32x256xf32>
    %6 = arith.maximumf %4, %5 : vector<32x256xf32>
    %c0_2 = arith.constant 0 : index
    %c0_3 = arith.constant 0 : index
    %7 = vector.load %arg7[%c0_2, %c0_3] : memref<32x16xf32, #tpu.memory_space<vmem>>, vector<32x16xf32>
    %8 = arith.truncf %6 : vector<32x256xf32> to vector<32x256xbf16>
    %c0_4 = arith.constant 0 : index
    %c0_5 = arith.constant 0 : index
    %9 = vector.load %arg4[%c0_4, %c0_5] : memref<256x16xbf16, #tpu.memory_space<vmem>>, vector<256x16xbf16>
    %cst_6 = arith.constant dense<0.000000e+00> : vector<32x16xf32>
    %10 = tpu.matmul %8, %9, %cst_6 {dimension_numbers = #tpu.dot_dimension_numbers<[1], [0], [0], [1], [0, 0, 1, 1], [], []>} : vector<32x256xbf16>, vector<256x16xbf16>, vector<32x16xf32> -> vector<32x16xf32>
    %11 = arith.addf %7, %10 : vector<32x16xf32>
    %c0_7 = arith.constant 0 : index
    %c0_8 = arith.constant 0 : index
    %12 = vector.load %arg7[%c0_7, %c0_8] : memref<32x16xf32, #tpu.memory_space<vmem>>, vector<32x16xf32>
    tpu.vector_store %arg7[%c0_7, %c0_8], %11 {strides = array<i32>} : memref<32x16xf32, #tpu.memory_space<vmem>>, vector<32x16xf32>,
    %c0_i32_9 = arith.constant 0 : i32
    %13 = arith.cmpi eq, %arg2, %c0_i32_9 : i32
    %14 = arith.extui %13 : i1 to i32
    %c0_i32_10 = arith.constant 0 : i32
    %15 = arith.cmpi ne, %14, %c0_i32_10 : i32
    scf.if %15 {
      %c0_11 = arith.constant 0 : index
      %c0_12 = arith.constant 0 : index
      %16 = vector.load %arg7[%c0_11, %c0_12] : memref<32x16xf32, #tpu.memory_space<vmem>>, vector<32x16xf32>
      %c0_13 = arith.constant 0 : index
      %c0_14 = arith.constant 0 : index
      %17 = vector.load %arg5[%c0_13, %c0_14] : memref<1x16xf32, #tpu.memory_space<vmem>>, vector<1x16xf32>
      %18 = vector.broadcast %17 : vector<1x16xf32> to vector<32x16xf32>
      %19 = arith.addf %16, %18 : vector<32x16xf32>
      %c0_15 = arith.constant 0 : index
      %c0_16 = arith.constant 0 : index
      %20 = vector.load %arg6[%c0_15, %c0_16] : memref<32x16xf32, #tpu.memory_space<vmem>>, vector<32x16xf32>
      tpu.vector_store %arg6[%c0_15, %c0_16], %19 {strides = array<i32>} : memref<32x16xf32, #tpu.memory_space<vmem>>, vector<32x16xf32>,
    } else {
    }
    return
  }
  func.func @transform_0(%arg0: i32, %arg1: i32, %arg2: i32) -> (i32, i32) {
    %c0_i32 = arith.constant 0 : i32
    return %arg0, %arg2 : i32, i32
  }
  func.func @transform_1(%arg0: i32, %arg1: i32, %arg2: i32) -> (i32, i32) {
    %c0_i32 = arith.constant 0 : i32
    return %arg2, %arg1 : i32, i32
  }
  func.func @transform_2(%arg0: i32, %arg1: i32, %arg2: i32) -> (i32, i32) {
    %c0_i32 = arith.constant 0 : i32
    %c0_i32_0 = arith.constant 0 : i32
    return %c0_i32, %arg1 : i32, i32
  }
  func.func @transform_3(%arg0: i32, %arg1: i32, %arg2: i32) -> (i32, i32) {
    %c0_i32 = arith.constant 0 : i32
    return %arg0, %arg1 : i32, i32
  }
}

module attributes {stable_mosaic.version = 11 : i64} {
  func.func @kernel(%arg0: i32, %arg1: i32, %arg2: i32, %arg3: memref<128x128xbf16, #tpu.memory_space<vmem>>, %arg4: memref<128x8xbf16, #tpu.memory_space<vmem>>, %arg5: memref<1x8xf32, #tpu.memory_space<vmem>>, %arg6: memref<128x8xf32, #tpu.memory_space<vmem>>, %arg7: memref<128x8xf32, #tpu.memory_space<vmem>>) attributes {dimension_semantics = [#tpu.dimension_semantics<parallel>, #tpu.dimension_semantics<parallel>, #tpu.dimension_semantics<arbitrary>], iteration_bounds = array<i64: 1, 1, 1>, scalar_prefetch = 0 : i64, scratch_operands = 1 : i64, tpu.core_type = #tpu.core_type<tc>, window_params = [{transform_indices = @transform_0, window_bounds = array<i64: 128, 128>}, {transform_indices = @transform_1, window_bounds = array<i64: 128, 8>}, {transform_indices = @transform_2, window_bounds = array<i64: 1, 8>}, {transform_indices = @transform_3, window_bounds = array<i64: 128, 8>}]} {
    %c0_i32 = arith.constant 0 : i32
    %0 = arith.cmpi eq, %arg2, %c0_i32 : i32
    %1 = arith.extui %0 : i1 to i32
    %c0_i32_0 = arith.constant 0 : i32
    %2 = arith.cmpi ne, %1, %c0_i32_0 : i32
    scf.if %2 {
      %cst_11 = arith.constant 0.000000e+00 : f32
      %16 = vector.broadcast %cst_11 : f32 to vector<128x8xf32>
      %c0_12 = arith.constant 0 : index
      %c0_13 = arith.constant 0 : index
      %17 = vector.load %arg7[%c0_12, %c0_13] : memref<128x8xf32, #tpu.memory_space<vmem>>, vector<128x8xf32>
      tpu.vector_store %arg7[%c0_12, %c0_13], %16 {strides = array<i32>} : memref<128x8xf32, #tpu.memory_space<vmem>>, vector<128x8xf32>,
    } else {
    }
    %c0 = arith.constant 0 : index
    %c0_1 = arith.constant 0 : index
    %3 = vector.load %arg3[%c0, %c0_1] : memref<128x128xbf16, #tpu.memory_space<vmem>>, vector<128x128xbf16>
    %4 = arith.extf %3 : vector<128x128xbf16> to vector<128x128xf32>
    %cst = arith.constant 0.000000e+00 : f32
    %5 = vector.broadcast %cst : f32 to vector<128x128xf32>
    %6 = arith.maximumf %4, %5 : vector<128x128xf32>
    %c0_2 = arith.constant 0 : index
    %c0_3 = arith.constant 0 : index
    %7 = vector.load %arg7[%c0_2, %c0_3] : memref<128x8xf32, #tpu.memory_space<vmem>>, vector<128x8xf32>
    %8 = arith.truncf %6 : vector<128x128xf32> to vector<128x128xbf16>
    %c0_4 = arith.constant 0 : index
    %c0_5 = arith.constant 0 : index
    %9 = vector.load %arg4[%c0_4, %c0_5] : memref<128x8xbf16, #tpu.memory_space<vmem>>, vector<128x8xbf16>
    %cst_6 = arith.constant dense<0.000000e+00> : vector<128x8xf32>
    %10 = tpu.matmul %8, %9, %cst_6 {dimension_numbers = #tpu.dot_dimension_numbers<[1], [0], [0], [1], [0, 0, 1, 1], [], []>} : vector<128x128xbf16>, vector<128x8xbf16>, vector<128x8xf32> -> vector<128x8xf32>
    %11 = arith.addf %7, %10 : vector<128x8xf32>
    %c0_7 = arith.constant 0 : index
    %c0_8 = arith.constant 0 : index
    %12 = vector.load %arg7[%c0_7, %c0_8] : memref<128x8xf32, #tpu.memory_space<vmem>>, vector<128x8xf32>
    tpu.vector_store %arg7[%c0_7, %c0_8], %11 {strides = array<i32>} : memref<128x8xf32, #tpu.memory_space<vmem>>, vector<128x8xf32>,
    %c0_i32_9 = arith.constant 0 : i32
    %13 = arith.cmpi eq, %arg2, %c0_i32_9 : i32
    %14 = arith.extui %13 : i1 to i32
    %c0_i32_10 = arith.constant 0 : i32
    %15 = arith.cmpi ne, %14, %c0_i32_10 : i32
    scf.if %15 {
      %c0_11 = arith.constant 0 : index
      %c0_12 = arith.constant 0 : index
      %16 = vector.load %arg7[%c0_11, %c0_12] : memref<128x8xf32, #tpu.memory_space<vmem>>, vector<128x8xf32>
      %c0_13 = arith.constant 0 : index
      %c0_14 = arith.constant 0 : index
      %17 = vector.load %arg5[%c0_13, %c0_14] : memref<1x8xf32, #tpu.memory_space<vmem>>, vector<1x8xf32>
      %18 = vector.broadcast %17 : vector<1x8xf32> to vector<128x8xf32>
      %19 = arith.addf %16, %18 : vector<128x8xf32>
      %c0_15 = arith.constant 0 : index
      %c0_16 = arith.constant 0 : index
      %20 = vector.load %arg6[%c0_15, %c0_16] : memref<128x8xf32, #tpu.memory_space<vmem>>, vector<128x8xf32>
      tpu.vector_store %arg6[%c0_15, %c0_16], %19 {strides = array<i32>} : memref<128x8xf32, #tpu.memory_space<vmem>>, vector<128x8xf32>,
    } else {
    }
    return
  }
  func.func @transform_0(%arg0: i32, %arg1: i32, %arg2: i32) -> (i32, i32) {
    %c0_i32 = arith.constant 0 : i32
    return %arg0, %arg2 : i32, i32
  }
  func.func @transform_1(%arg0: i32, %arg1: i32, %arg2: i32) -> (i32, i32) {
    %c0_i32 = arith.constant 0 : i32
    return %arg2, %arg1 : i32, i32
  }
  func.func @transform_2(%arg0: i32, %arg1: i32, %arg2: i32) -> (i32, i32) {
    %c0_i32 = arith.constant 0 : i32
    %c0_i32_0 = arith.constant 0 : i32
    return %c0_i32, %arg1 : i32, i32
  }
  func.func @transform_3(%arg0: i32, %arg1: i32, %arg2: i32) -> (i32, i32) {
    %c0_i32 = arith.constant 0 : i32
    return %arg0, %arg1 : i32, i32
  }
}

module attributes {stable_mosaic.version = 11 : i64} {
  func.func @_stats_kernel(%arg0: i32, %arg1: memref<512x8xf32, #tpu.memory_space<vmem>>, %arg2: memref<1x8xf32, #tpu.memory_space<vmem>>, %arg3: memref<1x8xf32, #tpu.memory_space<vmem>>) attributes {dimension_semantics = [#tpu.dimension_semantics<arbitrary>], iteration_bounds = array<i64: 1>, scalar_prefetch = 0 : i64, scratch_operands = 0 : i64, tpu.core_type = #tpu.core_type<tc>, window_params = [{transform_indices = @transform_0, window_bounds = array<i64: 512, 8>}, {pipeline_mode = #tpu.pipeline_mode<synchronous>, transform_indices = @transform_1, window_bounds = array<i64: 1, 8>}, {pipeline_mode = #tpu.pipeline_mode<synchronous>, transform_indices = @transform_2, window_bounds = array<i64: 1, 8>}]} {
    %c0_i32 = arith.constant 0 : i32
    %0 = arith.cmpi eq, %arg0, %c0_i32 : i32
    %1 = arith.extui %0 : i1 to i32
    %c0_i32_0 = arith.constant 0 : i32
    %2 = arith.cmpi ne, %1, %c0_i32_0 : i32
    scf.if %2 {
      %cst_11 = arith.constant 0.000000e+00 : f32
      %15 = vector.broadcast %cst_11 : f32 to vector<1x8xf32>
      %c0_12 = arith.constant 0 : index
      %c0_13 = arith.constant 0 : index
      %16 = vector.load %arg2[%c0_12, %c0_13] : memref<1x8xf32, #tpu.memory_space<vmem>>, vector<1x8xf32>
      tpu.vector_store %arg2[%c0_12, %c0_13], %15 {strides = array<i32>} : memref<1x8xf32, #tpu.memory_space<vmem>>, vector<1x8xf32>,
      %cst_14 = arith.constant 0.000000e+00 : f32
      %17 = vector.broadcast %cst_14 : f32 to vector<1x8xf32>
      %c0_15 = arith.constant 0 : index
      %c0_16 = arith.constant 0 : index
      %18 = vector.load %arg3[%c0_15, %c0_16] : memref<1x8xf32, #tpu.memory_space<vmem>>, vector<1x8xf32>
      tpu.vector_store %arg3[%c0_15, %c0_16], %17 {strides = array<i32>} : memref<1x8xf32, #tpu.memory_space<vmem>>, vector<1x8xf32>,
    } else {
    }
    %c0 = arith.constant 0 : index
    %c0_1 = arith.constant 0 : index
    %3 = vector.load %arg1[%c0, %c0_1] : memref<512x8xf32, #tpu.memory_space<vmem>>, vector<512x8xf32>
    %c0_2 = arith.constant 0 : index
    %c0_3 = arith.constant 0 : index
    %4 = vector.load %arg2[%c0_2, %c0_3] : memref<1x8xf32, #tpu.memory_space<vmem>>, vector<1x8xf32>
    %cst = arith.constant dense<0.000000e+00> : vector<8xf32>
    %5 = vector.multi_reduction <add>, %3, %cst [0] : vector<512x8xf32> to vector<8xf32>
    %6 = vector.shape_cast %5 : vector<8xf32> to vector<1x8xf32>
    %7 = arith.addf %4, %6 : vector<1x8xf32>
    %c0_4 = arith.constant 0 : index
    %c0_5 = arith.constant 0 : index
    %8 = vector.load %arg2[%c0_4, %c0_5] : memref<1x8xf32, #tpu.memory_space<vmem>>, vector<1x8xf32>
    tpu.vector_store %arg2[%c0_4, %c0_5], %7 {strides = array<i32>} : memref<1x8xf32, #tpu.memory_space<vmem>>, vector<1x8xf32>,
    %c0_6 = arith.constant 0 : index
    %c0_7 = arith.constant 0 : index
    %9 = vector.load %arg3[%c0_6, %c0_7] : memref<1x8xf32, #tpu.memory_space<vmem>>, vector<1x8xf32>
    %10 = arith.mulf %3, %3 : vector<512x8xf32>
    %cst_8 = arith.constant dense<0.000000e+00> : vector<8xf32>
    %11 = vector.multi_reduction <add>, %10, %cst_8 [0] : vector<512x8xf32> to vector<8xf32>
    %12 = vector.shape_cast %11 : vector<8xf32> to vector<1x8xf32>
    %13 = arith.addf %9, %12 : vector<1x8xf32>
    %c0_9 = arith.constant 0 : index
    %c0_10 = arith.constant 0 : index
    %14 = vector.load %arg3[%c0_9, %c0_10] : memref<1x8xf32, #tpu.memory_space<vmem>>, vector<1x8xf32>
    tpu.vector_store %arg3[%c0_9, %c0_10], %13 {strides = array<i32>} : memref<1x8xf32, #tpu.memory_space<vmem>>, vector<1x8xf32>,
    return
  }
  func.func @transform_0(%arg0: i32) -> (i32, i32) {
    %c0_i32 = arith.constant 0 : i32
    %c0_i32_0 = arith.constant 0 : i32
    return %arg0, %c0_i32 : i32, i32
  }
  func.func @transform_1(%arg0: i32) -> (i32, i32) {
    %c0_i32 = arith.constant 0 : i32
    %c0_i32_0 = arith.constant 0 : i32
    %c0_i32_1 = arith.constant 0 : i32
    return %c0_i32, %c0_i32_0 : i32, i32
  }
  func.func @transform_2(%arg0: i32) -> (i32, i32) {
    %c0_i32 = arith.constant 0 : i32
    %c0_i32_0 = arith.constant 0 : i32
    %c0_i32_1 = arith.constant 0 : i32
    return %c0_i32, %c0_i32_0 : i32, i32
  }
}

module attributes {stable_mosaic.version = 11 : i64} {
  func.func @_affine_kernel(%arg0: i32, %arg1: memref<512x8xf32, #tpu.memory_space<vmem>>, %arg2: memref<1x8xf32, #tpu.memory_space<vmem>>, %arg3: memref<1x8xf32, #tpu.memory_space<vmem>>, %arg4: memref<512x8xf32, #tpu.memory_space<vmem>>) attributes {dimension_semantics = [#tpu.dimension_semantics<parallel>], iteration_bounds = array<i64: 1>, scalar_prefetch = 0 : i64, scratch_operands = 0 : i64, tpu.core_type = #tpu.core_type<tc>, window_params = [{transform_indices = @transform_0, window_bounds = array<i64: 512, 8>}, {pipeline_mode = #tpu.pipeline_mode<synchronous>, transform_indices = @transform_1, window_bounds = array<i64: 1, 8>}, {pipeline_mode = #tpu.pipeline_mode<synchronous>, transform_indices = @transform_2, window_bounds = array<i64: 1, 8>}, {transform_indices = @transform_3, window_bounds = array<i64: 512, 8>}]} {
    %c0 = arith.constant 0 : index
    %c0_0 = arith.constant 0 : index
    %0 = vector.load %arg1[%c0, %c0_0] : memref<512x8xf32, #tpu.memory_space<vmem>>, vector<512x8xf32>
    %c0_1 = arith.constant 0 : index
    %c0_2 = arith.constant 0 : index
    %1 = vector.load %arg2[%c0_1, %c0_2] : memref<1x8xf32, #tpu.memory_space<vmem>>, vector<1x8xf32>
    %2 = vector.broadcast %1 : vector<1x8xf32> to vector<512x8xf32>
    %3 = arith.mulf %0, %2 : vector<512x8xf32>
    %c0_3 = arith.constant 0 : index
    %c0_4 = arith.constant 0 : index
    %4 = vector.load %arg3[%c0_3, %c0_4] : memref<1x8xf32, #tpu.memory_space<vmem>>, vector<1x8xf32>
    %5 = vector.broadcast %4 : vector<1x8xf32> to vector<512x8xf32>
    %6 = arith.addf %3, %5 : vector<512x8xf32>
    %c0_5 = arith.constant 0 : index
    %c0_6 = arith.constant 0 : index
    %7 = vector.load %arg4[%c0_5, %c0_6] : memref<512x8xf32, #tpu.memory_space<vmem>>, vector<512x8xf32>
    tpu.vector_store %arg4[%c0_5, %c0_6], %6 {strides = array<i32>} : memref<512x8xf32, #tpu.memory_space<vmem>>, vector<512x8xf32>,
    return
  }
  func.func @transform_0(%arg0: i32) -> (i32, i32) {
    %c0_i32 = arith.constant 0 : i32
    %c0_i32_0 = arith.constant 0 : i32
    return %arg0, %c0_i32 : i32, i32
  }
  func.func @transform_1(%arg0: i32) -> (i32, i32) {
    %c0_i32 = arith.constant 0 : i32
    %c0_i32_0 = arith.constant 0 : i32
    %c0_i32_1 = arith.constant 0 : i32
    return %c0_i32, %c0_i32_0 : i32, i32
  }
  func.func @transform_2(%arg0: i32) -> (i32, i32) {
    %c0_i32 = arith.constant 0 : i32
    %c0_i32_0 = arith.constant 0 : i32
    %c0_i32_1 = arith.constant 0 : i32
    return %c0_i32, %c0_i32_0 : i32, i32
  }
  func.func @transform_3(%arg0: i32) -> (i32, i32) {
    %c0_i32 = arith.constant 0 : i32
    %c0_i32_0 = arith.constant 0 : i32
    return %arg0, %c0_i32 : i32, i32
  }
}

module attributes {stable_mosaic.version = 11 : i64} {
  func.func @kernel(%arg0: i32, %arg1: i32, %arg2: i32, %arg3: memref<256x64xbf16, #tpu.memory_space<vmem>>, %arg4: memref<64x3xbf16, #tpu.memory_space<vmem>>, %arg5: memref<1x3xf32, #tpu.memory_space<vmem>>, %arg6: memref<256x3xf32, #tpu.memory_space<vmem>>, %arg7: memref<256x3xf32, #tpu.memory_space<vmem>>) attributes {dimension_semantics = [#tpu.dimension_semantics<parallel>, #tpu.dimension_semantics<parallel>, #tpu.dimension_semantics<arbitrary>], iteration_bounds = array<i64: 2, 1, 1>, scalar_prefetch = 0 : i64, scratch_operands = 1 : i64, tpu.core_type = #tpu.core_type<tc>, window_params = [{transform_indices = @transform_0, window_bounds = array<i64: 256, 64>}, {transform_indices = @transform_1, window_bounds = array<i64: 64, 3>}, {transform_indices = @transform_2, window_bounds = array<i64: 1, 3>}, {transform_indices = @transform_3, window_bounds = array<i64: 256, 3>}]} {
    %c0_i32 = arith.constant 0 : i32
    %0 = arith.cmpi eq, %arg2, %c0_i32 : i32
    %1 = arith.extui %0 : i1 to i32
    %c0_i32_0 = arith.constant 0 : i32
    %2 = arith.cmpi ne, %1, %c0_i32_0 : i32
    scf.if %2 {
      %cst_11 = arith.constant 0.000000e+00 : f32
      %16 = vector.broadcast %cst_11 : f32 to vector<256x3xf32>
      %c0_12 = arith.constant 0 : index
      %c0_13 = arith.constant 0 : index
      %17 = vector.load %arg7[%c0_12, %c0_13] : memref<256x3xf32, #tpu.memory_space<vmem>>, vector<256x3xf32>
      tpu.vector_store %arg7[%c0_12, %c0_13], %16 {strides = array<i32>} : memref<256x3xf32, #tpu.memory_space<vmem>>, vector<256x3xf32>,
    } else {
    }
    %c0 = arith.constant 0 : index
    %c0_1 = arith.constant 0 : index
    %3 = vector.load %arg3[%c0, %c0_1] : memref<256x64xbf16, #tpu.memory_space<vmem>>, vector<256x64xbf16>
    %4 = arith.extf %3 : vector<256x64xbf16> to vector<256x64xf32>
    %cst = arith.constant 0.000000e+00 : f32
    %5 = vector.broadcast %cst : f32 to vector<256x64xf32>
    %6 = arith.maximumf %4, %5 : vector<256x64xf32>
    %c0_2 = arith.constant 0 : index
    %c0_3 = arith.constant 0 : index
    %7 = vector.load %arg7[%c0_2, %c0_3] : memref<256x3xf32, #tpu.memory_space<vmem>>, vector<256x3xf32>
    %8 = arith.truncf %6 : vector<256x64xf32> to vector<256x64xbf16>
    %c0_4 = arith.constant 0 : index
    %c0_5 = arith.constant 0 : index
    %9 = vector.load %arg4[%c0_4, %c0_5] : memref<64x3xbf16, #tpu.memory_space<vmem>>, vector<64x3xbf16>
    %cst_6 = arith.constant dense<0.000000e+00> : vector<256x3xf32>
    %10 = tpu.matmul %8, %9, %cst_6 {dimension_numbers = #tpu.dot_dimension_numbers<[1], [0], [0], [1], [0, 0, 1, 1], [], []>} : vector<256x64xbf16>, vector<64x3xbf16>, vector<256x3xf32> -> vector<256x3xf32>
    %11 = arith.addf %7, %10 : vector<256x3xf32>
    %c0_7 = arith.constant 0 : index
    %c0_8 = arith.constant 0 : index
    %12 = vector.load %arg7[%c0_7, %c0_8] : memref<256x3xf32, #tpu.memory_space<vmem>>, vector<256x3xf32>
    tpu.vector_store %arg7[%c0_7, %c0_8], %11 {strides = array<i32>} : memref<256x3xf32, #tpu.memory_space<vmem>>, vector<256x3xf32>,
    %c0_i32_9 = arith.constant 0 : i32
    %13 = arith.cmpi eq, %arg2, %c0_i32_9 : i32
    %14 = arith.extui %13 : i1 to i32
    %c0_i32_10 = arith.constant 0 : i32
    %15 = arith.cmpi ne, %14, %c0_i32_10 : i32
    scf.if %15 {
      %c0_11 = arith.constant 0 : index
      %c0_12 = arith.constant 0 : index
      %16 = vector.load %arg7[%c0_11, %c0_12] : memref<256x3xf32, #tpu.memory_space<vmem>>, vector<256x3xf32>
      %c0_13 = arith.constant 0 : index
      %c0_14 = arith.constant 0 : index
      %17 = vector.load %arg5[%c0_13, %c0_14] : memref<1x3xf32, #tpu.memory_space<vmem>>, vector<1x3xf32>
      %18 = vector.broadcast %17 : vector<1x3xf32> to vector<256x3xf32>
      %19 = arith.addf %16, %18 : vector<256x3xf32>
      %20 = math.tanh %19 : vector<256x3xf32>
      %c0_15 = arith.constant 0 : index
      %c0_16 = arith.constant 0 : index
      %21 = vector.load %arg6[%c0_15, %c0_16] : memref<256x3xf32, #tpu.memory_space<vmem>>, vector<256x3xf32>
      tpu.vector_store %arg6[%c0_15, %c0_16], %20 {strides = array<i32>} : memref<256x3xf32, #tpu.memory_space<vmem>>, vector<256x3xf32>,
    } else {
    }
    return
  }
  func.func @transform_0(%arg0: i32, %arg1: i32, %arg2: i32) -> (i32, i32) {
    %c0_i32 = arith.constant 0 : i32
    return %arg0, %arg2 : i32, i32
  }
  func.func @transform_1(%arg0: i32, %arg1: i32, %arg2: i32) -> (i32, i32) {
    %c0_i32 = arith.constant 0 : i32
    return %arg2, %arg1 : i32, i32
  }
  func.func @transform_2(%arg0: i32, %arg1: i32, %arg2: i32) -> (i32, i32) {
    %c0_i32 = arith.constant 0 : i32
    %c0_i32_0 = arith.constant 0 : i32
    return %c0_i32, %arg1 : i32, i32
  }
  func.func @transform_3(%arg0: i32, %arg1: i32, %arg2: i32) -> (i32, i32) {
    %c0_i32 = arith.constant 0 : i32
    return %arg0, %arg1 : i32, i32
  }
}

</mosaic_0001>

<llo_original>
// kernel: unet_forward.39
$region0: #{unet_forward.39}
  #allocation0 [shape = 'u32[]', space=smem, size = 0x4, offset = 0x4, fixed_abs, tag = 'smem constant byte address 0x4 - core index']
  #allocation1 [shape = 'u32[144,128]{1,0:T(1,128)}', space=vmem, size = 0x12000, scoped, tag = 'internal scratch']
  #allocation2 [shape = 'f32[256,8]{1,0:T(8,128)}', space=vmem, size = 0x20000, scoped, tag = 'scratch operand']
  %s0 = inlined_call_operand.vmem [shape: bf16[512,48], index: 0, kind: input, shape index: {}]
  %s1 = inlined_call_operand.vmem [shape: bf16[48,8], index: 1, kind: input, shape index: {}]
  %s2 = inlined_call_operand.vmem [shape: f32[1,8], index: 2, kind: input, shape index: {}]
  %s3 = inlined_call_operand.vmem [shape: f32[512,8], index: 3, kind: output, shape index: {}]
  %s4 = sld [smem:[#allocation0]]
  $region53: #{unet_forward.39} parent=0
    _
  %s6 = ssub.s32 1, %s4
  %s7 = scalar_select 0, %s6, %s4
  loop: start=0, step=1, limit=4
  $region2: #{unet_forward.39} parent=0 // loop_pre_header
    _
  $region3: #{unet_forward.39} parent=0 // loop_header
    %s9 = sphi 0, %s13
    %p10 = scmp.ge.s32.totalorder %s9, 4
    %s16 = sphi 0, %s35
    %s17 = sphi 0, %s31
    %s18 = sphi 0, %s27
    %s19 = sphi 0, %s16
    %s20 = sphi 0, %s17
    %s21 = sphi 0, %s18
    %s22 = sphi 0, %s19
    %s23 = sphi 0, %s20
    %s24 = sphi 0, %s21
    %s40 = sphi 0, %s42
    %s43 = sphi 0, %s40
    %s44 = sphi 0, %s43
    %s60 = sphi 0, %s44
    %s68 = sphi 0, %s70
    %s71 = sphi 0, %s68
    %s72 = sphi 0, %s71
    %s88 = sphi 0, %s72
    %s94 = sphi 0, %s96
    %s97 = sphi 0, %s94
    %s98 = sphi 0, %s97
    %s114 = sphi 0, %s98
    %s122 = sphi 0, %s124
    %s125 = sphi 0, %s122
    %s126 = sphi 0, %s125
    %s142 = sphi 0, %s126
  $region4: #{unet_forward.39} parent=0 // loop_header_branch
    %12 = sbr.rel (%p10) target = $region8
  $region5: #{unet_forward.39} parent=0 // loop_body
    %s14 = ssub.s32 %s9, 1
    %s15 = ssub.s32 %s9, 2
    %s25 = sadd.s32 1, %s18
    %p26 = scmp.ge.s32.totalorder %s25, 1
    %s27 = scalar_select %p26, 0, %s25
    %s28 = sadd.s32 1, %s17
    %s29 = scalar_select %p26, %s28, %s17
    %p30 = scmp.ge.s32.totalorder %s29, 1
    %s31 = scalar_select %p30, 0, %s29
    %s32 = sadd.s32 1, %s16
    %s33 = scalar_select %p30, %s32, %s16
    %p34 = scmp.ge.s32.totalorder %s33, 2
    %s35 = scalar_select %p34, 0, %s33
    %s36 = ssub.s32 %s16, %s35
    %s37 = ssub.s32 %s18, %s27
    %s38 = sor.u32 %s36, %s37
    %p39 = scmp.eq.s32.totalorder %s38, 0
    %s41 = sadd.s32 %s40, 1
    %s42 = scalar_select %p39, %s40, %s41
    %p45 = pneg %p39
    %p46 = scmp.eq.s32.totalorder %s9, 1
    %p47 = por %p45, %p46
    %p48 = scmp.ne.s32.totalorder %s40, %s43
    %p49 = scmp.eq.s32.totalorder %s9, 0
    %p50 = por %p48, %p49
    %p51 = scmp.ne.s32.totalorder %s40, %s43
    %p52 = scmp.eq.s32.totalorder %s14, 1
    %p53 = por %p51, %p52
    %p54 = scmp.ne.s32.totalorder %s43, %s44
    %p55 = scmp.eq.s32.totalorder %s14, 0
    %p56 = por %p54, %p55
    %p57 = scmp.ne.s32.totalorder %s43, %s44
    %p58 = scmp.eq.s32.totalorder %s15, 1
    %p59 = por %p57, %p58
    %p61 = scmp.ne.s32.totalorder %s44, %s60
    %p62 = scmp.eq.s32.totalorder %s15, 0
    %p63 = por %p61, %p62
    %s64 = ssub.s32 %s18, %s27
    %s65 = ssub.s32 %s17, %s31
    %s66 = sor.u32 %s64, %s65
    %p67 = scmp.eq.s32.totalorder %s66, 0
    %s69 = sadd.s32 %s68, 1
    %s70 = scalar_select %p67, %s68, %s69
    %p73 = pneg %p67
    %p74 = scmp.eq.s32.totalorder %s9, 1
    %p75 = por %p73, %p74
    %p76 = scmp.ne.s32.totalorder %s68, %s71
    %p77 = scmp.eq.s32.totalorder %s9, 0
    %p78 = por %p76, %p77
    %p79 = scmp.ne.s32.totalorder %s68, %s71
    %p80 = scmp.eq.s32.totalorder %s14, 1
    %p81 = por %p79, %p80
    %p82 = scmp.ne.s32.totalorder %s71, %s72
    %p83 = scmp.eq.s32.totalorder %s14, 0
    %p84 = por %p82, %p83
    %p85 = scmp.ne.s32.totalorder %s71, %s72
    %p86 = scmp.eq.s32.totalorder %s15, 1
    %p87 = por %p85, %p86
    %p89 = scmp.ne.s32.totalorder %s72, %s88
    %p90 = scmp.eq.s32.totalorder %s15, 0
    %p91 = por %p89, %p90
    %s92 = ssub.s32 %s17, %s31
    %p93 = scmp.eq.s32.totalorder %s92, 0
    %s95 = sadd.s32 %s94, 1
    %s96 = scalar_select %p93, %s94, %s95
    %p99 = pneg %p93
    %p100 = scmp.eq.s32.totalorder %s9, 1
    %p101 = por %p99, %p100
    %p102 = scmp.ne.s32.totalorder %s94, %s97
    %p103 = scmp.eq.s32.totalorder %s9, 0
    %p104 = por %p102, %p103
    %p105 = scmp.ne.s32.totalorder %s94, %s97
    %p106 = scmp.eq.s32.totalorder %s14, 1
    %p107 = por %p105, %p106
    %p108 = scmp.ne.s32.totalorder %s97, %s98
    %p109 = scmp.eq.s32.totalorder %s14, 0
    %p110 = por %p108, %p109
    %p111 = scmp.ne.s32.totalorder %s97, %s98
    %p112 = scmp.eq.s32.totalorder %s15, 1
    %p113 = por %p111, %p112
    %p115 = scmp.ne.s32.totalorder %s98, %s114
    %p116 = scmp.eq.s32.totalorder %s15, 0
    %p117 = por %p115, %p116
    %s118 = ssub.s32 %s16, %s35
    %s119 = ssub.s32 %s17, %s31
    %s120 = sor.u32 %s118, %s119
    %p121 = scmp.eq.s32.totalorder %s120, 0
    %s123 = sadd.s32 %s122, 1
    %s124 = scalar_select %p121, %s122, %s123
    %p127 = pneg %p121
    %p128 = scmp.eq.s32.totalorder %s9, 1
    %p129 = por %p127, %p128
    %p130 = scmp.ne.s32.totalorder %s122, %s125
    %p131 = scmp.eq.s32.totalorder %s9, 0
    %p132 = por %p130, %p131
    %p133 = scmp.ne.s32.totalorder %s122, %s125
    %p134 = scmp.eq.s32.totalorder %s14, 1
    %p135 = por %p133, %p134
    %p136 = scmp.ne.s32.totalorder %s125, %s126
    %p137 = scmp.eq.s32.totalorder %s14, 0
    %p138 = por %p136, %p137
    %p139 = scmp.ne.s32.totalorder %s125, %s126
    %p140 = scmp.eq.s32.totalorder %s15, 1
    %p141 = por %p139, %p140
    %p143 = scmp.ne.s32.totalorder %s126, %s142
    %p144 = scmp.eq.s32.totalorder %s15, 0
    %p145 = por %p143, %p144
    %p146 = scmp.le.s32.totalorder 1, %s9
    %p147 = scmp.lt.s32.totalorder %s9, 3
    %p148 = pnand %p146, %p147
    %p149 = pneg %p148
    // Predicated region
    $region9: #{unet_forward.39} parent=5 // pred_check
      _
    $region10: #{unet_forward.39} parent=5 // pred_check_branch
      %151 = sbr.rel (%p148) target = $region12
    $region11: #{unet_forward.39} parent=5 // pred_region
      %s152 = ssub.s32 %s9, 1
      // Predicated region
      $region13: #{unet_forward.39} parent=11 // pred_check
        %p153 = pneg %p84
      $region14: #{unet_forward.39} parent=11 // pred_check_branch
        %155 = sbr.rel (%p153) target = $region16
      $region15: #{unet_forward.39} parent=11 // pred_region
        %s156 = smul.u32 6, %s21
        %p157 = scmp.lt.s32.totalorder %s156, 5
        %s158 = scalar_select %p157, %s156, 5
        %p159 = scmp.lt.s32.totalorder %s20, 0
        %s160 = scalar_select %p159, %s20, 0
        %s161 = sadd.s32 %s160, %s158
        %s162 = smul.addr %s161, 4
        %s163 = scalar_lea.vmem %s1, %s162
        %s164 = smul.u32 6, %s21
      $region16: #{unet_forward.39} parent=11 // pred_fallthru
        _
      // Predicated region
      $region17: #{unet_forward.39} parent=11 // pred_check
        %p165 = pneg %p110
      $region18: #{unet_forward.39} parent=11 // pred_check_branch
        %167 = sbr.rel (%p165) target = $region20
      $region19: #{unet_forward.39} parent=11 // pred_region
        %p168 = scmp.lt.s32.totalorder %s20, 0
        %s169 = scalar_select %p168, %s20, 0
        %s170 = scalar_lea.vmem %s2, %s169
      $region20: #{unet_forward.39} parent=11 // pred_fallthru
        _
    $region12: #{unet_forward.39} parent=5 // pred_fallthru
      _
    %p171 = scmp.lt.s32.totalorder %s9, 2
    // Predicated region
    $region21: #{unet_forward.39} parent=5 // pred_check
      %p172 = pneg %p171
    $region22: #{unet_forward.39} parent=5 // pred_check_branch
      %174 = sbr.rel (%p172) target = $region24
    $region23: #{unet_forward.39} parent=5 // pred_region
      // Predicated region
      $region25: #{unet_forward.39} parent=23 // pred_check
        %p175 = pneg %p50
      $region26: #{unet_forward.39} parent=23 // pred_check_branch
        %177 = sbr.rel (%p175) target = $region28
      $region27: #{unet_forward.39} parent=23 // pred_region
        %s178 = smul.u32 32, %s16
        %p179 = scmp.lt.s32.totalorder %s178, 63
        %s180 = scalar_select %p179, %s178, 63
        %p181 = scmp.lt.s32.totalorder %s18, 0
        %s182 = scalar_select %p181, %s18, 0
        %s183 = sadd.s32 %s182, %s180
        %s184 = smul.addr %s183, 4
        %s185 = scalar_lea.vmem %s0, %s184
        %s186 = smul.u32 32, %s16
      $region28: #{unet_forward.39} parent=23 // pred_fallthru
        _
    $region24: #{unet_forward.39} parent=5 // pred_fallthru
      _
    %p187 = scmp.le.s32.totalorder 1, %s9
    %p188 = scmp.lt.s32.totalorder %s9, 3
    %p189 = pnand %p187, %p188
    %p190 = pneg %p189
    // Predicated region
    $region29: #{unet_forward.39} parent=5 // pred_check
      _
    $region30: #{unet_forward.39} parent=5 // pred_check_branch
      %192 = sbr.rel (%p189) target = $region32
    $region31: #{unet_forward.39} parent=5 // pred_region
      %s193 = ssub.s32 %s9, 1
      %s194 = smul.u32 32, %s19
      %p195 = scmp.lt.s32.totalorder %s194, 63
      %s196 = scalar_select %p195, %s194, 63
      %p197 = scmp.lt.s32.totalorder %s21, 0
      %s198 = scalar_select %p197, %s21, 0
      %s199 = sadd.s32 %s198, %s196
      %s200 = smul.addr %s199, 4
      %s201 = scalar_lea.vmem %s0, %s200
      %p202 = pneg %p56
      %p203 = pneg %p53
      %s204 = smul.u32 6, %s21
      %p205 = scmp.lt.s32.totalorder %s204, 5
      %s206 = scalar_select %p205, %s204, 5
      %p207 = scmp.lt.s32.totalorder %s20, 0
      %s208 = scalar_select %p207, %s20, 0
      %s209 = sadd.s32 %s208, %s206
      %s210 = smul.addr %s209, 4
      %s211 = scalar_lea.vmem %s1, %s210
      %p212 = pneg %p84
      %p213 = pneg %p81
      %p214 = scmp.lt.s32.totalorder %s20, 0
      %s215 = scalar_select %p214, %s20, 0
      %s216 = scalar_lea.vmem %s2, %s215
      %p217 = pneg %p110
      %p218 = pneg %p107
      %p219 = pneg %p138
      %p220 = pneg %p135
      %s221 = smul.u32 32, %s19
      %p222 = scmp.lt.s32.totalorder %s221, 63
      %s223 = scalar_select %p222, %s221, 63
      %p224 = scmp.lt.s32.totalorder %s20, 0
      %s225 = scalar_select %p224, %s20, 0
      %s226 = sadd.s32 %s225, %s223
      %s227 = smul.addr %s226, 8
      %s228 = scalar_lea.vmem %s3, %s227
      %s229 = smul.u32 32, %s19
      %p230 = scmp.lt.s32.totalorder %s229, 63
      %s231 = scalar_select %p230, %s229, 63
      %p232 = scmp.lt.s32.totalorder %s21, 0
      %s233 = scalar_select %p232, %s21, 0
      %s234 = sadd.s32 %s233, %s231
      %s235 = smul.addr %s234, 4
      %s236 = scalar_lea.vmem %s0, %s235
      %s237 = smul.u32 32, %s19
      %s238 = smul.u32 6, %s21
      %p239 = scmp.lt.s32.totalorder %s238, 5
      %s240 = scalar_select %p239, %s238, 5
      %p241 = scmp.lt.s32.totalorder %s20, 0
      %s242 = scalar_select %p241, %s20, 0
      %s243 = sadd.s32 %s242, %s240
      %s244 = smul.addr %s243, 4
      %s245 = scalar_lea.vmem %s1, %s244
      %s246 = smul.u32 6, %s21
      %p247 = scmp.lt.s32.totalorder %s20, 0
      %s248 = scalar_select %p247, %s20, 0
      %s249 = scalar_lea.vmem %s2, %s248
      %s250 = smul.u32 32, %s19
      %p251 = scmp.lt.s32.totalorder %s250, 63
      %s252 = scalar_select %p251, %s250, 63
      %p253 = scmp.lt.s32.totalorder %s20, 0
      %s254 = scalar_select %p253, %s20, 0
      %s255 = sadd.s32 %s254, %s252
      %s256 = smul.addr %s255, 8
      %s257 = scalar_lea.vmem %s3, %s256
      %s258 = smul.u32 32, %s19
      %p260 = scmp.eq.s32.totalorder %s21, 0
      // Predicated region
      $region33: #{unet_forward.39} parent=31 // pred_check
        %p261 = pneg %p260
      $region34: #{unet_forward.39} parent=31 // pred_check_branch
        %263 = sbr.rel (%p261) target = $region36
      $region35: #{unet_forward.39} parent=31 // pred_region
        %vm264 = vcmask 64512
        %265 = vst.msk [vmem:[#allocation2] sm:$0xff] %vm264, 0.0
        %266 = vst.msk [vmem:[#allocation2 + $0x8] sm:$0xff] %vm264, 0.0
        %267 = vst.msk [vmem:[#allocation2 + $0x10] sm:$0xff] %vm264, 0.0
        %268 = vst.msk [vmem:[#allocation2 + $0x18] sm:$0xff] %vm264, 0.0
        %269 = vst.msk [vmem:[#allocation2 + $0x20] sm:$0xff] %vm264, 0.0
        %270 = vst.msk [vmem:[#allocation2 + $0x28] sm:$0xff] %vm264, 0.0
        %271 = vst.msk [vmem:[#allocation2 + $0x30] sm:$0xff] %vm264, 0.0
        %272 = vst.msk [vmem:[#allocation2 + $0x38] sm:$0xff] %vm264, 0.0
        %273 = vst.msk [vmem:[#allocation2 + $0x40] sm:$0xff] %vm264, 0.0
        %274 = vst.msk [vmem:[#allocation2 + $0x48] sm:$0xff] %vm264, 0.0
        %275 = vst.msk [vmem:[#allocation2 + $0x50] sm:$0xff] %vm264, 0.0
        %276 = vst.msk [vmem:[#allocation2 + $0x58] sm:$0xff] %vm264, 0.0
        %277 = vst.msk [vmem:[#allocation2 + $0x60] sm:$0xff] %vm264, 0.0
        %278 = vst.msk [vmem:[#allocation2 + $0x68] sm:$0xff] %vm264, 0.0
        %279 = vst.msk [vmem:[#allocation2 + $0x70] sm:$0xff] %vm264, 0.0
        %280 = vst.msk [vmem:[#allocation2 + $0x78] sm:$0xff] %vm264, 0.0
        %281 = vst.msk [vmem:[#allocation2 + $0x80] sm:$0xff] %vm264, 0.0
        %282 = vst.msk [vmem:[#allocation2 + $0x88] sm:$0xff] %vm264, 0.0
        %283 = vst.msk [vmem:[#allocation2 + $0x90] sm:$0xff] %vm264, 0.0
        %284 = vst.msk [vmem:[#allocation2 + $0x98] sm:$0xff] %vm264, 0.0
        %285 = vst.msk [vmem:[#allocation2 + $0xa0] sm:$0xff] %vm264, 0.0
        %286 = vst.msk [vmem:[#allocation2 + $0xa8] sm:$0xff] %vm264, 0.0
        %287 = vst.msk [vmem:[#allocation2 + $0xb0] sm:$0xff] %vm264, 0.0
        %288 = vst.msk [vmem:[#allocation2 + $0xb8] sm:$0xff] %vm264, 0.0
        %289 = vst.msk [vmem:[#allocation2 + $0xc0] sm:$0xff] %vm264, 0.0
        %290 = vst.msk [vmem:[#allocation2 + $0xc8] sm:$0xff] %vm264, 0.0
        %291 = vst.msk [vmem:[#allocation2 + $0xd0] sm:$0xff] %vm264, 0.0
        %292 = vst.msk [vmem:[#allocation2 + $0xd8] sm:$0xff] %vm264, 0.0
        %293 = vst.msk [vmem:[#allocation2 + $0xe0] sm:$0xff] %vm264, 0.0
        %294 = vst.msk [vmem:[#allocation2 + $0xe8] sm:$0xff] %vm264, 0.0
        %295 = vst.msk [vmem:[#allocation2 + $0xf0] sm:$0xff] %vm264, 0.0
        %296 = vst.msk [vmem:[#allocation2 + $0xf8] sm:$0xff] %vm264, 0.0
      $region36: #{unet_forward.39} parent=31 // pred_fallthru
        _
      %v297 = vld [vmem:[%s236] sm:$0xf]
      %v298 = vld [vmem:[%s236 + $0x4] sm:$0xf]
      %v299 = vld [vmem:[%s236 + $0x8] sm:$0xf]
      %v300 = vld [vmem:[%s236 + $0xc] sm:$0xf]
      %v301 = vld [vmem:[%s236 + $0x10] sm:$0xf]
      %v302 = vld [vmem:[%s236 + $0x14] sm:$0xf]
      %v303 = vld [vmem:[%s236 + $0x18] sm:$0xf]
      %v304 = vld [vmem:[%s236 + $0x1c] sm:$0xf]
      %v305 = vld [vmem:[%s236 + $0x20] sm:$0xf]
      %v306 = vld [vmem:[%s236 + $0x24] sm:$0xf]
      %v307 = vld [vmem:[%s236 + $0x28] sm:$0xf]
      %v308 = vld [vmem:[%s236 + $0x2c] sm:$0xf]
      %v309 = vld [vmem:[%s236 + $0x30] sm:$0xf]
      %v310 = vld [vmem:[%s236 + $0x34] sm:$0xf]
      %v311 = vld [vmem:[%s236 + $0x38] sm:$0xf]
      %v312 = vld [vmem:[%s236 + $0x3c] sm:$0xf]
      %v313 = vld [vmem:[%s236 + $0x40] sm:$0xf]
      %v314 = vld [vmem:[%s236 + $0x44] sm:$0xf]
      %v315 = vld [vmem:[%s236 + $0x48] sm:$0xf]
      %v316 = vld [vmem:[%s236 + $0x4c] sm:$0xf]
      %v317 = vld [vmem:[%s236 + $0x50] sm:$0xf]
      %v318 = vld [vmem:[%s236 + $0x54] sm:$0xf]
      %v319 = vld [vmem:[%s236 + $0x58] sm:$0xf]
      %v320 = vld [vmem:[%s236 + $0x5c] sm:$0xf]
      %v321 = vld [vmem:[%s236 + $0x60] sm:$0xf]
      %v322 = vld [vmem:[%s236 + $0x64] sm:$0xf]
      %v323 = vld [vmem:[%s236 + $0x68] sm:$0xf]
      %v324 = vld [vmem:[%s236 + $0x6c] sm:$0xf]
      %v325 = vld [vmem:[%s236 + $0x70] sm:$0xf]
      %v326 = vld [vmem:[%s236 + $0x74] sm:$0xf]
      %v327 = vld [vmem:[%s236 + $0x78] sm:$0xf]
      %v328 = vld [vmem:[%s236 + $0x7c] sm:$0xf]
      %v329 = vld [vmem:[#allocation2] sm:$0xff]
      %v330 = vld [vmem:[#allocation2 + $0x8] sm:$0xff]
      %v331 = vld [vmem:[#allocation2 + $0x10] sm:$0xff]
      %v332 = vld [vmem:[#allocation2 + $0x18] sm:$0xff]
      %v333 = vld [vmem:[#allocation2 + $0x20] sm:$0xff]
      %v334 = vld [vmem:[#allocation2 + $0x28] sm:$0xff]
      %v335 = vld [vmem:[#allocation2 + $0x30] sm:$0xff]
      %v336 = vld [vmem:[#allocation2 + $0x38] sm:$0xff]
      %v337 = vld [vmem:[#allocation2 + $0x40] sm:$0xff]
      %v338 = vld [vmem:[#allocation2 + $0x48] sm:$0xff]
      %v339 = vld [vmem:[#allocation2 + $0x50] sm:$0xff]
      %v340 = vld [vmem:[#allocation2 + $0x58] sm:$0xff]
      %v341 = vld [vmem:[#allocation2 + $0x60] sm:$0xff]
      %v342 = vld [vmem:[#allocation2 + $0x68] sm:$0xff]
      %v343 = vld [vmem:[#allocation2 + $0x70] sm:$0xff]
      %v344 = vld [vmem:[#allocation2 + $0x78] sm:$0xff]
      %v345 = vld [vmem:[#allocation2 + $0x80] sm:$0xff]
      %v346 = vld [vmem:[#allocation2 + $0x88] sm:$0xff]
      %v347 = vld [vmem:[#allocation2 + $0x90] sm:$0xff]
      %v348 = vld [vmem:[#allocation2 + $0x98] sm:$0xff]
      %v349 = vld [vmem:[#allocation2 + $0xa0] sm:$0xff]
      %v350 = vld [vmem:[#allocation2 + $0xa8] sm:$0xff]
      %v351 = vld [vmem:[#allocation2 + $0xb0] sm:$0xff]
      %v352 = vld [vmem:[#allocation2 + $0xb8] sm:$0xff]
      %v353 = vld [vmem:[#allocation2 + $0xc0] sm:$0xff]
      %v354 = vld [vmem:[#allocation2 + $0xc8] sm:$0xff]
      %v355 = vld [vmem:[#allocation2 + $0xd0] sm:$0xff]
      %v356 = vld [vmem:[#allocation2 + $0xd8] sm:$0xff]
      %v357 = vld [vmem:[#allocation2 + $0xe0] sm:$0xff]
      %v358 = vld [vmem:[#allocation2 + $0xe8] sm:$0xff]
      %v359 = vld [vmem:[#allocation2 + $0xf0] sm:$0xff]
      %v360 = vld [vmem:[#allocation2 + $0xf8] sm:$0xff]
      %v361 = vld [vmem:[%s245] sm:$0xf]
      %v362 = vld [vmem:[%s245 + $0x4] sm:$0xf]
      %v363 = vld [vmem:[%s245 + $0x8] sm:$0xf]
      %v364 = vld [vmem:[%s245 + $0xc] sm:$0xf]
      %v365 = vld [vmem:[%s245 + $0x10] sm:$0xf]
      %v366 = vld [vmem:[%s245 + $0x14] sm:$0xf]
      %v399 = vunpack.c.l.b16 %v297
      %v400 = vunpack.c.l.b16 %v298
      %v401 = vunpack.c.l.b16 %v299
      %v402 = vunpack.c.l.b16 %v300
      %v403 = vunpack.c.l.b16 %v301
      %v404 = vunpack.c.l.b16 %v302
      %v405 = vunpack.c.l.b16 %v303
      %v406 = vunpack.c.l.b16 %v304
      %v407 = vunpack.c.l.b16 %v305
      %v408 = vunpack.c.l.b16 %v306
      %v409 = vunpack.c.l.b16 %v307
      %v410 = vunpack.c.l.b16 %v308
      %v411 = vunpack.c.l.b16 %v309
      %v412 = vunpack.c.l.b16 %v310
      %v413 = vunpack.c.l.b16 %v311
      %v414 = vunpack.c.l.b16 %v312
      %v415 = vunpack.c.l.b16 %v313
      %v416 = vunpack.c.l.b16 %v314
      %v417 = vunpack.c.l.b16 %v315
      %v418 = vunpack.c.l.b16 %v316
      %v419 = vunpack.c.l.b16 %v317
      %v420 = vunpack.c.l.b16 %v318
      %v421 = vunpack.c.l.b16 %v319
      %v422 = vunpack.c.l.b16 %v320
      %v423 = vunpack.c.l.b16 %v321
      %v424 = vunpack.c.l.b16 %v322
      %v425 = vunpack.c.l.b16 %v323
      %v426 = vunpack.c.l.b16 %v324
      %v427 = vunpack.c.l.b16 %v325
      %v428 = vunpack.c.l.b16 %v326
      %v429 = vunpack.c.l.b16 %v327
      %v430 = vunpack.c.l.b16 %v328
      %v431 = vpack.c.b16 %v400, %v399
      %v432 = vpack.c.b16 %v402, %v401
      %v433 = vpack.c.b16 %v404, %v403
      %v434 = vpack.c.b16 %v406, %v405
      %v435 = vpack.c.b16 %v408, %v407
      %v436 = vpack.c.b16 %v410, %v409
      %v437 = vpack.c.b16 %v412, %v411
      %v438 = vpack.c.b16 %v414, %v413
      %v439 = vpack.c.b16 %v416, %v415
      %v440 = vpack.c.b16 %v418, %v417
      %v441 = vpack.c.b16 %v420, %v419
      %v442 = vpack.c.b16 %v422, %v421
      %v443 = vpack.c.b16 %v424, %v423
      %v444 = vpack.c.b16 %v426, %v425
      %v445 = vpack.c.b16 %v428, %v427
      %v446 = vpack.c.b16 %v430, %v429
      %v453 = vunpack.c.l.b16 %v361
      %v454 = vunpack.c.l.b16 %v362
      %v455 = vunpack.c.l.b16 %v363
      %v456 = vunpack.c.l.b16 %v364
      %v457 = vunpack.c.l.b16 %v365
      %v458 = vunpack.c.l.b16 %v366
      %v459 = vpack.c.b16 %v454, %v453
      %v460 = vpack.c.b16 %v456, %v455
      %v461 = vpack.c.b16 %v458, %v457
      %vm465 = vcmask 392192
      %v467 = vsel %vm465, %v431, 0
      %v470 = vsel %vm465, %v432, 0
      %v473 = vsel %vm465, %v433, 0
      %v476 = vsel %vm465, %v434, 0
      %v479 = vsel %vm465, %v435, 0
      %v482 = vsel %vm465, %v436, 0
      %v485 = vsel %vm465, %v437, 0
      %v488 = vsel %vm465, %v438, 0
      %v491 = vsel %vm465, %v439, 0
      %v494 = vsel %vm465, %v440, 0
      %v497 = vsel %vm465, %v441, 0
      %v500 = vsel %vm465, %v442, 0
      %v503 = vsel %vm465, %v443, 0
      %v506 = vsel %vm465, %v444, 0
      %v509 = vsel %vm465, %v445, 0
      %v512 = vsel %vm465, %v446, 0
      %514 = vmatprep.subr.bf16.mxu0 0
      %515 = vmatpush1.bf16.msra.mxu0 0
      %516 = vmatprep.subr.bf16.mxu0 0
      %517 = vmatpush1.bf16.msra.mxu0 0
      %518 = vmatprep.subr.bf16.mxu0 0
      %519 = vmatpush1.bf16.msra.mxu0 0
      %520 = vmatprep.subr.bf16.mxu0 0
      %521 = vmatpush1.bf16.msra.mxu0 0
      %522 = vmatprep.subr.bf16.mxu0 0
      %523 = vmatpush1.bf16.msra.mxu0 0
      %524 = vmatprep.subr.bf16.mxu0 0
      %525 = vmatpush1.bf16.msra.mxu0 %v461
      %526 = vmatprep.subr.bf16.mxu0 0
      %527 = vmatpush1.bf16.msra.mxu0 %v460
      %528 = vmatprep.subr.bf16.mxu0 0
      %529 = vmatpush1.bf16.msra.mxu0 %v459
      %530 = vmatprep.subr.bf16.mxu0 0
      %531 = vmatpush2.bf16.msra.mxu0 0
      %532 = vmatprep.subr.bf16.mxu0 0
      %533 = vmatpush2.bf16.msra.mxu0 0
      %534 = vmatprep.subr.bf16.mxu0 0
      %535 = vmatpush2.bf16.msra.mxu0 0
      %536 = vmatprep.subr.bf16.mxu0 0
      %537 = vmatpush2.bf16.msra.mxu0 0
      %538 = vmatprep.subr.bf16.mxu0 0
      %539 = vmatpush2.bf16.msra.mxu0 0
      %540 = vmatprep.subr.bf16.mxu0 0
      %541 = vmatpush2.bf16.msra.mxu0 0
      %542 = vmatprep.subr.bf16.mxu0 0
      %543 = vmatpush2.bf16.msra.mxu0 0
      %544 = vmatprep.subr.bf16.mxu0 0
      %545 = vmatpush2.bf16.msra.mxu0 0
      %546 = vmatprep.mubr.bf16.mxu0 0
      %547 = vmatmul.mubr.bf16.gmra.mxu0 %v467
      %v548 = vpop.f32.mrf.mxu0
      %v549 = vadd.f32 0.0, %v548
      %v550 = vpop.f32.mrf.mxu0
      %v551 = vpop.f32.mrf.mxu0
      %v552 = vadd.f32 0.0, %v551
      %v553 = vpop.f32.mrf.mxu0
      %554 = vmatprep.mubr.bf16.mxu0 0
      %555 = vmatmul.mubr.bf16.gmra.mxu0 %v470
      %v556 = vpop.f32.mrf.mxu0
      %v557 = vadd.f32 0.0, %v556
      %v558 = vpop.f32.mrf.mxu0
      %v559 = vpop.f32.mrf.mxu0
      %v560 = vadd.f32 0.0, %v559
      %v561 = vpop.f32.mrf.mxu0
      %562 = vmatprep.mubr.bf16.mxu0 0
      %563 = vmatmul.mubr.bf16.gmra.mxu0 %v473
      %v564 = vpop.f32.mrf.mxu0
      %v565 = vadd.f32 0.0, %v564
      %v566 = vpop.f32.mrf.mxu0
      %v567 = vpop.f32.mrf.mxu0
      %v568 = vadd.f32 0.0, %v567
      %v569 = vpop.f32.mrf.mxu0
      %570 = vmatprep.mubr.bf16.mxu0 0
      %571 = vmatmul.mubr.bf16.gmra.mxu0 %v476
      %v572 = vpop.f32.mrf.mxu0
      %v573 = vadd.f32 0.0, %v572
      %v574 = vpop.f32.mrf.mxu0
      %v575 = vpop.f32.mrf.mxu0
      %v576 = vadd.f32 0.0, %v575
      %v577 = vpop.f32.mrf.mxu0
      %578 = vmatprep.mubr.bf16.mxu0 0
      %579 = vmatmul.mubr.bf16.gmra.mxu0 %v479
      %v580 = vpop.f32.mrf.mxu0
      %v581 = vadd.f32 0.0, %v580
      %v582 = vpop.f32.mrf.mxu0
      %v583 = vpop.f32.mrf.mxu0
      %v584 = vadd.f32 0.0, %v583
      %v585 = vpop.f32.mrf.mxu0
      %586 = vmatprep.mubr.bf16.mxu0 0
      %587 = vmatmul.mubr.bf16.gmra.mxu0 %v482
      %v588 = vpop.f32.mrf.mxu0
      %v589 = vadd.f32 0.0, %v588
      %v590 = vpop.f32.mrf.mxu0
      %v591 = vpop.f32.mrf.mxu0
      %v592 = vadd.f32 0.0, %v591
      %v593 = vpop.f32.mrf.mxu0
      %594 = vmatprep.mubr.bf16.mxu0 0
      %595 = vmatmul.mubr.bf16.gmra.mxu0 %v485
      %v596 = vpop.f32.mrf.mxu0
      %v597 = vadd.f32 0.0, %v596
      %v598 = vpop.f32.mrf.mxu0
      %v599 = vpop.f32.mrf.mxu0
      %v600 = vadd.f32 0.0, %v599
      %v601 = vpop.f32.mrf.mxu0
      %602 = vmatprep.mubr.bf16.mxu0 0
      %603 = vmatmul.mubr.bf16.gmra.mxu0 %v488
      %v604 = vpop.f32.mrf.mxu0
      %v605 = vadd.f32 0.0, %v604
      %v606 = vpop.f32.mrf.mxu0
      %v607 = vpop.f32.mrf.mxu0
      %v608 = vadd.f32 0.0, %v607
      %v609 = vpop.f32.mrf.mxu0
      %610 = vmatprep.mubr.bf16.mxu0 0
      %611 = vmatmul.mubr.bf16.gmra.mxu0 %v491
      %v612 = vpop.f32.mrf.mxu0
      %v613 = vadd.f32 0.0, %v612
      %v614 = vpop.f32.mrf.mxu0
      %v615 = vpop.f32.mrf.mxu0
      %v616 = vadd.f32 0.0, %v615
      %v617 = vpop.f32.mrf.mxu0
      %618 = vmatprep.mubr.bf16.mxu0 0
      %619 = vmatmul.mubr.bf16.gmra.mxu0 %v494
      %v620 = vpop.f32.mrf.mxu0
      %v621 = vadd.f32 0.0, %v620
      %v622 = vpop.f32.mrf.mxu0
      %v623 = vpop.f32.mrf.mxu0
      %v624 = vadd.f32 0.0, %v623
      %v625 = vpop.f32.mrf.mxu0
      %626 = vmatprep.mubr.bf16.mxu0 0
      %627 = vmatmul.mubr.bf16.gmra.mxu0 %v497
      %v628 = vpop.f32.mrf.mxu0
      %v629 = vadd.f32 0.0, %v628
      %v630 = vpop.f32.mrf.mxu0
      %v631 = vpop.f32.mrf.mxu0
      %v632 = vadd.f32 0.0, %v631
      %v633 = vpop.f32.mrf.mxu0
      %634 = vmatprep.mubr.bf16.mxu0 0
      %635 = vmatmul.mubr.bf16.gmra.mxu0 %v500
      %v636 = vpop.f32.mrf.mxu0
      %v637 = vadd.f32 0.0, %v636
      %v638 = vpop.f32.mrf.mxu0
      %v639 = vpop.f32.mrf.mxu0
      %v640 = vadd.f32 0.0, %v639
      %v641 = vpop.f32.mrf.mxu0
      %642 = vmatprep.mubr.bf16.mxu0 0
      %643 = vmatmul.mubr.bf16.gmra.mxu0 %v503
      %v644 = vpop.f32.mrf.mxu0
      %v645 = vadd.f32 0.0, %v644
      %v646 = vpop.f32.mrf.mxu0
      %v647 = vpop.f32.mrf.mxu0
      %v648 = vadd.f32 0.0, %v647
      %v649 = vpop.f32.mrf.mxu0
      %650 = vmatprep.mubr.bf16.mxu0 0
      %651 = vmatmul.mubr.bf16.gmra.mxu0 %v506
      %v652 = vpop.f32.mrf.mxu0
      %v653 = vadd.f32 0.0, %v652
      %v654 = vpop.f32.mrf.mxu0
      %v655 = vpop.f32.mrf.mxu0
      %v656 = vadd.f32 0.0, %v655
      %v657 = vpop.f32.mrf.mxu0
      %658 = vmatprep.mubr.bf16.mxu0 0
      %659 = vmatmul.mubr.bf16.gmra.mxu0 %v509
      %v660 = vpop.f32.mrf.mxu0
      %v661 = vadd.f32 0.0, %v660
      %v662 = vpop.f32.mrf.mxu0
      %v663 = vpop.f32.mrf.mxu0
      %v664 = vadd.f32 0.0, %v663
      %v665 = vpop.f32.mrf.mxu0
      %666 = vmatprep.mubr.bf16.mxu0 0
      %667 = vmatmul.mubr.bf16.gmra.mxu0 %v512
      %v668 = vpop.f32.mrf.mxu0
      %v669 = vadd.f32 0.0, %v668
      %v670 = vpop.f32.mrf.mxu0
      %v671 = vpop.f32.mrf.mxu0
      %v672 = vadd.f32 0.0, %v671
      %v673 = vpop.f32.mrf.mxu0
      %674 = vdwg.mxu0
      %v675 = vadd.f32 %v329, %v549
      %v676 = vadd.f32 %v330, %v552
      %v677 = vadd.f32 %v331, %v557
      %v678 = vadd.f32 %v332, %v560
      %v679 = vadd.f32 %v333, %v565
      %v680 = vadd.f32 %v334, %v568
      %v681 = vadd.f32 %v335, %v573
      %v682 = vadd.f32 %v336, %v576
      %v683 = vadd.f32 %v337, %v581
      %v684 = vadd.f32 %v338, %v584
      %v685 = vadd.f32 %v339, %v589
      %v686 = vadd.f32 %v340, %v592
      %v687 = vadd.f32 %v341, %v597
      %v688 = vadd.f32 %v342, %v600
      %v689 = vadd.f32 %v343, %v605
      %v690 = vadd.f32 %v344, %v608
      %v691 = vadd.f32 %v345, %v613
      %v692 = vadd.f32 %v346, %v616
      %v693 = vadd.f32 %v347, %v621
      %v694 = vadd.f32 %v348, %v624
      %v695 = vadd.f32 %v349, %v629
      %v696 = vadd.f32 %v350, %v632
      %v697 = vadd.f32 %v351, %v637
      %v698 = vadd.f32 %v352, %v640
      %v699 = vadd.f32 %v353, %v645
      %v700 = vadd.f32 %v354, %v648
      %v701 = vadd.f32 %v355, %v653
      %v702 = vadd.f32 %v356, %v656
      %v703 = vadd.f32 %v357, %v661
      %v704 = vadd.f32 %v358, %v664
      %v705 = vadd.f32 %v359, %v669
      %v706 = vadd.f32 %v360, %v672
      %vm707 = vcmask 64512
      %708 = vst.msk [vmem:[#allocation2] sm:$0xff] %vm707, %v675
      %709 = vst.msk [vmem:[#allocation2 + $0x8] sm:$0xff] %vm707, %v676
      %710 = vst.msk [vmem:[#allocation2 + $0x10] sm:$0xff] %vm707, %v677
      %711 = vst.msk [vmem:[#allocation2 + $0x18] sm:$0xff] %vm707, %v678
      %712 = vst.msk [vmem:[#allocation2 + $0x20] sm:$0xff] %vm707, %v679
      %713 = vst.msk [vmem:[#allocation2 + $0x28] sm:$0xff] %vm707, %v680
      %714 = vst.msk [vmem:[#allocation2 + $0x30] sm:$0xff] %vm707, %v681
      %715 = vst.msk [vmem:[#allocation2 + $0x38] sm:$0xff] %vm707, %v682
      %716 = vst.msk [vmem:[#allocation2 + $0x40] sm:$0xff] %vm707, %v683
      %717 = vst.msk [vmem:[#allocation2 + $0x48] sm:$0xff] %vm707, %v684
      %718 = vst.msk [vmem:[#allocation2 + $0x50] sm:$0xff] %vm707, %v685
      %719 = vst.msk [vmem:[#allocation2 + $0x58] sm:$0xff] %vm707, %v686
      %720 = vst.msk [vmem:[#allocation2 + $0x60] sm:$0xff] %vm707, %v687
      %721 = vst.msk [vmem:[#allocation2 + $0x68] sm:$0xff] %vm707, %v688
      %722 = vst.msk [vmem:[#allocation2 + $0x70] sm:$0xff] %vm707, %v689
      %723 = vst.msk [vmem:[#allocation2 + $0x78] sm:$0xff] %vm707, %v690
      %724 = vst.msk [vmem:[#allocation2 + $0x80] sm:$0xff] %vm707, %v691
      %725 = vst.msk [vmem:[#allocation2 + $0x88] sm:$0xff] %vm707, %v692
      %726 = vst.msk [vmem:[#allocation2 + $0x90] sm:$0xff] %vm707, %v693
      %727 = vst.msk [vmem:[#allocation2 + $0x98] sm:$0xff] %vm707, %v694
      %728 = vst.msk [vmem:[#allocation2 + $0xa0] sm:$0xff] %vm707, %v695
      %729 = vst.msk [vmem:[#allocation2 + $0xa8] sm:$0xff] %vm707, %v696
      %730 = vst.msk [vmem:[#allocation2 + $0xb0] sm:$0xff] %vm707, %v697
      %731 = vst.msk [vmem:[#allocation2 + $0xb8] sm:$0xff] %vm707, %v698
      %732 = vst.msk [vmem:[#allocation2 + $0xc0] sm:$0xff] %vm707, %v699
      %733 = vst.msk [vmem:[#allocation2 + $0xc8] sm:$0xff] %vm707, %v700
      %734 = vst.msk [vmem:[#allocation2 + $0xd0] sm:$0xff] %vm707, %v701
      %735 = vst.msk [vmem:[#allocation2 + $0xd8] sm:$0xff] %vm707, %v702
      %736 = vst.msk [vmem:[#allocation2 + $0xe0] sm:$0xff] %vm707, %v703
      %737 = vst.msk [vmem:[#allocation2 + $0xe8] sm:$0xff] %vm707, %v704
      %738 = vst.msk [vmem:[#allocation2 + $0xf0] sm:$0xff] %vm707, %v705
      %739 = vst.msk [vmem:[#allocation2 + $0xf8] sm:$0xff] %vm707, %v706
      // Predicated region
      $region37: #{unet_forward.39} parent=31 // pred_check
        %p740 = pneg %p260
      $region38: #{unet_forward.39} parent=31 // pred_check_branch
        %742 = sbr.rel (%p740) target = $region40
      $region39: #{unet_forward.39} parent=31 // pred_region
        %v743 = vld [vmem:[#allocation2] sm:$0xff]
        %v744 = vld [vmem:[#allocation2 + $0x8] sm:$0xff]
        %v745 = vld [vmem:[#allocation2 + $0x10] sm:$0xff]
        %v746 = vld [vmem:[#allocation2 + $0x18] sm:$0xff]
        %v747 = vld [vmem:[#allocation2 + $0x20] sm:$0xff]
        %v748 = vld [vmem:[#allocation2 + $0x28] sm:$0xff]
        %v749 = vld [vmem:[#allocation2 + $0x30] sm:$0xff]
        %v750 = vld [vmem:[#allocation2 + $0x38] sm:$0xff]
        %v751 = vld [vmem:[#allocation2 + $0x40] sm:$0xff]
        %v752 = vld [vmem:[#allocation2 + $0x48] sm:$0xff]
        %v753 = vld [vmem:[#allocation2 + $0x50] sm:$0xff]
        %v754 = vld [vmem:[#allocation2 + $0x58] sm:$0xff]
        %v755 = vld [vmem:[#allocation2 + $0x60] sm:$0xff]
        %v756 = vld [vmem:[#allocation2 + $0x68] sm:$0xff]
        %v757 = vld [vmem:[#allocation2 + $0x70] sm:$0xff]
        %v758 = vld [vmem:[#allocation2 + $0x78] sm:$0xff]
        %v759 = vld [vmem:[#allocation2 + $0x80] sm:$0xff]
        %v760 = vld [vmem:[#allocation2 + $0x88] sm:$0xff]
        %v761 = vld [vmem:[#allocation2 + $0x90] sm:$0xff]
        %v762 = vld [vmem:[#allocation2 + $0x98] sm:$0xff]
        %v763 = vld [vmem:[#allocation2 + $0xa0] sm:$0xff]
        %v764 = vld [vmem:[#allocation2 + $0xa8] sm:$0xff]
        %v765 = vld [vmem:[#allocation2 + $0xb0] sm:$0xff]
        %v766 = vld [vmem:[#allocation2 + $0xb8] sm:$0xff]
        %v767 = vld [vmem:[#allocation2 + $0xc0] sm:$0xff]
        %v768 = vld [vmem:[#allocation2 + $0xc8] sm:$0xff]
        %v769 = vld [vmem:[#allocation2 + $0xd0] sm:$0xff]
        %v770 = vld [vmem:[#allocation2 + $0xd8] sm:$0xff]
        %v771 = vld [vmem:[#allocation2 + $0xe0] sm:$0xff]
        %v772 = vld [vmem:[#allocation2 + $0xe8] sm:$0xff]
        %v773 = vld [vmem:[#allocation2 + $0xf0] sm:$0xff]
        %v774 = vld [vmem:[#allocation2 + $0xf8] sm:$0xff]
        %v775 = vld [vmem:[%s249] sm:$0x1]
        %v777 = vlaneseq
        %v778 = vshrl.u32 %v777, 7
        %v779 = vsub.s32 0, %v778
        %v780 = vrot.slane %v775, %v779
        %v782 = vadd.f32 %v743, %v780
        %v783 = vadd.f32 %v744, %v780
        %v784 = vadd.f32 %v745, %v780
        %v785 = vadd.f32 %v746, %v780
        %v786 = vadd.f32 %v747, %v780
        %v787 = vadd.f32 %v748, %v780
        %v788 = vadd.f32 %v749, %v780
        %v789 = vadd.f32 %v750, %v780
        %v790 = vadd.f32 %v751, %v780
        %v791 = vadd.f32 %v752, %v780
        %v792 = vadd.f32 %v753, %v780
        %v793 = vadd.f32 %v754, %v780
        %v794 = vadd.f32 %v755, %v780
        %v795 = vadd.f32 %v756, %v780
        %v796 = vadd.f32 %v757, %v780
        %v797 = vadd.f32 %v758, %v780
        %v798 = vadd.f32 %v759, %v780
        %v799 = vadd.f32 %v760, %v780
        %v800 = vadd.f32 %v761, %v780
        %v801 = vadd.f32 %v762, %v780
        %v802 = vadd.f32 %v763, %v780
        %v803 = vadd.f32 %v764, %v780
        %v804 = vadd.f32 %v765, %v780
        %v805 = vadd.f32 %v766, %v780
        %v806 = vadd.f32 %v767, %v780
        %v807 = vadd.f32 %v768, %v780
        %v808 = vadd.f32 %v769, %v780
        %v809 = vadd.f32 %v770, %v780
        %v810 = vadd.f32 %v771, %v780
        %v811 = vadd.f32 %v772, %v780
        %v812 = vadd.f32 %v773, %v780
        %v813 = vadd.f32 %v774, %v780
        %814 = vst.msk [vmem:[%s257] sm:$0xff] %vm707, %v782
        %815 = vst.msk [vmem:[%s257 + $0x8] sm:$0xff] %vm707, %v783
        %816 = vst.msk [vmem:[%s257 + $0x10] sm:$0xff] %vm707, %v784
        %817 = vst.msk [vmem:[%s257 + $0x18] sm:$0xff] %vm707, %v785
        %818 = vst.msk [vmem:[%s257 + $0x20] sm:$0xff] %vm707, %v786
        %819 = vst.msk [vmem:[%s257 + $0x28] sm:$0xff] %vm707, %v787
        %820 = vst.msk [vmem:[%s257 + $0x30] sm:$0xff] %vm707, %v788
        %821 = vst.msk [vmem:[%s257 + $0x38] sm:$0xff] %vm707, %v789
        %822 = vst.msk [vmem:[%s257 + $0x40] sm:$0xff] %vm707, %v790
        %823 = vst.msk [vmem:[%s257 + $0x48] sm:$0xff] %vm707, %v791
        %824 = vst.msk [vmem:[%s257 + $0x50] sm:$0xff] %vm707, %v792
        %825 = vst.msk [vmem:[%s257 + $0x58] sm:$0xff] %vm707, %v793
        %826 = vst.msk [vmem:[%s257 + $0x60] sm:$0xff] %vm707, %v794
        %827 = vst.msk [vmem:[%s257 + $0x68] sm:$0xff] %vm707, %v795
        %828 = vst.msk [vmem:[%s257 + $0x70] sm:$0xff] %vm707, %v796
        %829 = vst.msk [vmem:[%s257 + $0x78] sm:$0xff] %vm707, %v797
        %830 = vst.msk [vmem:[%s257 + $0x80] sm:$0xff] %vm707, %v798
        %831 = vst.msk [vmem:[%s257 + $0x88] sm:$0xff] %vm707, %v799
        %832 = vst.msk [vmem:[%s257 + $0x90] sm:$0xff] %vm707, %v800
        %833 = vst.msk [vmem:[%s257 + $0x98] sm:$0xff] %vm707, %v801
        %834 = vst.msk [vmem:[%s257 + $0xa0] sm:$0xff] %vm707, %v802
        %835 = vst.msk [vmem:[%s257 + $0xa8] sm:$0xff] %vm707, %v803
        %836 = vst.msk [vmem:[%s257 + $0xb0] sm:$0xff] %vm707, %v804
        %837 = vst.msk [vmem:[%s257 + $0xb8] sm:$0xff] %vm707, %v805
        %838 = vst.msk [vmem:[%s257 + $0xc0] sm:$0xff] %vm707, %v806
        %839 = vst.msk [vmem:[%s257 + $0xc8] sm:$0xff] %vm707, %v807
        %840 = vst.msk [vmem:[%s257 + $0xd0] sm:$0xff] %vm707, %v808
        %841 = vst.msk [vmem:[%s257 + $0xd8] sm:$0xff] %vm707, %v809
        %842 = vst.msk [vmem:[%s257 + $0xe0] sm:$0xff] %vm707, %v810
        %843 = vst.msk [vmem:[%s257 + $0xe8] sm:$0xff] %vm707, %v811
        %844 = vst.msk [vmem:[%s257 + $0xf0] sm:$0xff] %vm707, %v812
        %845 = vst.msk [vmem:[%s257 + $0xf8] sm:$0xff] %vm707, %v813
      $region40: #{unet_forward.39} parent=31 // pred_fallthru
        _
      %s846 = smul.u32 32, %s19
      %p847 = scmp.lt.s32.totalorder %s846, 63
      %s848 = scalar_select %p847, %s846, 63
      %p849 = scmp.lt.s32.totalorder %s20, 0
      %s850 = scalar_select %p849, %s20, 0
      %s851 = sadd.s32 %s850, %s848
      %s852 = smul.addr %s851, 8
      %s853 = scalar_lea.vmem %s3, %s852
      // Predicated region
      $region41: #{unet_forward.39} parent=31 // pred_check
        %p854 = pneg %p135
      $region42: #{unet_forward.39} parent=31 // pred_check_branch
        %856 = sbr.rel (%p854) target = $region44
      $region43: #{unet_forward.39} parent=31 // pred_region
        %s857 = smul.u32 32, %s19
      $region44: #{unet_forward.39} parent=31 // pred_fallthru
        _
    $region32: #{unet_forward.39} parent=5 // pred_fallthru
      _
    %p858 = scmp.le.s32.totalorder 2, %s9
    // Predicated region
    $region45: #{unet_forward.39} parent=5 // pred_check
      %p859 = pneg %p858
    $region46: #{unet_forward.39} parent=5 // pred_check_branch
      %861 = sbr.rel (%p859) target = $region48
    $region47: #{unet_forward.39} parent=5 // pred_region
      %s862 = ssub.s32 %s9, 2
      // Predicated region
      $region49: #{unet_forward.39} parent=47 // pred_check
        %p863 = pneg %p141
      $region50: #{unet_forward.39} parent=47 // pred_check_branch
        %865 = sbr.rel (%p863) target = $region52
      $region51: #{unet_forward.39} parent=47 // pred_region
        %s866 = smul.u32 32, %s22
        %p867 = scmp.lt.s32.totalorder %s866, 63
        %s868 = scalar_select %p867, %s866, 63
        %p869 = scmp.lt.s32.totalorder %s23, 0
        %s870 = scalar_select %p869, %s23, 0
        %s871 = sadd.s32 %s870, %s868
        %s872 = smul.addr %s871, 8
        %s873 = scalar_lea.vmem %s3, %s872
      $region52: #{unet_forward.39} parent=47 // pred_fallthru
        _
    $region48: #{unet_forward.39} parent=5 // pred_fallthru
      _
  $region6: #{unet_forward.39} parent=0 // loop_footer
    %s13 = sadd.s32 1, %s9
  $region7: #{unet_forward.39} parent=0 // loop_footer_branch
    %8 = sbr.rel target = $region3
  $region8: #{unet_forward.39} parent=0 // loop_exit
    _

// kernel: unet_forward.41
$region0: #{unet_forward.41}
  #allocation0 [shape = 'u32[]', space=smem, size = 0x4, offset = 0x4, fixed_abs, tag = 'smem constant byte address 0x4 - core index']
  #allocation1 [shape = 'u32[144,128]{1,0:T(1,128)}', space=vmem, size = 0x12000, scoped, tag = 'internal scratch']
  %s0 = inlined_call_operand.vmem [shape: f32[128,16], index: 0, kind: input, shape index: {}]
  %s1 = inlined_call_operand.vmem [shape: f32[1,16], index: 1, kind: output, shape index: {0}]
  %s2 = inlined_call_operand.vmem [shape: f32[1,16], index: 2, kind: output, shape index: {1}]
  %3 = xla_tuple %s1, %s2
  %s4 = sld [smem:[#allocation0]]
  $region26: #{unet_forward.41} parent=0
    _
  %s6 = ssub.s32 1, %s4
  %s7 = scalar_select 0, %s6, %s4
  // Predicated region
  $region2: #{unet_forward.41} parent=0 // pred_check
    _
  $region3: #{unet_forward.41} parent=0 // pred_check_branch
    %9 = sbr.rel (0) target = $region5
  $region4: #{unet_forward.41} parent=0 // pred_region
    _
  $region5: #{unet_forward.41} parent=0 // pred_fallthru
    _
  %p10 = scmp.eq.s32.totalorder 0, 0
  // Predicated region
  $region6: #{unet_forward.41} parent=0 // pred_check
    %p11 = pneg %p10
  $region7: #{unet_forward.41} parent=0 // pred_check_branch
    %13 = sbr.rel (%p11) target = $region9
  $region8: #{unet_forward.41} parent=0 // pred_region
    %vm14 = vcmask 122880
    %15 = vst.msk [vmem:[%s1] sm:$0x1] %vm14, 0.0
    %16 = vst.msk [vmem:[%s2] sm:$0x1] %vm14, 0.0
  $region9: #{unet_forward.41} parent=0 // pred_fallthru
    _
  %v17 = vld [vmem:[%s0] sm:$0xff]
  %v18 = vld [vmem:[%s0 + $0x8] sm:$0xff]
  %v19 = vld [vmem:[%s0 + $0x10] sm:$0xff]
  %v20 = vld [vmem:[%s0 + $0x18] sm:$0xff]
  %v21 = vld [vmem:[%s0 + $0x20] sm:$0xff]
  %v22 = vld [vmem:[%s0 + $0x28] sm:$0xff]
  %v23 = vld [vmem:[%s0 + $0x30] sm:$0xff]
  %v24 = vld [vmem:[%s0 + $0x38] sm:$0xff]
  %v25 = vld [vmem:[%s0 + $0x40] sm:$0xff]
  %v26 = vld [vmem:[%s0 + $0x48] sm:$0xff]
  %v27 = vld [vmem:[%s0 + $0x50] sm:$0xff]
  %v28 = vld [vmem:[%s0 + $0x58] sm:$0xff]
  %v29 = vld [vmem:[%s0 + $0x60] sm:$0xff]
  %v30 = vld [vmem:[%s0 + $0x68] sm:$0xff]
  %v31 = vld [vmem:[%s0 + $0x70] sm:$0xff]
  %v32 = vld [vmem:[%s0 + $0x78] sm:$0xff]
  %v33 = vld [vmem:[%s1] sm:$0x1]
  %vm34 = vcmask 130048
  %v35 = vsel %vm34, %v17, 0.0
  %v36 = vsel %vm34, %v18, 0.0
  %v37 = vadd.f32 %v35, %v36
  %v38 = vsel %vm34, %v19, 0.0
  %v39 = vadd.f32 %v37, %v38
  %v40 = vsel %vm34, %v20, 0.0
  %v41 = vadd.f32 %v39, %v40
  %v42 = vsel %vm34, %v21, 0.0
  %v43 = vadd.f32 %v41, %v42
  %v44 = vsel %vm34, %v22, 0.0
  %v45 = vadd.f32 %v43, %v44
  %v46 = vsel %vm34, %v23, 0.0
  %v47 = vadd.f32 %v45, %v46
  %v48 = vsel %vm34, %v24, 0.0
  %v49 = vadd.f32 %v47, %v48
  %v50 = vsel %vm34, %v25, 0.0
  %v51 = vadd.f32 %v49, %v50
  %v52 = vsel %vm34, %v26, 0.0
  %v53 = vadd.f32 %v51, %v52
  %v54 = vsel %vm34, %v27, 0.0
  %v55 = vadd.f32 %v53, %v54
  %v56 = vsel %vm34, %v28, 0.0
  %v57 = vadd.f32 %v55, %v56
  %v58 = vsel %vm34, %v29, 0.0
  %v59 = vadd.f32 %v57, %v58
  %v60 = vsel %vm34, %v30, 0.0
  %v61 = vadd.f32 %v59, %v60
  %v62 = vsel %vm34, %v31, 0.0
  %v63 = vadd.f32 %v61, %v62
  %v64 = vsel %vm34, %v32, 0.0
  %v65 = vadd.f32 %v63, %v64
  %v66 = vrot.slane %v65, 4
  %v67 = vadd.f32 %v65, %v66
  %v68 = vrot.slane %v67, 2
  %v69 = vadd.f32 %v67, %v68
  %v70 = vrot.slane %v69, 1
  %v71 = vadd.f32 %v69, %v70
  %v72 = vadd.f32 %v33, %v71
  %vm73 = vcmask 122880
  %74 = vst.msk [vmem:[%s1] sm:$0x1] %vm73, %v72
  %v75 = vld [vmem:[%s2] sm:$0x1]
  %v76 = vmul.f32 %v17, %v17
  %v77 = vmul.f32 %v18, %v18
  %v78 = vmul.f32 %v19, %v19
  %v79 = vmul.f32 %v20, %v20
  %v80 = vmul.f32 %v21, %v21
  %v81 = vmul.f32 %v22, %v22
  %v82 = vmul.f32 %v23, %v23
  %v83 = vmul.f32 %v24, %v24
  %v84 = vmul.f32 %v25, %v25
  %v85 = vmul.f32 %v26, %v26
  %v86 = vmul.f32 %v27, %v27
  %v87 = vmul.f32 %v28, %v28
  %v88 = vmul.f32 %v29, %v29
  %v89 = vmul.f32 %v30, %v30
  %v90 = vmul.f32 %v31, %v31
  %v91 = vmul.f32 %v32, %v32
  %v92 = vsel %vm34, %v76, 0.0
  %v93 = vsel %vm34, %v77, 0.0
  %v94 = vadd.f32 %v92, %v93
  %v95 = vsel %vm34, %v78, 0.0
  %v96 = vadd.f32 %v94, %v95
  %v97 = vsel %vm34, %v79, 0.0
  %v98 = vadd.f32 %v96, %v97
  %v99 = vsel %vm34, %v80, 0.0
  %v100 = vadd.f32 %v98, %v99
  %v101 = vsel %vm34, %v81, 0.0
  %v102 = vadd.f32 %v100, %v101
  %v103 = vsel %vm34, %v82, 0.0
  %v104 = vadd.f32 %v102, %v103
  %v105 = vsel %vm34, %v83, 0.0
  %v106 = vadd.f32 %v104, %v105
  %v107 = vsel %vm34, %v84, 0.0
  %v108 = vadd.f32 %v106, %v107
  %v109 = vsel %vm34, %v85, 0.0
  %v110 = vadd.f32 %v108, %v109
  %v111 = vsel %vm34, %v86, 0.0
  %v112 = vadd.f32 %v110, %v111
  %v113 = vsel %vm34, %v87, 0.0
  %v114 = vadd.f32 %v112, %v113
  %v115 = vsel %vm34, %v88, 0.0
  %v116 = vadd.f32 %v114, %v115
  %v117 = vsel %vm34, %v89, 0.0
  %v118 = vadd.f32 %v116, %v117
  %v119 = vsel %vm34, %v90, 0.0
  %v120 = vadd.f32 %v118, %v119
  %v121 = vsel %vm34, %v91, 0.0
  %v122 = vadd.f32 %v120, %v121
  %v123 = vrot.slane %v122, 4
  %v124 = vadd.f32 %v122, %v123
  %v125 = vrot.slane %v124, 2
  %v126 = vadd.f32 %v124, %v125
  %v127 = vrot.slane %v126, 1
  %v128 = vadd.f32 %v126, %v127
  %v129 = vadd.f32 %v75, %v128
  %130 = vst.msk [vmem:[%s2] sm:$0x1] %vm73, %v129
  // Predicated region
  $region10: #{unet_forward.41} parent=0 // pred_check
    _
  $region11: #{unet_forward.41} parent=0 // pred_check_branch
    %132 = sbr.rel (0) target = $region13
  $region12: #{unet_forward.41} parent=0 // pred_region
    _
  $region13: #{unet_forward.41} parent=0 // pred_fallthru
    _
  // Predicated region
  $region14: #{unet_forward.41} parent=0 // pred_check
    _
  $region15: #{unet_forward.41} parent=0 // pred_check_branch
    %134 = sbr.rel (0) target = $region17
  $region16: #{unet_forward.41} parent=0 // pred_region
    _
  $region17: #{unet_forward.41} parent=0 // pred_fallthru
    _
  // Predicated region
  $region18: #{unet_forward.41} parent=0 // pred_check
    _
  $region19: #{unet_forward.41} parent=0 // pred_check_branch
    %136 = sbr.rel (0) target = $region21
  $region20: #{unet_forward.41} parent=0 // pred_region
    _
  $region21: #{unet_forward.41} parent=0 // pred_fallthru
    _
  // Predicated region
  $region22: #{unet_forward.41} parent=0 // pred_check
    _
  $region23: #{unet_forward.41} parent=0 // pred_check_branch
    %138 = sbr.rel (0) target = $region25
  $region24: #{unet_forward.41} parent=0 // pred_region
    _
  $region25: #{unet_forward.41} parent=0 // pred_fallthru
    _

// kernel: unet_forward.40
$region0: #{unet_forward.40}
  #allocation0 [shape = 'u32[]', space=smem, size = 0x4, offset = 0x4, fixed_abs, tag = 'smem constant byte address 0x4 - core index']
  #allocation1 [shape = 'u32[144,128]{1,0:T(1,128)}', space=vmem, size = 0x12000, scoped, tag = 'internal scratch']
  #allocation2 [shape = 'f32[128,16]{1,0:T(8,128)}', space=vmem, size = 0x10000, scoped, tag = 'scratch operand']
  %s0 = inlined_call_operand.vmem [shape: bf16[128,128], index: 0, kind: input, shape index: {}]
  %s1 = inlined_call_operand.vmem [shape: bf16[128,16], index: 1, kind: input, shape index: {}]
  %s2 = inlined_call_operand.vmem [shape: f32[1,16], index: 2, kind: input, shape index: {}]
  %s3 = inlined_call_operand.vmem [shape: f32[128,16], index: 3, kind: output, shape index: {}]
  %s4 = sld [smem:[#allocation0]]
  $region30: #{unet_forward.40} parent=0
    _
  %s6 = ssub.s32 1, %s4
  %s7 = scalar_select 0, %s6, %s4
  // Predicated region
  $region2: #{unet_forward.40} parent=0 // pred_check
    _
  $region3: #{unet_forward.40} parent=0 // pred_check_branch
    %9 = sbr.rel (0) target = $region5
  $region4: #{unet_forward.40} parent=0 // pred_region
    _
  $region5: #{unet_forward.40} parent=0 // pred_fallthru
    _
  // Predicated region
  $region6: #{unet_forward.40} parent=0 // pred_check
    _
  $region7: #{unet_forward.40} parent=0 // pred_check_branch
    %11 = sbr.rel (0) target = $region9
  $region8: #{unet_forward.40} parent=0 // pred_region
    _
  $region9: #{unet_forward.40} parent=0 // pred_fallthru
    _
  // Predicated region
  $region10: #{unet_forward.40} parent=0 // pred_check
    _
  $region11: #{unet_forward.40} parent=0 // pred_check_branch
    %13 = sbr.rel (0) target = $region13
  $region12: #{unet_forward.40} parent=0 // pred_region
    _
  $region13: #{unet_forward.40} parent=0 // pred_fallthru
    _
  %p15 = scmp.eq.s32.totalorder 0, 0
  // Predicated region
  $region14: #{unet_forward.40} parent=0 // pred_check
    %p16 = pneg %p15
  $region15: #{unet_forward.40} parent=0 // pred_check_branch
    %18 = sbr.rel (%p16) target = $region17
  $region16: #{unet_forward.40} parent=0 // pred_region
    %vm19 = vcmask 130048
    %20 = vst.msk [vmem:[#allocation2] sm:$0xff] %vm19, 0.0
    %21 = vst.msk [vmem:[#allocation2 + $0x8] sm:$0xff] %vm19, 0.0
    %22 = vst.msk [vmem:[#allocation2 + $0x10] sm:$0xff] %vm19, 0.0
    %23 = vst.msk [vmem:[#allocation2 + $0x18] sm:$0xff] %vm19, 0.0
    %24 = vst.msk [vmem:[#allocation2 + $0x20] sm:$0xff] %vm19, 0.0
    %25 = vst.msk [vmem:[#allocation2 + $0x28] sm:$0xff] %vm19, 0.0
    %26 = vst.msk [vmem:[#allocation2 + $0x30] sm:$0xff] %vm19, 0.0
    %27 = vst.msk [vmem:[#allocation2 + $0x38] sm:$0xff] %vm19, 0.0
    %28 = vst.msk [vmem:[#allocation2 + $0x40] sm:$0xff] %vm19, 0.0
    %29 = vst.msk [vmem:[#allocation2 + $0x48] sm:$0xff] %vm19, 0.0
    %30 = vst.msk [vmem:[#allocation2 + $0x50] sm:$0xff] %vm19, 0.0
    %31 = vst.msk [vmem:[#allocation2 + $0x58] sm:$0xff] %vm19, 0.0
    %32 = vst.msk [vmem:[#allocation2 + $0x60] sm:$0xff] %vm19, 0.0
    %33 = vst.msk [vmem:[#allocation2 + $0x68] sm:$0xff] %vm19, 0.0
    %34 = vst.msk [vmem:[#allocation2 + $0x70] sm:$0xff] %vm19, 0.0
    %35 = vst.msk [vmem:[#allocation2 + $0x78] sm:$0xff] %vm19, 0.0
  $region17: #{unet_forward.40} parent=0 // pred_fallthru
    _
  %v36 = vld [vmem:[%s0] sm:$0xf]
  %v37 = vld [vmem:[%s0 + $0x4] sm:$0xf]
  %v38 = vld [vmem:[%s0 + $0x8] sm:$0xf]
  %v39 = vld [vmem:[%s0 + $0xc] sm:$0xf]
  %v40 = vld [vmem:[%s0 + $0x10] sm:$0xf]
  %v41 = vld [vmem:[%s0 + $0x14] sm:$0xf]
  %v42 = vld [vmem:[%s0 + $0x18] sm:$0xf]
  %v43 = vld [vmem:[%s0 + $0x1c] sm:$0xf]
  %v44 = vld [vmem:[%s0 + $0x20] sm:$0xf]
  %v45 = vld [vmem:[%s0 + $0x24] sm:$0xf]
  %v46 = vld [vmem:[%s0 + $0x28] sm:$0xf]
  %v47 = vld [vmem:[%s0 + $0x2c] sm:$0xf]
  %v48 = vld [vmem:[%s0 + $0x30] sm:$0xf]
  %v49 = vld [vmem:[%s0 + $0x34] sm:$0xf]
  %v50 = vld [vmem:[%s0 + $0x38] sm:$0xf]
  %v51 = vld [vmem:[%s0 + $0x3c] sm:$0xf]
  %v52 = vunpack.c.l.bf16 %v36
  %v53 = vunpack.c.l.bf16 %v37
  %v54 = vunpack.c.l.bf16 %v38
  %v55 = vunpack.c.l.bf16 %v39
  %v56 = vunpack.c.l.bf16 %v40
  %v57 = vunpack.c.l.bf16 %v41
  %v58 = vunpack.c.l.bf16 %v42
  %v59 = vunpack.c.l.bf16 %v43
  %v60 = vunpack.c.l.bf16 %v44
  %v61 = vunpack.c.l.bf16 %v45
  %v62 = vunpack.c.l.bf16 %v46
  %v63 = vunpack.c.l.bf16 %v47
  %v64 = vunpack.c.l.bf16 %v48
  %v65 = vunpack.c.l.bf16 %v49
  %v66 = vunpack.c.l.bf16 %v50
  %v67 = vunpack.c.l.bf16 %v51
  %vm68 = vcmp.gt.f32.partialorder %v52, 0.0
  %vm69 = vcmp.gt.f32.partialorder %v53, 0.0
  %vm70 = vcmp.gt.f32.partialorder %v54, 0.0
  %vm71 = vcmp.gt.f32.partialorder %v55, 0.0
  %vm72 = vcmp.gt.f32.partialorder %v56, 0.0
  %vm73 = vcmp.gt.f32.partialorder %v57, 0.0
  %vm74 = vcmp.gt.f32.partialorder %v58, 0.0
  %vm75 = vcmp.gt.f32.partialorder %v59, 0.0
  %vm76 = vcmp.gt.f32.partialorder %v60, 0.0
  %vm77 = vcmp.gt.f32.partialorder %v61, 0.0
  %vm78 = vcmp.gt.f32.partialorder %v62, 0.0
  %vm79 = vcmp.gt.f32.partialorder %v63, 0.0
  %vm80 = vcmp.gt.f32.partialorder %v64, 0.0
  %vm81 = vcmp.gt.f32.partialorder %v65, 0.0
  %vm82 = vcmp.gt.f32.partialorder %v66, 0.0
  %vm83 = vcmp.gt.f32.partialorder %v67, 0.0
  %v84 = vmul.f32 %v52, 0.2
  %v85 = vmul.f32 %v53, 0.2
  %v86 = vmul.f32 %v54, 0.2
  %v87 = vmul.f32 %v55, 0.2
  %v88 = vmul.f32 %v56, 0.2
  %v89 = vmul.f32 %v57, 0.2
  %v90 = vmul.f32 %v58, 0.2
  %v91 = vmul.f32 %v59, 0.2
  %v92 = vmul.f32 %v60, 0.2
  %v93 = vmul.f32 %v61, 0.2
  %v94 = vmul.f32 %v62, 0.2
  %v95 = vmul.f32 %v63, 0.2
  %v96 = vmul.f32 %v64, 0.2
  %v97 = vmul.f32 %v65, 0.2
  %v98 = vmul.f32 %v66, 0.2
  %v99 = vmul.f32 %v67, 0.2
  %v100 = vsel %vm68, %v52, %v84
  %v101 = vsel %vm69, %v53, %v85
  %v102 = vsel %vm70, %v54, %v86
  %v103 = vsel %vm71, %v55, %v87
  %v104 = vsel %vm72, %v56, %v88
  %v105 = vsel %vm73, %v57, %v89
  %v106 = vsel %vm74, %v58, %v90
  %v107 = vsel %vm75, %v59, %v91
  %v108 = vsel %vm76, %v60, %v92
  %v109 = vsel %vm77, %v61, %v93
  %v110 = vsel %vm78, %v62, %v94
  %v111 = vsel %vm79, %v63, %v95
  %v112 = vsel %vm80, %v64, %v96
  %v113 = vsel %vm81, %v65, %v97
  %v114 = vsel %vm82, %v66, %v98
  %v115 = vsel %vm83, %v67, %v99
  %v116 = vld [vmem:[#allocation2] sm:$0xff]
  %v117 = vld [vmem:[#allocation2 + $0x8] sm:$0xff]
  %v118 = vld [vmem:[#allocation2 + $0x10] sm:$0xff]
  %v119 = vld [vmem:[#allocation2 + $0x18] sm:$0xff]
  %v120 = vld [vmem:[#allocation2 + $0x20] sm:$0xff]
  %v121 = vld [vmem:[#allocation2 + $0x28] sm:$0xff]
  %v122 = vld [vmem:[#allocation2 + $0x30] sm:$0xff]
  %v123 = vld [vmem:[#allocation2 + $0x38] sm:$0xff]
  %v124 = vld [vmem:[#allocation2 + $0x40] sm:$0xff]
  %v125 = vld [vmem:[#allocation2 + $0x48] sm:$0xff]
  %v126 = vld [vmem:[#allocation2 + $0x50] sm:$0xff]
  %v127 = vld [vmem:[#allocation2 + $0x58] sm:$0xff]
  %v128 = vld [vmem:[#allocation2 + $0x60] sm:$0xff]
  %v129 = vld [vmem:[#allocation2 + $0x68] sm:$0xff]
  %v130 = vld [vmem:[#allocation2 + $0x70] sm:$0xff]
  %v131 = vld [vmem:[#allocation2 + $0x78] sm:$0xff]
  %v132 = vpack.c.bf16 %v101, %v100
  %v133 = vpack.c.bf16 %v103, %v102
  %v134 = vpack.c.bf16 %v105, %v104
  %v135 = vpack.c.bf16 %v107, %v106
  %v136 = vpack.c.bf16 %v109, %v108
  %v137 = vpack.c.bf16 %v111, %v110
  %v138 = vpack.c.bf16 %v113, %v112
  %v139 = vpack.c.bf16 %v115, %v114
  %v140 = vld [vmem:[%s1] sm:$0xf]
  %v141 = vld [vmem:[%s1 + $0x4] sm:$0xf]
  %v142 = vld [vmem:[%s1 + $0x8] sm:$0xf]
  %v143 = vld [vmem:[%s1 + $0xc] sm:$0xf]
  %v144 = vld [vmem:[%s1 + $0x10] sm:$0xf]
  %v145 = vld [vmem:[%s1 + $0x14] sm:$0xf]
  %v146 = vld [vmem:[%s1 + $0x18] sm:$0xf]
  %v147 = vld [vmem:[%s1 + $0x1c] sm:$0xf]
  %v148 = vld [vmem:[%s1 + $0x20] sm:$0xf]
  %v149 = vld [vmem:[%s1 + $0x24] sm:$0xf]
  %v150 = vld [vmem:[%s1 + $0x28] sm:$0xf]
  %v151 = vld [vmem:[%s1 + $0x2c] sm:$0xf]
  %v152 = vld [vmem:[%s1 + $0x30] sm:$0xf]
  %v153 = vld [vmem:[%s1 + $0x34] sm:$0xf]
  %v154 = vld [vmem:[%s1 + $0x38] sm:$0xf]
  %v155 = vld [vmem:[%s1 + $0x3c] sm:$0xf]
  %v172 = vunpack.c.l.b16 %v140
  %v173 = vunpack.c.l.b16 %v141
  %v174 = vunpack.c.l.b16 %v142
  %v175 = vunpack.c.l.b16 %v143
  %v176 = vunpack.c.l.b16 %v144
  %v177 = vunpack.c.l.b16 %v145
  %v178 = vunpack.c.l.b16 %v146
  %v179 = vunpack.c.l.b16 %v147
  %v180 = vunpack.c.l.b16 %v148
  %v181 = vunpack.c.l.b16 %v149
  %v182 = vunpack.c.l.b16 %v150
  %v183 = vunpack.c.l.b16 %v151
  %v184 = vunpack.c.l.b16 %v152
  %v185 = vunpack.c.l.b16 %v153
  %v186 = vunpack.c.l.b16 %v154
  %v187 = vunpack.c.l.b16 %v155
  %v188 = vpack.c.b16 %v173, %v172
  %v189 = vpack.c.b16 %v175, %v174
  %v190 = vpack.c.b16 %v177, %v176
  %v191 = vpack.c.b16 %v179, %v178
  %v192 = vpack.c.b16 %v181, %v180
  %v193 = vpack.c.b16 %v183, %v182
  %v194 = vpack.c.b16 %v185, %v184
  %v195 = vpack.c.b16 %v187, %v186
  %204 = vmatprep.subr.bf16.mxu0 0
  %205 = vmatpush1.bf16.msra.mxu0 %v195
  %206 = vmatprep.subr.bf16.mxu0 0
  %207 = vmatpush1.bf16.msra.mxu0 %v194
  %208 = vmatprep.subr.bf16.mxu0 0
  %209 = vmatpush1.bf16.msra.mxu0 %v193
  %210 = vmatprep.subr.bf16.mxu0 0
  %211 = vmatpush1.bf16.msra.mxu0 %v192
  %212 = vmatprep.subr.bf16.mxu0 0
  %213 = vmatpush1.bf16.msra.mxu0 %v191
  %214 = vmatprep.subr.bf16.mxu0 0
  %215 = vmatpush1.bf16.msra.mxu0 %v190
  %216 = vmatprep.subr.bf16.mxu0 0
  %217 = vmatpush1.bf16.msra.mxu0 %v189
  %218 = vmatprep.subr.bf16.mxu0 0
  %219 = vmatpush1.bf16.msra.mxu0 %v188
  %220 = vmatprep.subr.bf16.mxu0 0
  %221 = vmatpush2.bf16.msra.mxu0 0
  %222 = vmatprep.subr.bf16.mxu0 0
  %223 = vmatpush2.bf16.msra.mxu0 0
  %224 = vmatprep.subr.bf16.mxu0 0
  %225 = vmatpush2.bf16.msra.mxu0 0
  %226 = vmatprep.subr.bf16.mxu0 0
  %227 = vmatpush2.bf16.msra.mxu0 0
  %228 = vmatprep.subr.bf16.mxu0 0
  %229 = vmatpush2.bf16.msra.mxu0 0
  %230 = vmatprep.subr.bf16.mxu0 0
  %231 = vmatpush2.bf16.msra.mxu0 0
  %232 = vmatprep.subr.bf16.mxu0 0
  %233 = vmatpush2.bf16.msra.mxu0 0
  %234 = vmatprep.subr.bf16.mxu0 0
  %235 = vmatpush2.bf16.msra.mxu0 0
  %236 = vmatprep.mubr.bf16.mxu0 0
  %237 = vmatmul.mubr.bf16.gmra.mxu0 %v132
  %v238 = vpop.f32.mrf.mxu0
  %v239 = vadd.f32 0.0, %v238
  %v240 = vpop.f32.mrf.mxu0
  %v241 = vpop.f32.mrf.mxu0
  %v242 = vadd.f32 0.0, %v241
  %v243 = vpop.f32.mrf.mxu0
  %244 = vmatprep.mubr.bf16.mxu0 0
  %245 = vmatmul.mubr.bf16.gmra.mxu0 %v133
  %v246 = vpop.f32.mrf.mxu0
  %v247 = vadd.f32 0.0, %v246
  %v248 = vpop.f32.mrf.mxu0
  %v249 = vpop.f32.mrf.mxu0
  %v250 = vadd.f32 0.0, %v249
  %v251 = vpop.f32.mrf.mxu0
  %252 = vmatprep.mubr.bf16.mxu0 0
  %253 = vmatmul.mubr.bf16.gmra.mxu0 %v134
  %v254 = vpop.f32.mrf.mxu0
  %v255 = vadd.f32 0.0, %v254
  %v256 = vpop.f32.mrf.mxu0
  %v257 = vpop.f32.mrf.mxu0
  %v258 = vadd.f32 0.0, %v257
  %v259 = vpop.f32.mrf.mxu0
  %260 = vmatprep.mubr.bf16.mxu0 0
  %261 = vmatmul.mubr.bf16.gmra.mxu0 %v135
  %v262 = vpop.f32.mrf.mxu0
  %v263 = vadd.f32 0.0, %v262
  %v264 = vpop.f32.mrf.mxu0
  %v265 = vpop.f32.mrf.mxu0
  %v266 = vadd.f32 0.0, %v265
  %v267 = vpop.f32.mrf.mxu0
  %268 = vmatprep.mubr.bf16.mxu0 0
  %269 = vmatmul.mubr.bf16.gmra.mxu0 %v136
  %v270 = vpop.f32.mrf.mxu0
  %v271 = vadd.f32 0.0, %v270
  %v272 = vpop.f32.mrf.mxu0
  %v273 = vpop.f32.mrf.mxu0
  %v274 = vadd.f32 0.0, %v273
  %v275 = vpop.f32.mrf.mxu0
  %276 = vmatprep.mubr.bf16.mxu0 0
  %277 = vmatmul.mubr.bf16.gmra.mxu0 %v137
  %v278 = vpop.f32.mrf.mxu0
  %v279 = vadd.f32 0.0, %v278
  %v280 = vpop.f32.mrf.mxu0
  %v281 = vpop.f32.mrf.mxu0
  %v282 = vadd.f32 0.0, %v281
  %v283 = vpop.f32.mrf.mxu0
  %284 = vmatprep.mubr.bf16.mxu0 0
  %285 = vmatmul.mubr.bf16.gmra.mxu0 %v138
  %v286 = vpop.f32.mrf.mxu0
  %v287 = vadd.f32 0.0, %v286
  %v288 = vpop.f32.mrf.mxu0
  %v289 = vpop.f32.mrf.mxu0
  %v290 = vadd.f32 0.0, %v289
  %v291 = vpop.f32.mrf.mxu0
  %292 = vmatprep.mubr.bf16.mxu0 0
  %293 = vmatmul.mubr.bf16.gmra.mxu0 %v139
  %v294 = vpop.f32.mrf.mxu0
  %v295 = vadd.f32 0.0, %v294
  %v296 = vpop.f32.mrf.mxu0
  %v297 = vpop.f32.mrf.mxu0
  %v298 = vadd.f32 0.0, %v297
  %v299 = vpop.f32.mrf.mxu0
  %300 = vdwg.mxu0
  %v301 = vadd.f32 %v116, %v239
  %v302 = vadd.f32 %v117, %v242
  %v303 = vadd.f32 %v118, %v247
  %v304 = vadd.f32 %v119, %v250
  %v305 = vadd.f32 %v120, %v255
  %v306 = vadd.f32 %v121, %v258
  %v307 = vadd.f32 %v122, %v263
  %v308 = vadd.f32 %v123, %v266
  %v309 = vadd.f32 %v124, %v271
  %v310 = vadd.f32 %v125, %v274
  %v311 = vadd.f32 %v126, %v279
  %v312 = vadd.f32 %v127, %v282
  %v313 = vadd.f32 %v128, %v287
  %v314 = vadd.f32 %v129, %v290
  %v315 = vadd.f32 %v130, %v295
  %v316 = vadd.f32 %v131, %v298
  %vm317 = vcmask 130048
  %318 = vst.msk [vmem:[#allocation2] sm:$0xff] %vm317, %v301
  %319 = vst.msk [vmem:[#allocation2 + $0x8] sm:$0xff] %vm317, %v302
  %320 = vst.msk [vmem:[#allocation2 + $0x10] sm:$0xff] %vm317, %v303
  %321 = vst.msk [vmem:[#allocation2 + $0x18] sm:$0xff] %vm317, %v304
  %322 = vst.msk [vmem:[#allocation2 + $0x20] sm:$0xff] %vm317, %v305
  %323 = vst.msk [vmem:[#allocation2 + $0x28] sm:$0xff] %vm317, %v306
  %324 = vst.msk [vmem:[#allocation2 + $0x30] sm:$0xff] %vm317, %v307
  %325 = vst.msk [vmem:[#allocation2 + $0x38] sm:$0xff] %vm317, %v308
  %326 = vst.msk [vmem:[#allocation2 + $0x40] sm:$0xff] %vm317, %v309
  %327 = vst.msk [vmem:[#allocation2 + $0x48] sm:$0xff] %vm317, %v310
  %328 = vst.msk [vmem:[#allocation2 + $0x50] sm:$0xff] %vm317, %v311
  %329 = vst.msk [vmem:[#allocation2 + $0x58] sm:$0xff] %vm317, %v312
  %330 = vst.msk [vmem:[#allocation2 + $0x60] sm:$0xff] %vm317, %v313
  %331 = vst.msk [vmem:[#allocation2 + $0x68] sm:$0xff] %vm317, %v314
  %332 = vst.msk [vmem:[#allocation2 + $0x70] sm:$0xff] %vm317, %v315
  %333 = vst.msk [vmem:[#allocation2 + $0x78] sm:$0xff] %vm317, %v316
  // Predicated region
  $region18: #{unet_forward.40} parent=0 // pred_check
    %p334 = pneg %p15
  $region19: #{unet_forward.40} parent=0 // pred_check_branch
    %336 = sbr.rel (%p334) target = $region21
  $region20: #{unet_forward.40} parent=0 // pred_region
    %v337 = vld [vmem:[#allocation2] sm:$0xff]
    %v338 = vld [vmem:[#allocation2 + $0x8] sm:$0xff]
    %v339 = vld [vmem:[#allocation2 + $0x10] sm:$0xff]
    %v340 = vld [vmem:[#allocation2 + $0x18] sm:$0xff]
    %v341 = vld [vmem:[#allocation2 + $0x20] sm:$0xff]
    %v342 = vld [vmem:[#allocation2 + $0x28] sm:$0xff]
    %v343 = vld [vmem:[#allocation2 + $0x30] sm:$0xff]
    %v344 = vld [vmem:[#allocation2 + $0x38] sm:$0xff]
    %v345 = vld [vmem:[#allocation2 + $0x40] sm:$0xff]
    %v346 = vld [vmem:[#allocation2 + $0x48] sm:$0xff]
    %v347 = vld [vmem:[#allocation2 + $0x50] sm:$0xff]
    %v348 = vld [vmem:[#allocation2 + $0x58] sm:$0xff]
    %v349 = vld [vmem:[#allocation2 + $0x60] sm:$0xff]
    %v350 = vld [vmem:[#allocation2 + $0x68] sm:$0xff]
    %v351 = vld [vmem:[#allocation2 + $0x70] sm:$0xff]
    %v352 = vld [vmem:[#allocation2 + $0x78] sm:$0xff]
    %v353 = vld [vmem:[%s2] sm:$0x1]
    %v355 = vlaneseq
    %v356 = vshrl.u32 %v355, 7
    %v357 = vsub.s32 0, %v356
    %v358 = vrot.slane %v353, %v357
    %v360 = vadd.f32 %v337, %v358
    %v361 = vadd.f32 %v338, %v358
    %v362 = vadd.f32 %v339, %v358
    %v363 = vadd.f32 %v340, %v358
    %v364 = vadd.f32 %v341, %v358
    %v365 = vadd.f32 %v342, %v358
    %v366 = vadd.f32 %v343, %v358
    %v367 = vadd.f32 %v344, %v358
    %v368 = vadd.f32 %v345, %v358
    %v369 = vadd.f32 %v346, %v358
    %v370 = vadd.f32 %v347, %v358
    %v371 = vadd.f32 %v348, %v358
    %v372 = vadd.f32 %v349, %v358
    %v373 = vadd.f32 %v350, %v358
    %v374 = vadd.f32 %v351, %v358
    %v375 = vadd.f32 %v352, %v358
    %376 = vst.msk [vmem:[%s3] sm:$0xff] %vm317, %v360
    %377 = vst.msk [vmem:[%s3 + $0x8] sm:$0xff] %vm317, %v361
    %378 = vst.msk [vmem:[%s3 + $0x10] sm:$0xff] %vm317, %v362
    %379 = vst.msk [vmem:[%s3 + $0x18] sm:$0xff] %vm317, %v363
    %380 = vst.msk [vmem:[%s3 + $0x20] sm:$0xff] %vm317, %v364
    %381 = vst.msk [vmem:[%s3 + $0x28] sm:$0xff] %vm317, %v365
    %382 = vst.msk [vmem:[%s3 + $0x30] sm:$0xff] %vm317, %v366
    %383 = vst.msk [vmem:[%s3 + $0x38] sm:$0xff] %vm317, %v367
    %384 = vst.msk [vmem:[%s3 + $0x40] sm:$0xff] %vm317, %v368
    %385 = vst.msk [vmem:[%s3 + $0x48] sm:$0xff] %vm317, %v369
    %386 = vst.msk [vmem:[%s3 + $0x50] sm:$0xff] %vm317, %v370
    %387 = vst.msk [vmem:[%s3 + $0x58] sm:$0xff] %vm317, %v371
    %388 = vst.msk [vmem:[%s3 + $0x60] sm:$0xff] %vm317, %v372
    %389 = vst.msk [vmem:[%s3 + $0x68] sm:$0xff] %vm317, %v373
    %390 = vst.msk [vmem:[%s3 + $0x70] sm:$0xff] %vm317, %v374
    %391 = vst.msk [vmem:[%s3 + $0x78] sm:$0xff] %vm317, %v375
  $region21: #{unet_forward.40} parent=0 // pred_fallthru
    _
  // Predicated region
  $region22: #{unet_forward.40} parent=0 // pred_check
    _
  $region23: #{unet_forward.40} parent=0 // pred_check_branch
    %393 = sbr.rel (0) target = $region25
  $region24: #{unet_forward.40} parent=0 // pred_region
    _
  $region25: #{unet_forward.40} parent=0 // pred_fallthru
    _
  // Predicated region
  $region26: #{unet_forward.40} parent=0 // pred_check
    _
  $region27: #{unet_forward.40} parent=0 // pred_check_branch
    %395 = sbr.rel (0) target = $region29
  $region28: #{unet_forward.40} parent=0 // pred_region
    _
  $region29: #{unet_forward.40} parent=0 // pred_fallthru
    _

// kernel: unet_forward.42
$region0: #{unet_forward.42}
  #allocation0 [shape = 'u32[]', space=smem, size = 0x4, offset = 0x4, fixed_abs, tag = 'smem constant byte address 0x4 - core index']
  #allocation1 [shape = 'u32[144,128]{1,0:T(1,128)}', space=vmem, size = 0x12000, scoped, tag = 'internal scratch']
  %s0 = inlined_call_operand.vmem [shape: f32[128,16], index: 0, kind: input, shape index: {}]
  %s1 = inlined_call_operand.vmem [shape: f32[1,16], index: 1, kind: input, shape index: {}]
  %s2 = inlined_call_operand.vmem [shape: f32[1,16], index: 2, kind: input, shape index: {}]
  %s3 = inlined_call_operand.vmem [shape: f32[128,16], index: 3, kind: output, shape index: {}]
  %s4 = sld [smem:[#allocation0]]
  $region22: #{unet_forward.42} parent=0
    _
  %s6 = ssub.s32 1, %s4
  %s7 = scalar_select 0, %s6, %s4
  // Predicated region
  $region2: #{unet_forward.42} parent=0 // pred_check
    _
  $region3: #{unet_forward.42} parent=0 // pred_check_branch
    %9 = sbr.rel (0) target = $region5
  $region4: #{unet_forward.42} parent=0 // pred_region
    _
  $region5: #{unet_forward.42} parent=0 // pred_fallthru
    _
  // Predicated region
  $region6: #{unet_forward.42} parent=0 // pred_check
    _
  $region7: #{unet_forward.42} parent=0 // pred_check_branch
    %11 = sbr.rel (0) target = $region9
  $region8: #{unet_forward.42} parent=0 // pred_region
    _
  $region9: #{unet_forward.42} parent=0 // pred_fallthru
    _
  // Predicated region
  $region10: #{unet_forward.42} parent=0 // pred_check
    _
  $region11: #{unet_forward.42} parent=0 // pred_check_branch
    %13 = sbr.rel (0) target = $region13
  $region12: #{unet_forward.42} parent=0 // pred_region
    _
  $region13: #{unet_forward.42} parent=0 // pred_fallthru
    _
  %v14 = vld [vmem:[%s0] sm:$0xff]
  %v15 = vld [vmem:[%s0 + $0x8] sm:$0xff]
  %v16 = vld [vmem:[%s0 + $0x10] sm:$0xff]
  %v17 = vld [vmem:[%s0 + $0x18] sm:$0xff]
  %v18 = vld [vmem:[%s0 + $0x20] sm:$0xff]
  %v19 = vld [vmem:[%s0 + $0x28] sm:$0xff]
  %v20 = vld [vmem:[%s0 + $0x30] sm:$0xff]
  %v21 = vld [vmem:[%s0 + $0x38] sm:$0xff]
  %v22 = vld [vmem:[%s0 + $0x40] sm:$0xff]
  %v23 = vld [vmem:[%s0 + $0x48] sm:$0xff]
  %v24 = vld [vmem:[%s0 + $0x50] sm:$0xff]
  %v25 = vld [vmem:[%s0 + $0x58] sm:$0xff]
  %v26 = vld [vmem:[%s0 + $0x60] sm:$0xff]
  %v27 = vld [vmem:[%s0 + $0x68] sm:$0xff]
  %v28 = vld [vmem:[%s0 + $0x70] sm:$0xff]
  %v29 = vld [vmem:[%s0 + $0x78] sm:$0xff]
  %v30 = vld [vmem:[%s1] sm:$0x1]
  %v32 = vlaneseq
  %v33 = vshrl.u32 %v32, 7
  %v34 = vsub.s32 0, %v33
  %v35 = vrot.slane %v30, %v34
  %v37 = vmul.f32 %v14, %v35
  %v38 = vmul.f32 %v15, %v35
  %v39 = vmul.f32 %v16, %v35
  %v40 = vmul.f32 %v17, %v35
  %v41 = vmul.f32 %v18, %v35
  %v42 = vmul.f32 %v19, %v35
  %v43 = vmul.f32 %v20, %v35
  %v44 = vmul.f32 %v21, %v35
  %v45 = vmul.f32 %v22, %v35
  %v46 = vmul.f32 %v23, %v35
  %v47 = vmul.f32 %v24, %v35
  %v48 = vmul.f32 %v25, %v35
  %v49 = vmul.f32 %v26, %v35
  %v50 = vmul.f32 %v27, %v35
  %v51 = vmul.f32 %v28, %v35
  %v52 = vmul.f32 %v29, %v35
  %v53 = vld [vmem:[%s2] sm:$0x1]
  %v55 = vlaneseq
  %v56 = vshrl.u32 %v55, 7
  %v57 = vsub.s32 0, %v56
  %v58 = vrot.slane %v53, %v57
  %v60 = vadd.f32 %v37, %v58
  %v61 = vadd.f32 %v38, %v58
  %v62 = vadd.f32 %v39, %v58
  %v63 = vadd.f32 %v40, %v58
  %v64 = vadd.f32 %v41, %v58
  %v65 = vadd.f32 %v42, %v58
  %v66 = vadd.f32 %v43, %v58
  %v67 = vadd.f32 %v44, %v58
  %v68 = vadd.f32 %v45, %v58
  %v69 = vadd.f32 %v46, %v58
  %v70 = vadd.f32 %v47, %v58
  %v71 = vadd.f32 %v48, %v58
  %v72 = vadd.f32 %v49, %v58
  %v73 = vadd.f32 %v50, %v58
  %v74 = vadd.f32 %v51, %v58
  %v75 = vadd.f32 %v52, %v58
  %vm76 = vcmask 130048
  %77 = vst.msk [vmem:[%s3] sm:$0xff] %vm76, %v60
  %78 = vst.msk [vmem:[%s3 + $0x8] sm:$0xff] %vm76, %v61
  %79 = vst.msk [vmem:[%s3 + $0x10] sm:$0xff] %vm76, %v62
  %80 = vst.msk [vmem:[%s3 + $0x18] sm:$0xff] %vm76, %v63
  %81 = vst.msk [vmem:[%s3 + $0x20] sm:$0xff] %vm76, %v64
  %82 = vst.msk [vmem:[%s3 + $0x28] sm:$0xff] %vm76, %v65
  %83 = vst.msk [vmem:[%s3 + $0x30] sm:$0xff] %vm76, %v66
  %84 = vst.msk [vmem:[%s3 + $0x38] sm:$0xff] %vm76, %v67
  %85 = vst.msk [vmem:[%s3 + $0x40] sm:$0xff] %vm76, %v68
  %86 = vst.msk [vmem:[%s3 + $0x48] sm:$0xff] %vm76, %v69
  %87 = vst.msk [vmem:[%s3 + $0x50] sm:$0xff] %vm76, %v70
  %88 = vst.msk [vmem:[%s3 + $0x58] sm:$0xff] %vm76, %v71
  %89 = vst.msk [vmem:[%s3 + $0x60] sm:$0xff] %vm76, %v72
  %90 = vst.msk [vmem:[%s3 + $0x68] sm:$0xff] %vm76, %v73
  %91 = vst.msk [vmem:[%s3 + $0x70] sm:$0xff] %vm76, %v74
  %92 = vst.msk [vmem:[%s3 + $0x78] sm:$0xff] %vm76, %v75
  // Predicated region
  $region14: #{unet_forward.42} parent=0 // pred_check
    _
  $region15: #{unet_forward.42} parent=0 // pred_check_branch
    %94 = sbr.rel (0) target = $region17
  $region16: #{unet_forward.42} parent=0 // pred_region
    _
  $region17: #{unet_forward.42} parent=0 // pred_fallthru
    _
  // Predicated region
  $region18: #{unet_forward.42} parent=0 // pred_check
    _
  $region19: #{unet_forward.42} parent=0 // pred_check_branch
    %96 = sbr.rel (0) target = $region21
  $region20: #{unet_forward.42} parent=0 // pred_region
    _
  $region21: #{unet_forward.42} parent=0 // pred_fallthru
    _

// kernel: unet_forward.45
$region0: #{unet_forward.45}
  #allocation0 [shape = 'u32[]', space=smem, size = 0x4, offset = 0x4, fixed_abs, tag = 'smem constant byte address 0x4 - core index']
  #allocation1 [shape = 'u32[144,128]{1,0:T(1,128)}', space=vmem, size = 0x12000, scoped, tag = 'internal scratch']
  %s0 = inlined_call_operand.vmem [shape: f32[32,32], index: 0, kind: input, shape index: {}]
  %s1 = inlined_call_operand.vmem [shape: f32[1,32], index: 1, kind: input, shape index: {}]
  %s2 = inlined_call_operand.vmem [shape: f32[1,32], index: 2, kind: input, shape index: {}]
  %s3 = inlined_call_operand.vmem [shape: f32[32,32], index: 3, kind: output, shape index: {}]
  %s4 = sld [smem:[#allocation0]]
  $region22: #{unet_forward.45} parent=0
    _
  %s6 = ssub.s32 1, %s4
  %s7 = scalar_select 0, %s6, %s4
  // Predicated region
  $region2: #{unet_forward.45} parent=0 // pred_check
    _
  $region3: #{unet_forward.45} parent=0 // pred_check_branch
    %9 = sbr.rel (0) target = $region5
  $region4: #{unet_forward.45} parent=0 // pred_region
    _
  $region5: #{unet_forward.45} parent=0 // pred_fallthru
    _
  // Predicated region
  $region6: #{unet_forward.45} parent=0 // pred_check
    _
  $region7: #{unet_forward.45} parent=0 // pred_check_branch
    %11 = sbr.rel (0) target = $region9
  $region8: #{unet_forward.45} parent=0 // pred_region
    _
  $region9: #{unet_forward.45} parent=0 // pred_fallthru
    _
  // Predicated region
  $region10: #{unet_forward.45} parent=0 // pred_check
    _
  $region11: #{unet_forward.45} parent=0 // pred_check_branch
    %13 = sbr.rel (0) target = $region13
  $region12: #{unet_forward.45} parent=0 // pred_region
    _
  $region13: #{unet_forward.45} parent=0 // pred_fallthru
    _
  %v14 = vld [vmem:[%s0] sm:$0xff]
  %v15 = vld [vmem:[%s0 + $0x8] sm:$0xff]
  %v16 = vld [vmem:[%s0 + $0x10] sm:$0xff]
  %v17 = vld [vmem:[%s0 + $0x18] sm:$0xff]
  %v18 = vld [vmem:[%s1] sm:$0x1]
  %v20 = vlaneseq
  %v21 = vshrl.u32 %v20, 7
  %v22 = vsub.s32 0, %v21
  %v23 = vrot.slane %v18, %v22
  %v25 = vmul.f32 %v14, %v23
  %v26 = vmul.f32 %v15, %v23
  %v27 = vmul.f32 %v16, %v23
  %v28 = vmul.f32 %v17, %v23
  %v29 = vld [vmem:[%s2] sm:$0x1]
  %v31 = vlaneseq
  %v32 = vshrl.u32 %v31, 7
  %v33 = vsub.s32 0, %v32
  %v34 = vrot.slane %v29, %v33
  %v36 = vadd.f32 %v25, %v34
  %v37 = vadd.f32 %v26, %v34
  %v38 = vadd.f32 %v27, %v34
  %v39 = vadd.f32 %v28, %v34
  %vm40 = vcmask 261120
  %41 = vst.msk [vmem:[%s3] sm:$0xff] %vm40, %v36
  %42 = vst.msk [vmem:[%s3 + $0x8] sm:$0xff] %vm40, %v37
  %43 = vst.msk [vmem:[%s3 + $0x10] sm:$0xff] %vm40, %v38
  %44 = vst.msk [vmem:[%s3 + $0x18] sm:$0xff] %vm40, %v39
  // Predicated region
  $region14: #{unet_forward.45} parent=0 // pred_check
    _
  $region15: #{unet_forward.45} parent=0 // pred_check_branch
    %46 = sbr.rel (0) target = $region17
  $region16: #{unet_forward.45} parent=0 // pred_region
    _
  $region17: #{unet_forward.45} parent=0 // pred_fallthru
    _
  // Predicated region
  $region18: #{unet_forward.45} parent=0 // pred_check
    _
  $region19: #{unet_forward.45} parent=0 // pred_check_branch
    %48 = sbr.rel (0) target = $region21
  $region20: #{unet_forward.45} parent=0 // pred_region
    _
  $region21: #{unet_forward.45} parent=0 // pred_fallthru
    _

// kernel: unet_forward.44
$region0: #{unet_forward.44}
  #allocation0 [shape = 'u32[]', space=smem, size = 0x4, offset = 0x4, fixed_abs, tag = 'smem constant byte address 0x4 - core index']
  #allocation1 [shape = 'u32[144,128]{1,0:T(1,128)}', space=vmem, size = 0x12000, scoped, tag = 'internal scratch']
  %s0 = inlined_call_operand.vmem [shape: f32[32,32], index: 0, kind: input, shape index: {}]
  %s1 = inlined_call_operand.vmem [shape: f32[1,32], index: 1, kind: output, shape index: {0}]
  %s2 = inlined_call_operand.vmem [shape: f32[1,32], index: 2, kind: output, shape index: {1}]
  %3 = xla_tuple %s1, %s2
  %s4 = sld [smem:[#allocation0]]
  $region26: #{unet_forward.44} parent=0
    _
  %s6 = ssub.s32 1, %s4
  %s7 = scalar_select 0, %s6, %s4
  // Predicated region
  $region2: #{unet_forward.44} parent=0 // pred_check
    _
  $region3: #{unet_forward.44} parent=0 // pred_check_branch
    %9 = sbr.rel (0) target = $region5
  $region4: #{unet_forward.44} parent=0 // pred_region
    _
  $region5: #{unet_forward.44} parent=0 // pred_fallthru
    _
  %p10 = scmp.eq.s32.totalorder 0, 0
  // Predicated region
  $region6: #{unet_forward.44} parent=0 // pred_check
    %p11 = pneg %p10
  $region7: #{unet_forward.44} parent=0 // pred_check_branch
    %13 = sbr.rel (%p11) target = $region9
  $region8: #{unet_forward.44} parent=0 // pred_region
    %vm14 = vcmask 253952
    %15 = vst.msk [vmem:[%s1] sm:$0x1] %vm14, 0.0
    %16 = vst.msk [vmem:[%s2] sm:$0x1] %vm14, 0.0
  $region9: #{unet_forward.44} parent=0 // pred_fallthru
    _
  %v17 = vld [vmem:[%s0] sm:$0xff]
  %v18 = vld [vmem:[%s0 + $0x8] sm:$0xff]
  %v19 = vld [vmem:[%s0 + $0x10] sm:$0xff]
  %v20 = vld [vmem:[%s0 + $0x18] sm:$0xff]
  %v21 = vld [vmem:[%s1] sm:$0x1]
  %vm22 = vcmask 261120
  %v23 = vsel %vm22, %v17, 0.0
  %v24 = vsel %vm22, %v18, 0.0
  %v25 = vadd.f32 %v23, %v24
  %v26 = vsel %vm22, %v19, 0.0
  %v27 = vadd.f32 %v25, %v26
  %v28 = vsel %vm22, %v20, 0.0
  %v29 = vadd.f32 %v27, %v28
  %v30 = vrot.slane %v29, 4
  %v31 = vadd.f32 %v29, %v30
  %v32 = vrot.slane %v31, 2
  %v33 = vadd.f32 %v31, %v32
  %v34 = vrot.slane %v33, 1
  %v35 = vadd.f32 %v33, %v34
  %v36 = vadd.f32 %v21, %v35
  %vm37 = vcmask 253952
  %38 = vst.msk [vmem:[%s1] sm:$0x1] %vm37, %v36
  %v39 = vld [vmem:[%s2] sm:$0x1]
  %v40 = vmul.f32 %v17, %v17
  %v41 = vmul.f32 %v18, %v18
  %v42 = vmul.f32 %v19, %v19
  %v43 = vmul.f32 %v20, %v20
  %v44 = vsel %vm22, %v40, 0.0
  %v45 = vsel %vm22, %v41, 0.0
  %v46 = vadd.f32 %v44, %v45
  %v47 = vsel %vm22, %v42, 0.0
  %v48 = vadd.f32 %v46, %v47
  %v49 = vsel %vm22, %v43, 0.0
  %v50 = vadd.f32 %v48, %v49
  %v51 = vrot.slane %v50, 4
  %v52 = vadd.f32 %v50, %v51
  %v53 = vrot.slane %v52, 2
  %v54 = vadd.f32 %v52, %v53
  %v55 = vrot.slane %v54, 1
  %v56 = vadd.f32 %v54, %v55
  %v57 = vadd.f32 %v39, %v56
  %58 = vst.msk [vmem:[%s2] sm:$0x1] %vm37, %v57
  // Predicated region
  $region10: #{unet_forward.44} parent=0 // pred_check
    _
  $region11: #{unet_forward.44} parent=0 // pred_check_branch
    %60 = sbr.rel (0) target = $region13
  $region12: #{unet_forward.44} parent=0 // pred_region
    _
  $region13: #{unet_forward.44} parent=0 // pred_fallthru
    _
  // Predicated region
  $region14: #{unet_forward.44} parent=0 // pred_check
    _
  $region15: #{unet_forward.44} parent=0 // pred_check_branch
    %62 = sbr.rel (0) target = $region17
  $region16: #{unet_forward.44} parent=0 // pred_region
    _
  $region17: #{unet_forward.44} parent=0 // pred_fallthru
    _
  // Predicated region
  $region18: #{unet_forward.44} parent=0 // pred_check
    _
  $region19: #{unet_forward.44} parent=0 // pred_check_branch
    %64 = sbr.rel (0) target = $region21
  $region20: #{unet_forward.44} parent=0 // pred_region
    _
  $region21: #{unet_forward.44} parent=0 // pred_fallthru
    _
  // Predicated region
  $region22: #{unet_forward.44} parent=0 // pred_check
    _
  $region23: #{unet_forward.44} parent=0 // pred_check_branch
    %66 = sbr.rel (0) target = $region25
  $region24: #{unet_forward.44} parent=0 // pred_region
    _
  $region25: #{unet_forward.44} parent=0 // pred_fallthru
    _

// kernel: unet_forward.43
$region0: #{unet_forward.43}
  #allocation0 [shape = 'u32[]', space=smem, size = 0x4, offset = 0x4, fixed_abs, tag = 'smem constant byte address 0x4 - core index']
  #allocation1 [shape = 'u32[144,128]{1,0:T(1,128)}', space=vmem, size = 0x12000, scoped, tag = 'internal scratch']
  #allocation2 [shape = 'f32[32,32]{1,0:T(8,128)}', space=vmem, size = 0x4000, scoped, tag = 'scratch operand']
  %s0 = inlined_call_operand.vmem [shape: bf16[32,256], index: 0, kind: input, shape index: {}]
  %s1 = inlined_call_operand.vmem [shape: bf16[256,32], index: 1, kind: input, shape index: {}]
  %s2 = inlined_call_operand.vmem [shape: f32[1,32], index: 2, kind: input, shape index: {}]
  %s3 = inlined_call_operand.vmem [shape: f32[32,32], index: 3, kind: output, shape index: {}]
  %s4 = sld [smem:[#allocation0]]
  $region30: #{unet_forward.43} parent=0
    _
  %s6 = ssub.s32 1, %s4
  %s7 = scalar_select 0, %s6, %s4
  // Predicated region
  $region2: #{unet_forward.43} parent=0 // pred_check
    _
  $region3: #{unet_forward.43} parent=0 // pred_check_branch
    %9 = sbr.rel (0) target = $region5
  $region4: #{unet_forward.43} parent=0 // pred_region
    _
  $region5: #{unet_forward.43} parent=0 // pred_fallthru
    _
  // Predicated region
  $region6: #{unet_forward.43} parent=0 // pred_check
    _
  $region7: #{unet_forward.43} parent=0 // pred_check_branch
    %11 = sbr.rel (0) target = $region9
  $region8: #{unet_forward.43} parent=0 // pred_region
    _
  $region9: #{unet_forward.43} parent=0 // pred_fallthru
    _
  // Predicated region
  $region10: #{unet_forward.43} parent=0 // pred_check
    _
  $region11: #{unet_forward.43} parent=0 // pred_check_branch
    %13 = sbr.rel (0) target = $region13
  $region12: #{unet_forward.43} parent=0 // pred_region
    _
  $region13: #{unet_forward.43} parent=0 // pred_fallthru
    _
  %p15 = scmp.eq.s32.totalorder 0, 0
  // Predicated region
  $region14: #{unet_forward.43} parent=0 // pred_check
    %p16 = pneg %p15
  $region15: #{unet_forward.43} parent=0 // pred_check_branch
    %18 = sbr.rel (%p16) target = $region17
  $region16: #{unet_forward.43} parent=0 // pred_region
    %vm19 = vcmask 261120
    %20 = vst.msk [vmem:[#allocation2] sm:$0xff] %vm19, 0.0
    %21 = vst.msk [vmem:[#allocation2 + $0x8] sm:$0xff] %vm19, 0.0
    %22 = vst.msk [vmem:[#allocation2 + $0x10] sm:$0xff] %vm19, 0.0
    %23 = vst.msk [vmem:[#allocation2 + $0x18] sm:$0xff] %vm19, 0.0
  $region17: #{unet_forward.43} parent=0 // pred_fallthru
    _
  %v24 = vld [vmem:[%s0] sm:$0xff]
  %v25 = vld [vmem:[%s0 + $0x8] sm:$0xff]
  %v26 = vld [vmem:[%s0 + $0x10] sm:$0xff]
  %v27 = vld [vmem:[%s0 + $0x18] sm:$0xff]
  %v28 = vunpack.c.l.bf16 %v24
  %v29 = vunpack.c.h.bf16 %v24
  %v30 = vunpack.c.l.bf16 %v25
  %v31 = vunpack.c.h.bf16 %v25
  %v32 = vunpack.c.l.bf16 %v26
  %v33 = vunpack.c.h.bf16 %v26
  %v34 = vunpack.c.l.bf16 %v27
  %v35 = vunpack.c.h.bf16 %v27
  %vm36 = vcmp.gt.f32.partialorder %v28, 0.0
  %vm37 = vcmp.gt.f32.partialorder %v29, 0.0
  %vm38 = vcmp.gt.f32.partialorder %v30, 0.0
  %vm39 = vcmp.gt.f32.partialorder %v31, 0.0
  %vm40 = vcmp.gt.f32.partialorder %v32, 0.0
  %vm41 = vcmp.gt.f32.partialorder %v33, 0.0
  %vm42 = vcmp.gt.f32.partialorder %v34, 0.0
  %vm43 = vcmp.gt.f32.partialorder %v35, 0.0
  %v44 = vmul.f32 %v28, 0.2
  %v45 = vmul.f32 %v29, 0.2
  %v46 = vmul.f32 %v30, 0.2
  %v47 = vmul.f32 %v31, 0.2
  %v48 = vmul.f32 %v32, 0.2
  %v49 = vmul.f32 %v33, 0.2
  %v50 = vmul.f32 %v34, 0.2
  %v51 = vmul.f32 %v35, 0.2
  %v52 = vsel %vm36, %v28, %v44
  %v53 = vsel %vm37, %v29, %v45
  %v54 = vsel %vm38, %v30, %v46
  %v55 = vsel %vm39, %v31, %v47
  %v56 = vsel %vm40, %v32, %v48
  %v57 = vsel %vm41, %v33, %v49
  %v58 = vsel %vm42, %v34, %v50
  %v59 = vsel %vm43, %v35, %v51
  %v60 = vld [vmem:[#allocation2] sm:$0xff]
  %v61 = vld [vmem:[#allocation2 + $0x8] sm:$0xff]
  %v62 = vld [vmem:[#allocation2 + $0x10] sm:$0xff]
  %v63 = vld [vmem:[#allocation2 + $0x18] sm:$0xff]
  %v64 = vpack.c.bf16 %v54, %v52
  %v65 = vpack.c.bf16 %v55, %v53
  %v66 = vpack.c.bf16 %v58, %v56
  %v67 = vpack.c.bf16 %v59, %v57
  %v68 = vld [vmem:[%s1] sm:$0xf]
  %v69 = vld [vmem:[%s1 + $0x4] sm:$0xf]
  %v70 = vld [vmem:[%s1 + $0x8] sm:$0xf]
  %v71 = vld [vmem:[%s1 + $0xc] sm:$0xf]
  %v72 = vld [vmem:[%s1 + $0x10] sm:$0xf]
  %v73 = vld [vmem:[%s1 + $0x14] sm:$0xf]
  %v74 = vld [vmem:[%s1 + $0x18] sm:$0xf]
  %v75 = vld [vmem:[%s1 + $0x1c] sm:$0xf]
  %v76 = vld [vmem:[%s1 + $0x20] sm:$0xf]
  %v77 = vld [vmem:[%s1 + $0x24] sm:$0xf]
  %v78 = vld [vmem:[%s1 + $0x28] sm:$0xf]
  %v79 = vld [vmem:[%s1 + $0x2c] sm:$0xf]
  %v80 = vld [vmem:[%s1 + $0x30] sm:$0xf]
  %v81 = vld [vmem:[%s1 + $0x34] sm:$0xf]
  %v82 = vld [vmem:[%s1 + $0x38] sm:$0xf]
  %v83 = vld [vmem:[%s1 + $0x3c] sm:$0xf]
  %v84 = vld [vmem:[%s1 + $0x40] sm:$0xf]
  %v85 = vld [vmem:[%s1 + $0x44] sm:$0xf]
  %v86 = vld [vmem:[%s1 + $0x48] sm:$0xf]
  %v87 = vld [vmem:[%s1 + $0x4c] sm:$0xf]
  %v88 = vld [vmem:[%s1 + $0x50] sm:$0xf]
  %v89 = vld [vmem:[%s1 + $0x54] sm:$0xf]
  %v90 = vld [vmem:[%s1 + $0x58] sm:$0xf]
  %v91 = vld [vmem:[%s1 + $0x5c] sm:$0xf]
  %v92 = vld [vmem:[%s1 + $0x60] sm:$0xf]
  %v93 = vld [vmem:[%s1 + $0x64] sm:$0xf]
  %v94 = vld [vmem:[%s1 + $0x68] sm:$0xf]
  %v95 = vld [vmem:[%s1 + $0x6c] sm:$0xf]
  %v96 = vld [vmem:[%s1 + $0x70] sm:$0xf]
  %v97 = vld [vmem:[%s1 + $0x74] sm:$0xf]
  %v98 = vld [vmem:[%s1 + $0x78] sm:$0xf]
  %v99 = vld [vmem:[%s1 + $0x7c] sm:$0xf]
  %v132 = vunpack.c.l.b16 %v68
  %v133 = vunpack.c.l.b16 %v69
  %v134 = vunpack.c.l.b16 %v70
  %v135 = vunpack.c.l.b16 %v71
  %v136 = vunpack.c.l.b16 %v72
  %v137 = vunpack.c.l.b16 %v73
  %v138 = vunpack.c.l.b16 %v74
  %v139 = vunpack.c.l.b16 %v75
  %v140 = vunpack.c.l.b16 %v76
  %v141 = vunpack.c.l.b16 %v77
  %v142 = vunpack.c.l.b16 %v78
  %v143 = vunpack.c.l.b16 %v79
  %v144 = vunpack.c.l.b16 %v80
  %v145 = vunpack.c.l.b16 %v81
  %v146 = vunpack.c.l.b16 %v82
  %v147 = vunpack.c.l.b16 %v83
  %v148 = vunpack.c.l.b16 %v84
  %v149 = vunpack.c.l.b16 %v85
  %v150 = vunpack.c.l.b16 %v86
  %v151 = vunpack.c.l.b16 %v87
  %v152 = vunpack.c.l.b16 %v88
  %v153 = vunpack.c.l.b16 %v89
  %v154 = vunpack.c.l.b16 %v90
  %v155 = vunpack.c.l.b16 %v91
  %v156 = vunpack.c.l.b16 %v92
  %v157 = vunpack.c.l.b16 %v93
  %v158 = vunpack.c.l.b16 %v94
  %v159 = vunpack.c.l.b16 %v95
  %v160 = vunpack.c.l.b16 %v96
  %v161 = vunpack.c.l.b16 %v97
  %v162 = vunpack.c.l.b16 %v98
  %v163 = vunpack.c.l.b16 %v99
  %v164 = vpack.c.b16 %v133, %v132
  %v165 = vpack.c.b16 %v135, %v134
  %v166 = vpack.c.b16 %v137, %v136
  %v167 = vpack.c.b16 %v139, %v138
  %v168 = vpack.c.b16 %v141, %v140
  %v169 = vpack.c.b16 %v143, %v142
  %v170 = vpack.c.b16 %v145, %v144
  %v171 = vpack.c.b16 %v147, %v146
  %v172 = vpack.c.b16 %v149, %v148
  %v173 = vpack.c.b16 %v151, %v150
  %v174 = vpack.c.b16 %v153, %v152
  %v175 = vpack.c.b16 %v155, %v154
  %v176 = vpack.c.b16 %v157, %v156
  %v177 = vpack.c.b16 %v159, %v158
  %v178 = vpack.c.b16 %v161, %v160
  %v179 = vpack.c.b16 %v163, %v162
  %196 = vmatprep.subr.bf16.mxu0 0
  %197 = vmatpush1.bf16.msra.mxu0 %v171
  %198 = vmatprep.subr.bf16.mxu0 0
  %199 = vmatpush1.bf16.msra.mxu0 %v170
  %200 = vmatprep.subr.bf16.mxu0 0
  %201 = vmatpush1.bf16.msra.mxu0 %v169
  %202 = vmatprep.subr.bf16.mxu0 0
  %203 = vmatpush1.bf16.msra.mxu0 %v168
  %204 = vmatprep.subr.bf16.mxu0 0
  %205 = vmatpush1.bf16.msra.mxu0 %v167
  %206 = vmatprep.subr.bf16.mxu0 0
  %207 = vmatpush1.bf16.msra.mxu0 %v166
  %208 = vmatprep.subr.bf16.mxu0 0
  %209 = vmatpush1.bf16.msra.mxu0 %v165
  %210 = vmatprep.subr.bf16.mxu0 0
  %211 = vmatpush1.bf16.msra.mxu0 %v164
  %212 = vmatprep.subr.bf16.mxu0 0
  %213 = vmatpush2.bf16.msra.mxu0 %v179
  %214 = vmatprep.subr.bf16.mxu0 0
  %215 = vmatpush2.bf16.msra.mxu0 %v178
  %216 = vmatprep.subr.bf16.mxu0 0
  %217 = vmatpush2.bf16.msra.mxu0 %v177
  %218 = vmatprep.subr.bf16.mxu0 0
  %219 = vmatpush2.bf16.msra.mxu0 %v176
  %220 = vmatprep.subr.bf16.mxu0 0
  %221 = vmatpush2.bf16.msra.mxu0 %v175
  %222 = vmatprep.subr.bf16.mxu0 0
  %223 = vmatpush2.bf16.msra.mxu0 %v174
  %224 = vmatprep.subr.bf16.mxu0 0
  %225 = vmatpush2.bf16.msra.mxu0 %v173
  %226 = vmatprep.subr.bf16.mxu0 0
  %227 = vmatpush2.bf16.msra.mxu0 %v172
  %228 = vmatprep.mubr.bf16.mxu0 %v65
  %229 = vmatmul.mubr.bf16.gmra.mxu0 %v64
  %v230 = vpop.f32.mrf.mxu0
  %v231 = vadd.f32 0.0, %v230
  %v232 = vpop.f32.mrf.mxu0
  %v233 = vpop.f32.mrf.mxu0
  %v234 = vadd.f32 0.0, %v233
  %v235 = vpop.f32.mrf.mxu0
  %236 = vmatprep.mubr.bf16.mxu0 %v67
  %237 = vmatmul.mubr.bf16.gmra.mxu0 %v66
  %v238 = vpop.f32.mrf.mxu0
  %v239 = vadd.f32 0.0, %v238
  %v240 = vpop.f32.mrf.mxu0
  %v241 = vpop.f32.mrf.mxu0
  %v242 = vadd.f32 0.0, %v241
  %v243 = vpop.f32.mrf.mxu0
  %244 = vdwg.mxu0
  %v245 = vadd.f32 %v60, %v231
  %v246 = vadd.f32 %v61, %v234
  %v247 = vadd.f32 %v62, %v239
  %v248 = vadd.f32 %v63, %v242
  %vm249 = vcmask 261120
  %250 = vst.msk [vmem:[#allocation2] sm:$0xff] %vm249, %v245
  %251 = vst.msk [vmem:[#allocation2 + $0x8] sm:$0xff] %vm249, %v246
  %252 = vst.msk [vmem:[#allocation2 + $0x10] sm:$0xff] %vm249, %v247
  %253 = vst.msk [vmem:[#allocation2 + $0x18] sm:$0xff] %vm249, %v248
  // Predicated region
  $region18: #{unet_forward.43} parent=0 // pred_check
    %p254 = pneg %p15
  $region19: #{unet_forward.43} parent=0 // pred_check_branch
    %256 = sbr.rel (%p254) target = $region21
  $region20: #{unet_forward.43} parent=0 // pred_region
    %v257 = vld [vmem:[#allocation2] sm:$0xff]
    %v258 = vld [vmem:[#allocation2 + $0x8] sm:$0xff]
    %v259 = vld [vmem:[#allocation2 + $0x10] sm:$0xff]
    %v260 = vld [vmem:[#allocation2 + $0x18] sm:$0xff]
    %v261 = vld [vmem:[%s2] sm:$0x1]
    %v263 = vlaneseq
    %v264 = vshrl.u32 %v263, 7
    %v265 = vsub.s32 0, %v264
    %v266 = vrot.slane %v261, %v265
    %v268 = vadd.f32 %v257, %v266
    %v269 = vadd.f32 %v258, %v266
    %v270 = vadd.f32 %v259, %v266
    %v271 = vadd.f32 %v260, %v266
    %272 = vst.msk [vmem:[%s3] sm:$0xff] %vm249, %v268
    %273 = vst.msk [vmem:[%s3 + $0x8] sm:$0xff] %vm249, %v269
    %274 = vst.msk [vmem:[%s3 + $0x10] sm:$0xff] %vm249, %v270
    %275 = vst.msk [vmem:[%s3 + $0x18] sm:$0xff] %vm249, %v271
  $region21: #{unet_forward.43} parent=0 // pred_fallthru
    _
  // Predicated region
  $region22: #{unet_forward.43} parent=0 // pred_check
    _
  $region23: #{unet_forward.43} parent=0 // pred_check_branch
    %277 = sbr.rel (0) target = $region25
  $region24: #{unet_forward.43} parent=0 // pred_region
    _
  $region25: #{unet_forward.43} parent=0 // pred_fallthru
    _
  // Predicated region
  $region26: #{unet_forward.43} parent=0 // pred_check
    _
  $region27: #{unet_forward.43} parent=0 // pred_check_branch
    %279 = sbr.rel (0) target = $region29
  $region28: #{unet_forward.43} parent=0 // pred_region
    _
  $region29: #{unet_forward.43} parent=0 // pred_fallthru
    _

// kernel: unet_forward.47
$region0: #{unet_forward.47}
  #allocation0 [shape = 'u32[]', space=smem, size = 0x4, offset = 0x4, fixed_abs, tag = 'smem constant byte address 0x4 - core index']
  #allocation1 [shape = 'u32[144,128]{1,0:T(1,128)}', space=vmem, size = 0x12000, scoped, tag = 'internal scratch']
  %s0 = inlined_call_operand.vmem [shape: f32[8,64], index: 0, kind: input, shape index: {}]
  %s1 = inlined_call_operand.vmem [shape: f32[1,64], index: 1, kind: output, shape index: {0}]
  %s2 = inlined_call_operand.vmem [shape: f32[1,64], index: 2, kind: output, shape index: {1}]
  %3 = xla_tuple %s1, %s2
  %s4 = sld [smem:[#allocation0]]
  $region26: #{unet_forward.47} parent=0
    _
  %s6 = ssub.s32 1, %s4
  %s7 = scalar_select 0, %s6, %s4
  // Predicated region
  $region2: #{unet_forward.47} parent=0 // pred_check
    _
  $region3: #{unet_forward.47} parent=0 // pred_check_branch
    %9 = sbr.rel (0) target = $region5
  $region4: #{unet_forward.47} parent=0 // pred_region
    _
  $region5: #{unet_forward.47} parent=0 // pred_fallthru
    _
  %p10 = scmp.eq.s32.totalorder 0, 0
  // Predicated region
  $region6: #{unet_forward.47} parent=0 // pred_check
    %p11 = pneg %p10
  $region7: #{unet_forward.47} parent=0 // pred_check_branch
    %13 = sbr.rel (%p11) target = $region9
  $region8: #{unet_forward.47} parent=0 // pred_region
    %vm14 = vcmask 516096
    %15 = vst.msk [vmem:[%s1] sm:$0x1] %vm14, 0.0
    %16 = vst.msk [vmem:[%s2] sm:$0x1] %vm14, 0.0
  $region9: #{unet_forward.47} parent=0 // pred_fallthru
    _
  %v17 = vld [vmem:[%s0] sm:$0xff]
  %v18 = vld [vmem:[%s1] sm:$0x1]
  %vm19 = vcmask 523264
  %v20 = vsel %vm19, %v17, 0.0
  %v21 = vrot.slane %v20, 4
  %v22 = vadd.f32 %v20, %v21
  %v23 = vrot.slane %v22, 2
  %v24 = vadd.f32 %v22, %v23
  %v25 = vrot.slane %v24, 1
  %v26 = vadd.f32 %v24, %v25
  %v27 = vadd.f32 %v18, %v26
  %vm28 = vcmask 516096
  %29 = vst.msk [vmem:[%s1] sm:$0x1] %vm28, %v27
  %v30 = vld [vmem:[%s2] sm:$0x1]
  %v31 = vmul.f32 %v17, %v17
  %v32 = vsel %vm19, %v31, 0.0
  %v33 = vrot.slane %v32, 4
  %v34 = vadd.f32 %v32, %v33
  %v35 = vrot.slane %v34, 2
  %v36 = vadd.f32 %v34, %v35
  %v37 = vrot.slane %v36, 1
  %v38 = vadd.f32 %v36, %v37
  %v39 = vadd.f32 %v30, %v38
  %40 = vst.msk [vmem:[%s2] sm:$0x1] %vm28, %v39
  // Predicated region
  $region10: #{unet_forward.47} parent=0 // pred_check
    _
  $region11: #{unet_forward.47} parent=0 // pred_check_branch
    %42 = sbr.rel (0) target = $region13
  $region12: #{unet_forward.47} parent=0 // pred_region
    _
  $region13: #{unet_forward.47} parent=0 // pred_fallthru
    _
  // Predicated region
  $region14: #{unet_forward.47} parent=0 // pred_check
    _
  $region15: #{unet_forward.47} parent=0 // pred_check_branch
    %44 = sbr.rel (0) target = $region17
  $region16: #{unet_forward.47} parent=0 // pred_region
    _
  $region17: #{unet_forward.47} parent=0 // pred_fallthru
    _
  // Predicated region
  $region18: #{unet_forward.47} parent=0 // pred_check
    _
  $region19: #{unet_forward.47} parent=0 // pred_check_branch
    %46 = sbr.rel (0) target = $region21
  $region20: #{unet_forward.47} parent=0 // pred_region
    _
  $region21: #{unet_forward.47} parent=0 // pred_fallthru
    _
  // Predicated region
  $region22: #{unet_forward.47} parent=0 // pred_check
    _
  $region23: #{unet_forward.47} parent=0 // pred_check_branch
    %48 = sbr.rel (0) target = $region25
  $region24: #{unet_forward.47} parent=0 // pred_region
    _
  $region25: #{unet_forward.47} parent=0 // pred_fallthru
    _

// kernel: unet_forward.48
$region0: #{unet_forward.48}
  #allocation0 [shape = 'u32[]', space=smem, size = 0x4, offset = 0x4, fixed_abs, tag = 'smem constant byte address 0x4 - core index']
  #allocation1 [shape = 'u32[144,128]{1,0:T(1,128)}', space=vmem, size = 0x12000, scoped, tag = 'internal scratch']
  %s0 = inlined_call_operand.vmem [shape: f32[8,64], index: 0, kind: input, shape index: {}]
  %s1 = inlined_call_operand.vmem [shape: f32[1,64], index: 1, kind: input, shape index: {}]
  %s2 = inlined_call_operand.vmem [shape: f32[1,64], index: 2, kind: input, shape index: {}]
  %s3 = inlined_call_operand.vmem [shape: f32[8,64], index: 3, kind: output, shape index: {}]
  %s4 = sld [smem:[#allocation0]]
  $region22: #{unet_forward.48} parent=0
    _
  %s6 = ssub.s32 1, %s4
  %s7 = scalar_select 0, %s6, %s4
  // Predicated region
  $region2: #{unet_forward.48} parent=0 // pred_check
    _
  $region3: #{unet_forward.48} parent=0 // pred_check_branch
    %9 = sbr.rel (0) target = $region5
  $region4: #{unet_forward.48} parent=0 // pred_region
    _
  $region5: #{unet_forward.48} parent=0 // pred_fallthru
    _
  // Predicated region
  $region6: #{unet_forward.48} parent=0 // pred_check
    _
  $region7: #{unet_forward.48} parent=0 // pred_check_branch
    %11 = sbr.rel (0) target = $region9
  $region8: #{unet_forward.48} parent=0 // pred_region
    _
  $region9: #{unet_forward.48} parent=0 // pred_fallthru
    _
  // Predicated region
  $region10: #{unet_forward.48} parent=0 // pred_check
    _
  $region11: #{unet_forward.48} parent=0 // pred_check_branch
    %13 = sbr.rel (0) target = $region13
  $region12: #{unet_forward.48} parent=0 // pred_region
    _
  $region13: #{unet_forward.48} parent=0 // pred_fallthru
    _
  %v14 = vld [vmem:[%s0] sm:$0xff]
  %v15 = vld [vmem:[%s1] sm:$0x1]
  %v17 = vlaneseq
  %v18 = vshrl.u32 %v17, 7
  %v19 = vsub.s32 0, %v18
  %v20 = vrot.slane %v15, %v19
  %v22 = vmul.f32 %v14, %v20
  %v23 = vld [vmem:[%s2] sm:$0x1]
  %v25 = vlaneseq
  %v26 = vshrl.u32 %v25, 7
  %v27 = vsub.s32 0, %v26
  %v28 = vrot.slane %v23, %v27
  %v30 = vadd.f32 %v22, %v28
  %vm31 = vcmask 523264
  %32 = vst.msk [vmem:[%s3] sm:$0xff] %vm31, %v30
  // Predicated region
  $region14: #{unet_forward.48} parent=0 // pred_check
    _
  $region15: #{unet_forward.48} parent=0 // pred_check_branch
    %34 = sbr.rel (0) target = $region17
  $region16: #{unet_forward.48} parent=0 // pred_region
    _
  $region17: #{unet_forward.48} parent=0 // pred_fallthru
    _
  // Predicated region
  $region18: #{unet_forward.48} parent=0 // pred_check
    _
  $region19: #{unet_forward.48} parent=0 // pred_check_branch
    %36 = sbr.rel (0) target = $region21
  $region20: #{unet_forward.48} parent=0 // pred_region
    _
  $region21: #{unet_forward.48} parent=0 // pred_fallthru
    _

// kernel: unet_forward.46
$region0: #{unet_forward.46}
  #allocation0 [shape = 'u32[]', space=smem, size = 0x4, offset = 0x4, fixed_abs, tag = 'smem constant byte address 0x4 - core index']
  #allocation1 [shape = 'u32[144,128]{1,0:T(1,128)}', space=vmem, size = 0x12000, scoped, tag = 'internal scratch']
  #allocation2 [shape = 'f32[8,64]{1,0:T(8,128)}', space=vmem, size = 0x1000, scoped, tag = 'scratch operand']
  %s0 = inlined_call_operand.vmem [shape: bf16[8,512], index: 0, kind: input, shape index: {}]
  %s1 = inlined_call_operand.vmem [shape: bf16[512,64], index: 1, kind: input, shape index: {}]
  %s2 = inlined_call_operand.vmem [shape: f32[1,64], index: 2, kind: input, shape index: {}]
  %s3 = inlined_call_operand.vmem [shape: f32[8,64], index: 3, kind: output, shape index: {}]
  %s4 = sld [smem:[#allocation0]]
  $region30: #{unet_forward.46} parent=0
    _
  %s6 = ssub.s32 1, %s4
  %s7 = scalar_select 0, %s6, %s4
  // Predicated region
  $region2: #{unet_forward.46} parent=0 // pred_check
    _
  $region3: #{unet_forward.46} parent=0 // pred_check_branch
    %9 = sbr.rel (0) target = $region5
  $region4: #{unet_forward.46} parent=0 // pred_region
    _
  $region5: #{unet_forward.46} parent=0 // pred_fallthru
    _
  // Predicated region
  $region6: #{unet_forward.46} parent=0 // pred_check
    _
  $region7: #{unet_forward.46} parent=0 // pred_check_branch
    %11 = sbr.rel (0) target = $region9
  $region8: #{unet_forward.46} parent=0 // pred_region
    _
  $region9: #{unet_forward.46} parent=0 // pred_fallthru
    _
  // Predicated region
  $region10: #{unet_forward.46} parent=0 // pred_check
    _
  $region11: #{unet_forward.46} parent=0 // pred_check_branch
    %13 = sbr.rel (0) target = $region13
  $region12: #{unet_forward.46} parent=0 // pred_region
    _
  $region13: #{unet_forward.46} parent=0 // pred_fallthru
    _
  %p15 = scmp.eq.s32.totalorder 0, 0
  // Predicated region
  $region14: #{unet_forward.46} parent=0 // pred_check
    %p16 = pneg %p15
  $region15: #{unet_forward.46} parent=0 // pred_check_branch
    %18 = sbr.rel (%p16) target = $region17
  $region16: #{unet_forward.46} parent=0 // pred_region
    %vm19 = vcmask 523264
    %20 = vst.msk [vmem:[#allocation2] sm:$0xff] %vm19, 0.0
  $region17: #{unet_forward.46} parent=0 // pred_fallthru
    _
  %v21 = vld [vmem:[%s0] sm:$0xff]
  %v22 = vld [vmem:[%s0 + $0x8] sm:$0xff]
  %v23 = vunpack.c.l.bf16 %v21
  %v24 = vunpack.c.h.bf16 %v21
  %v25 = vunpack.c.l.bf16 %v22
  %v26 = vunpack.c.h.bf16 %v22
  %vm27 = vcmp.gt.f32.partialorder %v23, 0.0
  %vm28 = vcmp.gt.f32.partialorder %v24, 0.0
  %vm29 = vcmp.gt.f32.partialorder %v25, 0.0
  %vm30 = vcmp.gt.f32.partialorder %v26, 0.0
  %v31 = vmul.f32 %v23, 0.2
  %v32 = vmul.f32 %v24, 0.2
  %v33 = vmul.f32 %v25, 0.2
  %v34 = vmul.f32 %v26, 0.2
  %v35 = vsel %vm27, %v23, %v31
  %v36 = vsel %vm28, %v24, %v32
  %v37 = vsel %vm29, %v25, %v33
  %v38 = vsel %vm30, %v26, %v34
  %v39 = vld [vmem:[#allocation2] sm:$0xff]
  %v40 = vpack.c.bf16 %v35, %v35
  %v41 = vpack.c.bf16 %v36, %v36
  %v42 = vpack.c.bf16 %v37, %v37
  %v43 = vpack.c.bf16 %v38, %v38
  %v44 = vld [vmem:[%s1] sm:$0xf]
  %v45 = vld [vmem:[%s1 + $0x4] sm:$0xf]
  %v46 = vld [vmem:[%s1 + $0x8] sm:$0xf]
  %v47 = vld [vmem:[%s1 + $0xc] sm:$0xf]
  %v48 = vld [vmem:[%s1 + $0x10] sm:$0xf]
  %v49 = vld [vmem:[%s1 + $0x14] sm:$0xf]
  %v50 = vld [vmem:[%s1 + $0x18] sm:$0xf]
  %v51 = vld [vmem:[%s1 + $0x1c] sm:$0xf]
  %v52 = vld [vmem:[%s1 + $0x20] sm:$0xf]
  %v53 = vld [vmem:[%s1 + $0x24] sm:$0xf]
  %v54 = vld [vmem:[%s1 + $0x28] sm:$0xf]
  %v55 = vld [vmem:[%s1 + $0x2c] sm:$0xf]
  %v56 = vld [vmem:[%s1 + $0x30] sm:$0xf]
  %v57 = vld [vmem:[%s1 + $0x34] sm:$0xf]
  %v58 = vld [vmem:[%s1 + $0x38] sm:$0xf]
  %v59 = vld [vmem:[%s1 + $0x3c] sm:$0xf]
  %v60 = vld [vmem:[%s1 + $0x40] sm:$0xf]
  %v61 = vld [vmem:[%s1 + $0x44] sm:$0xf]
  %v62 = vld [vmem:[%s1 + $0x48] sm:$0xf]
  %v63 = vld [vmem:[%s1 + $0x4c] sm:$0xf]
  %v64 = vld [vmem:[%s1 + $0x50] sm:$0xf]
  %v65 = vld [vmem:[%s1 + $0x54] sm:$0xf]
  %v66 = vld [vmem:[%s1 + $0x58] sm:$0xf]
  %v67 = vld [vmem:[%s1 + $0x5c] sm:$0xf]
  %v68 = vld [vmem:[%s1 + $0x60] sm:$0xf]
  %v69 = vld [vmem:[%s1 + $0x64] sm:$0xf]
  %v70 = vld [vmem:[%s1 + $0x68] sm:$0xf]
  %v71 = vld [vmem:[%s1 + $0x6c] sm:$0xf]
  %v72 = vld [vmem:[%s1 + $0x70] sm:$0xf]
  %v73 = vld [vmem:[%s1 + $0x74] sm:$0xf]
  %v74 = vld [vmem:[%s1 + $0x78] sm:$0xf]
  %v75 = vld [vmem:[%s1 + $0x7c] sm:$0xf]
  %v76 = vld [vmem:[%s1 + $0x80] sm:$0xf]
  %v77 = vld [vmem:[%s1 + $0x84] sm:$0xf]
  %v78 = vld [vmem:[%s1 + $0x88] sm:$0xf]
  %v79 = vld [vmem:[%s1 + $0x8c] sm:$0xf]
  %v80 = vld [vmem:[%s1 + $0x90] sm:$0xf]
  %v81 = vld [vmem:[%s1 + $0x94] sm:$0xf]
  %v82 = vld [vmem:[%s1 + $0x98] sm:$0xf]
  %v83 = vld [vmem:[%s1 + $0x9c] sm:$0xf]
  %v84 = vld [vmem:[%s1 + $0xa0] sm:$0xf]
  %v85 = vld [vmem:[%s1 + $0xa4] sm:$0xf]
  %v86 = vld [vmem:[%s1 + $0xa8] sm:$0xf]
  %v87 = vld [vmem:[%s1 + $0xac] sm:$0xf]
  %v88 = vld [vmem:[%s1 + $0xb0] sm:$0xf]
  %v89 = vld [vmem:[%s1 + $0xb4] sm:$0xf]
  %v90 = vld [vmem:[%s1 + $0xb8] sm:$0xf]
  %v91 = vld [vmem:[%s1 + $0xbc] sm:$0xf]
  %v92 = vld [vmem:[%s1 + $0xc0] sm:$0xf]
  %v93 = vld [vmem:[%s1 + $0xc4] sm:$0xf]
  %v94 = vld [vmem:[%s1 + $0xc8] sm:$0xf]
  %v95 = vld [vmem:[%s1 + $0xcc] sm:$0xf]
  %v96 = vld [vmem:[%s1 + $0xd0] sm:$0xf]
  %v97 = vld [vmem:[%s1 + $0xd4] sm:$0xf]
  %v98 = vld [vmem:[%s1 + $0xd8] sm:$0xf]
  %v99 = vld [vmem:[%s1 + $0xdc] sm:$0xf]
  %v100 = vld [vmem:[%s1 + $0xe0] sm:$0xf]
  %v101 = vld [vmem:[%s1 + $0xe4] sm:$0xf]
  %v102 = vld [vmem:[%s1 + $0xe8] sm:$0xf]
  %v103 = vld [vmem:[%s1 + $0xec] sm:$0xf]
  %v104 = vld [vmem:[%s1 + $0xf0] sm:$0xf]
  %v105 = vld [vmem:[%s1 + $0xf4] sm:$0xf]
  %v106 = vld [vmem:[%s1 + $0xf8] sm:$0xf]
  %v107 = vld [vmem:[%s1 + $0xfc] sm:$0xf]
  %v172 = vunpack.c.l.b16 %v44
  %v173 = vunpack.c.l.b16 %v45
  %v174 = vunpack.c.l.b16 %v46
  %v175 = vunpack.c.l.b16 %v47
  %v176 = vunpack.c.l.b16 %v48
  %v177 = vunpack.c.l.b16 %v49
  %v178 = vunpack.c.l.b16 %v50
  %v179 = vunpack.c.l.b16 %v51
  %v180 = vunpack.c.l.b16 %v52
  %v181 = vunpack.c.l.b16 %v53
  %v182 = vunpack.c.l.b16 %v54
  %v183 = vunpack.c.l.b16 %v55
  %v184 = vunpack.c.l.b16 %v56
  %v185 = vunpack.c.l.b16 %v57
  %v186 = vunpack.c.l.b16 %v58
  %v187 = vunpack.c.l.b16 %v59
  %v188 = vunpack.c.l.b16 %v60
  %v189 = vunpack.c.l.b16 %v61
  %v190 = vunpack.c.l.b16 %v62
  %v191 = vunpack.c.l.b16 %v63
  %v192 = vunpack.c.l.b16 %v64
  %v193 = vunpack.c.l.b16 %v65
  %v194 = vunpack.c.l.b16 %v66
  %v195 = vunpack.c.l.b16 %v67
  %v196 = vunpack.c.l.b16 %v68
  %v197 = vunpack.c.l.b16 %v69
  %v198 = vunpack.c.l.b16 %v70
  %v199 = vunpack.c.l.b16 %v71
  %v200 = vunpack.c.l.b16 %v72
  %v201 = vunpack.c.l.b16 %v73
  %v202 = vunpack.c.l.b16 %v74
  %v203 = vunpack.c.l.b16 %v75
  %v204 = vunpack.c.l.b16 %v76
  %v205 = vunpack.c.l.b16 %v77
  %v206 = vunpack.c.l.b16 %v78
  %v207 = vunpack.c.l.b16 %v79
  %v208 = vunpack.c.l.b16 %v80
  %v209 = vunpack.c.l.b16 %v81
  %v210 = vunpack.c.l.b16 %v82
  %v211 = vunpack.c.l.b16 %v83
  %v212 = vunpack.c.l.b16 %v84
  %v213 = vunpack.c.l.b16 %v85
  %v214 = vunpack.c.l.b16 %v86
  %v215 = vunpack.c.l.b16 %v87
  %v216 = vunpack.c.l.b16 %v88
  %v217 = vunpack.c.l.b16 %v89
  %v218 = vunpack.c.l.b16 %v90
  %v219 = vunpack.c.l.b16 %v91
  %v220 = vunpack.c.l.b16 %v92
  %v221 = vunpack.c.l.b16 %v93
  %v222 = vunpack.c.l.b16 %v94
  %v223 = vunpack.c.l.b16 %v95
  %v224 = vunpack.c.l.b16 %v96
  %v225 = vunpack.c.l.b16 %v97
  %v226 = vunpack.c.l.b16 %v98
  %v227 = vunpack.c.l.b16 %v99
  %v228 = vunpack.c.l.b16 %v100
  %v229 = vunpack.c.l.b16 %v101
  %v230 = vunpack.c.l.b16 %v102
  %v231 = vunpack.c.l.b16 %v103
  %v232 = vunpack.c.l.b16 %v104
  %v233 = vunpack.c.l.b16 %v105
  %v234 = vunpack.c.l.b16 %v106
  %v235 = vunpack.c.l.b16 %v107
  %v236 = vpack.c.b16 %v173, %v172
  %v237 = vpack.c.b16 %v175, %v174
  %v238 = vpack.c.b16 %v177, %v176
  %v239 = vpack.c.b16 %v179, %v178
  %v240 = vpack.c.b16 %v181, %v180
  %v241 = vpack.c.b16 %v183, %v182
  %v242 = vpack.c.b16 %v185, %v184
  %v243 = vpack.c.b16 %v187, %v186
  %v244 = vpack.c.b16 %v189, %v188
  %v245 = vpack.c.b16 %v191, %v190
  %v246 = vpack.c.b16 %v193, %v192
  %v247 = vpack.c.b16 %v195, %v194
  %v248 = vpack.c.b16 %v197, %v196
  %v249 = vpack.c.b16 %v199, %v198
  %v250 = vpack.c.b16 %v201, %v200
  %v251 = vpack.c.b16 %v203, %v202
  %v252 = vpack.c.b16 %v205, %v204
  %v253 = vpack.c.b16 %v207, %v206
  %v254 = vpack.c.b16 %v209, %v208
  %v255 = vpack.c.b16 %v211, %v210
  %v256 = vpack.c.b16 %v213, %v212
  %v257 = vpack.c.b16 %v215, %v214
  %v258 = vpack.c.b16 %v217, %v216
  %v259 = vpack.c.b16 %v219, %v218
  %v260 = vpack.c.b16 %v221, %v220
  %v261 = vpack.c.b16 %v223, %v222
  %v262 = vpack.c.b16 %v225, %v224
  %v263 = vpack.c.b16 %v227, %v226
  %v264 = vpack.c.b16 %v229, %v228
  %v265 = vpack.c.b16 %v231, %v230
  %v266 = vpack.c.b16 %v233, %v232
  %v267 = vpack.c.b16 %v235, %v234
  %300 = vmatprep.subr.bf16.mxu0 0
  %301 = vmatpush1.bf16.msra.mxu0 %v243
  %302 = vmatprep.subr.bf16.mxu0 0
  %303 = vmatpush1.bf16.msra.mxu0 %v242
  %304 = vmatprep.subr.bf16.mxu0 0
  %305 = vmatpush1.bf16.msra.mxu0 %v241
  %306 = vmatprep.subr.bf16.mxu0 0
  %307 = vmatpush1.bf16.msra.mxu0 %v240
  %308 = vmatprep.subr.bf16.mxu0 0
  %309 = vmatpush1.bf16.msra.mxu0 %v239
  %310 = vmatprep.subr.bf16.mxu0 0
  %311 = vmatpush1.bf16.msra.mxu0 %v238
  %312 = vmatprep.subr.bf16.mxu0 0
  %313 = vmatpush1.bf16.msra.mxu0 %v237
  %314 = vmatprep.subr.bf16.mxu0 0
  %315 = vmatpush1.bf16.msra.mxu0 %v236
  %316 = vmatprep.subr.bf16.mxu0 0
  %317 = vmatpush2.bf16.msra.mxu0 %v251
  %318 = vmatprep.subr.bf16.mxu0 0
  %319 = vmatpush2.bf16.msra.mxu0 %v250
  %320 = vmatprep.subr.bf16.mxu0 0
  %321 = vmatpush2.bf16.msra.mxu0 %v249
  %322 = vmatprep.subr.bf16.mxu0 0
  %323 = vmatpush2.bf16.msra.mxu0 %v248
  %324 = vmatprep.subr.bf16.mxu0 0
  %325 = vmatpush2.bf16.msra.mxu0 %v247
  %326 = vmatprep.subr.bf16.mxu0 0
  %327 = vmatpush2.bf16.msra.mxu0 %v246
  %328 = vmatprep.subr.bf16.mxu0 0
  %329 = vmatpush2.bf16.msra.mxu0 %v245
  %330 = vmatprep.subr.bf16.mxu0 0
  %331 = vmatpush2.bf16.msra.mxu0 %v244
  %332 = vmatprep.mubr.bf16.mxu0 %v41
  %333 = vmatmul.mubr.bf16.gmra.mxu0 %v40
  %v334 = vpop.f32.mrf.mxu0
  %v335 = vadd.f32 0.0, %v334
  %v336 = vpop.f32.mrf.mxu0
  %v337 = vpop.f32.mrf.mxu0
  %v338 = vpop.f32.mrf.mxu0
  %339 = vdwg.mxu0
  %340 = vmatprep.subr.bf16.mxu0 0
  %341 = vmatpush1.bf16.msra.mxu0 %v259
  %342 = vmatprep.subr.bf16.mxu0 0
  %343 = vmatpush1.bf16.msra.mxu0 %v258
  %344 = vmatprep.subr.bf16.mxu0 0
  %345 = vmatpush1.bf16.msra.mxu0 %v257
  %346 = vmatprep.subr.bf16.mxu0 0
  %347 = vmatpush1.bf16.msra.mxu0 %v256
  %348 = vmatprep.subr.bf16.mxu0 0
  %349 = vmatpush1.bf16.msra.mxu0 %v255
  %350 = vmatprep.subr.bf16.mxu0 0
  %351 = vmatpush1.bf16.msra.mxu0 %v254
  %352 = vmatprep.subr.bf16.mxu0 0
  %353 = vmatpush1.bf16.msra.mxu0 %v253
  %354 = vmatprep.subr.bf16.mxu0 0
  %355 = vmatpush1.bf16.msra.mxu0 %v252
  %356 = vmatprep.subr.bf16.mxu0 0
  %357 = vmatpush2.bf16.msra.mxu0 %v267
  %358 = vmatprep.subr.bf16.mxu0 0
  %359 = vmatpush2.bf16.msra.mxu0 %v266
  %360 = vmatprep.subr.bf16.mxu0 0
  %361 = vmatpush2.bf16.msra.mxu0 %v265
  %362 = vmatprep.subr.bf16.mxu0 0
  %363 = vmatpush2.bf16.msra.mxu0 %v264
  %364 = vmatprep.subr.bf16.mxu0 0
  %365 = vmatpush2.bf16.msra.mxu0 %v263
  %366 = vmatprep.subr.bf16.mxu0 0
  %367 = vmatpush2.bf16.msra.mxu0 %v262
  %368 = vmatprep.subr.bf16.mxu0 0
  %369 = vmatpush2.bf16.msra.mxu0 %v261
  %370 = vmatprep.subr.bf16.mxu0 0
  %371 = vmatpush2.bf16.msra.mxu0 %v260
  %372 = vmatprep.mubr.bf16.mxu0 %v43
  %373 = vmatmul.mubr.bf16.gmra.mxu0 %v42
  %v374 = vpop.f32.mrf.mxu0
  %v375 = vadd.f32 %v335, %v374
  %v376 = vpop.f32.mrf.mxu0
  %v377 = vpop.f32.mrf.mxu0
  %v378 = vpop.f32.mrf.mxu0
  %379 = vdwg.mxu0
  %v380 = vadd.f32 %v39, %v375
  %vm381 = vcmask 523264
  %382 = vst.msk [vmem:[#allocation2] sm:$0xff] %vm381, %v380
  // Predicated region
  $region18: #{unet_forward.46} parent=0 // pred_check
    %p383 = pneg %p15
  $region19: #{unet_forward.46} parent=0 // pred_check_branch
    %385 = sbr.rel (%p383) target = $region21
  $region20: #{unet_forward.46} parent=0 // pred_region
    %v386 = vld [vmem:[#allocation2] sm:$0xff]
    %v387 = vld [vmem:[%s2] sm:$0x1]
    %v389 = vlaneseq
    %v390 = vshrl.u32 %v389, 7
    %v391 = vsub.s32 0, %v390
    %v392 = vrot.slane %v387, %v391
    %v394 = vadd.f32 %v386, %v392
    %395 = vst.msk [vmem:[%s3] sm:$0xff] %vm381, %v394
  $region21: #{unet_forward.46} parent=0 // pred_fallthru
    _
  // Predicated region
  $region22: #{unet_forward.46} parent=0 // pred_check
    _
  $region23: #{unet_forward.46} parent=0 // pred_check_branch
    %397 = sbr.rel (0) target = $region25
  $region24: #{unet_forward.46} parent=0 // pred_region
    _
  $region25: #{unet_forward.46} parent=0 // pred_fallthru
    _
  // Predicated region
  $region26: #{unet_forward.46} parent=0 // pred_check
    _
  $region27: #{unet_forward.46} parent=0 // pred_check_branch
    %399 = sbr.rel (0) target = $region29
  $region28: #{unet_forward.46} parent=0 // pred_region
    _
  $region29: #{unet_forward.46} parent=0 // pred_fallthru
    _

// kernel: unet_forward.49
$region0: #{unet_forward.49}
  #allocation0 [shape = 'u32[]', space=smem, size = 0x4, offset = 0x4, fixed_abs, tag = 'smem constant byte address 0x4 - core index']
  #allocation1 [shape = 'u32[144,128]{1,0:T(1,128)}', space=vmem, size = 0x12000, scoped, tag = 'internal scratch']
  #allocation2 [shape = 'f32[8,64]{1,0:T(8,128)}', space=vmem, size = 0x1000, scoped, tag = 'scratch operand']
  %s0 = inlined_call_operand.vmem [shape: bf16[8,1024], index: 0, kind: input, shape index: {}]
  %s1 = inlined_call_operand.vmem [shape: bf16[1024,64], index: 1, kind: input, shape index: {}]
  %s2 = inlined_call_operand.vmem [shape: f32[1,64], index: 2, kind: input, shape index: {}]
  %s3 = inlined_call_operand.vmem [shape: f32[8,64], index: 3, kind: output, shape index: {}]
  %s4 = sld [smem:[#allocation0]]
  $region53: #{unet_forward.49} parent=0
    _
  %s6 = ssub.s32 1, %s4
  %s7 = scalar_select 0, %s6, %s4
  loop: start=0, step=1, limit=4
  $region2: #{unet_forward.49} parent=0 // loop_pre_header
    _
  $region3: #{unet_forward.49} parent=0 // loop_header
    %s9 = sphi 0, %s13
    %p10 = scmp.ge.s32.totalorder %s9, 4
    %s16 = sphi 0, %s35
    %s17 = sphi 0, %s31
    %s18 = sphi 0, %s27
    %s19 = sphi 0, %s16
    %s20 = sphi 0, %s17
    %s21 = sphi 0, %s18
    %s22 = sphi 0, %s19
    %s23 = sphi 0, %s20
    %s24 = sphi 0, %s21
    %s40 = sphi 0, %s42
    %s43 = sphi 0, %s40
    %s44 = sphi 0, %s43
    %s60 = sphi 0, %s44
    %s68 = sphi 0, %s70
    %s71 = sphi 0, %s68
    %s72 = sphi 0, %s71
    %s88 = sphi 0, %s72
    %s94 = sphi 0, %s96
    %s97 = sphi 0, %s94
    %s98 = sphi 0, %s97
    %s114 = sphi 0, %s98
    %s122 = sphi 0, %s124
    %s125 = sphi 0, %s122
    %s126 = sphi 0, %s125
    %s142 = sphi 0, %s126
  $region4: #{unet_forward.49} parent=0 // loop_header_branch
    %12 = sbr.rel (%p10) target = $region8
  $region5: #{unet_forward.49} parent=0 // loop_body
    %s14 = ssub.s32 %s9, 1
    %s15 = ssub.s32 %s9, 2
    %s25 = sadd.s32 1, %s18
    %p26 = scmp.ge.s32.totalorder %s25, 2
    %s27 = scalar_select %p26, 0, %s25
    %s28 = sadd.s32 1, %s17
    %s29 = scalar_select %p26, %s28, %s17
    %p30 = scmp.ge.s32.totalorder %s29, 1
    %s31 = scalar_select %p30, 0, %s29
    %s32 = sadd.s32 1, %s16
    %s33 = scalar_select %p30, %s32, %s16
    %p34 = scmp.ge.s32.totalorder %s33, 1
    %s35 = scalar_select %p34, 0, %s33
    %s36 = ssub.s32 %s16, %s35
    %s37 = ssub.s32 %s18, %s27
    %s38 = sor.u32 %s36, %s37
    %p39 = scmp.eq.s32.totalorder %s38, 0
    %s41 = sadd.s32 %s40, 1
    %s42 = scalar_select %p39, %s40, %s41
    %p45 = pneg %p39
    %p46 = scmp.eq.s32.totalorder %s9, 1
    %p47 = por %p45, %p46
    %p48 = scmp.ne.s32.totalorder %s40, %s43
    %p49 = scmp.eq.s32.totalorder %s9, 0
    %p50 = por %p48, %p49
    %p51 = scmp.ne.s32.totalorder %s40, %s43
    %p52 = scmp.eq.s32.totalorder %s14, 1
    %p53 = por %p51, %p52
    %p54 = scmp.ne.s32.totalorder %s43, %s44
    %p55 = scmp.eq.s32.totalorder %s14, 0
    %p56 = por %p54, %p55
    %p57 = scmp.ne.s32.totalorder %s43, %s44
    %p58 = scmp.eq.s32.totalorder %s15, 1
    %p59 = por %p57, %p58
    %p61 = scmp.ne.s32.totalorder %s44, %s60
    %p62 = scmp.eq.s32.totalorder %s15, 0
    %p63 = por %p61, %p62
    %s64 = ssub.s32 %s18, %s27
    %s65 = ssub.s32 %s17, %s31
    %s66 = sor.u32 %s64, %s65
    %p67 = scmp.eq.s32.totalorder %s66, 0
    %s69 = sadd.s32 %s68, 1
    %s70 = scalar_select %p67, %s68, %s69
    %p73 = pneg %p67
    %p74 = scmp.eq.s32.totalorder %s9, 1
    %p75 = por %p73, %p74
    %p76 = scmp.ne.s32.totalorder %s68, %s71
    %p77 = scmp.eq.s32.totalorder %s9, 0
    %p78 = por %p76, %p77
    %p79 = scmp.ne.s32.totalorder %s68, %s71
    %p80 = scmp.eq.s32.totalorder %s14, 1
    %p81 = por %p79, %p80
    %p82 = scmp.ne.s32.totalorder %s71, %s72
    %p83 = scmp.eq.s32.totalorder %s14, 0
    %p84 = por %p82, %p83
    %p85 = scmp.ne.s32.totalorder %s71, %s72
    %p86 = scmp.eq.s32.totalorder %s15, 1
    %p87 = por %p85, %p86
    %p89 = scmp.ne.s32.totalorder %s72, %s88
    %p90 = scmp.eq.s32.totalorder %s15, 0
    %p91 = por %p89, %p90
    %s92 = ssub.s32 %s17, %s31
    %p93 = scmp.eq.s32.totalorder %s92, 0
    %s95 = sadd.s32 %s94, 1
    %s96 = scalar_select %p93, %s94, %s95
    %p99 = pneg %p93
    %p100 = scmp.eq.s32.totalorder %s9, 1
    %p101 = por %p99, %p100
    %p102 = scmp.ne.s32.totalorder %s94, %s97
    %p103 = scmp.eq.s32.totalorder %s9, 0
    %p104 = por %p102, %p103
    %p105 = scmp.ne.s32.totalorder %s94, %s97
    %p106 = scmp.eq.s32.totalorder %s14, 1
    %p107 = por %p105, %p106
    %p108 = scmp.ne.s32.totalorder %s97, %s98
    %p109 = scmp.eq.s32.totalorder %s14, 0
    %p110 = por %p108, %p109
    %p111 = scmp.ne.s32.totalorder %s97, %s98
    %p112 = scmp.eq.s32.totalorder %s15, 1
    %p113 = por %p111, %p112
    %p115 = scmp.ne.s32.totalorder %s98, %s114
    %p116 = scmp.eq.s32.totalorder %s15, 0
    %p117 = por %p115, %p116
    %s118 = ssub.s32 %s16, %s35
    %s119 = ssub.s32 %s17, %s31
    %s120 = sor.u32 %s118, %s119
    %p121 = scmp.eq.s32.totalorder %s120, 0
    %s123 = sadd.s32 %s122, 1
    %s124 = scalar_select %p121, %s122, %s123
    %p127 = pneg %p121
    %p128 = scmp.eq.s32.totalorder %s9, 1
    %p129 = por %p127, %p128
    %p130 = scmp.ne.s32.totalorder %s122, %s125
    %p131 = scmp.eq.s32.totalorder %s9, 0
    %p132 = por %p130, %p131
    %p133 = scmp.ne.s32.totalorder %s122, %s125
    %p134 = scmp.eq.s32.totalorder %s14, 1
    %p135 = por %p133, %p134
    %p136 = scmp.ne.s32.totalorder %s125, %s126
    %p137 = scmp.eq.s32.totalorder %s14, 0
    %p138 = por %p136, %p137
    %p139 = scmp.ne.s32.totalorder %s125, %s126
    %p140 = scmp.eq.s32.totalorder %s15, 1
    %p141 = por %p139, %p140
    %p143 = scmp.ne.s32.totalorder %s126, %s142
    %p144 = scmp.eq.s32.totalorder %s15, 0
    %p145 = por %p143, %p144
    %p146 = scmp.le.s32.totalorder 1, %s9
    %p147 = scmp.lt.s32.totalorder %s9, 3
    %p148 = pnand %p146, %p147
    %p149 = pneg %p148
    // Predicated region
    $region9: #{unet_forward.49} parent=5 // pred_check
      _
    $region10: #{unet_forward.49} parent=5 // pred_check_branch
      %151 = sbr.rel (%p148) target = $region12
    $region11: #{unet_forward.49} parent=5 // pred_region
      %s152 = ssub.s32 %s9, 1
      // Predicated region
      $region13: #{unet_forward.49} parent=11 // pred_check
        %p153 = pneg %p110
      $region14: #{unet_forward.49} parent=11 // pred_check_branch
        %155 = sbr.rel (%p153) target = $region16
      $region15: #{unet_forward.49} parent=11 // pred_region
        %p156 = scmp.lt.s32.totalorder %s20, 0
        %s157 = scalar_select %p156, %s20, 0
        %s158 = scalar_lea.vmem %s2, %s157
      $region16: #{unet_forward.49} parent=11 // pred_fallthru
        _
    $region12: #{unet_forward.49} parent=5 // pred_fallthru
      _
    %p159 = scmp.lt.s32.totalorder %s9, 2
    // Predicated region
    $region17: #{unet_forward.49} parent=5 // pred_check
      %p160 = pneg %p159
    $region18: #{unet_forward.49} parent=5 // pred_check_branch
      %162 = sbr.rel (%p160) target = $region20
    $region19: #{unet_forward.49} parent=5 // pred_region
      // Predicated region
      $region21: #{unet_forward.49} parent=19 // pred_check
        %p163 = pneg %p50
      $region22: #{unet_forward.49} parent=19 // pred_check_branch
        %165 = sbr.rel (%p163) target = $region24
      $region23: #{unet_forward.49} parent=19 // pred_region
        %s166 = smul.u32 4, %s18
        %p167 = scmp.lt.s32.totalorder %s16, 0
        %s168 = scalar_select %p167, %s16, 0
        %p169 = scmp.lt.s32.totalorder %s166, 7
        %s170 = scalar_select %p169, %s166, 7
        %s171 = smul.addr %s168, 8
        %s172 = sadd.s32 %s170, %s171
        %s173 = smul.addr %s172, 4
        %s174 = scalar_lea.vmem %s0, %s173
        %s175 = smul.u32 4, %s18
      $region24: #{unet_forward.49} parent=19 // pred_fallthru
        _
      // Predicated region
      $region25: #{unet_forward.49} parent=19 // pred_check
        %p176 = pneg %p78
      $region26: #{unet_forward.49} parent=19 // pred_check_branch
        %178 = sbr.rel (%p176) target = $region28
      $region27: #{unet_forward.49} parent=19 // pred_region
        %s179 = smul.u32 64, %s18
        %p180 = scmp.lt.s32.totalorder %s179, 127
        %s181 = scalar_select %p180, %s179, 127
        %p182 = scmp.lt.s32.totalorder %s17, 0
        %s183 = scalar_select %p182, %s17, 0
        %s184 = sadd.s32 %s183, %s181
        %s185 = smul.addr %s184, 4
        %s186 = scalar_lea.vmem %s1, %s185
        %s187 = smul.u32 64, %s18
      $region28: #{unet_forward.49} parent=19 // pred_fallthru
        _
    $region20: #{unet_forward.49} parent=5 // pred_fallthru
      _
    %p188 = scmp.le.s32.totalorder 1, %s9
    %p189 = scmp.lt.s32.totalorder %s9, 3
    %p190 = pnand %p188, %p189
    %p191 = pneg %p190
    // Predicated region
    $region29: #{unet_forward.49} parent=5 // pred_check
      _
    $region30: #{unet_forward.49} parent=5 // pred_check_branch
      %193 = sbr.rel (%p190) target = $region32
    $region31: #{unet_forward.49} parent=5 // pred_region
      %s194 = ssub.s32 %s9, 1
      %s195 = smul.u32 4, %s21
      %p196 = scmp.lt.s32.totalorder %s19, 0
      %s197 = scalar_select %p196, %s19, 0
      %p198 = scmp.lt.s32.totalorder %s195, 7
      %s199 = scalar_select %p198, %s195, 7
      %s200 = smul.addr %s197, 8
      %s201 = sadd.s32 %s199, %s200
      %s202 = smul.addr %s201, 4
      %s203 = scalar_lea.vmem %s0, %s202
      %p204 = pneg %p56
      %p205 = pneg %p53
      %s206 = smul.u32 64, %s21
      %p207 = scmp.lt.s32.totalorder %s206, 127
      %s208 = scalar_select %p207, %s206, 127
      %p209 = scmp.lt.s32.totalorder %s20, 0
      %s210 = scalar_select %p209, %s20, 0
      %s211 = sadd.s32 %s210, %s208
      %s212 = smul.addr %s211, 4
      %s213 = scalar_lea.vmem %s1, %s212
      %p214 = pneg %p84
      %p215 = pneg %p81
      %p216 = scmp.lt.s32.totalorder %s20, 0
      %s217 = scalar_select %p216, %s20, 0
      %s218 = scalar_lea.vmem %s2, %s217
      %p219 = pneg %p110
      %p220 = pneg %p107
      %p221 = pneg %p138
      %p222 = pneg %p135
      %p223 = scmp.lt.s32.totalorder %s19, 0
      %s224 = scalar_select %p223, %s19, 0
      %p225 = scmp.lt.s32.totalorder %s20, 0
      %s226 = scalar_select %p225, %s20, 0
      %s227 = sadd.s32 %s226, %s224
      %s228 = smul.addr %s227, 8
      %s229 = scalar_lea.vmem %s3, %s228
      %s230 = smul.u32 4, %s21
      %p231 = scmp.lt.s32.totalorder %s19, 0
      %s232 = scalar_select %p231, %s19, 0
      %p233 = scmp.lt.s32.totalorder %s230, 7
      %s234 = scalar_select %p233, %s230, 7
      %s235 = smul.addr %s232, 8
      %s236 = sadd.s32 %s234, %s235
      %s237 = smul.addr %s236, 4
      %s238 = scalar_lea.vmem %s0, %s237
      %s239 = smul.u32 4, %s21
      %s240 = smul.u32 64, %s21
      %p241 = scmp.lt.s32.totalorder %s240, 127
      %s242 = scalar_select %p241, %s240, 127
      %p243 = scmp.lt.s32.totalorder %s20, 0
      %s244 = scalar_select %p243, %s20, 0
      %s245 = sadd.s32 %s244, %s242
      %s246 = smul.addr %s245, 4
      %s247 = scalar_lea.vmem %s1, %s246
      %s248 = smul.u32 64, %s21
      %p249 = scmp.lt.s32.totalorder %s20, 0
      %s250 = scalar_select %p249, %s20, 0
      %s251 = scalar_lea.vmem %s2, %s250
      %p252 = scmp.lt.s32.totalorder %s19, 0
      %s253 = scalar_select %p252, %s19, 0
      %p254 = scmp.lt.s32.totalorder %s20, 0
      %s255 = scalar_select %p254, %s20, 0
      %s256 = sadd.s32 %s255, %s253
      %s257 = smul.addr %s256, 8
      %s258 = scalar_lea.vmem %s3, %s257
      %p260 = scmp.eq.s32.totalorder %s21, 0
      // Predicated region
      $region33: #{unet_forward.49} parent=31 // pred_check
        %p261 = pneg %p260
      $region34: #{unet_forward.49} parent=31 // pred_check_branch
        %263 = sbr.rel (%p261) target = $region36
      $region35: #{unet_forward.49} parent=31 // pred_region
        %vm264 = vcmask 523264
        %265 = vst.msk [vmem:[#allocation2] sm:$0xff] %vm264, 0.0
      $region36: #{unet_forward.49} parent=31 // pred_fallthru
        _
      %v266 = vld [vmem:[%s238] sm:$0xff]
      %v267 = vld [vmem:[%s238 + $0x8] sm:$0xff]
      %v268 = vunpack.c.l.bf16 %v266
      %v269 = vunpack.c.h.bf16 %v266
      %v270 = vunpack.c.l.bf16 %v267
      %v271 = vunpack.c.h.bf16 %v267
      %vm272 = vcmp.gt.f32.partialorder %v268, 0.0
      %vm273 = vcmp.gt.f32.partialorder %v269, 0.0
      %vm274 = vcmp.gt.f32.partialorder %v270, 0.0
      %vm275 = vcmp.gt.f32.partialorder %v271, 0.0
      %v276 = vmul.f32 %v268, 0.2
      %v277 = vmul.f32 %v269, 0.2
      %v278 = vmul.f32 %v270, 0.2
      %v279 = vmul.f32 %v271, 0.2
      %v280 = vsel %vm272, %v268, %v276
      %v281 = vsel %vm273, %v269, %v277
      %v282 = vsel %vm274, %v270, %v278
      %v283 = vsel %vm275, %v271, %v279
      %v284 = vld [vmem:[#allocation2] sm:$0xff]
      %v285 = vpack.c.bf16 %v280, %v280
      %v286 = vpack.c.bf16 %v281, %v281
      %v287 = vpack.c.bf16 %v282, %v282
      %v288 = vpack.c.bf16 %v283, %v283
      %v289 = vld [vmem:[%s247] sm:$0xf]
      %v290 = vld [vmem:[%s247 + $0x4] sm:$0xf]
      %v291 = vld [vmem:[%s247 + $0x8] sm:$0xf]
      %v292 = vld [vmem:[%s247 + $0xc] sm:$0xf]
      %v293 = vld [vmem:[%s247 + $0x10] sm:$0xf]
      %v294 = vld [vmem:[%s247 + $0x14] sm:$0xf]
      %v295 = vld [vmem:[%s247 + $0x18] sm:$0xf]
      %v296 = vld [vmem:[%s247 + $0x1c] sm:$0xf]
      %v297 = vld [vmem:[%s247 + $0x20] sm:$0xf]
      %v298 = vld [vmem:[%s247 + $0x24] sm:$0xf]
      %v299 = vld [vmem:[%s247 + $0x28] sm:$0xf]
      %v300 = vld [vmem:[%s247 + $0x2c] sm:$0xf]
      %v301 = vld [vmem:[%s247 + $0x30] sm:$0xf]
      %v302 = vld [vmem:[%s247 + $0x34] sm:$0xf]
      %v303 = vld [vmem:[%s247 + $0x38] sm:$0xf]
      %v304 = vld [vmem:[%s247 + $0x3c] sm:$0xf]
      %v305 = vld [vmem:[%s247 + $0x40] sm:$0xf]
      %v306 = vld [vmem:[%s247 + $0x44] sm:$0xf]
      %v307 = vld [vmem:[%s247 + $0x48] sm:$0xf]
      %v308 = vld [vmem:[%s247 + $0x4c] sm:$0xf]
      %v309 = vld [vmem:[%s247 + $0x50] sm:$0xf]
      %v310 = vld [vmem:[%s247 + $0x54] sm:$0xf]
      %v311 = vld [vmem:[%s247 + $0x58] sm:$0xf]
      %v312 = vld [vmem:[%s247 + $0x5c] sm:$0xf]
      %v313 = vld [vmem:[%s247 + $0x60] sm:$0xf]
      %v314 = vld [vmem:[%s247 + $0x64] sm:$0xf]
      %v315 = vld [vmem:[%s247 + $0x68] sm:$0xf]
      %v316 = vld [vmem:[%s247 + $0x6c] sm:$0xf]
      %v317 = vld [vmem:[%s247 + $0x70] sm:$0xf]
      %v318 = vld [vmem:[%s247 + $0x74] sm:$0xf]
      %v319 = vld [vmem:[%s247 + $0x78] sm:$0xf]
      %v320 = vld [vmem:[%s247 + $0x7c] sm:$0xf]
      %v321 = vld [vmem:[%s247 + $0x80] sm:$0xf]
      %v322 = vld [vmem:[%s247 + $0x84] sm:$0xf]
      %v323 = vld [vmem:[%s247 + $0x88] sm:$0xf]
      %v324 = vld [vmem:[%s247 + $0x8c] sm:$0xf]
      %v325 = vld [vmem:[%s247 + $0x90] sm:$0xf]
      %v326 = vld [vmem:[%s247 + $0x94] sm:$0xf]
      %v327 = vld [vmem:[%s247 + $0x98] sm:$0xf]
      %v328 = vld [vmem:[%s247 + $0x9c] sm:$0xf]
      %v329 = vld [vmem:[%s247 + $0xa0] sm:$0xf]
      %v330 = vld [vmem:[%s247 + $0xa4] sm:$0xf]
      %v331 = vld [vmem:[%s247 + $0xa8] sm:$0xf]
      %v332 = vld [vmem:[%s247 + $0xac] sm:$0xf]
      %v333 = vld [vmem:[%s247 + $0xb0] sm:$0xf]
      %v334 = vld [vmem:[%s247 + $0xb4] sm:$0xf]
      %v335 = vld [vmem:[%s247 + $0xb8] sm:$0xf]
      %v336 = vld [vmem:[%s247 + $0xbc] sm:$0xf]
      %v337 = vld [vmem:[%s247 + $0xc0] sm:$0xf]
      %v338 = vld [vmem:[%s247 + $0xc4] sm:$0xf]
      %v339 = vld [vmem:[%s247 + $0xc8] sm:$0xf]
      %v340 = vld [vmem:[%s247 + $0xcc] sm:$0xf]
      %v341 = vld [vmem:[%s247 + $0xd0] sm:$0xf]
      %v342 = vld [vmem:[%s247 + $0xd4] sm:$0xf]
      %v343 = vld [vmem:[%s247 + $0xd8] sm:$0xf]
      %v344 = vld [vmem:[%s247 + $0xdc] sm:$0xf]
      %v345 = vld [vmem:[%s247 + $0xe0] sm:$0xf]
      %v346 = vld [vmem:[%s247 + $0xe4] sm:$0xf]
      %v347 = vld [vmem:[%s247 + $0xe8] sm:$0xf]
      %v348 = vld [vmem:[%s247 + $0xec] sm:$0xf]
      %v349 = vld [vmem:[%s247 + $0xf0] sm:$0xf]
      %v350 = vld [vmem:[%s247 + $0xf4] sm:$0xf]
      %v351 = vld [vmem:[%s247 + $0xf8] sm:$0xf]
      %v352 = vld [vmem:[%s247 + $0xfc] sm:$0xf]
      %v417 = vunpack.c.l.b16 %v289
      %v418 = vunpack.c.l.b16 %v290
      %v419 = vunpack.c.l.b16 %v291
      %v420 = vunpack.c.l.b16 %v292
      %v421 = vunpack.c.l.b16 %v293
      %v422 = vunpack.c.l.b16 %v294
      %v423 = vunpack.c.l.b16 %v295
      %v424 = vunpack.c.l.b16 %v296
      %v425 = vunpack.c.l.b16 %v297
      %v426 = vunpack.c.l.b16 %v298
      %v427 = vunpack.c.l.b16 %v299
      %v428 = vunpack.c.l.b16 %v300
      %v429 = vunpack.c.l.b16 %v301
      %v430 = vunpack.c.l.b16 %v302
      %v431 = vunpack.c.l.b16 %v303
      %v432 = vunpack.c.l.b16 %v304
      %v433 = vunpack.c.l.b16 %v305
      %v434 = vunpack.c.l.b16 %v306
      %v435 = vunpack.c.l.b16 %v307
      %v436 = vunpack.c.l.b16 %v308
      %v437 = vunpack.c.l.b16 %v309
      %v438 = vunpack.c.l.b16 %v310
      %v439 = vunpack.c.l.b16 %v311
      %v440 = vunpack.c.l.b16 %v312
      %v441 = vunpack.c.l.b16 %v313
      %v442 = vunpack.c.l.b16 %v314
      %v443 = vunpack.c.l.b16 %v315
      %v444 = vunpack.c.l.b16 %v316
      %v445 = vunpack.c.l.b16 %v317
      %v446 = vunpack.c.l.b16 %v318
      %v447 = vunpack.c.l.b16 %v319
      %v448 = vunpack.c.l.b16 %v320
      %v449 = vunpack.c.l.b16 %v321
      %v450 = vunpack.c.l.b16 %v322
      %v451 = vunpack.c.l.b16 %v323
      %v452 = vunpack.c.l.b16 %v324
      %v453 = vunpack.c.l.b16 %v325
      %v454 = vunpack.c.l.b16 %v326
      %v455 = vunpack.c.l.b16 %v327
      %v456 = vunpack.c.l.b16 %v328
      %v457 = vunpack.c.l.b16 %v329
      %v458 = vunpack.c.l.b16 %v330
      %v459 = vunpack.c.l.b16 %v331
      %v460 = vunpack.c.l.b16 %v332
      %v461 = vunpack.c.l.b16 %v333
      %v462 = vunpack.c.l.b16 %v334
      %v463 = vunpack.c.l.b16 %v335
      %v464 = vunpack.c.l.b16 %v336
      %v465 = vunpack.c.l.b16 %v337
      %v466 = vunpack.c.l.b16 %v338
      %v467 = vunpack.c.l.b16 %v339
      %v468 = vunpack.c.l.b16 %v340
      %v469 = vunpack.c.l.b16 %v341
      %v470 = vunpack.c.l.b16 %v342
      %v471 = vunpack.c.l.b16 %v343
      %v472 = vunpack.c.l.b16 %v344
      %v473 = vunpack.c.l.b16 %v345
      %v474 = vunpack.c.l.b16 %v346
      %v475 = vunpack.c.l.b16 %v347
      %v476 = vunpack.c.l.b16 %v348
      %v477 = vunpack.c.l.b16 %v349
      %v478 = vunpack.c.l.b16 %v350
      %v479 = vunpack.c.l.b16 %v351
      %v480 = vunpack.c.l.b16 %v352
      %v481 = vpack.c.b16 %v418, %v417
      %v482 = vpack.c.b16 %v420, %v419
      %v483 = vpack.c.b16 %v422, %v421
      %v484 = vpack.c.b16 %v424, %v423
      %v485 = vpack.c.b16 %v426, %v425
      %v486 = vpack.c.b16 %v428, %v427
      %v487 = vpack.c.b16 %v430, %v429
      %v488 = vpack.c.b16 %v432, %v431
      %v489 = vpack.c.b16 %v434, %v433
      %v490 = vpack.c.b16 %v436, %v435
      %v491 = vpack.c.b16 %v438, %v437
      %v492 = vpack.c.b16 %v440, %v439
      %v493 = vpack.c.b16 %v442, %v441
      %v494 = vpack.c.b16 %v444, %v443
      %v495 = vpack.c.b16 %v446, %v445
      %v496 = vpack.c.b16 %v448, %v447
      %v497 = vpack.c.b16 %v450, %v449
      %v498 = vpack.c.b16 %v452, %v451
      %v499 = vpack.c.b16 %v454, %v453
      %v500 = vpack.c.b16 %v456, %v455
      %v501 = vpack.c.b16 %v458, %v457
      %v502 = vpack.c.b16 %v460, %v459
      %v503 = vpack.c.b16 %v462, %v461
      %v504 = vpack.c.b16 %v464, %v463
      %v505 = vpack.c.b16 %v466, %v465
      %v506 = vpack.c.b16 %v468, %v467
      %v507 = vpack.c.b16 %v470, %v469
      %v508 = vpack.c.b16 %v472, %v471
      %v509 = vpack.c.b16 %v474, %v473
      %v510 = vpack.c.b16 %v476, %v475
      %v511 = vpack.c.b16 %v478, %v477
      %v512 = vpack.c.b16 %v480, %v479
      %545 = vmatprep.subr.bf16.mxu0 0
      %546 = vmatpush1.bf16.msra.mxu0 %v488
      %547 = vmatprep.subr.bf16.mxu0 0
      %548 = vmatpush1.bf16.msra.mxu0 %v487
      %549 = vmatprep.subr.bf16.mxu0 0
      %550 = vmatpush1.bf16.msra.mxu0 %v486
      %551 = vmatprep.subr.bf16.mxu0 0
      %552 = vmatpush1.bf16.msra.mxu0 %v485
      %553 = vmatprep.subr.bf16.mxu0 0
      %554 = vmatpush1.bf16.msra.mxu0 %v484
      %555 = vmatprep.subr.bf16.mxu0 0
      %556 = vmatpush1.bf16.msra.mxu0 %v483
      %557 = vmatprep.subr.bf16.mxu0 0
      %558 = vmatpush1.bf16.msra.mxu0 %v482
      %559 = vmatprep.subr.bf16.mxu0 0
      %560 = vmatpush1.bf16.msra.mxu0 %v481
      %561 = vmatprep.subr.bf16.mxu0 0
      %562 = vmatpush2.bf16.msra.mxu0 %v496
      %563 = vmatprep.subr.bf16.mxu0 0
      %564 = vmatpush2.bf16.msra.mxu0 %v495
      %565 = vmatprep.subr.bf16.mxu0 0
      %566 = vmatpush2.bf16.msra.mxu0 %v494
      %567 = vmatprep.subr.bf16.mxu0 0
      %568 = vmatpush2.bf16.msra.mxu0 %v493
      %569 = vmatprep.subr.bf16.mxu0 0
      %570 = vmatpush2.bf16.msra.mxu0 %v492
      %571 = vmatprep.subr.bf16.mxu0 0
      %572 = vmatpush2.bf16.msra.mxu0 %v491
      %573 = vmatprep.subr.bf16.mxu0 0
      %574 = vmatpush2.bf16.msra.mxu0 %v490
      %575 = vmatprep.subr.bf16.mxu0 0
      %576 = vmatpush2.bf16.msra.mxu0 %v489
      %577 = vmatprep.mubr.bf16.mxu0 %v286
      %578 = vmatmul.mubr.bf16.gmra.mxu0 %v285
      %v579 = vpop.f32.mrf.mxu0
      %v580 = vadd.f32 0.0, %v579
      %v581 = vpop.f32.mrf.mxu0
      %v582 = vpop.f32.mrf.mxu0
      %v583 = vpop.f32.mrf.mxu0
      %584 = vdwg.mxu0
      %585 = vmatprep.subr.bf16.mxu0 0
      %586 = vmatpush1.bf16.msra.mxu0 %v504
      %587 = vmatprep.subr.bf16.mxu0 0
      %588 = vmatpush1.bf16.msra.mxu0 %v503
      %589 = vmatprep.subr.bf16.mxu0 0
      %590 = vmatpush1.bf16.msra.mxu0 %v502
      %591 = vmatprep.subr.bf16.mxu0 0
      %592 = vmatpush1.bf16.msra.mxu0 %v501
      %593 = vmatprep.subr.bf16.mxu0 0
      %594 = vmatpush1.bf16.msra.mxu0 %v500
      %595 = vmatprep.subr.bf16.mxu0 0
      %596 = vmatpush1.bf16.msra.mxu0 %v499
      %597 = vmatprep.subr.bf16.mxu0 0
      %598 = vmatpush1.bf16.msra.mxu0 %v498
      %599 = vmatprep.subr.bf16.mxu0 0
      %600 = vmatpush1.bf16.msra.mxu0 %v497
      %601 = vmatprep.subr.bf16.mxu0 0
      %602 = vmatpush2.bf16.msra.mxu0 %v512
      %603 = vmatprep.subr.bf16.mxu0 0
      %604 = vmatpush2.bf16.msra.mxu0 %v511
      %605 = vmatprep.subr.bf16.mxu0 0
      %606 = vmatpush2.bf16.msra.mxu0 %v510
      %607 = vmatprep.subr.bf16.mxu0 0
      %608 = vmatpush2.bf16.msra.mxu0 %v509
      %609 = vmatprep.subr.bf16.mxu0 0
      %610 = vmatpush2.bf16.msra.mxu0 %v508
      %611 = vmatprep.subr.bf16.mxu0 0
      %612 = vmatpush2.bf16.msra.mxu0 %v507
      %613 = vmatprep.subr.bf16.mxu0 0
      %614 = vmatpush2.bf16.msra.mxu0 %v506
      %615 = vmatprep.subr.bf16.mxu0 0
      %616 = vmatpush2.bf16.msra.mxu0 %v505
      %617 = vmatprep.mubr.bf16.mxu0 %v288
      %618 = vmatmul.mubr.bf16.gmra.mxu0 %v287
      %v619 = vpop.f32.mrf.mxu0
      %v620 = vadd.f32 %v580, %v619
      %v621 = vpop.f32.mrf.mxu0
      %v622 = vpop.f32.mrf.mxu0
      %v623 = vpop.f32.mrf.mxu0
      %624 = vdwg.mxu0
      %v625 = vadd.f32 %v284, %v620
      %vm626 = vcmask 523264
      %627 = vst.msk [vmem:[#allocation2] sm:$0xff] %vm626, %v625
      %p628 = scmp.eq.s32.totalorder %s21, 1
      // Predicated region
      $region37: #{unet_forward.49} parent=31 // pred_check
        %p629 = pneg %p628
      $region38: #{unet_forward.49} parent=31 // pred_check_branch
        %631 = sbr.rel (%p629) target = $region40
      $region39: #{unet_forward.49} parent=31 // pred_region
        %v632 = vld [vmem:[#allocation2] sm:$0xff]
        %v633 = vld [vmem:[%s251] sm:$0x1]
        %v635 = vlaneseq
        %v636 = vshrl.u32 %v635, 7
        %v637 = vsub.s32 0, %v636
        %v638 = vrot.slane %v633, %v637
        %v640 = vadd.f32 %v632, %v638
        %641 = vst.msk [vmem:[%s258] sm:$0xff] %vm626, %v640
      $region40: #{unet_forward.49} parent=31 // pred_fallthru
        _
      %p642 = scmp.lt.s32.totalorder %s19, 0
      %s643 = scalar_select %p642, %s19, 0
      %p644 = scmp.lt.s32.totalorder %s20, 0
      %s645 = scalar_select %p644, %s20, 0
      %s646 = sadd.s32 %s645, %s643
      %s647 = smul.addr %s646, 8
      %s648 = scalar_lea.vmem %s3, %s647
      // Predicated region
      $region41: #{unet_forward.49} parent=31 // pred_check
        %p649 = pneg %p135
      $region42: #{unet_forward.49} parent=31 // pred_check_branch
        %651 = sbr.rel (%p649) target = $region44
      $region43: #{unet_forward.49} parent=31 // pred_region
        _
      $region44: #{unet_forward.49} parent=31 // pred_fallthru
        _
      // Predicated region
      $region45: #{unet_forward.49} parent=31 // pred_check
        %p652 = pneg %p135
      $region46: #{unet_forward.49} parent=31 // pred_check_branch
        %654 = sbr.rel (%p652) target = $region48
      $region47: #{unet_forward.49} parent=31 // pred_region
        %p655 = scmp.lt.s32.totalorder %s19, 0
        %s656 = scalar_select %p655, %s19, 0
        %p657 = scmp.lt.s32.totalorder %s20, 0
        %s658 = scalar_select %p657, %s20, 0
        %s659 = sadd.s32 %s658, %s656
        %s660 = smul.addr %s659, 8
        %s661 = scalar_lea.vmem %s3, %s660
      $region48: #{unet_forward.49} parent=31 // pred_fallthru
        _
    $region32: #{unet_forward.49} parent=5 // pred_fallthru
      _
    %p662 = scmp.le.s32.totalorder 2, %s9
    // Predicated region
    $region49: #{unet_forward.49} parent=5 // pred_check
      %p663 = pneg %p662
    $region50: #{unet_forward.49} parent=5 // pred_check_branch
      %665 = sbr.rel (%p663) target = $region52
    $region51: #{unet_forward.49} parent=5 // pred_region
      %s666 = ssub.s32 %s9, 2
    $region52: #{unet_forward.49} parent=5 // pred_fallthru
      _
  $region6: #{unet_forward.49} parent=0 // loop_footer
    %s13 = sadd.s32 1, %s9
  $region7: #{unet_forward.49} parent=0 // loop_footer_branch
    %8 = sbr.rel target = $region3
  $region8: #{unet_forward.49} parent=0 // loop_exit
    _

// kernel: unet_forward.50
$region0: #{unet_forward.50}
  #allocation0 [shape = 'u32[]', space=smem, size = 0x4, offset = 0x4, fixed_abs, tag = 'smem constant byte address 0x4 - core index']
  #allocation1 [shape = 'u32[144,128]{1,0:T(1,128)}', space=vmem, size = 0x12000, scoped, tag = 'internal scratch']
  #allocation2 [shape = 'f32[8,64]{1,0:T(8,128)}', space=vmem, size = 0x1000, scoped, tag = 'scratch operand']
  %s0 = inlined_call_operand.vmem [shape: bf16[8,256], index: 0, kind: input, shape index: {}]
  %s1 = inlined_call_operand.vmem [shape: bf16[256,64], index: 1, kind: input, shape index: {}]
  %s2 = inlined_call_operand.vmem [shape: f32[1,64], index: 2, kind: input, shape index: {}]
  %s3 = inlined_call_operand.vmem [shape: f32[8,64], index: 3, kind: output, shape index: {}]
  %s4 = sld [smem:[#allocation0]]
  $region30: #{unet_forward.50} parent=0
    _
  %s6 = ssub.s32 1, %s4
  %s7 = scalar_select 0, %s6, %s4
  // Predicated region
  $region2: #{unet_forward.50} parent=0 // pred_check
    _
  $region3: #{unet_forward.50} parent=0 // pred_check_branch
    %9 = sbr.rel (0) target = $region5
  $region4: #{unet_forward.50} parent=0 // pred_region
    _
  $region5: #{unet_forward.50} parent=0 // pred_fallthru
    _
  // Predicated region
  $region6: #{unet_forward.50} parent=0 // pred_check
    _
  $region7: #{unet_forward.50} parent=0 // pred_check_branch
    %11 = sbr.rel (0) target = $region9
  $region8: #{unet_forward.50} parent=0 // pred_region
    _
  $region9: #{unet_forward.50} parent=0 // pred_fallthru
    _
  // Predicated region
  $region10: #{unet_forward.50} parent=0 // pred_check
    _
  $region11: #{unet_forward.50} parent=0 // pred_check_branch
    %13 = sbr.rel (0) target = $region13
  $region12: #{unet_forward.50} parent=0 // pred_region
    _
  $region13: #{unet_forward.50} parent=0 // pred_fallthru
    _
  %p15 = scmp.eq.s32.totalorder 0, 0
  // Predicated region
  $region14: #{unet_forward.50} parent=0 // pred_check
    %p16 = pneg %p15
  $region15: #{unet_forward.50} parent=0 // pred_check_branch
    %18 = sbr.rel (%p16) target = $region17
  $region16: #{unet_forward.50} parent=0 // pred_region
    %vm19 = vcmask 523264
    %20 = vst.msk [vmem:[#allocation2] sm:$0xff] %vm19, 0.0
  $region17: #{unet_forward.50} parent=0 // pred_fallthru
    _
  %v21 = vld [vmem:[%s0] sm:$0xff]
  %v22 = vunpack.c.l.bf16 %v21
  %v23 = vunpack.c.h.bf16 %v21
  %v24 = vmax.f32 %v22, 0.0
  %v25 = vmax.f32 %v23, 0.0
  %v26 = vld [vmem:[#allocation2] sm:$0xff]
  %v27 = vpack.c.bf16 %v24, %v24
  %v28 = vpack.c.bf16 %v25, %v25
  %v29 = vld [vmem:[%s1] sm:$0xf]
  %v30 = vld [vmem:[%s1 + $0x4] sm:$0xf]
  %v31 = vld [vmem:[%s1 + $0x8] sm:$0xf]
  %v32 = vld [vmem:[%s1 + $0xc] sm:$0xf]
  %v33 = vld [vmem:[%s1 + $0x10] sm:$0xf]
  %v34 = vld [vmem:[%s1 + $0x14] sm:$0xf]
  %v35 = vld [vmem:[%s1 + $0x18] sm:$0xf]
  %v36 = vld [vmem:[%s1 + $0x1c] sm:$0xf]
  %v37 = vld [vmem:[%s1 + $0x20] sm:$0xf]
  %v38 = vld [vmem:[%s1 + $0x24] sm:$0xf]
  %v39 = vld [vmem:[%s1 + $0x28] sm:$0xf]
  %v40 = vld [vmem:[%s1 + $0x2c] sm:$0xf]
  %v41 = vld [vmem:[%s1 + $0x30] sm:$0xf]
  %v42 = vld [vmem:[%s1 + $0x34] sm:$0xf]
  %v43 = vld [vmem:[%s1 + $0x38] sm:$0xf]
  %v44 = vld [vmem:[%s1 + $0x3c] sm:$0xf]
  %v45 = vld [vmem:[%s1 + $0x40] sm:$0xf]
  %v46 = vld [vmem:[%s1 + $0x44] sm:$0xf]
  %v47 = vld [vmem:[%s1 + $0x48] sm:$0xf]
  %v48 = vld [vmem:[%s1 + $0x4c] sm:$0xf]
  %v49 = vld [vmem:[%s1 + $0x50] sm:$0xf]
  %v50 = vld [vmem:[%s1 + $0x54] sm:$0xf]
  %v51 = vld [vmem:[%s1 + $0x58] sm:$0xf]
  %v52 = vld [vmem:[%s1 + $0x5c] sm:$0xf]
  %v53 = vld [vmem:[%s1 + $0x60] sm:$0xf]
  %v54 = vld [vmem:[%s1 + $0x64] sm:$0xf]
  %v55 = vld [vmem:[%s1 + $0x68] sm:$0xf]
  %v56 = vld [vmem:[%s1 + $0x6c] sm:$0xf]
  %v57 = vld [vmem:[%s1 + $0x70] sm:$0xf]
  %v58 = vld [vmem:[%s1 + $0x74] sm:$0xf]
  %v59 = vld [vmem:[%s1 + $0x78] sm:$0xf]
  %v60 = vld [vmem:[%s1 + $0x7c] sm:$0xf]
  %v93 = vunpack.c.l.b16 %v29
  %v94 = vunpack.c.l.b16 %v30
  %v95 = vunpack.c.l.b16 %v31
  %v96 = vunpack.c.l.b16 %v32
  %v97 = vunpack.c.l.b16 %v33
  %v98 = vunpack.c.l.b16 %v34
  %v99 = vunpack.c.l.b16 %v35
  %v100 = vunpack.c.l.b16 %v36
  %v101 = vunpack.c.l.b16 %v37
  %v102 = vunpack.c.l.b16 %v38
  %v103 = vunpack.c.l.b16 %v39
  %v104 = vunpack.c.l.b16 %v40
  %v105 = vunpack.c.l.b16 %v41
  %v106 = vunpack.c.l.b16 %v42
  %v107 = vunpack.c.l.b16 %v43
  %v108 = vunpack.c.l.b16 %v44
  %v109 = vunpack.c.l.b16 %v45
  %v110 = vunpack.c.l.b16 %v46
  %v111 = vunpack.c.l.b16 %v47
  %v112 = vunpack.c.l.b16 %v48
  %v113 = vunpack.c.l.b16 %v49
  %v114 = vunpack.c.l.b16 %v50
  %v115 = vunpack.c.l.b16 %v51
  %v116 = vunpack.c.l.b16 %v52
  %v117 = vunpack.c.l.b16 %v53
  %v118 = vunpack.c.l.b16 %v54
  %v119 = vunpack.c.l.b16 %v55
  %v120 = vunpack.c.l.b16 %v56
  %v121 = vunpack.c.l.b16 %v57
  %v122 = vunpack.c.l.b16 %v58
  %v123 = vunpack.c.l.b16 %v59
  %v124 = vunpack.c.l.b16 %v60
  %v125 = vpack.c.b16 %v94, %v93
  %v126 = vpack.c.b16 %v96, %v95
  %v127 = vpack.c.b16 %v98, %v97
  %v128 = vpack.c.b16 %v100, %v99
  %v129 = vpack.c.b16 %v102, %v101
  %v130 = vpack.c.b16 %v104, %v103
  %v131 = vpack.c.b16 %v106, %v105
  %v132 = vpack.c.b16 %v108, %v107
  %v133 = vpack.c.b16 %v110, %v109
  %v134 = vpack.c.b16 %v112, %v111
  %v135 = vpack.c.b16 %v114, %v113
  %v136 = vpack.c.b16 %v116, %v115
  %v137 = vpack.c.b16 %v118, %v117
  %v138 = vpack.c.b16 %v120, %v119
  %v139 = vpack.c.b16 %v122, %v121
  %v140 = vpack.c.b16 %v124, %v123
  %157 = vmatprep.subr.bf16.mxu0 0
  %158 = vmatpush1.bf16.msra.mxu0 %v132
  %159 = vmatprep.subr.bf16.mxu0 0
  %160 = vmatpush1.bf16.msra.mxu0 %v131
  %161 = vmatprep.subr.bf16.mxu0 0
  %162 = vmatpush1.bf16.msra.mxu0 %v130
  %163 = vmatprep.subr.bf16.mxu0 0
  %164 = vmatpush1.bf16.msra.mxu0 %v129
  %165 = vmatprep.subr.bf16.mxu0 0
  %166 = vmatpush1.bf16.msra.mxu0 %v128
  %167 = vmatprep.subr.bf16.mxu0 0
  %168 = vmatpush1.bf16.msra.mxu0 %v127
  %169 = vmatprep.subr.bf16.mxu0 0
  %170 = vmatpush1.bf16.msra.mxu0 %v126
  %171 = vmatprep.subr.bf16.mxu0 0
  %172 = vmatpush1.bf16.msra.mxu0 %v125
  %173 = vmatprep.subr.bf16.mxu0 0
  %174 = vmatpush2.bf16.msra.mxu0 %v140
  %175 = vmatprep.subr.bf16.mxu0 0
  %176 = vmatpush2.bf16.msra.mxu0 %v139
  %177 = vmatprep.subr.bf16.mxu0 0
  %178 = vmatpush2.bf16.msra.mxu0 %v138
  %179 = vmatprep.subr.bf16.mxu0 0
  %180 = vmatpush2.bf16.msra.mxu0 %v137
  %181 = vmatprep.subr.bf16.mxu0 0
  %182 = vmatpush2.bf16.msra.mxu0 %v136
  %183 = vmatprep.subr.bf16.mxu0 0
  %184 = vmatpush2.bf16.msra.mxu0 %v135
  %185 = vmatprep.subr.bf16.mxu0 0
  %186 = vmatpush2.bf16.msra.mxu0 %v134
  %187 = vmatprep.subr.bf16.mxu0 0
  %188 = vmatpush2.bf16.msra.mxu0 %v133
  %189 = vmatprep.mubr.bf16.mxu0 %v28
  %190 = vmatmul.mubr.bf16.gmra.mxu0 %v27
  %v191 = vpop.f32.mrf.mxu0
  %v192 = vadd.f32 0.0, %v191
  %v193 = vpop.f32.mrf.mxu0
  %v194 = vpop.f32.mrf.mxu0
  %v195 = vpop.f32.mrf.mxu0
  %196 = vdwg.mxu0
  %v197 = vadd.f32 %v26, %v192
  %vm198 = vcmask 523264
  %199 = vst.msk [vmem:[#allocation2] sm:$0xff] %vm198, %v197
  // Predicated region
  $region18: #{unet_forward.50} parent=0 // pred_check
    %p200 = pneg %p15
  $region19: #{unet_forward.50} parent=0 // pred_check_branch
    %202 = sbr.rel (%p200) target = $region21
  $region20: #{unet_forward.50} parent=0 // pred_region
    %v203 = vld [vmem:[#allocation2] sm:$0xff]
    %v204 = vld [vmem:[%s2] sm:$0x1]
    %v206 = vlaneseq
    %v207 = vshrl.u32 %v206, 7
    %v208 = vsub.s32 0, %v207
    %v209 = vrot.slane %v204, %v208
    %v211 = vadd.f32 %v203, %v209
    %212 = vst.msk [vmem:[%s3] sm:$0xff] %vm198, %v211
  $region21: #{unet_forward.50} parent=0 // pred_fallthru
    _
  // Predicated region
  $region22: #{unet_forward.50} parent=0 // pred_check
    _
  $region23: #{unet_forward.50} parent=0 // pred_check_branch
    %214 = sbr.rel (0) target = $region25
  $region24: #{unet_forward.50} parent=0 // pred_region
    _
  $region25: #{unet_forward.50} parent=0 // pred_fallthru
    _
  // Predicated region
  $region26: #{unet_forward.50} parent=0 // pred_check
    _
  $region27: #{unet_forward.50} parent=0 // pred_check_branch
    %216 = sbr.rel (0) target = $region29
  $region28: #{unet_forward.50} parent=0 // pred_region
    _
  $region29: #{unet_forward.50} parent=0 // pred_fallthru
    _

// kernel: unet_forward.56
$region0: #{unet_forward.56}
  #allocation0 [shape = 'u32[]', space=smem, size = 0x4, offset = 0x4, fixed_abs, tag = 'smem constant byte address 0x4 - core index']
  #allocation1 [shape = 'u32[144,128]{1,0:T(1,128)}', space=vmem, size = 0x12000, scoped, tag = 'internal scratch']
  #allocation2 [shape = 'f32[8,32]{1,0:T(8,128)}', space=vmem, size = 0x1000, scoped, tag = 'scratch operand']
  %s0 = inlined_call_operand.vmem [shape: bf16[8,512], index: 0, kind: input, shape index: {}]
  %s1 = inlined_call_operand.vmem [shape: bf16[512,32], index: 1, kind: input, shape index: {}]
  %s2 = inlined_call_operand.vmem [shape: f32[1,32], index: 2, kind: input, shape index: {}]
  %s3 = inlined_call_operand.vmem [shape: f32[8,32], index: 3, kind: output, shape index: {}]
  %s4 = sld [smem:[#allocation0]]
  $region30: #{unet_forward.56} parent=0
    _
  %s6 = ssub.s32 1, %s4
  %s7 = scalar_select 0, %s6, %s4
  // Predicated region
  $region2: #{unet_forward.56} parent=0 // pred_check
    _
  $region3: #{unet_forward.56} parent=0 // pred_check_branch
    %9 = sbr.rel (0) target = $region5
  $region4: #{unet_forward.56} parent=0 // pred_region
    _
  $region5: #{unet_forward.56} parent=0 // pred_fallthru
    _
  // Predicated region
  $region6: #{unet_forward.56} parent=0 // pred_check
    _
  $region7: #{unet_forward.56} parent=0 // pred_check_branch
    %11 = sbr.rel (0) target = $region9
  $region8: #{unet_forward.56} parent=0 // pred_region
    _
  $region9: #{unet_forward.56} parent=0 // pred_fallthru
    _
  // Predicated region
  $region10: #{unet_forward.56} parent=0 // pred_check
    _
  $region11: #{unet_forward.56} parent=0 // pred_check_branch
    %13 = sbr.rel (0) target = $region13
  $region12: #{unet_forward.56} parent=0 // pred_region
    _
  $region13: #{unet_forward.56} parent=0 // pred_fallthru
    _
  %p15 = scmp.eq.s32.totalorder 0, 0
  // Predicated region
  $region14: #{unet_forward.56} parent=0 // pred_check
    %p16 = pneg %p15
  $region15: #{unet_forward.56} parent=0 // pred_check_branch
    %18 = sbr.rel (%p16) target = $region17
  $region16: #{unet_forward.56} parent=0 // pred_region
    %vm19 = vcmask 261120
    %20 = vst.msk [vmem:[#allocation2] sm:$0xff] %vm19, 0.0
  $region17: #{unet_forward.56} parent=0 // pred_fallthru
    _
  %v21 = vld [vmem:[%s0] sm:$0xff]
  %v22 = vld [vmem:[%s0 + $0x8] sm:$0xff]
  %v23 = vunpack.c.l.bf16 %v21
  %v24 = vunpack.c.h.bf16 %v21
  %v25 = vunpack.c.l.bf16 %v22
  %v26 = vunpack.c.h.bf16 %v22
  %v27 = vmax.f32 %v23, 0.0
  %v28 = vmax.f32 %v24, 0.0
  %v29 = vmax.f32 %v25, 0.0
  %v30 = vmax.f32 %v26, 0.0
  %v31 = vld [vmem:[#allocation2] sm:$0xff]
  %v32 = vpack.c.bf16 %v27, %v27
  %v33 = vpack.c.bf16 %v28, %v28
  %v34 = vpack.c.bf16 %v29, %v29
  %v35 = vpack.c.bf16 %v30, %v30
  %v36 = vld [vmem:[%s1] sm:$0xf]
  %v37 = vld [vmem:[%s1 + $0x4] sm:$0xf]
  %v38 = vld [vmem:[%s1 + $0x8] sm:$0xf]
  %v39 = vld [vmem:[%s1 + $0xc] sm:$0xf]
  %v40 = vld [vmem:[%s1 + $0x10] sm:$0xf]
  %v41 = vld [vmem:[%s1 + $0x14] sm:$0xf]
  %v42 = vld [vmem:[%s1 + $0x18] sm:$0xf]
  %v43 = vld [vmem:[%s1 + $0x1c] sm:$0xf]
  %v44 = vld [vmem:[%s1 + $0x20] sm:$0xf]
  %v45 = vld [vmem:[%s1 + $0x24] sm:$0xf]
  %v46 = vld [vmem:[%s1 + $0x28] sm:$0xf]
  %v47 = vld [vmem:[%s1 + $0x2c] sm:$0xf]
  %v48 = vld [vmem:[%s1 + $0x30] sm:$0xf]
  %v49 = vld [vmem:[%s1 + $0x34] sm:$0xf]
  %v50 = vld [vmem:[%s1 + $0x38] sm:$0xf]
  %v51 = vld [vmem:[%s1 + $0x3c] sm:$0xf]
  %v52 = vld [vmem:[%s1 + $0x40] sm:$0xf]
  %v53 = vld [vmem:[%s1 + $0x44] sm:$0xf]
  %v54 = vld [vmem:[%s1 + $0x48] sm:$0xf]
  %v55 = vld [vmem:[%s1 + $0x4c] sm:$0xf]
  %v56 = vld [vmem:[%s1 + $0x50] sm:$0xf]
  %v57 = vld [vmem:[%s1 + $0x54] sm:$0xf]
  %v58 = vld [vmem:[%s1 + $0x58] sm:$0xf]
  %v59 = vld [vmem:[%s1 + $0x5c] sm:$0xf]
  %v60 = vld [vmem:[%s1 + $0x60] sm:$0xf]
  %v61 = vld [vmem:[%s1 + $0x64] sm:$0xf]
  %v62 = vld [vmem:[%s1 + $0x68] sm:$0xf]
  %v63 = vld [vmem:[%s1 + $0x6c] sm:$0xf]
  %v64 = vld [vmem:[%s1 + $0x70] sm:$0xf]
  %v65 = vld [vmem:[%s1 + $0x74] sm:$0xf]
  %v66 = vld [vmem:[%s1 + $0x78] sm:$0xf]
  %v67 = vld [vmem:[%s1 + $0x7c] sm:$0xf]
  %v68 = vld [vmem:[%s1 + $0x80] sm:$0xf]
  %v69 = vld [vmem:[%s1 + $0x84] sm:$0xf]
  %v70 = vld [vmem:[%s1 + $0x88] sm:$0xf]
  %v71 = vld [vmem:[%s1 + $0x8c] sm:$0xf]
  %v72 = vld [vmem:[%s1 + $0x90] sm:$0xf]
  %v73 = vld [vmem:[%s1 + $0x94] sm:$0xf]
  %v74 = vld [vmem:[%s1 + $0x98] sm:$0xf]
  %v75 = vld [vmem:[%s1 + $0x9c] sm:$0xf]
  %v76 = vld [vmem:[%s1 + $0xa0] sm:$0xf]
  %v77 = vld [vmem:[%s1 + $0xa4] sm:$0xf]
  %v78 = vld [vmem:[%s1 + $0xa8] sm:$0xf]
  %v79 = vld [vmem:[%s1 + $0xac] sm:$0xf]
  %v80 = vld [vmem:[%s1 + $0xb0] sm:$0xf]
  %v81 = vld [vmem:[%s1 + $0xb4] sm:$0xf]
  %v82 = vld [vmem:[%s1 + $0xb8] sm:$0xf]
  %v83 = vld [vmem:[%s1 + $0xbc] sm:$0xf]
  %v84 = vld [vmem:[%s1 + $0xc0] sm:$0xf]
  %v85 = vld [vmem:[%s1 + $0xc4] sm:$0xf]
  %v86 = vld [vmem:[%s1 + $0xc8] sm:$0xf]
  %v87 = vld [vmem:[%s1 + $0xcc] sm:$0xf]
  %v88 = vld [vmem:[%s1 + $0xd0] sm:$0xf]
  %v89 = vld [vmem:[%s1 + $0xd4] sm:$0xf]
  %v90 = vld [vmem:[%s1 + $0xd8] sm:$0xf]
  %v91 = vld [vmem:[%s1 + $0xdc] sm:$0xf]
  %v92 = vld [vmem:[%s1 + $0xe0] sm:$0xf]
  %v93 = vld [vmem:[%s1 + $0xe4] sm:$0xf]
  %v94 = vld [vmem:[%s1 + $0xe8] sm:$0xf]
  %v95 = vld [vmem:[%s1 + $0xec] sm:$0xf]
  %v96 = vld [vmem:[%s1 + $0xf0] sm:$0xf]
  %v97 = vld [vmem:[%s1 + $0xf4] sm:$0xf]
  %v98 = vld [vmem:[%s1 + $0xf8] sm:$0xf]
  %v99 = vld [vmem:[%s1 + $0xfc] sm:$0xf]
  %v164 = vunpack.c.l.b16 %v36
  %v165 = vunpack.c.l.b16 %v37
  %v166 = vunpack.c.l.b16 %v38
  %v167 = vunpack.c.l.b16 %v39
  %v168 = vunpack.c.l.b16 %v40
  %v169 = vunpack.c.l.b16 %v41
  %v170 = vunpack.c.l.b16 %v42
  %v171 = vunpack.c.l.b16 %v43
  %v172 = vunpack.c.l.b16 %v44
  %v173 = vunpack.c.l.b16 %v45
  %v174 = vunpack.c.l.b16 %v46
  %v175 = vunpack.c.l.b16 %v47
  %v176 = vunpack.c.l.b16 %v48
  %v177 = vunpack.c.l.b16 %v49
  %v178 = vunpack.c.l.b16 %v50
  %v179 = vunpack.c.l.b16 %v51
  %v180 = vunpack.c.l.b16 %v52
  %v181 = vunpack.c.l.b16 %v53
  %v182 = vunpack.c.l.b16 %v54
  %v183 = vunpack.c.l.b16 %v55
  %v184 = vunpack.c.l.b16 %v56
  %v185 = vunpack.c.l.b16 %v57
  %v186 = vunpack.c.l.b16 %v58
  %v187 = vunpack.c.l.b16 %v59
  %v188 = vunpack.c.l.b16 %v60
  %v189 = vunpack.c.l.b16 %v61
  %v190 = vunpack.c.l.b16 %v62
  %v191 = vunpack.c.l.b16 %v63
  %v192 = vunpack.c.l.b16 %v64
  %v193 = vunpack.c.l.b16 %v65
  %v194 = vunpack.c.l.b16 %v66
  %v195 = vunpack.c.l.b16 %v67
  %v196 = vunpack.c.l.b16 %v68
  %v197 = vunpack.c.l.b16 %v69
  %v198 = vunpack.c.l.b16 %v70
  %v199 = vunpack.c.l.b16 %v71
  %v200 = vunpack.c.l.b16 %v72
  %v201 = vunpack.c.l.b16 %v73
  %v202 = vunpack.c.l.b16 %v74
  %v203 = vunpack.c.l.b16 %v75
  %v204 = vunpack.c.l.b16 %v76
  %v205 = vunpack.c.l.b16 %v77
  %v206 = vunpack.c.l.b16 %v78
  %v207 = vunpack.c.l.b16 %v79
  %v208 = vunpack.c.l.b16 %v80
  %v209 = vunpack.c.l.b16 %v81
  %v210 = vunpack.c.l.b16 %v82
  %v211 = vunpack.c.l.b16 %v83
  %v212 = vunpack.c.l.b16 %v84
  %v213 = vunpack.c.l.b16 %v85
  %v214 = vunpack.c.l.b16 %v86
  %v215 = vunpack.c.l.b16 %v87
  %v216 = vunpack.c.l.b16 %v88
  %v217 = vunpack.c.l.b16 %v89
  %v218 = vunpack.c.l.b16 %v90
  %v219 = vunpack.c.l.b16 %v91
  %v220 = vunpack.c.l.b16 %v92
  %v221 = vunpack.c.l.b16 %v93
  %v222 = vunpack.c.l.b16 %v94
  %v223 = vunpack.c.l.b16 %v95
  %v224 = vunpack.c.l.b16 %v96
  %v225 = vunpack.c.l.b16 %v97
  %v226 = vunpack.c.l.b16 %v98
  %v227 = vunpack.c.l.b16 %v99
  %v228 = vpack.c.b16 %v165, %v164
  %v229 = vpack.c.b16 %v167, %v166
  %v230 = vpack.c.b16 %v169, %v168
  %v231 = vpack.c.b16 %v171, %v170
  %v232 = vpack.c.b16 %v173, %v172
  %v233 = vpack.c.b16 %v175, %v174
  %v234 = vpack.c.b16 %v177, %v176
  %v235 = vpack.c.b16 %v179, %v178
  %v236 = vpack.c.b16 %v181, %v180
  %v237 = vpack.c.b16 %v183, %v182
  %v238 = vpack.c.b16 %v185, %v184
  %v239 = vpack.c.b16 %v187, %v186
  %v240 = vpack.c.b16 %v189, %v188
  %v241 = vpack.c.b16 %v191, %v190
  %v242 = vpack.c.b16 %v193, %v192
  %v243 = vpack.c.b16 %v195, %v194
  %v244 = vpack.c.b16 %v197, %v196
  %v245 = vpack.c.b16 %v199, %v198
  %v246 = vpack.c.b16 %v201, %v200
  %v247 = vpack.c.b16 %v203, %v202
  %v248 = vpack.c.b16 %v205, %v204
  %v249 = vpack.c.b16 %v207, %v206
  %v250 = vpack.c.b16 %v209, %v208
  %v251 = vpack.c.b16 %v211, %v210
  %v252 = vpack.c.b16 %v213, %v212
  %v253 = vpack.c.b16 %v215, %v214
  %v254 = vpack.c.b16 %v217, %v216
  %v255 = vpack.c.b16 %v219, %v218
  %v256 = vpack.c.b16 %v221, %v220
  %v257 = vpack.c.b16 %v223, %v222
  %v258 = vpack.c.b16 %v225, %v224
  %v259 = vpack.c.b16 %v227, %v226
  %292 = vmatprep.subr.bf16.mxu0 0
  %293 = vmatpush1.bf16.msra.mxu0 %v235
  %294 = vmatprep.subr.bf16.mxu0 0
  %295 = vmatpush1.bf16.msra.mxu0 %v234
  %296 = vmatprep.subr.bf16.mxu0 0
  %297 = vmatpush1.bf16.msra.mxu0 %v233
  %298 = vmatprep.subr.bf16.mxu0 0
  %299 = vmatpush1.bf16.msra.mxu0 %v232
  %300 = vmatprep.subr.bf16.mxu0 0
  %301 = vmatpush1.bf16.msra.mxu0 %v231
  %302 = vmatprep.subr.bf16.mxu0 0
  %303 = vmatpush1.bf16.msra.mxu0 %v230
  %304 = vmatprep.subr.bf16.mxu0 0
  %305 = vmatpush1.bf16.msra.mxu0 %v229
  %306 = vmatprep.subr.bf16.mxu0 0
  %307 = vmatpush1.bf16.msra.mxu0 %v228
  %308 = vmatprep.subr.bf16.mxu0 0
  %309 = vmatpush2.bf16.msra.mxu0 %v243
  %310 = vmatprep.subr.bf16.mxu0 0
  %311 = vmatpush2.bf16.msra.mxu0 %v242
  %312 = vmatprep.subr.bf16.mxu0 0
  %313 = vmatpush2.bf16.msra.mxu0 %v241
  %314 = vmatprep.subr.bf16.mxu0 0
  %315 = vmatpush2.bf16.msra.mxu0 %v240
  %316 = vmatprep.subr.bf16.mxu0 0
  %317 = vmatpush2.bf16.msra.mxu0 %v239
  %318 = vmatprep.subr.bf16.mxu0 0
  %319 = vmatpush2.bf16.msra.mxu0 %v238
  %320 = vmatprep.subr.bf16.mxu0 0
  %321 = vmatpush2.bf16.msra.mxu0 %v237
  %322 = vmatprep.subr.bf16.mxu0 0
  %323 = vmatpush2.bf16.msra.mxu0 %v236
  %324 = vmatprep.mubr.bf16.mxu0 %v33
  %325 = vmatmul.mubr.bf16.gmra.mxu0 %v32
  %v326 = vpop.f32.mrf.mxu0
  %v327 = vadd.f32 0.0, %v326
  %v328 = vpop.f32.mrf.mxu0
  %v329 = vpop.f32.mrf.mxu0
  %v330 = vpop.f32.mrf.mxu0
  %331 = vdwg.mxu0
  %332 = vmatprep.subr.bf16.mxu0 0
  %333 = vmatpush1.bf16.msra.mxu0 %v251
  %334 = vmatprep.subr.bf16.mxu0 0
  %335 = vmatpush1.bf16.msra.mxu0 %v250
  %336 = vmatprep.subr.bf16.mxu0 0
  %337 = vmatpush1.bf16.msra.mxu0 %v249
  %338 = vmatprep.subr.bf16.mxu0 0
  %339 = vmatpush1.bf16.msra.mxu0 %v248
  %340 = vmatprep.subr.bf16.mxu0 0
  %341 = vmatpush1.bf16.msra.mxu0 %v247
  %342 = vmatprep.subr.bf16.mxu0 0
  %343 = vmatpush1.bf16.msra.mxu0 %v246
  %344 = vmatprep.subr.bf16.mxu0 0
  %345 = vmatpush1.bf16.msra.mxu0 %v245
  %346 = vmatprep.subr.bf16.mxu0 0
  %347 = vmatpush1.bf16.msra.mxu0 %v244
  %348 = vmatprep.subr.bf16.mxu0 0
  %349 = vmatpush2.bf16.msra.mxu0 %v259
  %350 = vmatprep.subr.bf16.mxu0 0
  %351 = vmatpush2.bf16.msra.mxu0 %v258
  %352 = vmatprep.subr.bf16.mxu0 0
  %353 = vmatpush2.bf16.msra.mxu0 %v257
  %354 = vmatprep.subr.bf16.mxu0 0
  %355 = vmatpush2.bf16.msra.mxu0 %v256
  %356 = vmatprep.subr.bf16.mxu0 0
  %357 = vmatpush2.bf16.msra.mxu0 %v255
  %358 = vmatprep.subr.bf16.mxu0 0
  %359 = vmatpush2.bf16.msra.mxu0 %v254
  %360 = vmatprep.subr.bf16.mxu0 0
  %361 = vmatpush2.bf16.msra.mxu0 %v253
  %362 = vmatprep.subr.bf16.mxu0 0
  %363 = vmatpush2.bf16.msra.mxu0 %v252
  %364 = vmatprep.mubr.bf16.mxu0 %v35
  %365 = vmatmul.mubr.bf16.gmra.mxu0 %v34
  %v366 = vpop.f32.mrf.mxu0
  %v367 = vadd.f32 %v327, %v366
  %v368 = vpop.f32.mrf.mxu0
  %v369 = vpop.f32.mrf.mxu0
  %v370 = vpop.f32.mrf.mxu0
  %371 = vdwg.mxu0
  %v372 = vadd.f32 %v31, %v367
  %vm373 = vcmask 261120
  %374 = vst.msk [vmem:[#allocation2] sm:$0xff] %vm373, %v372
  // Predicated region
  $region18: #{unet_forward.56} parent=0 // pred_check
    %p375 = pneg %p15
  $region19: #{unet_forward.56} parent=0 // pred_check_branch
    %377 = sbr.rel (%p375) target = $region21
  $region20: #{unet_forward.56} parent=0 // pred_region
    %v378 = vld [vmem:[#allocation2] sm:$0xff]
    %v379 = vld [vmem:[%s2] sm:$0x1]
    %v381 = vlaneseq
    %v382 = vshrl.u32 %v381, 7
    %v383 = vsub.s32 0, %v382
    %v384 = vrot.slane %v379, %v383
    %v386 = vadd.f32 %v378, %v384
    %387 = vst.msk [vmem:[%s3] sm:$0xff] %vm373, %v386
  $region21: #{unet_forward.56} parent=0 // pred_fallthru
    _
  // Predicated region
  $region22: #{unet_forward.56} parent=0 // pred_check
    _
  $region23: #{unet_forward.56} parent=0 // pred_check_branch
    %389 = sbr.rel (0) target = $region25
  $region24: #{unet_forward.56} parent=0 // pred_region
    _
  $region25: #{unet_forward.56} parent=0 // pred_fallthru
    _
  // Predicated region
  $region26: #{unet_forward.56} parent=0 // pred_check
    _
  $region27: #{unet_forward.56} parent=0 // pred_check_branch
    %391 = sbr.rel (0) target = $region29
  $region28: #{unet_forward.56} parent=0 // pred_region
    _
  $region29: #{unet_forward.56} parent=0 // pred_fallthru
    _

// kernel: unet_forward.62
$region0: #{unet_forward.62}
  #allocation0 [shape = 'u32[]', space=smem, size = 0x4, offset = 0x4, fixed_abs, tag = 'smem constant byte address 0x4 - core index']
  #allocation1 [shape = 'u32[144,128]{1,0:T(1,128)}', space=vmem, size = 0x12000, scoped, tag = 'internal scratch']
  #allocation2 [shape = 'f32[32,16]{1,0:T(8,128)}', space=vmem, size = 0x4000, scoped, tag = 'scratch operand']
  %s0 = inlined_call_operand.vmem [shape: bf16[32,256], index: 0, kind: input, shape index: {}]
  %s1 = inlined_call_operand.vmem [shape: bf16[256,16], index: 1, kind: input, shape index: {}]
  %s2 = inlined_call_operand.vmem [shape: f32[1,16], index: 2, kind: input, shape index: {}]
  %s3 = inlined_call_operand.vmem [shape: f32[32,16], index: 3, kind: output, shape index: {}]
  %s4 = sld [smem:[#allocation0]]
  $region30: #{unet_forward.62} parent=0
    _
  %s6 = ssub.s32 1, %s4
  %s7 = scalar_select 0, %s6, %s4
  // Predicated region
  $region2: #{unet_forward.62} parent=0 // pred_check
    _
  $region3: #{unet_forward.62} parent=0 // pred_check_branch
    %9 = sbr.rel (0) target = $region5
  $region4: #{unet_forward.62} parent=0 // pred_region
    _
  $region5: #{unet_forward.62} parent=0 // pred_fallthru
    _
  // Predicated region
  $region6: #{unet_forward.62} parent=0 // pred_check
    _
  $region7: #{unet_forward.62} parent=0 // pred_check_branch
    %11 = sbr.rel (0) target = $region9
  $region8: #{unet_forward.62} parent=0 // pred_region
    _
  $region9: #{unet_forward.62} parent=0 // pred_fallthru
    _
  // Predicated region
  $region10: #{unet_forward.62} parent=0 // pred_check
    _
  $region11: #{unet_forward.62} parent=0 // pred_check_branch
    %13 = sbr.rel (0) target = $region13
  $region12: #{unet_forward.62} parent=0 // pred_region
    _
  $region13: #{unet_forward.62} parent=0 // pred_fallthru
    _
  %p15 = scmp.eq.s32.totalorder 0, 0
  // Predicated region
  $region14: #{unet_forward.62} parent=0 // pred_check
    %p16 = pneg %p15
  $region15: #{unet_forward.62} parent=0 // pred_check_branch
    %18 = sbr.rel (%p16) target = $region17
  $region16: #{unet_forward.62} parent=0 // pred_region
    %vm19 = vcmask 130048
    %20 = vst.msk [vmem:[#allocation2] sm:$0xff] %vm19, 0.0
    %21 = vst.msk [vmem:[#allocation2 + $0x8] sm:$0xff] %vm19, 0.0
    %22 = vst.msk [vmem:[#allocation2 + $0x10] sm:$0xff] %vm19, 0.0
    %23 = vst.msk [vmem:[#allocation2 + $0x18] sm:$0xff] %vm19, 0.0
  $region17: #{unet_forward.62} parent=0 // pred_fallthru
    _
  %v24 = vld [vmem:[%s0] sm:$0xff]
  %v25 = vld [vmem:[%s0 + $0x8] sm:$0xff]
  %v26 = vld [vmem:[%s0 + $0x10] sm:$0xff]
  %v27 = vld [vmem:[%s0 + $0x18] sm:$0xff]
  %v28 = vunpack.c.l.bf16 %v24
  %v29 = vunpack.c.h.bf16 %v24
  %v30 = vunpack.c.l.bf16 %v25
  %v31 = vunpack.c.h.bf16 %v25
  %v32 = vunpack.c.l.bf16 %v26
  %v33 = vunpack.c.h.bf16 %v26
  %v34 = vunpack.c.l.bf16 %v27
  %v35 = vunpack.c.h.bf16 %v27
  %v36 = vmax.f32 %v28, 0.0
  %v37 = vmax.f32 %v29, 0.0
  %v38 = vmax.f32 %v30, 0.0
  %v39 = vmax.f32 %v31, 0.0
  %v40 = vmax.f32 %v32, 0.0
  %v41 = vmax.f32 %v33, 0.0
  %v42 = vmax.f32 %v34, 0.0
  %v43 = vmax.f32 %v35, 0.0
  %v44 = vld [vmem:[#allocation2] sm:$0xff]
  %v45 = vld [vmem:[#allocation2 + $0x8] sm:$0xff]
  %v46 = vld [vmem:[#allocation2 + $0x10] sm:$0xff]
  %v47 = vld [vmem:[#allocation2 + $0x18] sm:$0xff]
  %v48 = vpack.c.bf16 %v38, %v36
  %v49 = vpack.c.bf16 %v39, %v37
  %v50 = vpack.c.bf16 %v42, %v40
  %v51 = vpack.c.bf16 %v43, %v41
  %v52 = vld [vmem:[%s1] sm:$0xf]
  %v53 = vld [vmem:[%s1 + $0x4] sm:$0xf]
  %v54 = vld [vmem:[%s1 + $0x8] sm:$0xf]
  %v55 = vld [vmem:[%s1 + $0xc] sm:$0xf]
  %v56 = vld [vmem:[%s1 + $0x10] sm:$0xf]
  %v57 = vld [vmem:[%s1 + $0x14] sm:$0xf]
  %v58 = vld [vmem:[%s1 + $0x18] sm:$0xf]
  %v59 = vld [vmem:[%s1 + $0x1c] sm:$0xf]
  %v60 = vld [vmem:[%s1 + $0x20] sm:$0xf]
  %v61 = vld [vmem:[%s1 + $0x24] sm:$0xf]
  %v62 = vld [vmem:[%s1 + $0x28] sm:$0xf]
  %v63 = vld [vmem:[%s1 + $0x2c] sm:$0xf]
  %v64 = vld [vmem:[%s1 + $0x30] sm:$0xf]
  %v65 = vld [vmem:[%s1 + $0x34] sm:$0xf]
  %v66 = vld [vmem:[%s1 + $0x38] sm:$0xf]
  %v67 = vld [vmem:[%s1 + $0x3c] sm:$0xf]
  %v68 = vld [vmem:[%s1 + $0x40] sm:$0xf]
  %v69 = vld [vmem:[%s1 + $0x44] sm:$0xf]
  %v70 = vld [vmem:[%s1 + $0x48] sm:$0xf]
  %v71 = vld [vmem:[%s1 + $0x4c] sm:$0xf]
  %v72 = vld [vmem:[%s1 + $0x50] sm:$0xf]
  %v73 = vld [vmem:[%s1 + $0x54] sm:$0xf]
  %v74 = vld [vmem:[%s1 + $0x58] sm:$0xf]
  %v75 = vld [vmem:[%s1 + $0x5c] sm:$0xf]
  %v76 = vld [vmem:[%s1 + $0x60] sm:$0xf]
  %v77 = vld [vmem:[%s1 + $0x64] sm:$0xf]
  %v78 = vld [vmem:[%s1 + $0x68] sm:$0xf]
  %v79 = vld [vmem:[%s1 + $0x6c] sm:$0xf]
  %v80 = vld [vmem:[%s1 + $0x70] sm:$0xf]
  %v81 = vld [vmem:[%s1 + $0x74] sm:$0xf]
  %v82 = vld [vmem:[%s1 + $0x78] sm:$0xf]
  %v83 = vld [vmem:[%s1 + $0x7c] sm:$0xf]
  %v116 = vunpack.c.l.b16 %v52
  %v117 = vunpack.c.l.b16 %v53
  %v118 = vunpack.c.l.b16 %v54
  %v119 = vunpack.c.l.b16 %v55
  %v120 = vunpack.c.l.b16 %v56
  %v121 = vunpack.c.l.b16 %v57
  %v122 = vunpack.c.l.b16 %v58
  %v123 = vunpack.c.l.b16 %v59
  %v124 = vunpack.c.l.b16 %v60
  %v125 = vunpack.c.l.b16 %v61
  %v126 = vunpack.c.l.b16 %v62
  %v127 = vunpack.c.l.b16 %v63
  %v128 = vunpack.c.l.b16 %v64
  %v129 = vunpack.c.l.b16 %v65
  %v130 = vunpack.c.l.b16 %v66
  %v131 = vunpack.c.l.b16 %v67
  %v132 = vunpack.c.l.b16 %v68
  %v133 = vunpack.c.l.b16 %v69
  %v134 = vunpack.c.l.b16 %v70
  %v135 = vunpack.c.l.b16 %v71
  %v136 = vunpack.c.l.b16 %v72
  %v137 = vunpack.c.l.b16 %v73
  %v138 = vunpack.c.l.b16 %v74
  %v139 = vunpack.c.l.b16 %v75
  %v140 = vunpack.c.l.b16 %v76
  %v141 = vunpack.c.l.b16 %v77
  %v142 = vunpack.c.l.b16 %v78
  %v143 = vunpack.c.l.b16 %v79
  %v144 = vunpack.c.l.b16 %v80
  %v145 = vunpack.c.l.b16 %v81
  %v146 = vunpack.c.l.b16 %v82
  %v147 = vunpack.c.l.b16 %v83
  %v148 = vpack.c.b16 %v117, %v116
  %v149 = vpack.c.b16 %v119, %v118
  %v150 = vpack.c.b16 %v121, %v120
  %v151 = vpack.c.b16 %v123, %v122
  %v152 = vpack.c.b16 %v125, %v124
  %v153 = vpack.c.b16 %v127, %v126
  %v154 = vpack.c.b16 %v129, %v128
  %v155 = vpack.c.b16 %v131, %v130
  %v156 = vpack.c.b16 %v133, %v132
  %v157 = vpack.c.b16 %v135, %v134
  %v158 = vpack.c.b16 %v137, %v136
  %v159 = vpack.c.b16 %v139, %v138
  %v160 = vpack.c.b16 %v141, %v140
  %v161 = vpack.c.b16 %v143, %v142
  %v162 = vpack.c.b16 %v145, %v144
  %v163 = vpack.c.b16 %v147, %v146
  %180 = vmatprep.subr.bf16.mxu0 0
  %181 = vmatpush1.bf16.msra.mxu0 %v155
  %182 = vmatprep.subr.bf16.mxu0 0
  %183 = vmatpush1.bf16.msra.mxu0 %v154
  %184 = vmatprep.subr.bf16.mxu0 0
  %185 = vmatpush1.bf16.msra.mxu0 %v153
  %186 = vmatprep.subr.bf16.mxu0 0
  %187 = vmatpush1.bf16.msra.mxu0 %v152
  %188 = vmatprep.subr.bf16.mxu0 0
  %189 = vmatpush1.bf16.msra.mxu0 %v151
  %190 = vmatprep.subr.bf16.mxu0 0
  %191 = vmatpush1.bf16.msra.mxu0 %v150
  %192 = vmatprep.subr.bf16.mxu0 0
  %193 = vmatpush1.bf16.msra.mxu0 %v149
  %194 = vmatprep.subr.bf16.mxu0 0
  %195 = vmatpush1.bf16.msra.mxu0 %v148
  %196 = vmatprep.subr.bf16.mxu0 0
  %197 = vmatpush2.bf16.msra.mxu0 %v163
  %198 = vmatprep.subr.bf16.mxu0 0
  %199 = vmatpush2.bf16.msra.mxu0 %v162
  %200 = vmatprep.subr.bf16.mxu0 0
  %201 = vmatpush2.bf16.msra.mxu0 %v161
  %202 = vmatprep.subr.bf16.mxu0 0
  %203 = vmatpush2.bf16.msra.mxu0 %v160
  %204 = vmatprep.subr.bf16.mxu0 0
  %205 = vmatpush2.bf16.msra.mxu0 %v159
  %206 = vmatprep.subr.bf16.mxu0 0
  %207 = vmatpush2.bf16.msra.mxu0 %v158
  %208 = vmatprep.subr.bf16.mxu0 0
  %209 = vmatpush2.bf16.msra.mxu0 %v157
  %210 = vmatprep.subr.bf16.mxu0 0
  %211 = vmatpush2.bf16.msra.mxu0 %v156
  %212 = vmatprep.mubr.bf16.mxu0 %v49
  %213 = vmatmul.mubr.bf16.gmra.mxu0 %v48
  %v214 = vpop.f32.mrf.mxu0
  %v215 = vadd.f32 0.0, %v214
  %v216 = vpop.f32.mrf.mxu0
  %v217 = vpop.f32.mrf.mxu0
  %v218 = vadd.f32 0.0, %v217
  %v219 = vpop.f32.mrf.mxu0
  %220 = vmatprep.mubr.bf16.mxu0 %v51
  %221 = vmatmul.mubr.bf16.gmra.mxu0 %v50
  %v222 = vpop.f32.mrf.mxu0
  %v223 = vadd.f32 0.0, %v222
  %v224 = vpop.f32.mrf.mxu0
  %v225 = vpop.f32.mrf.mxu0
  %v226 = vadd.f32 0.0, %v225
  %v227 = vpop.f32.mrf.mxu0
  %228 = vdwg.mxu0
  %v229 = vadd.f32 %v44, %v215
  %v230 = vadd.f32 %v45, %v218
  %v231 = vadd.f32 %v46, %v223
  %v232 = vadd.f32 %v47, %v226
  %vm233 = vcmask 130048
  %234 = vst.msk [vmem:[#allocation2] sm:$0xff] %vm233, %v229
  %235 = vst.msk [vmem:[#allocation2 + $0x8] sm:$0xff] %vm233, %v230
  %236 = vst.msk [vmem:[#allocation2 + $0x10] sm:$0xff] %vm233, %v231
  %237 = vst.msk [vmem:[#allocation2 + $0x18] sm:$0xff] %vm233, %v232
  // Predicated region
  $region18: #{unet_forward.62} parent=0 // pred_check
    %p238 = pneg %p15
  $region19: #{unet_forward.62} parent=0 // pred_check_branch
    %240 = sbr.rel (%p238) target = $region21
  $region20: #{unet_forward.62} parent=0 // pred_region
    %v241 = vld [vmem:[#allocation2] sm:$0xff]
    %v242 = vld [vmem:[#allocation2 + $0x8] sm:$0xff]
    %v243 = vld [vmem:[#allocation2 + $0x10] sm:$0xff]
    %v244 = vld [vmem:[#allocation2 + $0x18] sm:$0xff]
    %v245 = vld [vmem:[%s2] sm:$0x1]
    %v247 = vlaneseq
    %v248 = vshrl.u32 %v247, 7
    %v249 = vsub.s32 0, %v248
    %v250 = vrot.slane %v245, %v249
    %v252 = vadd.f32 %v241, %v250
    %v253 = vadd.f32 %v242, %v250
    %v254 = vadd.f32 %v243, %v250
    %v255 = vadd.f32 %v244, %v250
    %256 = vst.msk [vmem:[%s3] sm:$0xff] %vm233, %v252
    %257 = vst.msk [vmem:[%s3 + $0x8] sm:$0xff] %vm233, %v253
    %258 = vst.msk [vmem:[%s3 + $0x10] sm:$0xff] %vm233, %v254
    %259 = vst.msk [vmem:[%s3 + $0x18] sm:$0xff] %vm233, %v255
  $region21: #{unet_forward.62} parent=0 // pred_fallthru
    _
  // Predicated region
  $region22: #{unet_forward.62} parent=0 // pred_check
    _
  $region23: #{unet_forward.62} parent=0 // pred_check_branch
    %261 = sbr.rel (0) target = $region25
  $region24: #{unet_forward.62} parent=0 // pred_region
    _
  $region25: #{unet_forward.62} parent=0 // pred_fallthru
    _
  // Predicated region
  $region26: #{unet_forward.62} parent=0 // pred_check
    _
  $region27: #{unet_forward.62} parent=0 // pred_check_branch
    %263 = sbr.rel (0) target = $region29
  $region28: #{unet_forward.62} parent=0 // pred_region
    _
  $region29: #{unet_forward.62} parent=0 // pred_fallthru
    _

// kernel: unet_forward.68
$region0: #{unet_forward.68}
  #allocation0 [shape = 'u32[]', space=smem, size = 0x4, offset = 0x4, fixed_abs, tag = 'smem constant byte address 0x4 - core index']
  #allocation1 [shape = 'u32[144,128]{1,0:T(1,128)}', space=vmem, size = 0x12000, scoped, tag = 'internal scratch']
  #allocation2 [shape = 'f32[128,8]{1,0:T(8,128)}', space=vmem, size = 0x10000, scoped, tag = 'scratch operand']
  %s0 = inlined_call_operand.vmem [shape: bf16[128,128], index: 0, kind: input, shape index: {}]
  %s1 = inlined_call_operand.vmem [shape: bf16[128,8], index: 1, kind: input, shape index: {}]
  %s2 = inlined_call_operand.vmem [shape: f32[1,8], index: 2, kind: input, shape index: {}]
  %s3 = inlined_call_operand.vmem [shape: f32[128,8], index: 3, kind: output, shape index: {}]
  %s4 = sld [smem:[#allocation0]]
  $region30: #{unet_forward.68} parent=0
    _
  %s6 = ssub.s32 1, %s4
  %s7 = scalar_select 0, %s6, %s4
  // Predicated region
  $region2: #{unet_forward.68} parent=0 // pred_check
    _
  $region3: #{unet_forward.68} parent=0 // pred_check_branch
    %9 = sbr.rel (0) target = $region5
  $region4: #{unet_forward.68} parent=0 // pred_region
    _
  $region5: #{unet_forward.68} parent=0 // pred_fallthru
    _
  // Predicated region
  $region6: #{unet_forward.68} parent=0 // pred_check
    _
  $region7: #{unet_forward.68} parent=0 // pred_check_branch
    %11 = sbr.rel (0) target = $region9
  $region8: #{unet_forward.68} parent=0 // pred_region
    _
  $region9: #{unet_forward.68} parent=0 // pred_fallthru
    _
  // Predicated region
  $region10: #{unet_forward.68} parent=0 // pred_check
    _
  $region11: #{unet_forward.68} parent=0 // pred_check_branch
    %13 = sbr.rel (0) target = $region13
  $region12: #{unet_forward.68} parent=0 // pred_region
    _
  $region13: #{unet_forward.68} parent=0 // pred_fallthru
    _
  %p15 = scmp.eq.s32.totalorder 0, 0
  // Predicated region
  $region14: #{unet_forward.68} parent=0 // pred_check
    %p16 = pneg %p15
  $region15: #{unet_forward.68} parent=0 // pred_check_branch
    %18 = sbr.rel (%p16) target = $region17
  $region16: #{unet_forward.68} parent=0 // pred_region
    %vm19 = vcmask 64512
    %20 = vst.msk [vmem:[#allocation2] sm:$0xff] %vm19, 0.0
    %21 = vst.msk [vmem:[#allocation2 + $0x8] sm:$0xff] %vm19, 0.0
    %22 = vst.msk [vmem:[#allocation2 + $0x10] sm:$0xff] %vm19, 0.0
    %23 = vst.msk [vmem:[#allocation2 + $0x18] sm:$0xff] %vm19, 0.0
    %24 = vst.msk [vmem:[#allocation2 + $0x20] sm:$0xff] %vm19, 0.0
    %25 = vst.msk [vmem:[#allocation2 + $0x28] sm:$0xff] %vm19, 0.0
    %26 = vst.msk [vmem:[#allocation2 + $0x30] sm:$0xff] %vm19, 0.0
    %27 = vst.msk [vmem:[#allocation2 + $0x38] sm:$0xff] %vm19, 0.0
    %28 = vst.msk [vmem:[#allocation2 + $0x40] sm:$0xff] %vm19, 0.0
    %29 = vst.msk [vmem:[#allocation2 + $0x48] sm:$0xff] %vm19, 0.0
    %30 = vst.msk [vmem:[#allocation2 + $0x50] sm:$0xff] %vm19, 0.0
    %31 = vst.msk [vmem:[#allocation2 + $0x58] sm:$0xff] %vm19, 0.0
    %32 = vst.msk [vmem:[#allocation2 + $0x60] sm:$0xff] %vm19, 0.0
    %33 = vst.msk [vmem:[#allocation2 + $0x68] sm:$0xff] %vm19, 0.0
    %34 = vst.msk [vmem:[#allocation2 + $0x70] sm:$0xff] %vm19, 0.0
    %35 = vst.msk [vmem:[#allocation2 + $0x78] sm:$0xff] %vm19, 0.0
  $region17: #{unet_forward.68} parent=0 // pred_fallthru
    _
  %v36 = vld [vmem:[%s0] sm:$0xf]
  %v37 = vld [vmem:[%s0 + $0x4] sm:$0xf]
  %v38 = vld [vmem:[%s0 + $0x8] sm:$0xf]
  %v39 = vld [vmem:[%s0 + $0xc] sm:$0xf]
  %v40 = vld [vmem:[%s0 + $0x10] sm:$0xf]
  %v41 = vld [vmem:[%s0 + $0x14] sm:$0xf]
  %v42 = vld [vmem:[%s0 + $0x18] sm:$0xf]
  %v43 = vld [vmem:[%s0 + $0x1c] sm:$0xf]
  %v44 = vld [vmem:[%s0 + $0x20] sm:$0xf]
  %v45 = vld [vmem:[%s0 + $0x24] sm:$0xf]
  %v46 = vld [vmem:[%s0 + $0x28] sm:$0xf]
  %v47 = vld [vmem:[%s0 + $0x2c] sm:$0xf]
  %v48 = vld [vmem:[%s0 + $0x30] sm:$0xf]
  %v49 = vld [vmem:[%s0 + $0x34] sm:$0xf]
  %v50 = vld [vmem:[%s0 + $0x38] sm:$0xf]
  %v51 = vld [vmem:[%s0 + $0x3c] sm:$0xf]
  %v52 = vunpack.c.l.bf16 %v36
  %v53 = vunpack.c.l.bf16 %v37
  %v54 = vunpack.c.l.bf16 %v38
  %v55 = vunpack.c.l.bf16 %v39
  %v56 = vunpack.c.l.bf16 %v40
  %v57 = vunpack.c.l.bf16 %v41
  %v58 = vunpack.c.l.bf16 %v42
  %v59 = vunpack.c.l.bf16 %v43
  %v60 = vunpack.c.l.bf16 %v44
  %v61 = vunpack.c.l.bf16 %v45
  %v62 = vunpack.c.l.bf16 %v46
  %v63 = vunpack.c.l.bf16 %v47
  %v64 = vunpack.c.l.bf16 %v48
  %v65 = vunpack.c.l.bf16 %v49
  %v66 = vunpack.c.l.bf16 %v50
  %v67 = vunpack.c.l.bf16 %v51
  %v68 = vmax.f32 %v52, 0.0
  %v69 = vmax.f32 %v53, 0.0
  %v70 = vmax.f32 %v54, 0.0
  %v71 = vmax.f32 %v55, 0.0
  %v72 = vmax.f32 %v56, 0.0
  %v73 = vmax.f32 %v57, 0.0
  %v74 = vmax.f32 %v58, 0.0
  %v75 = vmax.f32 %v59, 0.0
  %v76 = vmax.f32 %v60, 0.0
  %v77 = vmax.f32 %v61, 0.0
  %v78 = vmax.f32 %v62, 0.0
  %v79 = vmax.f32 %v63, 0.0
  %v80 = vmax.f32 %v64, 0.0
  %v81 = vmax.f32 %v65, 0.0
  %v82 = vmax.f32 %v66, 0.0
  %v83 = vmax.f32 %v67, 0.0
  %v84 = vld [vmem:[#allocation2] sm:$0xff]
  %v85 = vld [vmem:[#allocation2 + $0x8] sm:$0xff]
  %v86 = vld [vmem:[#allocation2 + $0x10] sm:$0xff]
  %v87 = vld [vmem:[#allocation2 + $0x18] sm:$0xff]
  %v88 = vld [vmem:[#allocation2 + $0x20] sm:$0xff]
  %v89 = vld [vmem:[#allocation2 + $0x28] sm:$0xff]
  %v90 = vld [vmem:[#allocation2 + $0x30] sm:$0xff]
  %v91 = vld [vmem:[#allocation2 + $0x38] sm:$0xff]
  %v92 = vld [vmem:[#allocation2 + $0x40] sm:$0xff]
  %v93 = vld [vmem:[#allocation2 + $0x48] sm:$0xff]
  %v94 = vld [vmem:[#allocation2 + $0x50] sm:$0xff]
  %v95 = vld [vmem:[#allocation2 + $0x58] sm:$0xff]
  %v96 = vld [vmem:[#allocation2 + $0x60] sm:$0xff]
  %v97 = vld [vmem:[#allocation2 + $0x68] sm:$0xff]
  %v98 = vld [vmem:[#allocation2 + $0x70] sm:$0xff]
  %v99 = vld [vmem:[#allocation2 + $0x78] sm:$0xff]
  %v100 = vpack.c.bf16 %v69, %v68
  %v101 = vpack.c.bf16 %v71, %v70
  %v102 = vpack.c.bf16 %v73, %v72
  %v103 = vpack.c.bf16 %v75, %v74
  %v104 = vpack.c.bf16 %v77, %v76
  %v105 = vpack.c.bf16 %v79, %v78
  %v106 = vpack.c.bf16 %v81, %v80
  %v107 = vpack.c.bf16 %v83, %v82
  %v108 = vld [vmem:[%s1] sm:$0xf]
  %v109 = vld [vmem:[%s1 + $0x4] sm:$0xf]
  %v110 = vld [vmem:[%s1 + $0x8] sm:$0xf]
  %v111 = vld [vmem:[%s1 + $0xc] sm:$0xf]
  %v112 = vld [vmem:[%s1 + $0x10] sm:$0xf]
  %v113 = vld [vmem:[%s1 + $0x14] sm:$0xf]
  %v114 = vld [vmem:[%s1 + $0x18] sm:$0xf]
  %v115 = vld [vmem:[%s1 + $0x1c] sm:$0xf]
  %v116 = vld [vmem:[%s1 + $0x20] sm:$0xf]
  %v117 = vld [vmem:[%s1 + $0x24] sm:$0xf]
  %v118 = vld [vmem:[%s1 + $0x28] sm:$0xf]
  %v119 = vld [vmem:[%s1 + $0x2c] sm:$0xf]
  %v120 = vld [vmem:[%s1 + $0x30] sm:$0xf]
  %v121 = vld [vmem:[%s1 + $0x34] sm:$0xf]
  %v122 = vld [vmem:[%s1 + $0x38] sm:$0xf]
  %v123 = vld [vmem:[%s1 + $0x3c] sm:$0xf]
  %v140 = vunpack.c.l.b16 %v108
  %v141 = vunpack.c.l.b16 %v109
  %v142 = vunpack.c.l.b16 %v110
  %v143 = vunpack.c.l.b16 %v111
  %v144 = vunpack.c.l.b16 %v112
  %v145 = vunpack.c.l.b16 %v113
  %v146 = vunpack.c.l.b16 %v114
  %v147 = vunpack.c.l.b16 %v115
  %v148 = vunpack.c.l.b16 %v116
  %v149 = vunpack.c.l.b16 %v117
  %v150 = vunpack.c.l.b16 %v118
  %v151 = vunpack.c.l.b16 %v119
  %v152 = vunpack.c.l.b16 %v120
  %v153 = vunpack.c.l.b16 %v121
  %v154 = vunpack.c.l.b16 %v122
  %v155 = vunpack.c.l.b16 %v123
  %v156 = vpack.c.b16 %v141, %v140
  %v157 = vpack.c.b16 %v143, %v142
  %v158 = vpack.c.b16 %v145, %v144
  %v159 = vpack.c.b16 %v147, %v146
  %v160 = vpack.c.b16 %v149, %v148
  %v161 = vpack.c.b16 %v151, %v150
  %v162 = vpack.c.b16 %v153, %v152
  %v163 = vpack.c.b16 %v155, %v154
  %172 = vmatprep.subr.bf16.mxu0 0
  %173 = vmatpush1.bf16.msra.mxu0 %v163
  %174 = vmatprep.subr.bf16.mxu0 0
  %175 = vmatpush1.bf16.msra.mxu0 %v162
  %176 = vmatprep.subr.bf16.mxu0 0
  %177 = vmatpush1.bf16.msra.mxu0 %v161
  %178 = vmatprep.subr.bf16.mxu0 0
  %179 = vmatpush1.bf16.msra.mxu0 %v160
  %180 = vmatprep.subr.bf16.mxu0 0
  %181 = vmatpush1.bf16.msra.mxu0 %v159
  %182 = vmatprep.subr.bf16.mxu0 0
  %183 = vmatpush1.bf16.msra.mxu0 %v158
  %184 = vmatprep.subr.bf16.mxu0 0
  %185 = vmatpush1.bf16.msra.mxu0 %v157
  %186 = vmatprep.subr.bf16.mxu0 0
  %187 = vmatpush1.bf16.msra.mxu0 %v156
  %188 = vmatprep.subr.bf16.mxu0 0
  %189 = vmatpush2.bf16.msra.mxu0 0
  %190 = vmatprep.subr.bf16.mxu0 0
  %191 = vmatpush2.bf16.msra.mxu0 0
  %192 = vmatprep.subr.bf16.mxu0 0
  %193 = vmatpush2.bf16.msra.mxu0 0
  %194 = vmatprep.subr.bf16.mxu0 0
  %195 = vmatpush2.bf16.msra.mxu0 0
  %196 = vmatprep.subr.bf16.mxu0 0
  %197 = vmatpush2.bf16.msra.mxu0 0
  %198 = vmatprep.subr.bf16.mxu0 0
  %199 = vmatpush2.bf16.msra.mxu0 0
  %200 = vmatprep.subr.bf16.mxu0 0
  %201 = vmatpush2.bf16.msra.mxu0 0
  %202 = vmatprep.subr.bf16.mxu0 0
  %203 = vmatpush2.bf16.msra.mxu0 0
  %204 = vmatprep.mubr.bf16.mxu0 0
  %205 = vmatmul.mubr.bf16.gmra.mxu0 %v100
  %v206 = vpop.f32.mrf.mxu0
  %v207 = vadd.f32 0.0, %v206
  %v208 = vpop.f32.mrf.mxu0
  %v209 = vpop.f32.mrf.mxu0
  %v210 = vadd.f32 0.0, %v209
  %v211 = vpop.f32.mrf.mxu0
  %212 = vmatprep.mubr.bf16.mxu0 0
  %213 = vmatmul.mubr.bf16.gmra.mxu0 %v101
  %v214 = vpop.f32.mrf.mxu0
  %v215 = vadd.f32 0.0, %v214
  %v216 = vpop.f32.mrf.mxu0
  %v217 = vpop.f32.mrf.mxu0
  %v218 = vadd.f32 0.0, %v217
  %v219 = vpop.f32.mrf.mxu0
  %220 = vmatprep.mubr.bf16.mxu0 0
  %221 = vmatmul.mubr.bf16.gmra.mxu0 %v102
  %v222 = vpop.f32.mrf.mxu0
  %v223 = vadd.f32 0.0, %v222
  %v224 = vpop.f32.mrf.mxu0
  %v225 = vpop.f32.mrf.mxu0
  %v226 = vadd.f32 0.0, %v225
  %v227 = vpop.f32.mrf.mxu0
  %228 = vmatprep.mubr.bf16.mxu0 0
  %229 = vmatmul.mubr.bf16.gmra.mxu0 %v103
  %v230 = vpop.f32.mrf.mxu0
  %v231 = vadd.f32 0.0, %v230
  %v232 = vpop.f32.mrf.mxu0
  %v233 = vpop.f32.mrf.mxu0
  %v234 = vadd.f32 0.0, %v233
  %v235 = vpop.f32.mrf.mxu0
  %236 = vmatprep.mubr.bf16.mxu0 0
  %237 = vmatmul.mubr.bf16.gmra.mxu0 %v104
  %v238 = vpop.f32.mrf.mxu0
  %v239 = vadd.f32 0.0, %v238
  %v240 = vpop.f32.mrf.mxu0
  %v241 = vpop.f32.mrf.mxu0
  %v242 = vadd.f32 0.0, %v241
  %v243 = vpop.f32.mrf.mxu0
  %244 = vmatprep.mubr.bf16.mxu0 0
  %245 = vmatmul.mubr.bf16.gmra.mxu0 %v105
  %v246 = vpop.f32.mrf.mxu0
  %v247 = vadd.f32 0.0, %v246
  %v248 = vpop.f32.mrf.mxu0
  %v249 = vpop.f32.mrf.mxu0
  %v250 = vadd.f32 0.0, %v249
  %v251 = vpop.f32.mrf.mxu0
  %252 = vmatprep.mubr.bf16.mxu0 0
  %253 = vmatmul.mubr.bf16.gmra.mxu0 %v106
  %v254 = vpop.f32.mrf.mxu0
  %v255 = vadd.f32 0.0, %v254
  %v256 = vpop.f32.mrf.mxu0
  %v257 = vpop.f32.mrf.mxu0
  %v258 = vadd.f32 0.0, %v257
  %v259 = vpop.f32.mrf.mxu0
  %260 = vmatprep.mubr.bf16.mxu0 0
  %261 = vmatmul.mubr.bf16.gmra.mxu0 %v107
  %v262 = vpop.f32.mrf.mxu0
  %v263 = vadd.f32 0.0, %v262
  %v264 = vpop.f32.mrf.mxu0
  %v265 = vpop.f32.mrf.mxu0
  %v266 = vadd.f32 0.0, %v265
  %v267 = vpop.f32.mrf.mxu0
  %268 = vdwg.mxu0
  %v269 = vadd.f32 %v84, %v207
  %v270 = vadd.f32 %v85, %v210
  %v271 = vadd.f32 %v86, %v215
  %v272 = vadd.f32 %v87, %v218
  %v273 = vadd.f32 %v88, %v223
  %v274 = vadd.f32 %v89, %v226
  %v275 = vadd.f32 %v90, %v231
  %v276 = vadd.f32 %v91, %v234
  %v277 = vadd.f32 %v92, %v239
  %v278 = vadd.f32 %v93, %v242
  %v279 = vadd.f32 %v94, %v247
  %v280 = vadd.f32 %v95, %v250
  %v281 = vadd.f32 %v96, %v255
  %v282 = vadd.f32 %v97, %v258
  %v283 = vadd.f32 %v98, %v263
  %v284 = vadd.f32 %v99, %v266
  %vm285 = vcmask 64512
  %286 = vst.msk [vmem:[#allocation2] sm:$0xff] %vm285, %v269
  %287 = vst.msk [vmem:[#allocation2 + $0x8] sm:$0xff] %vm285, %v270
  %288 = vst.msk [vmem:[#allocation2 + $0x10] sm:$0xff] %vm285, %v271
  %289 = vst.msk [vmem:[#allocation2 + $0x18] sm:$0xff] %vm285, %v272
  %290 = vst.msk [vmem:[#allocation2 + $0x20] sm:$0xff] %vm285, %v273
  %291 = vst.msk [vmem:[#allocation2 + $0x28] sm:$0xff] %vm285, %v274
  %292 = vst.msk [vmem:[#allocation2 + $0x30] sm:$0xff] %vm285, %v275
  %293 = vst.msk [vmem:[#allocation2 + $0x38] sm:$0xff] %vm285, %v276
  %294 = vst.msk [vmem:[#allocation2 + $0x40] sm:$0xff] %vm285, %v277
  %295 = vst.msk [vmem:[#allocation2 + $0x48] sm:$0xff] %vm285, %v278
  %296 = vst.msk [vmem:[#allocation2 + $0x50] sm:$0xff] %vm285, %v279
  %297 = vst.msk [vmem:[#allocation2 + $0x58] sm:$0xff] %vm285, %v280
  %298 = vst.msk [vmem:[#allocation2 + $0x60] sm:$0xff] %vm285, %v281
  %299 = vst.msk [vmem:[#allocation2 + $0x68] sm:$0xff] %vm285, %v282
  %300 = vst.msk [vmem:[#allocation2 + $0x70] sm:$0xff] %vm285, %v283
  %301 = vst.msk [vmem:[#allocation2 + $0x78] sm:$0xff] %vm285, %v284
  // Predicated region
  $region18: #{unet_forward.68} parent=0 // pred_check
    %p302 = pneg %p15
  $region19: #{unet_forward.68} parent=0 // pred_check_branch
    %304 = sbr.rel (%p302) target = $region21
  $region20: #{unet_forward.68} parent=0 // pred_region
    %v305 = vld [vmem:[#allocation2] sm:$0xff]
    %v306 = vld [vmem:[#allocation2 + $0x8] sm:$0xff]
    %v307 = vld [vmem:[#allocation2 + $0x10] sm:$0xff]
    %v308 = vld [vmem:[#allocation2 + $0x18] sm:$0xff]
    %v309 = vld [vmem:[#allocation2 + $0x20] sm:$0xff]
    %v310 = vld [vmem:[#allocation2 + $0x28] sm:$0xff]
    %v311 = vld [vmem:[#allocation2 + $0x30] sm:$0xff]
    %v312 = vld [vmem:[#allocation2 + $0x38] sm:$0xff]
    %v313 = vld [vmem:[#allocation2 + $0x40] sm:$0xff]
    %v314 = vld [vmem:[#allocation2 + $0x48] sm:$0xff]
    %v315 = vld [vmem:[#allocation2 + $0x50] sm:$0xff]
    %v316 = vld [vmem:[#allocation2 + $0x58] sm:$0xff]
    %v317 = vld [vmem:[#allocation2 + $0x60] sm:$0xff]
    %v318 = vld [vmem:[#allocation2 + $0x68] sm:$0xff]
    %v319 = vld [vmem:[#allocation2 + $0x70] sm:$0xff]
    %v320 = vld [vmem:[#allocation2 + $0x78] sm:$0xff]
    %v321 = vld [vmem:[%s2] sm:$0x1]
    %v323 = vlaneseq
    %v324 = vshrl.u32 %v323, 7
    %v325 = vsub.s32 0, %v324
    %v326 = vrot.slane %v321, %v325
    %v328 = vadd.f32 %v305, %v326
    %v329 = vadd.f32 %v306, %v326
    %v330 = vadd.f32 %v307, %v326
    %v331 = vadd.f32 %v308, %v326
    %v332 = vadd.f32 %v309, %v326
    %v333 = vadd.f32 %v310, %v326
    %v334 = vadd.f32 %v311, %v326
    %v335 = vadd.f32 %v312, %v326
    %v336 = vadd.f32 %v313, %v326
    %v337 = vadd.f32 %v314, %v326
    %v338 = vadd.f32 %v315, %v326
    %v339 = vadd.f32 %v316, %v326
    %v340 = vadd.f32 %v317, %v326
    %v341 = vadd.f32 %v318, %v326
    %v342 = vadd.f32 %v319, %v326
    %v343 = vadd.f32 %v320, %v326
    %344 = vst.msk [vmem:[%s3] sm:$0xff] %vm285, %v328
    %345 = vst.msk [vmem:[%s3 + $0x8] sm:$0xff] %vm285, %v329
    %346 = vst.msk [vmem:[%s3 + $0x10] sm:$0xff] %vm285, %v330
    %347 = vst.msk [vmem:[%s3 + $0x18] sm:$0xff] %vm285, %v331
    %348 = vst.msk [vmem:[%s3 + $0x20] sm:$0xff] %vm285, %v332
    %349 = vst.msk [vmem:[%s3 + $0x28] sm:$0xff] %vm285, %v333
    %350 = vst.msk [vmem:[%s3 + $0x30] sm:$0xff] %vm285, %v334
    %351 = vst.msk [vmem:[%s3 + $0x38] sm:$0xff] %vm285, %v335
    %352 = vst.msk [vmem:[%s3 + $0x40] sm:$0xff] %vm285, %v336
    %353 = vst.msk [vmem:[%s3 + $0x48] sm:$0xff] %vm285, %v337
    %354 = vst.msk [vmem:[%s3 + $0x50] sm:$0xff] %vm285, %v338
    %355 = vst.msk [vmem:[%s3 + $0x58] sm:$0xff] %vm285, %v339
    %356 = vst.msk [vmem:[%s3 + $0x60] sm:$0xff] %vm285, %v340
    %357 = vst.msk [vmem:[%s3 + $0x68] sm:$0xff] %vm285, %v341
    %358 = vst.msk [vmem:[%s3 + $0x70] sm:$0xff] %vm285, %v342
    %359 = vst.msk [vmem:[%s3 + $0x78] sm:$0xff] %vm285, %v343
  $region21: #{unet_forward.68} parent=0 // pred_fallthru
    _
  // Predicated region
  $region22: #{unet_forward.68} parent=0 // pred_check
    _
  $region23: #{unet_forward.68} parent=0 // pred_check_branch
    %361 = sbr.rel (0) target = $region25
  $region24: #{unet_forward.68} parent=0 // pred_region
    _
  $region25: #{unet_forward.68} parent=0 // pred_fallthru
    _
  // Predicated region
  $region26: #{unet_forward.68} parent=0 // pred_check
    _
  $region27: #{unet_forward.68} parent=0 // pred_check_branch
    %363 = sbr.rel (0) target = $region29
  $region28: #{unet_forward.68} parent=0 // pred_region
    _
  $region29: #{unet_forward.68} parent=0 // pred_fallthru
    _

// kernel: unet_forward.72
$region0: #{unet_forward.72}
  #allocation0 [shape = 'u32[]', space=smem, size = 0x4, offset = 0x4, fixed_abs, tag = 'smem constant byte address 0x4 - core index']
  #allocation1 [shape = 'u32[144,128]{1,0:T(1,128)}', space=vmem, size = 0x12000, scoped, tag = 'internal scratch']
  %s0 = inlined_call_operand.vmem [shape: f32[512,8], index: 0, kind: input, shape index: {}]
  %s1 = inlined_call_operand.vmem [shape: f32[1,8], index: 1, kind: output, shape index: {0}]
  %s2 = inlined_call_operand.vmem [shape: f32[1,8], index: 2, kind: output, shape index: {1}]
  %3 = xla_tuple %s1, %s2
  %s4 = sld [smem:[#allocation0]]
  $region26: #{unet_forward.72} parent=0
    _
  %s6 = ssub.s32 1, %s4
  %s7 = scalar_select 0, %s6, %s4
  // Predicated region
  $region2: #{unet_forward.72} parent=0 // pred_check
    _
  $region3: #{unet_forward.72} parent=0 // pred_check_branch
    %9 = sbr.rel (0) target = $region5
  $region4: #{unet_forward.72} parent=0 // pred_region
    _
  $region5: #{unet_forward.72} parent=0 // pred_fallthru
    _
  %p10 = scmp.eq.s32.totalorder 0, 0
  // Predicated region
  $region6: #{unet_forward.72} parent=0 // pred_check
    %p11 = pneg %p10
  $region7: #{unet_forward.72} parent=0 // pred_check_branch
    %13 = sbr.rel (%p11) target = $region9
  $region8: #{unet_forward.72} parent=0 // pred_region
    %vm14 = vcmask 57344
    %15 = vst.msk [vmem:[%s1] sm:$0x1] %vm14, 0.0
    %16 = vst.msk [vmem:[%s2] sm:$0x1] %vm14, 0.0
  $region9: #{unet_forward.72} parent=0 // pred_fallthru
    _
  %v17 = vld [vmem:[%s0] sm:$0xff]
  %v18 = vld [vmem:[%s0 + $0x8] sm:$0xff]
  %v19 = vld [vmem:[%s0 + $0x10] sm:$0xff]
  %v20 = vld [vmem:[%s0 + $0x18] sm:$0xff]
  %v21 = vld [vmem:[%s0 + $0x20] sm:$0xff]
  %v22 = vld [vmem:[%s0 + $0x28] sm:$0xff]
  %v23 = vld [vmem:[%s0 + $0x30] sm:$0xff]
  %v24 = vld [vmem:[%s0 + $0x38] sm:$0xff]
  %v25 = vld [vmem:[%s0 + $0x40] sm:$0xff]
  %v26 = vld [vmem:[%s0 + $0x48] sm:$0xff]
  %v27 = vld [vmem:[%s0 + $0x50] sm:$0xff]
  %v28 = vld [vmem:[%s0 + $0x58] sm:$0xff]
  %v29 = vld [vmem:[%s0 + $0x60] sm:$0xff]
  %v30 = vld [vmem:[%s0 + $0x68] sm:$0xff]
  %v31 = vld [vmem:[%s0 + $0x70] sm:$0xff]
  %v32 = vld [vmem:[%s0 + $0x78] sm:$0xff]
  %v33 = vld [vmem:[%s0 + $0x80] sm:$0xff]
  %v34 = vld [vmem:[%s0 + $0x88] sm:$0xff]
  %v35 = vld [vmem:[%s0 + $0x90] sm:$0xff]
  %v36 = vld [vmem:[%s0 + $0x98] sm:$0xff]
  %v37 = vld [vmem:[%s0 + $0xa0] sm:$0xff]
  %v38 = vld [vmem:[%s0 + $0xa8] sm:$0xff]
  %v39 = vld [vmem:[%s0 + $0xb0] sm:$0xff]
  %v40 = vld [vmem:[%s0 + $0xb8] sm:$0xff]
  %v41 = vld [vmem:[%s0 + $0xc0] sm:$0xff]
  %v42 = vld [vmem:[%s0 + $0xc8] sm:$0xff]
  %v43 = vld [vmem:[%s0 + $0xd0] sm:$0xff]
  %v44 = vld [vmem:[%s0 + $0xd8] sm:$0xff]
  %v45 = vld [vmem:[%s0 + $0xe0] sm:$0xff]
  %v46 = vld [vmem:[%s0 + $0xe8] sm:$0xff]
  %v47 = vld [vmem:[%s0 + $0xf0] sm:$0xff]
  %v48 = vld [vmem:[%s0 + $0xf8] sm:$0xff]
  %v49 = vld [vmem:[%s0 + $0x100] sm:$0xff]
  %v50 = vld [vmem:[%s0 + $0x108] sm:$0xff]
  %v51 = vld [vmem:[%s0 + $0x110] sm:$0xff]
  %v52 = vld [vmem:[%s0 + $0x118] sm:$0xff]
  %v53 = vld [vmem:[%s0 + $0x120] sm:$0xff]
  %v54 = vld [vmem:[%s0 + $0x128] sm:$0xff]
  %v55 = vld [vmem:[%s0 + $0x130] sm:$0xff]
  %v56 = vld [vmem:[%s0 + $0x138] sm:$0xff]
  %v57 = vld [vmem:[%s0 + $0x140] sm:$0xff]
  %v58 = vld [vmem:[%s0 + $0x148] sm:$0xff]
  %v59 = vld [vmem:[%s0 + $0x150] sm:$0xff]
  %v60 = vld [vmem:[%s0 + $0x158] sm:$0xff]
  %v61 = vld [vmem:[%s0 + $0x160] sm:$0xff]
  %v62 = vld [vmem:[%s0 + $0x168] sm:$0xff]
  %v63 = vld [vmem:[%s0 + $0x170] sm:$0xff]
  %v64 = vld [vmem:[%s0 + $0x178] sm:$0xff]
  %v65 = vld [vmem:[%s0 + $0x180] sm:$0xff]
  %v66 = vld [vmem:[%s0 + $0x188] sm:$0xff]
  %v67 = vld [vmem:[%s0 + $0x190] sm:$0xff]
  %v68 = vld [vmem:[%s0 + $0x198] sm:$0xff]
  %v69 = vld [vmem:[%s0 + $0x1a0] sm:$0xff]
  %v70 = vld [vmem:[%s0 + $0x1a8] sm:$0xff]
  %v71 = vld [vmem:[%s0 + $0x1b0] sm:$0xff]
  %v72 = vld [vmem:[%s0 + $0x1b8] sm:$0xff]
  %v73 = vld [vmem:[%s0 + $0x1c0] sm:$0xff]
  %v74 = vld [vmem:[%s0 + $0x1c8] sm:$0xff]
  %v75 = vld [vmem:[%s0 + $0x1d0] sm:$0xff]
  %v76 = vld [vmem:[%s0 + $0x1d8] sm:$0xff]
  %v77 = vld [vmem:[%s0 + $0x1e0] sm:$0xff]
  %v78 = vld [vmem:[%s0 + $0x1e8] sm:$0xff]
  %v79 = vld [vmem:[%s0 + $0x1f0] sm:$0xff]
  %v80 = vld [vmem:[%s0 + $0x1f8] sm:$0xff]
  %v81 = vld [vmem:[%s1] sm:$0x1]
  %vm82 = vcmask 64512
  %v83 = vsel %vm82, %v17, 0.0
  %v84 = vsel %vm82, %v18, 0.0
  %v85 = vadd.f32 %v83, %v84
  %v86 = vsel %vm82, %v19, 0.0
  %v87 = vadd.f32 %v85, %v86
  %v88 = vsel %vm82, %v20, 0.0
  %v89 = vadd.f32 %v87, %v88
  %v90 = vsel %vm82, %v21, 0.0
  %v91 = vadd.f32 %v89, %v90
  %v92 = vsel %vm82, %v22, 0.0
  %v93 = vadd.f32 %v91, %v92
  %v94 = vsel %vm82, %v23, 0.0
  %v95 = vadd.f32 %v93, %v94
  %v96 = vsel %vm82, %v24, 0.0
  %v97 = vadd.f32 %v95, %v96
  %v98 = vsel %vm82, %v25, 0.0
  %v99 = vadd.f32 %v97, %v98
  %v100 = vsel %vm82, %v26, 0.0
  %v101 = vadd.f32 %v99, %v100
  %v102 = vsel %vm82, %v27, 0.0
  %v103 = vadd.f32 %v101, %v102
  %v104 = vsel %vm82, %v28, 0.0
  %v105 = vadd.f32 %v103, %v104
  %v106 = vsel %vm82, %v29, 0.0
  %v107 = vadd.f32 %v105, %v106
  %v108 = vsel %vm82, %v30, 0.0
  %v109 = vadd.f32 %v107, %v108
  %v110 = vsel %vm82, %v31, 0.0
  %v111 = vadd.f32 %v109, %v110
  %v112 = vsel %vm82, %v32, 0.0
  %v113 = vadd.f32 %v111, %v112
  %v114 = vsel %vm82, %v33, 0.0
  %v115 = vadd.f32 %v113, %v114
  %v116 = vsel %vm82, %v34, 0.0
  %v117 = vadd.f32 %v115, %v116
  %v118 = vsel %vm82, %v35, 0.0
  %v119 = vadd.f32 %v117, %v118
  %v120 = vsel %vm82, %v36, 0.0
  %v121 = vadd.f32 %v119, %v120
  %v122 = vsel %vm82, %v37, 0.0
  %v123 = vadd.f32 %v121, %v122
  %v124 = vsel %vm82, %v38, 0.0
  %v125 = vadd.f32 %v123, %v124
  %v126 = vsel %vm82, %v39, 0.0
  %v127 = vadd.f32 %v125, %v126
  %v128 = vsel %vm82, %v40, 0.0
  %v129 = vadd.f32 %v127, %v128
  %v130 = vsel %vm82, %v41, 0.0
  %v131 = vadd.f32 %v129, %v130
  %v132 = vsel %vm82, %v42, 0.0
  %v133 = vadd.f32 %v131, %v132
  %v134 = vsel %vm82, %v43, 0.0
  %v135 = vadd.f32 %v133, %v134
  %v136 = vsel %vm82, %v44, 0.0
  %v137 = vadd.f32 %v135, %v136
  %v138 = vsel %vm82, %v45, 0.0
  %v139 = vadd.f32 %v137, %v138
  %v140 = vsel %vm82, %v46, 0.0
  %v141 = vadd.f32 %v139, %v140
  %v142 = vsel %vm82, %v47, 0.0
  %v143 = vadd.f32 %v141, %v142
  %v144 = vsel %vm82, %v48, 0.0
  %v145 = vadd.f32 %v143, %v144
  %v146 = vsel %vm82, %v49, 0.0
  %v147 = vadd.f32 %v145, %v146
  %v148 = vsel %vm82, %v50, 0.0
  %v149 = vadd.f32 %v147, %v148
  %v150 = vsel %vm82, %v51, 0.0
  %v151 = vadd.f32 %v149, %v150
  %v152 = vsel %vm82, %v52, 0.0
  %v153 = vadd.f32 %v151, %v152
  %v154 = vsel %vm82, %v53, 0.0
  %v155 = vadd.f32 %v153, %v154
  %v156 = vsel %vm82, %v54, 0.0
  %v157 = vadd.f32 %v155, %v156
  %v158 = vsel %vm82, %v55, 0.0
  %v159 = vadd.f32 %v157, %v158
  %v160 = vsel %vm82, %v56, 0.0
  %v161 = vadd.f32 %v159, %v160
  %v162 = vsel %vm82, %v57, 0.0
  %v163 = vadd.f32 %v161, %v162
  %v164 = vsel %vm82, %v58, 0.0
  %v165 = vadd.f32 %v163, %v164
  %v166 = vsel %vm82, %v59, 0.0
  %v167 = vadd.f32 %v165, %v166
  %v168 = vsel %vm82, %v60, 0.0
  %v169 = vadd.f32 %v167, %v168
  %v170 = vsel %vm82, %v61, 0.0
  %v171 = vadd.f32 %v169, %v170
  %v172 = vsel %vm82, %v62, 0.0
  %v173 = vadd.f32 %v171, %v172
  %v174 = vsel %vm82, %v63, 0.0
  %v175 = vadd.f32 %v173, %v174
  %v176 = vsel %vm82, %v64, 0.0
  %v177 = vadd.f32 %v175, %v176
  %v178 = vsel %vm82, %v65, 0.0
  %v179 = vadd.f32 %v177, %v178
  %v180 = vsel %vm82, %v66, 0.0
  %v181 = vadd.f32 %v179, %v180
  %v182 = vsel %vm82, %v67, 0.0
  %v183 = vadd.f32 %v181, %v182
  %v184 = vsel %vm82, %v68, 0.0
  %v185 = vadd.f32 %v183, %v184
  %v186 = vsel %vm82, %v69, 0.0
  %v187 = vadd.f32 %v185, %v186
  %v188 = vsel %vm82, %v70, 0.0
  %v189 = vadd.f32 %v187, %v188
  %v190 = vsel %vm82, %v71, 0.0
  %v191 = vadd.f32 %v189, %v190
  %v192 = vsel %vm82, %v72, 0.0
  %v193 = vadd.f32 %v191, %v192
  %v194 = vsel %vm82, %v73, 0.0
  %v195 = vadd.f32 %v193, %v194
  %v196 = vsel %vm82, %v74, 0.0
  %v197 = vadd.f32 %v195, %v196
  %v198 = vsel %vm82, %v75, 0.0
  %v199 = vadd.f32 %v197, %v198
  %v200 = vsel %vm82, %v76, 0.0
  %v201 = vadd.f32 %v199, %v200
  %v202 = vsel %vm82, %v77, 0.0
  %v203 = vadd.f32 %v201, %v202
  %v204 = vsel %vm82, %v78, 0.0
  %v205 = vadd.f32 %v203, %v204
  %v206 = vsel %vm82, %v79, 0.0
  %v207 = vadd.f32 %v205, %v206
  %v208 = vsel %vm82, %v80, 0.0
  %v209 = vadd.f32 %v207, %v208
  %v210 = vrot.slane %v209, 4
  %v211 = vadd.f32 %v209, %v210
  %v212 = vrot.slane %v211, 2
  %v213 = vadd.f32 %v211, %v212
  %v214 = vrot.slane %v213, 1
  %v215 = vadd.f32 %v213, %v214
  %v216 = vadd.f32 %v81, %v215
  %vm217 = vcmask 57344
  %218 = vst.msk [vmem:[%s1] sm:$0x1] %vm217, %v216
  %v219 = vld [vmem:[%s2] sm:$0x1]
  %v220 = vmul.f32 %v17, %v17
  %v221 = vmul.f32 %v18, %v18
  %v222 = vmul.f32 %v19, %v19
  %v223 = vmul.f32 %v20, %v20
  %v224 = vmul.f32 %v21, %v21
  %v225 = vmul.f32 %v22, %v22
  %v226 = vmul.f32 %v23, %v23
  %v227 = vmul.f32 %v24, %v24
  %v228 = vmul.f32 %v25, %v25
  %v229 = vmul.f32 %v26, %v26
  %v230 = vmul.f32 %v27, %v27
  %v231 = vmul.f32 %v28, %v28
  %v232 = vmul.f32 %v29, %v29
  %v233 = vmul.f32 %v30, %v30
  %v234 = vmul.f32 %v31, %v31
  %v235 = vmul.f32 %v32, %v32
  %v236 = vmul.f32 %v33, %v33
  %v237 = vmul.f32 %v34, %v34
  %v238 = vmul.f32 %v35, %v35
  %v239 = vmul.f32 %v36, %v36
  %v240 = vmul.f32 %v37, %v37
  %v241 = vmul.f32 %v38, %v38
  %v242 = vmul.f32 %v39, %v39
  %v243 = vmul.f32 %v40, %v40
  %v244 = vmul.f32 %v41, %v41
  %v245 = vmul.f32 %v42, %v42
  %v246 = vmul.f32 %v43, %v43
  %v247 = vmul.f32 %v44, %v44
  %v248 = vmul.f32 %v45, %v45
  %v249 = vmul.f32 %v46, %v46
  %v250 = vmul.f32 %v47, %v47
  %v251 = vmul.f32 %v48, %v48
  %v252 = vmul.f32 %v49, %v49
  %v253 = vmul.f32 %v50, %v50
  %v254 = vmul.f32 %v51, %v51
  %v255 = vmul.f32 %v52, %v52
  %v256 = vmul.f32 %v53, %v53
  %v257 = vmul.f32 %v54, %v54
  %v258 = vmul.f32 %v55, %v55
  %v259 = vmul.f32 %v56, %v56
  %v260 = vmul.f32 %v57, %v57
  %v261 = vmul.f32 %v58, %v58
  %v262 = vmul.f32 %v59, %v59
  %v263 = vmul.f32 %v60, %v60
  %v264 = vmul.f32 %v61, %v61
  %v265 = vmul.f32 %v62, %v62
  %v266 = vmul.f32 %v63, %v63
  %v267 = vmul.f32 %v64, %v64
  %v268 = vmul.f32 %v65, %v65
  %v269 = vmul.f32 %v66, %v66
  %v270 = vmul.f32 %v67, %v67
  %v271 = vmul.f32 %v68, %v68
  %v272 = vmul.f32 %v69, %v69
  %v273 = vmul.f32 %v70, %v70
  %v274 = vmul.f32 %v71, %v71
  %v275 = vmul.f32 %v72, %v72
  %v276 = vmul.f32 %v73, %v73
  %v277 = vmul.f32 %v74, %v74
  %v278 = vmul.f32 %v75, %v75
  %v279 = vmul.f32 %v76, %v76
  %v280 = vmul.f32 %v77, %v77
  %v281 = vmul.f32 %v78, %v78
  %v282 = vmul.f32 %v79, %v79
  %v283 = vmul.f32 %v80, %v80
  %v284 = vsel %vm82, %v220, 0.0
  %v285 = vsel %vm82, %v221, 0.0
  %v286 = vadd.f32 %v284, %v285
  %v287 = vsel %vm82, %v222, 0.0
  %v288 = vadd.f32 %v286, %v287
  %v289 = vsel %vm82, %v223, 0.0
  %v290 = vadd.f32 %v288, %v289
  %v291 = vsel %vm82, %v224, 0.0
  %v292 = vadd.f32 %v290, %v291
  %v293 = vsel %vm82, %v225, 0.0
  %v294 = vadd.f32 %v292, %v293
  %v295 = vsel %vm82, %v226, 0.0
  %v296 = vadd.f32 %v294, %v295
  %v297 = vsel %vm82, %v227, 0.0
  %v298 = vadd.f32 %v296, %v297
  %v299 = vsel %vm82, %v228, 0.0
  %v300 = vadd.f32 %v298, %v299
  %v301 = vsel %vm82, %v229, 0.0
  %v302 = vadd.f32 %v300, %v301
  %v303 = vsel %vm82, %v230, 0.0
  %v304 = vadd.f32 %v302, %v303
  %v305 = vsel %vm82, %v231, 0.0
  %v306 = vadd.f32 %v304, %v305
  %v307 = vsel %vm82, %v232, 0.0
  %v308 = vadd.f32 %v306, %v307
  %v309 = vsel %vm82, %v233, 0.0
  %v310 = vadd.f32 %v308, %v309
  %v311 = vsel %vm82, %v234, 0.0
  %v312 = vadd.f32 %v310, %v311
  %v313 = vsel %vm82, %v235, 0.0
  %v314 = vadd.f32 %v312, %v313
  %v315 = vsel %vm82, %v236, 0.0
  %v316 = vadd.f32 %v314, %v315
  %v317 = vsel %vm82, %v237, 0.0
  %v318 = vadd.f32 %v316, %v317
  %v319 = vsel %vm82, %v238, 0.0
  %v320 = vadd.f32 %v318, %v319
  %v321 = vsel %vm82, %v239, 0.0
  %v322 = vadd.f32 %v320, %v321
  %v323 = vsel %vm82, %v240, 0.0
  %v324 = vadd.f32 %v322, %v323
  %v325 = vsel %vm82, %v241, 0.0
  %v326 = vadd.f32 %v324, %v325
  %v327 = vsel %vm82, %v242, 0.0
  %v328 = vadd.f32 %v326, %v327
  %v329 = vsel %vm82, %v243, 0.0
  %v330 = vadd.f32 %v328, %v329
  %v331 = vsel %vm82, %v244, 0.0
  %v332 = vadd.f32 %v330, %v331
  %v333 = vsel %vm82, %v245, 0.0
  %v334 = vadd.f32 %v332, %v333
  %v335 = vsel %vm82, %v246, 0.0
  %v336 = vadd.f32 %v334, %v335
  %v337 = vsel %vm82, %v247, 0.0
  %v338 = vadd.f32 %v336, %v337
  %v339 = vsel %vm82, %v248, 0.0
  %v340 = vadd.f32 %v338, %v339
  %v341 = vsel %vm82, %v249, 0.0
  %v342 = vadd.f32 %v340, %v341
  %v343 = vsel %vm82, %v250, 0.0
  %v344 = vadd.f32 %v342, %v343
  %v345 = vsel %vm82, %v251, 0.0
  %v346 = vadd.f32 %v344, %v345
  %v347 = vsel %vm82, %v252, 0.0
  %v348 = vadd.f32 %v346, %v347
  %v349 = vsel %vm82, %v253, 0.0
  %v350 = vadd.f32 %v348, %v349
  %v351 = vsel %vm82, %v254, 0.0
  %v352 = vadd.f32 %v350, %v351
  %v353 = vsel %vm82, %v255, 0.0
  %v354 = vadd.f32 %v352, %v353
  %v355 = vsel %vm82, %v256, 0.0
  %v356 = vadd.f32 %v354, %v355
  %v357 = vsel %vm82, %v257, 0.0
  %v358 = vadd.f32 %v356, %v357
  %v359 = vsel %vm82, %v258, 0.0
  %v360 = vadd.f32 %v358, %v359
  %v361 = vsel %vm82, %v259, 0.0
  %v362 = vadd.f32 %v360, %v361
  %v363 = vsel %vm82, %v260, 0.0
  %v364 = vadd.f32 %v362, %v363
  %v365 = vsel %vm82, %v261, 0.0
  %v366 = vadd.f32 %v364, %v365
  %v367 = vsel %vm82, %v262, 0.0
  %v368 = vadd.f32 %v366, %v367
  %v369 = vsel %vm82, %v263, 0.0
  %v370 = vadd.f32 %v368, %v369
  %v371 = vsel %vm82, %v264, 0.0
  %v372 = vadd.f32 %v370, %v371
  %v373 = vsel %vm82, %v265, 0.0
  %v374 = vadd.f32 %v372, %v373
  %v375 = vsel %vm82, %v266, 0.0
  %v376 = vadd.f32 %v374, %v375
  %v377 = vsel %vm82, %v267, 0.0
  %v378 = vadd.f32 %v376, %v377
  %v379 = vsel %vm82, %v268, 0.0
  %v380 = vadd.f32 %v378, %v379
  %v381 = vsel %vm82, %v269, 0.0
  %v382 = vadd.f32 %v380, %v381
  %v383 = vsel %vm82, %v270, 0.0
  %v384 = vadd.f32 %v382, %v383
  %v385 = vsel %vm82, %v271, 0.0
  %v386 = vadd.f32 %v384, %v385
  %v387 = vsel %vm82, %v272, 0.0
  %v388 = vadd.f32 %v386, %v387
  %v389 = vsel %vm82, %v273, 0.0
  %v390 = vadd.f32 %v388, %v389
  %v391 = vsel %vm82, %v274, 0.0
  %v392 = vadd.f32 %v390, %v391
  %v393 = vsel %vm82, %v275, 0.0
  %v394 = vadd.f32 %v392, %v393
  %v395 = vsel %vm82, %v276, 0.0
  %v396 = vadd.f32 %v394, %v395
  %v397 = vsel %vm82, %v277, 0.0
  %v398 = vadd.f32 %v396, %v397
  %v399 = vsel %vm82, %v278, 0.0
  %v400 = vadd.f32 %v398, %v399
  %v401 = vsel %vm82, %v279, 0.0
  %v402 = vadd.f32 %v400, %v401
  %v403 = vsel %vm82, %v280, 0.0
  %v404 = vadd.f32 %v402, %v403
  %v405 = vsel %vm82, %v281, 0.0
  %v406 = vadd.f32 %v404, %v405
  %v407 = vsel %vm82, %v282, 0.0
  %v408 = vadd.f32 %v406, %v407
  %v409 = vsel %vm82, %v283, 0.0
  %v410 = vadd.f32 %v408, %v409
  %v411 = vrot.slane %v410, 4
  %v412 = vadd.f32 %v410, %v411
  %v413 = vrot.slane %v412, 2
  %v414 = vadd.f32 %v412, %v413
  %v415 = vrot.slane %v414, 1
  %v416 = vadd.f32 %v414, %v415
  %v417 = vadd.f32 %v219, %v416
  %418 = vst.msk [vmem:[%s2] sm:$0x1] %vm217, %v417
  // Predicated region
  $region10: #{unet_forward.72} parent=0 // pred_check
    _
  $region11: #{unet_forward.72} parent=0 // pred_check_branch
    %420 = sbr.rel (0) target = $region13
  $region12: #{unet_forward.72} parent=0 // pred_region
    _
  $region13: #{unet_forward.72} parent=0 // pred_fallthru
    _
  // Predicated region
  $region14: #{unet_forward.72} parent=0 // pred_check
    _
  $region15: #{unet_forward.72} parent=0 // pred_check_branch
    %422 = sbr.rel (0) target = $region17
  $region16: #{unet_forward.72} parent=0 // pred_region
    _
  $region17: #{unet_forward.72} parent=0 // pred_fallthru
    _
  // Predicated region
  $region18: #{unet_forward.72} parent=0 // pred_check
    _
  $region19: #{unet_forward.72} parent=0 // pred_check_branch
    %424 = sbr.rel (0) target = $region21
  $region20: #{unet_forward.72} parent=0 // pred_region
    _
  $region21: #{unet_forward.72} parent=0 // pred_fallthru
    _
  // Predicated region
  $region22: #{unet_forward.72} parent=0 // pred_check
    _
  $region23: #{unet_forward.72} parent=0 // pred_check_branch
    %426 = sbr.rel (0) target = $region25
  $region24: #{unet_forward.72} parent=0 // pred_region
    _
  $region25: #{unet_forward.72} parent=0 // pred_fallthru
    _

// kernel: unet_forward.73
$region0: #{unet_forward.73}
  #allocation0 [shape = 'u32[]', space=smem, size = 0x4, offset = 0x4, fixed_abs, tag = 'smem constant byte address 0x4 - core index']
  #allocation1 [shape = 'u32[144,128]{1,0:T(1,128)}', space=vmem, size = 0x12000, scoped, tag = 'internal scratch']
  %s0 = inlined_call_operand.vmem [shape: f32[512,8], index: 0, kind: input, shape index: {}]
  %s1 = inlined_call_operand.vmem [shape: f32[1,8], index: 1, kind: input, shape index: {}]
  %s2 = inlined_call_operand.vmem [shape: f32[1,8], index: 2, kind: input, shape index: {}]
  %s3 = inlined_call_operand.vmem [shape: f32[512,8], index: 3, kind: output, shape index: {}]
  %s4 = sld [smem:[#allocation0]]
  $region22: #{unet_forward.73} parent=0
    _
  %s6 = ssub.s32 1, %s4
  %s7 = scalar_select 0, %s6, %s4
  // Predicated region
  $region2: #{unet_forward.73} parent=0 // pred_check
    _
  $region3: #{unet_forward.73} parent=0 // pred_check_branch
    %9 = sbr.rel (0) target = $region5
  $region4: #{unet_forward.73} parent=0 // pred_region
    _
  $region5: #{unet_forward.73} parent=0 // pred_fallthru
    _
  // Predicated region
  $region6: #{unet_forward.73} parent=0 // pred_check
    _
  $region7: #{unet_forward.73} parent=0 // pred_check_branch
    %11 = sbr.rel (0) target = $region9
  $region8: #{unet_forward.73} parent=0 // pred_region
    _
  $region9: #{unet_forward.73} parent=0 // pred_fallthru
    _
  // Predicated region
  $region10: #{unet_forward.73} parent=0 // pred_check
    _
  $region11: #{unet_forward.73} parent=0 // pred_check_branch
    %13 = sbr.rel (0) target = $region13
  $region12: #{unet_forward.73} parent=0 // pred_region
    _
  $region13: #{unet_forward.73} parent=0 // pred_fallthru
    _
  %v14 = vld [vmem:[%s0] sm:$0xff]
  %v15 = vld [vmem:[%s0 + $0x8] sm:$0xff]
  %v16 = vld [vmem:[%s0 + $0x10] sm:$0xff]
  %v17 = vld [vmem:[%s0 + $0x18] sm:$0xff]
  %v18 = vld [vmem:[%s0 + $0x20] sm:$0xff]
  %v19 = vld [vmem:[%s0 + $0x28] sm:$0xff]
  %v20 = vld [vmem:[%s0 + $0x30] sm:$0xff]
  %v21 = vld [vmem:[%s0 + $0x38] sm:$0xff]
  %v22 = vld [vmem:[%s0 + $0x40] sm:$0xff]
  %v23 = vld [vmem:[%s0 + $0x48] sm:$0xff]
  %v24 = vld [vmem:[%s0 + $0x50] sm:$0xff]
  %v25 = vld [vmem:[%s0 + $0x58] sm:$0xff]
  %v26 = vld [vmem:[%s0 + $0x60] sm:$0xff]
  %v27 = vld [vmem:[%s0 + $0x68] sm:$0xff]
  %v28 = vld [vmem:[%s0 + $0x70] sm:$0xff]
  %v29 = vld [vmem:[%s0 + $0x78] sm:$0xff]
  %v30 = vld [vmem:[%s0 + $0x80] sm:$0xff]
  %v31 = vld [vmem:[%s0 + $0x88] sm:$0xff]
  %v32 = vld [vmem:[%s0 + $0x90] sm:$0xff]
  %v33 = vld [vmem:[%s0 + $0x98] sm:$0xff]
  %v34 = vld [vmem:[%s0 + $0xa0] sm:$0xff]
  %v35 = vld [vmem:[%s0 + $0xa8] sm:$0xff]
  %v36 = vld [vmem:[%s0 + $0xb0] sm:$0xff]
  %v37 = vld [vmem:[%s0 + $0xb8] sm:$0xff]
  %v38 = vld [vmem:[%s0 + $0xc0] sm:$0xff]
  %v39 = vld [vmem:[%s0 + $0xc8] sm:$0xff]
  %v40 = vld [vmem:[%s0 + $0xd0] sm:$0xff]
  %v41 = vld [vmem:[%s0 + $0xd8] sm:$0xff]
  %v42 = vld [vmem:[%s0 + $0xe0] sm:$0xff]
  %v43 = vld [vmem:[%s0 + $0xe8] sm:$0xff]
  %v44 = vld [vmem:[%s0 + $0xf0] sm:$0xff]
  %v45 = vld [vmem:[%s0 + $0xf8] sm:$0xff]
  %v46 = vld [vmem:[%s0 + $0x100] sm:$0xff]
  %v47 = vld [vmem:[%s0 + $0x108] sm:$0xff]
  %v48 = vld [vmem:[%s0 + $0x110] sm:$0xff]
  %v49 = vld [vmem:[%s0 + $0x118] sm:$0xff]
  %v50 = vld [vmem:[%s0 + $0x120] sm:$0xff]
  %v51 = vld [vmem:[%s0 + $0x128] sm:$0xff]
  %v52 = vld [vmem:[%s0 + $0x130] sm:$0xff]
  %v53 = vld [vmem:[%s0 + $0x138] sm:$0xff]
  %v54 = vld [vmem:[%s0 + $0x140] sm:$0xff]
  %v55 = vld [vmem:[%s0 + $0x148] sm:$0xff]
  %v56 = vld [vmem:[%s0 + $0x150] sm:$0xff]
  %v57 = vld [vmem:[%s0 + $0x158] sm:$0xff]
  %v58 = vld [vmem:[%s0 + $0x160] sm:$0xff]
  %v59 = vld [vmem:[%s0 + $0x168] sm:$0xff]
  %v60 = vld [vmem:[%s0 + $0x170] sm:$0xff]
  %v61 = vld [vmem:[%s0 + $0x178] sm:$0xff]
  %v62 = vld [vmem:[%s0 + $0x180] sm:$0xff]
  %v63 = vld [vmem:[%s0 + $0x188] sm:$0xff]
  %v64 = vld [vmem:[%s0 + $0x190] sm:$0xff]
  %v65 = vld [vmem:[%s0 + $0x198] sm:$0xff]
  %v66 = vld [vmem:[%s0 + $0x1a0] sm:$0xff]
  %v67 = vld [vmem:[%s0 + $0x1a8] sm:$0xff]
  %v68 = vld [vmem:[%s0 + $0x1b0] sm:$0xff]
  %v69 = vld [vmem:[%s0 + $0x1b8] sm:$0xff]
  %v70 = vld [vmem:[%s0 + $0x1c0] sm:$0xff]
  %v71 = vld [vmem:[%s0 + $0x1c8] sm:$0xff]
  %v72 = vld [vmem:[%s0 + $0x1d0] sm:$0xff]
  %v73 = vld [vmem:[%s0 + $0x1d8] sm:$0xff]
  %v74 = vld [vmem:[%s0 + $0x1e0] sm:$0xff]
  %v75 = vld [vmem:[%s0 + $0x1e8] sm:$0xff]
  %v76 = vld [vmem:[%s0 + $0x1f0] sm:$0xff]
  %v77 = vld [vmem:[%s0 + $0x1f8] sm:$0xff]
  %v78 = vld [vmem:[%s1] sm:$0x1]
  %v80 = vlaneseq
  %v81 = vshrl.u32 %v80, 7
  %v82 = vsub.s32 0, %v81
  %v83 = vrot.slane %v78, %v82
  %v85 = vmul.f32 %v14, %v83
  %v86 = vmul.f32 %v15, %v83
  %v87 = vmul.f32 %v16, %v83
  %v88 = vmul.f32 %v17, %v83
  %v89 = vmul.f32 %v18, %v83
  %v90 = vmul.f32 %v19, %v83
  %v91 = vmul.f32 %v20, %v83
  %v92 = vmul.f32 %v21, %v83
  %v93 = vmul.f32 %v22, %v83
  %v94 = vmul.f32 %v23, %v83
  %v95 = vmul.f32 %v24, %v83
  %v96 = vmul.f32 %v25, %v83
  %v97 = vmul.f32 %v26, %v83
  %v98 = vmul.f32 %v27, %v83
  %v99 = vmul.f32 %v28, %v83
  %v100 = vmul.f32 %v29, %v83
  %v101 = vmul.f32 %v30, %v83
  %v102 = vmul.f32 %v31, %v83
  %v103 = vmul.f32 %v32, %v83
  %v104 = vmul.f32 %v33, %v83
  %v105 = vmul.f32 %v34, %v83
  %v106 = vmul.f32 %v35, %v83
  %v107 = vmul.f32 %v36, %v83
  %v108 = vmul.f32 %v37, %v83
  %v109 = vmul.f32 %v38, %v83
  %v110 = vmul.f32 %v39, %v83
  %v111 = vmul.f32 %v40, %v83
  %v112 = vmul.f32 %v41, %v83
  %v113 = vmul.f32 %v42, %v83
  %v114 = vmul.f32 %v43, %v83
  %v115 = vmul.f32 %v44, %v83
  %v116 = vmul.f32 %v45, %v83
  %v117 = vmul.f32 %v46, %v83
  %v118 = vmul.f32 %v47, %v83
  %v119 = vmul.f32 %v48, %v83
  %v120 = vmul.f32 %v49, %v83
  %v121 = vmul.f32 %v50, %v83
  %v122 = vmul.f32 %v51, %v83
  %v123 = vmul.f32 %v52, %v83
  %v124 = vmul.f32 %v53, %v83
  %v125 = vmul.f32 %v54, %v83
  %v126 = vmul.f32 %v55, %v83
  %v127 = vmul.f32 %v56, %v83
  %v128 = vmul.f32 %v57, %v83
  %v129 = vmul.f32 %v58, %v83
  %v130 = vmul.f32 %v59, %v83
  %v131 = vmul.f32 %v60, %v83
  %v132 = vmul.f32 %v61, %v83
  %v133 = vmul.f32 %v62, %v83
  %v134 = vmul.f32 %v63, %v83
  %v135 = vmul.f32 %v64, %v83
  %v136 = vmul.f32 %v65, %v83
  %v137 = vmul.f32 %v66, %v83
  %v138 = vmul.f32 %v67, %v83
  %v139 = vmul.f32 %v68, %v83
  %v140 = vmul.f32 %v69, %v83
  %v141 = vmul.f32 %v70, %v83
  %v142 = vmul.f32 %v71, %v83
  %v143 = vmul.f32 %v72, %v83
  %v144 = vmul.f32 %v73, %v83
  %v145 = vmul.f32 %v74, %v83
  %v146 = vmul.f32 %v75, %v83
  %v147 = vmul.f32 %v76, %v83
  %v148 = vmul.f32 %v77, %v83
  %v149 = vld [vmem:[%s2] sm:$0x1]
  %v151 = vlaneseq
  %v152 = vshrl.u32 %v151, 7
  %v153 = vsub.s32 0, %v152
  %v154 = vrot.slane %v149, %v153
  %v156 = vadd.f32 %v85, %v154
  %v157 = vadd.f32 %v86, %v154
  %v158 = vadd.f32 %v87, %v154
  %v159 = vadd.f32 %v88, %v154
  %v160 = vadd.f32 %v89, %v154
  %v161 = vadd.f32 %v90, %v154
  %v162 = vadd.f32 %v91, %v154
  %v163 = vadd.f32 %v92, %v154
  %v164 = vadd.f32 %v93, %v154
  %v165 = vadd.f32 %v94, %v154
  %v166 = vadd.f32 %v95, %v154
  %v167 = vadd.f32 %v96, %v154
  %v168 = vadd.f32 %v97, %v154
  %v169 = vadd.f32 %v98, %v154
  %v170 = vadd.f32 %v99, %v154
  %v171 = vadd.f32 %v100, %v154
  %v172 = vadd.f32 %v101, %v154
  %v173 = vadd.f32 %v102, %v154
  %v174 = vadd.f32 %v103, %v154
  %v175 = vadd.f32 %v104, %v154
  %v176 = vadd.f32 %v105, %v154
  %v177 = vadd.f32 %v106, %v154
  %v178 = vadd.f32 %v107, %v154
  %v179 = vadd.f32 %v108, %v154
  %v180 = vadd.f32 %v109, %v154
  %v181 = vadd.f32 %v110, %v154
  %v182 = vadd.f32 %v111, %v154
  %v183 = vadd.f32 %v112, %v154
  %v184 = vadd.f32 %v113, %v154
  %v185 = vadd.f32 %v114, %v154
  %v186 = vadd.f32 %v115, %v154
  %v187 = vadd.f32 %v116, %v154
  %v188 = vadd.f32 %v117, %v154
  %v189 = vadd.f32 %v118, %v154
  %v190 = vadd.f32 %v119, %v154
  %v191 = vadd.f32 %v120, %v154
  %v192 = vadd.f32 %v121, %v154
  %v193 = vadd.f32 %v122, %v154
  %v194 = vadd.f32 %v123, %v154
  %v195 = vadd.f32 %v124, %v154
  %v196 = vadd.f32 %v125, %v154
  %v197 = vadd.f32 %v126, %v154
  %v198 = vadd.f32 %v127, %v154
  %v199 = vadd.f32 %v128, %v154
  %v200 = vadd.f32 %v129, %v154
  %v201 = vadd.f32 %v130, %v154
  %v202 = vadd.f32 %v131, %v154
  %v203 = vadd.f32 %v132, %v154
  %v204 = vadd.f32 %v133, %v154
  %v205 = vadd.f32 %v134, %v154
  %v206 = vadd.f32 %v135, %v154
  %v207 = vadd.f32 %v136, %v154
  %v208 = vadd.f32 %v137, %v154
  %v209 = vadd.f32 %v138, %v154
  %v210 = vadd.f32 %v139, %v154
  %v211 = vadd.f32 %v140, %v154
  %v212 = vadd.f32 %v141, %v154
  %v213 = vadd.f32 %v142, %v154
  %v214 = vadd.f32 %v143, %v154
  %v215 = vadd.f32 %v144, %v154
  %v216 = vadd.f32 %v145, %v154
  %v217 = vadd.f32 %v146, %v154
  %v218 = vadd.f32 %v147, %v154
  %v219 = vadd.f32 %v148, %v154
  %vm220 = vcmask 64512
  %221 = vst.msk [vmem:[%s3] sm:$0xff] %vm220, %v156
  %222 = vst.msk [vmem:[%s3 + $0x8] sm:$0xff] %vm220, %v157
  %223 = vst.msk [vmem:[%s3 + $0x10] sm:$0xff] %vm220, %v158
  %224 = vst.msk [vmem:[%s3 + $0x18] sm:$0xff] %vm220, %v159
  %225 = vst.msk [vmem:[%s3 + $0x20] sm:$0xff] %vm220, %v160
  %226 = vst.msk [vmem:[%s3 + $0x28] sm:$0xff] %vm220, %v161
  %227 = vst.msk [vmem:[%s3 + $0x30] sm:$0xff] %vm220, %v162
  %228 = vst.msk [vmem:[%s3 + $0x38] sm:$0xff] %vm220, %v163
  %229 = vst.msk [vmem:[%s3 + $0x40] sm:$0xff] %vm220, %v164
  %230 = vst.msk [vmem:[%s3 + $0x48] sm:$0xff] %vm220, %v165
  %231 = vst.msk [vmem:[%s3 + $0x50] sm:$0xff] %vm220, %v166
  %232 = vst.msk [vmem:[%s3 + $0x58] sm:$0xff] %vm220, %v167
  %233 = vst.msk [vmem:[%s3 + $0x60] sm:$0xff] %vm220, %v168
  %234 = vst.msk [vmem:[%s3 + $0x68] sm:$0xff] %vm220, %v169
  %235 = vst.msk [vmem:[%s3 + $0x70] sm:$0xff] %vm220, %v170
  %236 = vst.msk [vmem:[%s3 + $0x78] sm:$0xff] %vm220, %v171
  %237 = vst.msk [vmem:[%s3 + $0x80] sm:$0xff] %vm220, %v172
  %238 = vst.msk [vmem:[%s3 + $0x88] sm:$0xff] %vm220, %v173
  %239 = vst.msk [vmem:[%s3 + $0x90] sm:$0xff] %vm220, %v174
  %240 = vst.msk [vmem:[%s3 + $0x98] sm:$0xff] %vm220, %v175
  %241 = vst.msk [vmem:[%s3 + $0xa0] sm:$0xff] %vm220, %v176
  %242 = vst.msk [vmem:[%s3 + $0xa8] sm:$0xff] %vm220, %v177
  %243 = vst.msk [vmem:[%s3 + $0xb0] sm:$0xff] %vm220, %v178
  %244 = vst.msk [vmem:[%s3 + $0xb8] sm:$0xff] %vm220, %v179
  %245 = vst.msk [vmem:[%s3 + $0xc0] sm:$0xff] %vm220, %v180
  %246 = vst.msk [vmem:[%s3 + $0xc8] sm:$0xff] %vm220, %v181
  %247 = vst.msk [vmem:[%s3 + $0xd0] sm:$0xff] %vm220, %v182
  %248 = vst.msk [vmem:[%s3 + $0xd8] sm:$0xff] %vm220, %v183
  %249 = vst.msk [vmem:[%s3 + $0xe0] sm:$0xff] %vm220, %v184
  %250 = vst.msk [vmem:[%s3 + $0xe8] sm:$0xff] %vm220, %v185
  %251 = vst.msk [vmem:[%s3 + $0xf0] sm:$0xff] %vm220, %v186
  %252 = vst.msk [vmem:[%s3 + $0xf8] sm:$0xff] %vm220, %v187
  %253 = vst.msk [vmem:[%s3 + $0x100] sm:$0xff] %vm220, %v188
  %254 = vst.msk [vmem:[%s3 + $0x108] sm:$0xff] %vm220, %v189
  %255 = vst.msk [vmem:[%s3 + $0x110] sm:$0xff] %vm220, %v190
  %256 = vst.msk [vmem:[%s3 + $0x118] sm:$0xff] %vm220, %v191
  %257 = vst.msk [vmem:[%s3 + $0x120] sm:$0xff] %vm220, %v192
  %258 = vst.msk [vmem:[%s3 + $0x128] sm:$0xff] %vm220, %v193
  %259 = vst.msk [vmem:[%s3 + $0x130] sm:$0xff] %vm220, %v194
  %260 = vst.msk [vmem:[%s3 + $0x138] sm:$0xff] %vm220, %v195
  %261 = vst.msk [vmem:[%s3 + $0x140] sm:$0xff] %vm220, %v196
  %262 = vst.msk [vmem:[%s3 + $0x148] sm:$0xff] %vm220, %v197
  %263 = vst.msk [vmem:[%s3 + $0x150] sm:$0xff] %vm220, %v198
  %264 = vst.msk [vmem:[%s3 + $0x158] sm:$0xff] %vm220, %v199
  %265 = vst.msk [vmem:[%s3 + $0x160] sm:$0xff] %vm220, %v200
  %266 = vst.msk [vmem:[%s3 + $0x168] sm:$0xff] %vm220, %v201
  %267 = vst.msk [vmem:[%s3 + $0x170] sm:$0xff] %vm220, %v202
  %268 = vst.msk [vmem:[%s3 + $0x178] sm:$0xff] %vm220, %v203
  %269 = vst.msk [vmem:[%s3 + $0x180] sm:$0xff] %vm220, %v204
  %270 = vst.msk [vmem:[%s3 + $0x188] sm:$0xff] %vm220, %v205
  %271 = vst.msk [vmem:[%s3 + $0x190] sm:$0xff] %vm220, %v206
  %272 = vst.msk [vmem:[%s3 + $0x198] sm:$0xff] %vm220, %v207
  %273 = vst.msk [vmem:[%s3 + $0x1a0] sm:$0xff] %vm220, %v208
  %274 = vst.msk [vmem:[%s3 + $0x1a8] sm:$0xff] %vm220, %v209
  %275 = vst.msk [vmem:[%s3 + $0x1b0] sm:$0xff] %vm220, %v210
  %276 = vst.msk [vmem:[%s3 + $0x1b8] sm:$0xff] %vm220, %v211
  %277 = vst.msk [vmem:[%s3 + $0x1c0] sm:$0xff] %vm220, %v212
  %278 = vst.msk [vmem:[%s3 + $0x1c8] sm:$0xff] %vm220, %v213
  %279 = vst.msk [vmem:[%s3 + $0x1d0] sm:$0xff] %vm220, %v214
  %280 = vst.msk [vmem:[%s3 + $0x1d8] sm:$0xff] %vm220, %v215
  %281 = vst.msk [vmem:[%s3 + $0x1e0] sm:$0xff] %vm220, %v216
  %282 = vst.msk [vmem:[%s3 + $0x1e8] sm:$0xff] %vm220, %v217
  %283 = vst.msk [vmem:[%s3 + $0x1f0] sm:$0xff] %vm220, %v218
  %284 = vst.msk [vmem:[%s3 + $0x1f8] sm:$0xff] %vm220, %v219
  // Predicated region
  $region14: #{unet_forward.73} parent=0 // pred_check
    _
  $region15: #{unet_forward.73} parent=0 // pred_check_branch
    %286 = sbr.rel (0) target = $region17
  $region16: #{unet_forward.73} parent=0 // pred_region
    _
  $region17: #{unet_forward.73} parent=0 // pred_fallthru
    _
  // Predicated region
  $region18: #{unet_forward.73} parent=0 // pred_check
    _
  $region19: #{unet_forward.73} parent=0 // pred_check_branch
    %288 = sbr.rel (0) target = $region21
  $region20: #{unet_forward.73} parent=0 // pred_region
    _
  $region21: #{unet_forward.73} parent=0 // pred_fallthru
    _

// kernel: unet_forward.74
$region0: #{unet_forward.74}
  #allocation0 [shape = 'u32[]', space=smem, size = 0x4, offset = 0x4, fixed_abs, tag = 'smem constant byte address 0x4 - core index']
  #allocation1 [shape = 'u32[144,128]{1,0:T(1,128)}', space=vmem, size = 0x12000, scoped, tag = 'internal scratch']
  #allocation2 [shape = 'f32[256,3]{1,0:T(8,128)}', space=vmem, size = 0x20000, scoped, tag = 'scratch operand']
  %s0 = inlined_call_operand.vmem [shape: bf16[512,64], index: 0, kind: input, shape index: {}]
  %s1 = inlined_call_operand.vmem [shape: bf16[64,3], index: 1, kind: input, shape index: {}]
  %s2 = inlined_call_operand.vmem [shape: f32[1,3], index: 2, kind: input, shape index: {}]
  %s3 = inlined_call_operand.vmem [shape: f32[512,3], index: 3, kind: output, shape index: {}]
  %s4 = sld [smem:[#allocation0]]
  $region53: #{unet_forward.74} parent=0
    _
  %s6 = ssub.s32 1, %s4
  %s7 = scalar_select 0, %s6, %s4
  loop: start=0, step=1, limit=4
  $region2: #{unet_forward.74} parent=0 // loop_pre_header
    _
  $region3: #{unet_forward.74} parent=0 // loop_header
    %s9 = sphi 0, %s13
    %p10 = scmp.ge.s32.totalorder %s9, 4
    %s16 = sphi 0, %s35
    %s17 = sphi 0, %s31
    %s18 = sphi 0, %s27
    %s19 = sphi 0, %s16
    %s20 = sphi 0, %s17
    %s21 = sphi 0, %s18
    %s22 = sphi 0, %s19
    %s23 = sphi 0, %s20
    %s24 = sphi 0, %s21
    %s40 = sphi 0, %s42
    %s43 = sphi 0, %s40
    %s44 = sphi 0, %s43
    %s60 = sphi 0, %s44
    %s68 = sphi 0, %s70
    %s71 = sphi 0, %s68
    %s72 = sphi 0, %s71
    %s88 = sphi 0, %s72
    %s94 = sphi 0, %s96
    %s97 = sphi 0, %s94
    %s98 = sphi 0, %s97
    %s114 = sphi 0, %s98
    %s122 = sphi 0, %s124
    %s125 = sphi 0, %s122
    %s126 = sphi 0, %s125
    %s142 = sphi 0, %s126
  $region4: #{unet_forward.74} parent=0 // loop_header_branch
    %12 = sbr.rel (%p10) target = $region8
  $region5: #{unet_forward.74} parent=0 // loop_body
    %s14 = ssub.s32 %s9, 1
    %s15 = ssub.s32 %s9, 2
    %s25 = sadd.s32 1, %s18
    %p26 = scmp.ge.s32.totalorder %s25, 1
    %s27 = scalar_select %p26, 0, %s25
    %s28 = sadd.s32 1, %s17
    %s29 = scalar_select %p26, %s28, %s17
    %p30 = scmp.ge.s32.totalorder %s29, 1
    %s31 = scalar_select %p30, 0, %s29
    %s32 = sadd.s32 1, %s16
    %s33 = scalar_select %p30, %s32, %s16
    %p34 = scmp.ge.s32.totalorder %s33, 2
    %s35 = scalar_select %p34, 0, %s33
    %s36 = ssub.s32 %s16, %s35
    %s37 = ssub.s32 %s18, %s27
    %s38 = sor.u32 %s36, %s37
    %p39 = scmp.eq.s32.totalorder %s38, 0
    %s41 = sadd.s32 %s40, 1
    %s42 = scalar_select %p39, %s40, %s41
    %p45 = pneg %p39
    %p46 = scmp.eq.s32.totalorder %s9, 1
    %p47 = por %p45, %p46
    %p48 = scmp.ne.s32.totalorder %s40, %s43
    %p49 = scmp.eq.s32.totalorder %s9, 0
    %p50 = por %p48, %p49
    %p51 = scmp.ne.s32.totalorder %s40, %s43
    %p52 = scmp.eq.s32.totalorder %s14, 1
    %p53 = por %p51, %p52
    %p54 = scmp.ne.s32.totalorder %s43, %s44
    %p55 = scmp.eq.s32.totalorder %s14, 0
    %p56 = por %p54, %p55
    %p57 = scmp.ne.s32.totalorder %s43, %s44
    %p58 = scmp.eq.s32.totalorder %s15, 1
    %p59 = por %p57, %p58
    %p61 = scmp.ne.s32.totalorder %s44, %s60
    %p62 = scmp.eq.s32.totalorder %s15, 0
    %p63 = por %p61, %p62
    %s64 = ssub.s32 %s18, %s27
    %s65 = ssub.s32 %s17, %s31
    %s66 = sor.u32 %s64, %s65
    %p67 = scmp.eq.s32.totalorder %s66, 0
    %s69 = sadd.s32 %s68, 1
    %s70 = scalar_select %p67, %s68, %s69
    %p73 = pneg %p67
    %p74 = scmp.eq.s32.totalorder %s9, 1
    %p75 = por %p73, %p74
    %p76 = scmp.ne.s32.totalorder %s68, %s71
    %p77 = scmp.eq.s32.totalorder %s9, 0
    %p78 = por %p76, %p77
    %p79 = scmp.ne.s32.totalorder %s68, %s71
    %p80 = scmp.eq.s32.totalorder %s14, 1
    %p81 = por %p79, %p80
    %p82 = scmp.ne.s32.totalorder %s71, %s72
    %p83 = scmp.eq.s32.totalorder %s14, 0
    %p84 = por %p82, %p83
    %p85 = scmp.ne.s32.totalorder %s71, %s72
    %p86 = scmp.eq.s32.totalorder %s15, 1
    %p87 = por %p85, %p86
    %p89 = scmp.ne.s32.totalorder %s72, %s88
    %p90 = scmp.eq.s32.totalorder %s15, 0
    %p91 = por %p89, %p90
    %s92 = ssub.s32 %s17, %s31
    %p93 = scmp.eq.s32.totalorder %s92, 0
    %s95 = sadd.s32 %s94, 1
    %s96 = scalar_select %p93, %s94, %s95
    %p99 = pneg %p93
    %p100 = scmp.eq.s32.totalorder %s9, 1
    %p101 = por %p99, %p100
    %p102 = scmp.ne.s32.totalorder %s94, %s97
    %p103 = scmp.eq.s32.totalorder %s9, 0
    %p104 = por %p102, %p103
    %p105 = scmp.ne.s32.totalorder %s94, %s97
    %p106 = scmp.eq.s32.totalorder %s14, 1
    %p107 = por %p105, %p106
    %p108 = scmp.ne.s32.totalorder %s97, %s98
    %p109 = scmp.eq.s32.totalorder %s14, 0
    %p110 = por %p108, %p109
    %p111 = scmp.ne.s32.totalorder %s97, %s98
    %p112 = scmp.eq.s32.totalorder %s15, 1
    %p113 = por %p111, %p112
    %p115 = scmp.ne.s32.totalorder %s98, %s114
    %p116 = scmp.eq.s32.totalorder %s15, 0
    %p117 = por %p115, %p116
    %s118 = ssub.s32 %s16, %s35
    %s119 = ssub.s32 %s17, %s31
    %s120 = sor.u32 %s118, %s119
    %p121 = scmp.eq.s32.totalorder %s120, 0
    %s123 = sadd.s32 %s122, 1
    %s124 = scalar_select %p121, %s122, %s123
    %p127 = pneg %p121
    %p128 = scmp.eq.s32.totalorder %s9, 1
    %p129 = por %p127, %p128
    %p130 = scmp.ne.s32.totalorder %s122, %s125
    %p131 = scmp.eq.s32.totalorder %s9, 0
    %p132 = por %p130, %p131
    %p133 = scmp.ne.s32.totalorder %s122, %s125
    %p134 = scmp.eq.s32.totalorder %s14, 1
    %p135 = por %p133, %p134
    %p136 = scmp.ne.s32.totalorder %s125, %s126
    %p137 = scmp.eq.s32.totalorder %s14, 0
    %p138 = por %p136, %p137
    %p139 = scmp.ne.s32.totalorder %s125, %s126
    %p140 = scmp.eq.s32.totalorder %s15, 1
    %p141 = por %p139, %p140
    %p143 = scmp.ne.s32.totalorder %s126, %s142
    %p144 = scmp.eq.s32.totalorder %s15, 0
    %p145 = por %p143, %p144
    %p146 = scmp.le.s32.totalorder 1, %s9
    %p147 = scmp.lt.s32.totalorder %s9, 3
    %p148 = pnand %p146, %p147
    %p149 = pneg %p148
    // Predicated region
    $region9: #{unet_forward.74} parent=5 // pred_check
      _
    $region10: #{unet_forward.74} parent=5 // pred_check_branch
      %151 = sbr.rel (%p148) target = $region12
    $region11: #{unet_forward.74} parent=5 // pred_region
      %s152 = ssub.s32 %s9, 1
      // Predicated region
      $region13: #{unet_forward.74} parent=11 // pred_check
        %p153 = pneg %p84
      $region14: #{unet_forward.74} parent=11 // pred_check_branch
        %155 = sbr.rel (%p153) target = $region16
      $region15: #{unet_forward.74} parent=11 // pred_region
        %s156 = smul.u32 8, %s21
        %p157 = scmp.lt.s32.totalorder %s156, 7
        %s158 = scalar_select %p157, %s156, 7
        %p159 = scmp.lt.s32.totalorder %s20, 0
        %s160 = scalar_select %p159, %s20, 0
        %s161 = sadd.s32 %s160, %s158
        %s162 = smul.addr %s161, 4
        %s163 = scalar_lea.vmem %s1, %s162
        %s164 = smul.u32 8, %s21
      $region16: #{unet_forward.74} parent=11 // pred_fallthru
        _
      // Predicated region
      $region17: #{unet_forward.74} parent=11 // pred_check
        %p165 = pneg %p110
      $region18: #{unet_forward.74} parent=11 // pred_check_branch
        %167 = sbr.rel (%p165) target = $region20
      $region19: #{unet_forward.74} parent=11 // pred_region
        %p168 = scmp.lt.s32.totalorder %s20, 0
        %s169 = scalar_select %p168, %s20, 0
        %s170 = scalar_lea.vmem %s2, %s169
      $region20: #{unet_forward.74} parent=11 // pred_fallthru
        _
    $region12: #{unet_forward.74} parent=5 // pred_fallthru
      _
    %p171 = scmp.lt.s32.totalorder %s9, 2
    // Predicated region
    $region21: #{unet_forward.74} parent=5 // pred_check
      %p172 = pneg %p171
    $region22: #{unet_forward.74} parent=5 // pred_check_branch
      %174 = sbr.rel (%p172) target = $region24
    $region23: #{unet_forward.74} parent=5 // pred_region
      // Predicated region
      $region25: #{unet_forward.74} parent=23 // pred_check
        %p175 = pneg %p50
      $region26: #{unet_forward.74} parent=23 // pred_check_branch
        %177 = sbr.rel (%p175) target = $region28
      $region27: #{unet_forward.74} parent=23 // pred_region
        %s178 = smul.u32 32, %s16
        %p179 = scmp.lt.s32.totalorder %s178, 63
        %s180 = scalar_select %p179, %s178, 63
        %p181 = scmp.lt.s32.totalorder %s18, 0
        %s182 = scalar_select %p181, %s18, 0
        %s183 = sadd.s32 %s182, %s180
        %s184 = smul.addr %s183, 4
        %s185 = scalar_lea.vmem %s0, %s184
        %s186 = smul.u32 32, %s16
      $region28: #{unet_forward.74} parent=23 // pred_fallthru
        _
    $region24: #{unet_forward.74} parent=5 // pred_fallthru
      _
    %p187 = scmp.le.s32.totalorder 1, %s9
    %p188 = scmp.lt.s32.totalorder %s9, 3
    %p189 = pnand %p187, %p188
    %p190 = pneg %p189
    // Predicated region
    $region29: #{unet_forward.74} parent=5 // pred_check
      _
    $region30: #{unet_forward.74} parent=5 // pred_check_branch
      %192 = sbr.rel (%p189) target = $region32
    $region31: #{unet_forward.74} parent=5 // pred_region
      %s193 = ssub.s32 %s9, 1
      %s194 = smul.u32 32, %s19
      %p195 = scmp.lt.s32.totalorder %s194, 63
      %s196 = scalar_select %p195, %s194, 63
      %p197 = scmp.lt.s32.totalorder %s21, 0
      %s198 = scalar_select %p197, %s21, 0
      %s199 = sadd.s32 %s198, %s196
      %s200 = smul.addr %s199, 4
      %s201 = scalar_lea.vmem %s0, %s200
      %p202 = pneg %p56
      %p203 = pneg %p53
      %s204 = smul.u32 8, %s21
      %p205 = scmp.lt.s32.totalorder %s204, 7
      %s206 = scalar_select %p205, %s204, 7
      %p207 = scmp.lt.s32.totalorder %s20, 0
      %s208 = scalar_select %p207, %s20, 0
      %s209 = sadd.s32 %s208, %s206
      %s210 = smul.addr %s209, 4
      %s211 = scalar_lea.vmem %s1, %s210
      %p212 = pneg %p84
      %p213 = pneg %p81
      %p214 = scmp.lt.s32.totalorder %s20, 0
      %s215 = scalar_select %p214, %s20, 0
      %s216 = scalar_lea.vmem %s2, %s215
      %p217 = pneg %p110
      %p218 = pneg %p107
      %p219 = pneg %p138
      %p220 = pneg %p135
      %s221 = smul.u32 32, %s19
      %p222 = scmp.lt.s32.totalorder %s221, 63
      %s223 = scalar_select %p222, %s221, 63
      %p224 = scmp.lt.s32.totalorder %s20, 0
      %s225 = scalar_select %p224, %s20, 0
      %s226 = sadd.s32 %s225, %s223
      %s227 = smul.addr %s226, 8
      %s228 = scalar_lea.vmem %s3, %s227
      %s229 = smul.u32 32, %s19
      %p230 = scmp.lt.s32.totalorder %s229, 63
      %s231 = scalar_select %p230, %s229, 63
      %p232 = scmp.lt.s32.totalorder %s21, 0
      %s233 = scalar_select %p232, %s21, 0
      %s234 = sadd.s32 %s233, %s231
      %s235 = smul.addr %s234, 4
      %s236 = scalar_lea.vmem %s0, %s235
      %s237 = smul.u32 32, %s19
      %s238 = smul.u32 8, %s21
      %p239 = scmp.lt.s32.totalorder %s238, 7
      %s240 = scalar_select %p239, %s238, 7
      %p241 = scmp.lt.s32.totalorder %s20, 0
      %s242 = scalar_select %p241, %s20, 0
      %s243 = sadd.s32 %s242, %s240
      %s244 = smul.addr %s243, 4
      %s245 = scalar_lea.vmem %s1, %s244
      %s246 = smul.u32 8, %s21
      %p247 = scmp.lt.s32.totalorder %s20, 0
      %s248 = scalar_select %p247, %s20, 0
      %s249 = scalar_lea.vmem %s2, %s248
      %s250 = smul.u32 32, %s19
      %p251 = scmp.lt.s32.totalorder %s250, 63
      %s252 = scalar_select %p251, %s250, 63
      %p253 = scmp.lt.s32.totalorder %s20, 0
      %s254 = scalar_select %p253, %s20, 0
      %s255 = sadd.s32 %s254, %s252
      %s256 = smul.addr %s255, 8
      %s257 = scalar_lea.vmem %s3, %s256
      %s258 = smul.u32 32, %s19
      %p260 = scmp.eq.s32.totalorder %s21, 0
      // Predicated region
      $region33: #{unet_forward.74} parent=31 // pred_check
        %p261 = pneg %p260
      $region34: #{unet_forward.74} parent=31 // pred_check_branch
        %263 = sbr.rel (%p261) target = $region36
      $region35: #{unet_forward.74} parent=31 // pred_region
        %vm264 = vcmask 23552
        %265 = vst.msk [vmem:[#allocation2] sm:$0xff] %vm264, 0.0
        %266 = vst.msk [vmem:[#allocation2 + $0x8] sm:$0xff] %vm264, 0.0
        %267 = vst.msk [vmem:[#allocation2 + $0x10] sm:$0xff] %vm264, 0.0
        %268 = vst.msk [vmem:[#allocation2 + $0x18] sm:$0xff] %vm264, 0.0
        %269 = vst.msk [vmem:[#allocation2 + $0x20] sm:$0xff] %vm264, 0.0
        %270 = vst.msk [vmem:[#allocation2 + $0x28] sm:$0xff] %vm264, 0.0
        %271 = vst.msk [vmem:[#allocation2 + $0x30] sm:$0xff] %vm264, 0.0
        %272 = vst.msk [vmem:[#allocation2 + $0x38] sm:$0xff] %vm264, 0.0
        %273 = vst.msk [vmem:[#allocation2 + $0x40] sm:$0xff] %vm264, 0.0
        %274 = vst.msk [vmem:[#allocation2 + $0x48] sm:$0xff] %vm264, 0.0
        %275 = vst.msk [vmem:[#allocation2 + $0x50] sm:$0xff] %vm264, 0.0
        %276 = vst.msk [vmem:[#allocation2 + $0x58] sm:$0xff] %vm264, 0.0
        %277 = vst.msk [vmem:[#allocation2 + $0x60] sm:$0xff] %vm264, 0.0
        %278 = vst.msk [vmem:[#allocation2 + $0x68] sm:$0xff] %vm264, 0.0
        %279 = vst.msk [vmem:[#allocation2 + $0x70] sm:$0xff] %vm264, 0.0
        %280 = vst.msk [vmem:[#allocation2 + $0x78] sm:$0xff] %vm264, 0.0
        %281 = vst.msk [vmem:[#allocation2 + $0x80] sm:$0xff] %vm264, 0.0
        %282 = vst.msk [vmem:[#allocation2 + $0x88] sm:$0xff] %vm264, 0.0
        %283 = vst.msk [vmem:[#allocation2 + $0x90] sm:$0xff] %vm264, 0.0
        %284 = vst.msk [vmem:[#allocation2 + $0x98] sm:$0xff] %vm264, 0.0
        %285 = vst.msk [vmem:[#allocation2 + $0xa0] sm:$0xff] %vm264, 0.0
        %286 = vst.msk [vmem:[#allocation2 + $0xa8] sm:$0xff] %vm264, 0.0
        %287 = vst.msk [vmem:[#allocation2 + $0xb0] sm:$0xff] %vm264, 0.0
        %288 = vst.msk [vmem:[#allocation2 + $0xb8] sm:$0xff] %vm264, 0.0
        %289 = vst.msk [vmem:[#allocation2 + $0xc0] sm:$0xff] %vm264, 0.0
        %290 = vst.msk [vmem:[#allocation2 + $0xc8] sm:$0xff] %vm264, 0.0
        %291 = vst.msk [vmem:[#allocation2 + $0xd0] sm:$0xff] %vm264, 0.0
        %292 = vst.msk [vmem:[#allocation2 + $0xd8] sm:$0xff] %vm264, 0.0
        %293 = vst.msk [vmem:[#allocation2 + $0xe0] sm:$0xff] %vm264, 0.0
        %294 = vst.msk [vmem:[#allocation2 + $0xe8] sm:$0xff] %vm264, 0.0
        %295 = vst.msk [vmem:[#allocation2 + $0xf0] sm:$0xff] %vm264, 0.0
        %296 = vst.msk [vmem:[#allocation2 + $0xf8] sm:$0xff] %vm264, 0.0
      $region36: #{unet_forward.74} parent=31 // pred_fallthru
        _
      %v297 = vld [vmem:[%s236] sm:$0xf]
      %v298 = vld [vmem:[%s236 + $0x4] sm:$0xf]
      %v299 = vld [vmem:[%s236 + $0x8] sm:$0xf]
      %v300 = vld [vmem:[%s236 + $0xc] sm:$0xf]
      %v301 = vld [vmem:[%s236 + $0x10] sm:$0xf]
      %v302 = vld [vmem:[%s236 + $0x14] sm:$0xf]
      %v303 = vld [vmem:[%s236 + $0x18] sm:$0xf]
      %v304 = vld [vmem:[%s236 + $0x1c] sm:$0xf]
      %v305 = vld [vmem:[%s236 + $0x20] sm:$0xf]
      %v306 = vld [vmem:[%s236 + $0x24] sm:$0xf]
      %v307 = vld [vmem:[%s236 + $0x28] sm:$0xf]
      %v308 = vld [vmem:[%s236 + $0x2c] sm:$0xf]
      %v309 = vld [vmem:[%s236 + $0x30] sm:$0xf]
      %v310 = vld [vmem:[%s236 + $0x34] sm:$0xf]
      %v311 = vld [vmem:[%s236 + $0x38] sm:$0xf]
      %v312 = vld [vmem:[%s236 + $0x3c] sm:$0xf]
      %v313 = vld [vmem:[%s236 + $0x40] sm:$0xf]
      %v314 = vld [vmem:[%s236 + $0x44] sm:$0xf]
      %v315 = vld [vmem:[%s236 + $0x48] sm:$0xf]
      %v316 = vld [vmem:[%s236 + $0x4c] sm:$0xf]
      %v317 = vld [vmem:[%s236 + $0x50] sm:$0xf]
      %v318 = vld [vmem:[%s236 + $0x54] sm:$0xf]
      %v319 = vld [vmem:[%s236 + $0x58] sm:$0xf]
      %v320 = vld [vmem:[%s236 + $0x5c] sm:$0xf]
      %v321 = vld [vmem:[%s236 + $0x60] sm:$0xf]
      %v322 = vld [vmem:[%s236 + $0x64] sm:$0xf]
      %v323 = vld [vmem:[%s236 + $0x68] sm:$0xf]
      %v324 = vld [vmem:[%s236 + $0x6c] sm:$0xf]
      %v325 = vld [vmem:[%s236 + $0x70] sm:$0xf]
      %v326 = vld [vmem:[%s236 + $0x74] sm:$0xf]
      %v327 = vld [vmem:[%s236 + $0x78] sm:$0xf]
      %v328 = vld [vmem:[%s236 + $0x7c] sm:$0xf]
      %v329 = vunpack.c.l.bf16 %v297
      %v330 = vunpack.c.l.bf16 %v298
      %v331 = vunpack.c.l.bf16 %v299
      %v332 = vunpack.c.l.bf16 %v300
      %v333 = vunpack.c.l.bf16 %v301
      %v334 = vunpack.c.l.bf16 %v302
      %v335 = vunpack.c.l.bf16 %v303
      %v336 = vunpack.c.l.bf16 %v304
      %v337 = vunpack.c.l.bf16 %v305
      %v338 = vunpack.c.l.bf16 %v306
      %v339 = vunpack.c.l.bf16 %v307
      %v340 = vunpack.c.l.bf16 %v308
      %v341 = vunpack.c.l.bf16 %v309
      %v342 = vunpack.c.l.bf16 %v310
      %v343 = vunpack.c.l.bf16 %v311
      %v344 = vunpack.c.l.bf16 %v312
      %v345 = vunpack.c.l.bf16 %v313
      %v346 = vunpack.c.l.bf16 %v314
      %v347 = vunpack.c.l.bf16 %v315
      %v348 = vunpack.c.l.bf16 %v316
      %v349 = vunpack.c.l.bf16 %v317
      %v350 = vunpack.c.l.bf16 %v318
      %v351 = vunpack.c.l.bf16 %v319
      %v352 = vunpack.c.l.bf16 %v320
      %v353 = vunpack.c.l.bf16 %v321
      %v354 = vunpack.c.l.bf16 %v322
      %v355 = vunpack.c.l.bf16 %v323
      %v356 = vunpack.c.l.bf16 %v324
      %v357 = vunpack.c.l.bf16 %v325
      %v358 = vunpack.c.l.bf16 %v326
      %v359 = vunpack.c.l.bf16 %v327
      %v360 = vunpack.c.l.bf16 %v328
      %v361 = vmax.f32 %v329, 0.0
      %v362 = vmax.f32 %v330, 0.0
      %v363 = vmax.f32 %v331, 0.0
      %v364 = vmax.f32 %v332, 0.0
      %v365 = vmax.f32 %v333, 0.0
      %v366 = vmax.f32 %v334, 0.0
      %v367 = vmax.f32 %v335, 0.0
      %v368 = vmax.f32 %v336, 0.0
      %v369 = vmax.f32 %v337, 0.0
      %v370 = vmax.f32 %v338, 0.0
      %v371 = vmax.f32 %v339, 0.0
      %v372 = vmax.f32 %v340, 0.0
      %v373 = vmax.f32 %v341, 0.0
      %v374 = vmax.f32 %v342, 0.0
      %v375 = vmax.f32 %v343, 0.0
      %v376 = vmax.f32 %v344, 0.0
      %v377 = vmax.f32 %v345, 0.0
      %v378 = vmax.f32 %v346, 0.0
      %v379 = vmax.f32 %v347, 0.0
      %v380 = vmax.f32 %v348, 0.0
      %v381 = vmax.f32 %v349, 0.0
      %v382 = vmax.f32 %v350, 0.0
      %v383 = vmax.f32 %v351, 0.0
      %v384 = vmax.f32 %v352, 0.0
      %v385 = vmax.f32 %v353, 0.0
      %v386 = vmax.f32 %v354, 0.0
      %v387 = vmax.f32 %v355, 0.0
      %v388 = vmax.f32 %v356, 0.0
      %v389 = vmax.f32 %v357, 0.0
      %v390 = vmax.f32 %v358, 0.0
      %v391 = vmax.f32 %v359, 0.0
      %v392 = vmax.f32 %v360, 0.0
      %v393 = vld [vmem:[#allocation2] sm:$0xff]
      %v394 = vld [vmem:[#allocation2 + $0x8] sm:$0xff]
      %v395 = vld [vmem:[#allocation2 + $0x10] sm:$0xff]
      %v396 = vld [vmem:[#allocation2 + $0x18] sm:$0xff]
      %v397 = vld [vmem:[#allocation2 + $0x20] sm:$0xff]
      %v398 = vld [vmem:[#allocation2 + $0x28] sm:$0xff]
      %v399 = vld [vmem:[#allocation2 + $0x30] sm:$0xff]
      %v400 = vld [vmem:[#allocation2 + $0x38] sm:$0xff]
      %v401 = vld [vmem:[#allocation2 + $0x40] sm:$0xff]
      %v402 = vld [vmem:[#allocation2 + $0x48] sm:$0xff]
      %v403 = vld [vmem:[#allocation2 + $0x50] sm:$0xff]
      %v404 = vld [vmem:[#allocation2 + $0x58] sm:$0xff]
      %v405 = vld [vmem:[#allocation2 + $0x60] sm:$0xff]
      %v406 = vld [vmem:[#allocation2 + $0x68] sm:$0xff]
      %v407 = vld [vmem:[#allocation2 + $0x70] sm:$0xff]
      %v408 = vld [vmem:[#allocation2 + $0x78] sm:$0xff]
      %v409 = vld [vmem:[#allocation2 + $0x80] sm:$0xff]
      %v410 = vld [vmem:[#allocation2 + $0x88] sm:$0xff]
      %v411 = vld [vmem:[#allocation2 + $0x90] sm:$0xff]
      %v412 = vld [vmem:[#allocation2 + $0x98] sm:$0xff]
      %v413 = vld [vmem:[#allocation2 + $0xa0] sm:$0xff]
      %v414 = vld [vmem:[#allocation2 + $0xa8] sm:$0xff]
      %v415 = vld [vmem:[#allocation2 + $0xb0] sm:$0xff]
      %v416 = vld [vmem:[#allocation2 + $0xb8] sm:$0xff]
      %v417 = vld [vmem:[#allocation2 + $0xc0] sm:$0xff]
      %v418 = vld [vmem:[#allocation2 + $0xc8] sm:$0xff]
      %v419 = vld [vmem:[#allocation2 + $0xd0] sm:$0xff]
      %v420 = vld [vmem:[#allocation2 + $0xd8] sm:$0xff]
      %v421 = vld [vmem:[#allocation2 + $0xe0] sm:$0xff]
      %v422 = vld [vmem:[#allocation2 + $0xe8] sm:$0xff]
      %v423 = vld [vmem:[#allocation2 + $0xf0] sm:$0xff]
      %v424 = vld [vmem:[#allocation2 + $0xf8] sm:$0xff]
      %v425 = vpack.c.bf16 %v362, %v361
      %v426 = vpack.c.bf16 %v364, %v363
      %v427 = vpack.c.bf16 %v366, %v365
      %v428 = vpack.c.bf16 %v368, %v367
      %v429 = vpack.c.bf16 %v370, %v369
      %v430 = vpack.c.bf16 %v372, %v371
      %v431 = vpack.c.bf16 %v374, %v373
      %v432 = vpack.c.bf16 %v376, %v375
      %v433 = vpack.c.bf16 %v378, %v377
      %v434 = vpack.c.bf16 %v380, %v379
      %v435 = vpack.c.bf16 %v382, %v381
      %v436 = vpack.c.bf16 %v384, %v383
      %v437 = vpack.c.bf16 %v386, %v385
      %v438 = vpack.c.bf16 %v388, %v387
      %v439 = vpack.c.bf16 %v390, %v389
      %v440 = vpack.c.bf16 %v392, %v391
      %v441 = vld [vmem:[%s245] sm:$0xf]
      %v442 = vld [vmem:[%s245 + $0x4] sm:$0xf]
      %v443 = vld [vmem:[%s245 + $0x8] sm:$0xf]
      %v444 = vld [vmem:[%s245 + $0xc] sm:$0xf]
      %v445 = vld [vmem:[%s245 + $0x10] sm:$0xf]
      %v446 = vld [vmem:[%s245 + $0x14] sm:$0xf]
      %v447 = vld [vmem:[%s245 + $0x18] sm:$0xf]
      %v448 = vld [vmem:[%s245 + $0x1c] sm:$0xf]
      %v457 = vunpack.c.l.b16 %v441
      %v458 = vunpack.c.l.b16 %v442
      %v459 = vunpack.c.l.b16 %v443
      %v460 = vunpack.c.l.b16 %v444
      %v461 = vunpack.c.l.b16 %v445
      %v462 = vunpack.c.l.b16 %v446
      %v463 = vunpack.c.l.b16 %v447
      %v464 = vunpack.c.l.b16 %v448
      %v465 = vpack.c.b16 %v458, %v457
      %v466 = vpack.c.b16 %v460, %v459
      %v467 = vpack.c.b16 %v462, %v461
      %v468 = vpack.c.b16 %v464, %v463
      %vm473 = vcmask 523264
      %v475 = vsel %vm473, %v425, 0
      %v478 = vsel %vm473, %v426, 0
      %v481 = vsel %vm473, %v427, 0
      %v484 = vsel %vm473, %v428, 0
      %v487 = vsel %vm473, %v429, 0
      %v490 = vsel %vm473, %v430, 0
      %v493 = vsel %vm473, %v431, 0
      %v496 = vsel %vm473, %v432, 0
      %v499 = vsel %vm473, %v433, 0
      %v502 = vsel %vm473, %v434, 0
      %v505 = vsel %vm473, %v435, 0
      %v508 = vsel %vm473, %v436, 0
      %v511 = vsel %vm473, %v437, 0
      %v514 = vsel %vm473, %v438, 0
      %v517 = vsel %vm473, %v439, 0
      %v520 = vsel %vm473, %v440, 0
      %522 = vmatprep.subr.bf16.mxu0 0
      %523 = vmatpush1.bf16.msra.mxu0 0
      %524 = vmatprep.subr.bf16.mxu0 0
      %525 = vmatpush1.bf16.msra.mxu0 0
      %526 = vmatprep.subr.bf16.mxu0 0
      %527 = vmatpush1.bf16.msra.mxu0 0
      %528 = vmatprep.subr.bf16.mxu0 0
      %529 = vmatpush1.bf16.msra.mxu0 0
      %530 = vmatprep.subr.bf16.mxu0 0
      %531 = vmatpush1.bf16.msra.mxu0 %v468
      %532 = vmatprep.subr.bf16.mxu0 0
      %533 = vmatpush1.bf16.msra.mxu0 %v467
      %534 = vmatprep.subr.bf16.mxu0 0
      %535 = vmatpush1.bf16.msra.mxu0 %v466
      %536 = vmatprep.subr.bf16.mxu0 0
      %537 = vmatpush1.bf16.msra.mxu0 %v465
      %538 = vmatprep.subr.bf16.mxu0 0
      %539 = vmatpush2.bf16.msra.mxu0 0
      %540 = vmatprep.subr.bf16.mxu0 0
      %541 = vmatpush2.bf16.msra.mxu0 0
      %542 = vmatprep.subr.bf16.mxu0 0
      %543 = vmatpush2.bf16.msra.mxu0 0
      %544 = vmatprep.subr.bf16.mxu0 0
      %545 = vmatpush2.bf16.msra.mxu0 0
      %546 = vmatprep.subr.bf16.mxu0 0
      %547 = vmatpush2.bf16.msra.mxu0 0
      %548 = vmatprep.subr.bf16.mxu0 0
      %549 = vmatpush2.bf16.msra.mxu0 0
      %550 = vmatprep.subr.bf16.mxu0 0
      %551 = vmatpush2.bf16.msra.mxu0 0
      %552 = vmatprep.subr.bf16.mxu0 0
      %553 = vmatpush2.bf16.msra.mxu0 0
      %554 = vmatprep.mubr.bf16.mxu0 0
      %555 = vmatmul.mubr.bf16.gmra.mxu0 %v475
      %v556 = vpop.f32.mrf.mxu0
      %v557 = vadd.f32 0.0, %v556
      %v558 = vpop.f32.mrf.mxu0
      %v559 = vpop.f32.mrf.mxu0
      %v560 = vadd.f32 0.0, %v559
      %v561 = vpop.f32.mrf.mxu0
      %562 = vmatprep.mubr.bf16.mxu0 0
      %563 = vmatmul.mubr.bf16.gmra.mxu0 %v478
      %v564 = vpop.f32.mrf.mxu0
      %v565 = vadd.f32 0.0, %v564
      %v566 = vpop.f32.mrf.mxu0
      %v567 = vpop.f32.mrf.mxu0
      %v568 = vadd.f32 0.0, %v567
      %v569 = vpop.f32.mrf.mxu0
      %570 = vmatprep.mubr.bf16.mxu0 0
      %571 = vmatmul.mubr.bf16.gmra.mxu0 %v481
      %v572 = vpop.f32.mrf.mxu0
      %v573 = vadd.f32 0.0, %v572
      %v574 = vpop.f32.mrf.mxu0
      %v575 = vpop.f32.mrf.mxu0
      %v576 = vadd.f32 0.0, %v575
      %v577 = vpop.f32.mrf.mxu0
      %578 = vmatprep.mubr.bf16.mxu0 0
      %579 = vmatmul.mubr.bf16.gmra.mxu0 %v484
      %v580 = vpop.f32.mrf.mxu0
      %v581 = vadd.f32 0.0, %v580
      %v582 = vpop.f32.mrf.mxu0
      %v583 = vpop.f32.mrf.mxu0
      %v584 = vadd.f32 0.0, %v583
      %v585 = vpop.f32.mrf.mxu0
      %586 = vmatprep.mubr.bf16.mxu0 0
      %587 = vmatmul.mubr.bf16.gmra.mxu0 %v487
      %v588 = vpop.f32.mrf.mxu0
      %v589 = vadd.f32 0.0, %v588
      %v590 = vpop.f32.mrf.mxu0
      %v591 = vpop.f32.mrf.mxu0
      %v592 = vadd.f32 0.0, %v591
      %v593 = vpop.f32.mrf.mxu0
      %594 = vmatprep.mubr.bf16.mxu0 0
      %595 = vmatmul.mubr.bf16.gmra.mxu0 %v490
      %v596 = vpop.f32.mrf.mxu0
      %v597 = vadd.f32 0.0, %v596
      %v598 = vpop.f32.mrf.mxu0
      %v599 = vpop.f32.mrf.mxu0
      %v600 = vadd.f32 0.0, %v599
      %v601 = vpop.f32.mrf.mxu0
      %602 = vmatprep.mubr.bf16.mxu0 0
      %603 = vmatmul.mubr.bf16.gmra.mxu0 %v493
      %v604 = vpop.f32.mrf.mxu0
      %v605 = vadd.f32 0.0, %v604
      %v606 = vpop.f32.mrf.mxu0
      %v607 = vpop.f32.mrf.mxu0
      %v608 = vadd.f32 0.0, %v607
      %v609 = vpop.f32.mrf.mxu0
      %610 = vmatprep.mubr.bf16.mxu0 0
      %611 = vmatmul.mubr.bf16.gmra.mxu0 %v496
      %v612 = vpop.f32.mrf.mxu0
      %v613 = vadd.f32 0.0, %v612
      %v614 = vpop.f32.mrf.mxu0
      %v615 = vpop.f32.mrf.mxu0
      %v616 = vadd.f32 0.0, %v615
      %v617 = vpop.f32.mrf.mxu0
      %618 = vmatprep.mubr.bf16.mxu0 0
      %619 = vmatmul.mubr.bf16.gmra.mxu0 %v499
      %v620 = vpop.f32.mrf.mxu0
      %v621 = vadd.f32 0.0, %v620
      %v622 = vpop.f32.mrf.mxu0
      %v623 = vpop.f32.mrf.mxu0
      %v624 = vadd.f32 0.0, %v623
      %v625 = vpop.f32.mrf.mxu0
      %626 = vmatprep.mubr.bf16.mxu0 0
      %627 = vmatmul.mubr.bf16.gmra.mxu0 %v502
      %v628 = vpop.f32.mrf.mxu0
      %v629 = vadd.f32 0.0, %v628
      %v630 = vpop.f32.mrf.mxu0
      %v631 = vpop.f32.mrf.mxu0
      %v632 = vadd.f32 0.0, %v631
      %v633 = vpop.f32.mrf.mxu0
      %634 = vmatprep.mubr.bf16.mxu0 0
      %635 = vmatmul.mubr.bf16.gmra.mxu0 %v505
      %v636 = vpop.f32.mrf.mxu0
      %v637 = vadd.f32 0.0, %v636
      %v638 = vpop.f32.mrf.mxu0
      %v639 = vpop.f32.mrf.mxu0
      %v640 = vadd.f32 0.0, %v639
      %v641 = vpop.f32.mrf.mxu0
      %642 = vmatprep.mubr.bf16.mxu0 0
      %643 = vmatmul.mubr.bf16.gmra.mxu0 %v508
      %v644 = vpop.f32.mrf.mxu0
      %v645 = vadd.f32 0.0, %v644
      %v646 = vpop.f32.mrf.mxu0
      %v647 = vpop.f32.mrf.mxu0
      %v648 = vadd.f32 0.0, %v647
      %v649 = vpop.f32.mrf.mxu0
      %650 = vmatprep.mubr.bf16.mxu0 0
      %651 = vmatmul.mubr.bf16.gmra.mxu0 %v511
      %v652 = vpop.f32.mrf.mxu0
      %v653 = vadd.f32 0.0, %v652
      %v654 = vpop.f32.mrf.mxu0
      %v655 = vpop.f32.mrf.mxu0
      %v656 = vadd.f32 0.0, %v655
      %v657 = vpop.f32.mrf.mxu0
      %658 = vmatprep.mubr.bf16.mxu0 0
      %659 = vmatmul.mubr.bf16.gmra.mxu0 %v514
      %v660 = vpop.f32.mrf.mxu0
      %v661 = vadd.f32 0.0, %v660
      %v662 = vpop.f32.mrf.mxu0
      %v663 = vpop.f32.mrf.mxu0
      %v664 = vadd.f32 0.0, %v663
      %v665 = vpop.f32.mrf.mxu0
      %666 = vmatprep.mubr.bf16.mxu0 0
      %667 = vmatmul.mubr.bf16.gmra.mxu0 %v517
      %v668 = vpop.f32.mrf.mxu0
      %v669 = vadd.f32 0.0, %v668
      %v670 = vpop.f32.mrf.mxu0
      %v671 = vpop.f32.mrf.mxu0
      %v672 = vadd.f32 0.0, %v671
      %v673 = vpop.f32.mrf.mxu0
      %674 = vmatprep.mubr.bf16.mxu0 0
      %675 = vmatmul.mubr.bf16.gmra.mxu0 %v520
      %v676 = vpop.f32.mrf.mxu0
      %v677 = vadd.f32 0.0, %v676
      %v678 = vpop.f32.mrf.mxu0
      %v679 = vpop.f32.mrf.mxu0
      %v680 = vadd.f32 0.0, %v679
      %v681 = vpop.f32.mrf.mxu0
      %682 = vdwg.mxu0
      %v683 = vadd.f32 %v393, %v557
      %v684 = vadd.f32 %v394, %v560
      %v685 = vadd.f32 %v395, %v565
      %v686 = vadd.f32 %v396, %v568
      %v687 = vadd.f32 %v397, %v573
      %v688 = vadd.f32 %v398, %v576
      %v689 = vadd.f32 %v399, %v581
      %v690 = vadd.f32 %v400, %v584
      %v691 = vadd.f32 %v401, %v589
      %v692 = vadd.f32 %v402, %v592
      %v693 = vadd.f32 %v403, %v597
      %v694 = vadd.f32 %v404, %v600
      %v695 = vadd.f32 %v405, %v605
      %v696 = vadd.f32 %v406, %v608
      %v697 = vadd.f32 %v407, %v613
      %v698 = vadd.f32 %v408, %v616
      %v699 = vadd.f32 %v409, %v621
      %v700 = vadd.f32 %v410, %v624
      %v701 = vadd.f32 %v411, %v629
      %v702 = vadd.f32 %v412, %v632
      %v703 = vadd.f32 %v413, %v637
      %v704 = vadd.f32 %v414, %v640
      %v705 = vadd.f32 %v415, %v645
      %v706 = vadd.f32 %v416, %v648
      %v707 = vadd.f32 %v417, %v653
      %v708 = vadd.f32 %v418, %v656
      %v709 = vadd.f32 %v419, %v661
      %v710 = vadd.f32 %v420, %v664
      %v711 = vadd.f32 %v421, %v669
      %v712 = vadd.f32 %v422, %v672
      %v713 = vadd.f32 %v423, %v677
      %v714 = vadd.f32 %v424, %v680
      %vm715 = vcmask 23552
      %716 = vst.msk [vmem:[#allocation2] sm:$0xff] %vm715, %v683
      %717 = vst.msk [vmem:[#allocation2 + $0x8] sm:$0xff] %vm715, %v684
      %718 = vst.msk [vmem:[#allocation2 + $0x10] sm:$0xff] %vm715, %v685
      %719 = vst.msk [vmem:[#allocation2 + $0x18] sm:$0xff] %vm715, %v686
      %720 = vst.msk [vmem:[#allocation2 + $0x20] sm:$0xff] %vm715, %v687
      %721 = vst.msk [vmem:[#allocation2 + $0x28] sm:$0xff] %vm715, %v688
      %722 = vst.msk [vmem:[#allocation2 + $0x30] sm:$0xff] %vm715, %v689
      %723 = vst.msk [vmem:[#allocation2 + $0x38] sm:$0xff] %vm715, %v690
      %724 = vst.msk [vmem:[#allocation2 + $0x40] sm:$0xff] %vm715, %v691
      %725 = vst.msk [vmem:[#allocation2 + $0x48] sm:$0xff] %vm715, %v692
      %726 = vst.msk [vmem:[#allocation2 + $0x50] sm:$0xff] %vm715, %v693
      %727 = vst.msk [vmem:[#allocation2 + $0x58] sm:$0xff] %vm715, %v694
      %728 = vst.msk [vmem:[#allocation2 + $0x60] sm:$0xff] %vm715, %v695
      %729 = vst.msk [vmem:[#allocation2 + $0x68] sm:$0xff] %vm715, %v696
      %730 = vst.msk [vmem:[#allocation2 + $0x70] sm:$0xff] %vm715, %v697
      %731 = vst.msk [vmem:[#allocation2 + $0x78] sm:$0xff] %vm715, %v698
      %732 = vst.msk [vmem:[#allocation2 + $0x80] sm:$0xff] %vm715, %v699
      %733 = vst.msk [vmem:[#allocation2 + $0x88] sm:$0xff] %vm715, %v700
      %734 = vst.msk [vmem:[#allocation2 + $0x90] sm:$0xff] %vm715, %v701
      %735 = vst.msk [vmem:[#allocation2 + $0x98] sm:$0xff] %vm715, %v702
      %736 = vst.msk [vmem:[#allocation2 + $0xa0] sm:$0xff] %vm715, %v703
      %737 = vst.msk [vmem:[#allocation2 + $0xa8] sm:$0xff] %vm715, %v704
      %738 = vst.msk [vmem:[#allocation2 + $0xb0] sm:$0xff] %vm715, %v705
      %739 = vst.msk [vmem:[#allocation2 + $0xb8] sm:$0xff] %vm715, %v706
      %740 = vst.msk [vmem:[#allocation2 + $0xc0] sm:$0xff] %vm715, %v707
      %741 = vst.msk [vmem:[#allocation2 + $0xc8] sm:$0xff] %vm715, %v708
      %742 = vst.msk [vmem:[#allocation2 + $0xd0] sm:$0xff] %vm715, %v709
      %743 = vst.msk [vmem:[#allocation2 + $0xd8] sm:$0xff] %vm715, %v710
      %744 = vst.msk [vmem:[#allocation2 + $0xe0] sm:$0xff] %vm715, %v711
      %745 = vst.msk [vmem:[#allocation2 + $0xe8] sm:$0xff] %vm715, %v712
      %746 = vst.msk [vmem:[#allocation2 + $0xf0] sm:$0xff] %vm715, %v713
      %747 = vst.msk [vmem:[#allocation2 + $0xf8] sm:$0xff] %vm715, %v714
      // Predicated region
      $region37: #{unet_forward.74} parent=31 // pred_check
        %p748 = pneg %p260
      $region38: #{unet_forward.74} parent=31 // pred_check_branch
        %750 = sbr.rel (%p748) target = $region40
      $region39: #{unet_forward.74} parent=31 // pred_region
        %v751 = vld [vmem:[#allocation2] sm:$0xff]
        %v752 = vld [vmem:[#allocation2 + $0x8] sm:$0xff]
        %v753 = vld [vmem:[#allocation2 + $0x10] sm:$0xff]
        %v754 = vld [vmem:[#allocation2 + $0x18] sm:$0xff]
        %v755 = vld [vmem:[#allocation2 + $0x20] sm:$0xff]
        %v756 = vld [vmem:[#allocation2 + $0x28] sm:$0xff]
        %v757 = vld [vmem:[#allocation2 + $0x30] sm:$0xff]
        %v758 = vld [vmem:[#allocation2 + $0x38] sm:$0xff]
        %v759 = vld [vmem:[#allocation2 + $0x40] sm:$0xff]
        %v760 = vld [vmem:[#allocation2 + $0x48] sm:$0xff]
        %v761 = vld [vmem:[#allocation2 + $0x50] sm:$0xff]
        %v762 = vld [vmem:[#allocation2 + $0x58] sm:$0xff]
        %v763 = vld [vmem:[#allocation2 + $0x60] sm:$0xff]
        %v764 = vld [vmem:[#allocation2 + $0x68] sm:$0xff]
        %v765 = vld [vmem:[#allocation2 + $0x70] sm:$0xff]
        %v766 = vld [vmem:[#allocation2 + $0x78] sm:$0xff]
        %v767 = vld [vmem:[#allocation2 + $0x80] sm:$0xff]
        %v768 = vld [vmem:[#allocation2 + $0x88] sm:$0xff]
        %v769 = vld [vmem:[#allocation2 + $0x90] sm:$0xff]
        %v770 = vld [vmem:[#allocation2 + $0x98] sm:$0xff]
        %v771 = vld [vmem:[#allocation2 + $0xa0] sm:$0xff]
        %v772 = vld [vmem:[#allocation2 + $0xa8] sm:$0xff]
        %v773 = vld [vmem:[#allocation2 + $0xb0] sm:$0xff]
        %v774 = vld [vmem:[#allocation2 + $0xb8] sm:$0xff]
        %v775 = vld [vmem:[#allocation2 + $0xc0] sm:$0xff]
        %v776 = vld [vmem:[#allocation2 + $0xc8] sm:$0xff]
        %v777 = vld [vmem:[#allocation2 + $0xd0] sm:$0xff]
        %v778 = vld [vmem:[#allocation2 + $0xd8] sm:$0xff]
        %v779 = vld [vmem:[#allocation2 + $0xe0] sm:$0xff]
        %v780 = vld [vmem:[#allocation2 + $0xe8] sm:$0xff]
        %v781 = vld [vmem:[#allocation2 + $0xf0] sm:$0xff]
        %v782 = vld [vmem:[#allocation2 + $0xf8] sm:$0xff]
        %v783 = vld [vmem:[%s249] sm:$0x1]
        %v785 = vlaneseq
        %v786 = vshrl.u32 %v785, 7
        %v787 = vsub.s32 0, %v786
        %v788 = vrot.slane %v783, %v787
        %v790 = vadd.f32 %v751, %v788
        %v791 = vadd.f32 %v752, %v788
        %v792 = vadd.f32 %v753, %v788
        %v793 = vadd.f32 %v754, %v788
        %v794 = vadd.f32 %v755, %v788
        %v795 = vadd.f32 %v756, %v788
        %v796 = vadd.f32 %v757, %v788
        %v797 = vadd.f32 %v758, %v788
        %v798 = vadd.f32 %v759, %v788
        %v799 = vadd.f32 %v760, %v788
        %v800 = vadd.f32 %v761, %v788
        %v801 = vadd.f32 %v762, %v788
        %v802 = vadd.f32 %v763, %v788
        %v803 = vadd.f32 %v764, %v788
        %v804 = vadd.f32 %v765, %v788
        %v805 = vadd.f32 %v766, %v788
        %v806 = vadd.f32 %v767, %v788
        %v807 = vadd.f32 %v768, %v788
        %v808 = vadd.f32 %v769, %v788
        %v809 = vadd.f32 %v770, %v788
        %v810 = vadd.f32 %v771, %v788
        %v811 = vadd.f32 %v772, %v788
        %v812 = vadd.f32 %v773, %v788
        %v813 = vadd.f32 %v774, %v788
        %v814 = vadd.f32 %v775, %v788
        %v815 = vadd.f32 %v776, %v788
        %v816 = vadd.f32 %v777, %v788
        %v817 = vadd.f32 %v778, %v788
        %v818 = vadd.f32 %v779, %v788
        %v819 = vadd.f32 %v780, %v788
        %v820 = vadd.f32 %v781, %v788
        %v821 = vadd.f32 %v782, %v788
        %v822 = vtanh.pop %v790
        %v823 = vtanh.pop %v791
        %v824 = vtanh.pop %v792
        %v825 = vtanh.pop %v793
        %v826 = vtanh.pop %v794
        %v827 = vtanh.pop %v795
        %v828 = vtanh.pop %v796
        %v829 = vtanh.pop %v797
        %v830 = vtanh.pop %v798
        %v831 = vtanh.pop %v799
        %v832 = vtanh.pop %v800
        %v833 = vtanh.pop %v801
        %v834 = vtanh.pop %v802
        %v835 = vtanh.pop %v803
        %v836 = vtanh.pop %v804
        %v837 = vtanh.pop %v805
        %v838 = vtanh.pop %v806
        %v839 = vtanh.pop %v807
        %v840 = vtanh.pop %v808
        %v841 = vtanh.pop %v809
        %v842 = vtanh.pop %v810
        %v843 = vtanh.pop %v811
        %v844 = vtanh.pop %v812
        %v845 = vtanh.pop %v813
        %v846 = vtanh.pop %v814
        %v847 = vtanh.pop %v815
        %v848 = vtanh.pop %v816
        %v849 = vtanh.pop %v817
        %v850 = vtanh.pop %v818
        %v851 = vtanh.pop %v819
        %v852 = vtanh.pop %v820
        %v853 = vtanh.pop %v821
        %854 = vst.msk [vmem:[%s257] sm:$0xff] %vm715, %v822
        %855 = vst.msk [vmem:[%s257 + $0x8] sm:$0xff] %vm715, %v823
        %856 = vst.msk [vmem:[%s257 + $0x10] sm:$0xff] %vm715, %v824
        %857 = vst.msk [vmem:[%s257 + $0x18] sm:$0xff] %vm715, %v825
        %858 = vst.msk [vmem:[%s257 + $0x20] sm:$0xff] %vm715, %v826
        %859 = vst.msk [vmem:[%s257 + $0x28] sm:$0xff] %vm715, %v827
        %860 = vst.msk [vmem:[%s257 + $0x30] sm:$0xff] %vm715, %v828
        %861 = vst.msk [vmem:[%s257 + $0x38] sm:$0xff] %vm715, %v829
        %862 = vst.msk [vmem:[%s257 + $0x40] sm:$0xff] %vm715, %v830
        %863 = vst.msk [vmem:[%s257 + $0x48] sm:$0xff] %vm715, %v831
        %864 = vst.msk [vmem:[%s257 + $0x50] sm:$0xff] %vm715, %v832
        %865 = vst.msk [vmem:[%s257 + $0x58] sm:$0xff] %vm715, %v833
        %866 = vst.msk [vmem:[%s257 + $0x60] sm:$0xff] %vm715, %v834
        %867 = vst.msk [vmem:[%s257 + $0x68] sm:$0xff] %vm715, %v835
        %868 = vst.msk [vmem:[%s257 + $0x70] sm:$0xff] %vm715, %v836
        %869 = vst.msk [vmem:[%s257 + $0x78] sm:$0xff] %vm715, %v837
        %870 = vst.msk [vmem:[%s257 + $0x80] sm:$0xff] %vm715, %v838
        %871 = vst.msk [vmem:[%s257 + $0x88] sm:$0xff] %vm715, %v839
        %872 = vst.msk [vmem:[%s257 + $0x90] sm:$0xff] %vm715, %v840
        %873 = vst.msk [vmem:[%s257 + $0x98] sm:$0xff] %vm715, %v841
        %874 = vst.msk [vmem:[%s257 + $0xa0] sm:$0xff] %vm715, %v842
        %875 = vst.msk [vmem:[%s257 + $0xa8] sm:$0xff] %vm715, %v843
        %876 = vst.msk [vmem:[%s257 + $0xb0] sm:$0xff] %vm715, %v844
        %877 = vst.msk [vmem:[%s257 + $0xb8] sm:$0xff] %vm715, %v845
        %878 = vst.msk [vmem:[%s257 + $0xc0] sm:$0xff] %vm715, %v846
        %879 = vst.msk [vmem:[%s257 + $0xc8] sm:$0xff] %vm715, %v847
        %880 = vst.msk [vmem:[%s257 + $0xd0] sm:$0xff] %vm715, %v848
        %881 = vst.msk [vmem:[%s257 + $0xd8] sm:$0xff] %vm715, %v849
        %882 = vst.msk [vmem:[%s257 + $0xe0] sm:$0xff] %vm715, %v850
        %883 = vst.msk [vmem:[%s257 + $0xe8] sm:$0xff] %vm715, %v851
        %884 = vst.msk [vmem:[%s257 + $0xf0] sm:$0xff] %vm715, %v852
        %885 = vst.msk [vmem:[%s257 + $0xf8] sm:$0xff] %vm715, %v853
      $region40: #{unet_forward.74} parent=31 // pred_fallthru
        _
      %s886 = smul.u32 32, %s19
      %p887 = scmp.lt.s32.totalorder %s886, 63
      %s888 = scalar_select %p887, %s886, 63
      %p889 = scmp.lt.s32.totalorder %s20, 0
      %s890 = scalar_select %p889, %s20, 0
      %s891 = sadd.s32 %s890, %s888
      %s892 = smul.addr %s891, 8
      %s893 = scalar_lea.vmem %s3, %s892
      // Predicated region
      $region41: #{unet_forward.74} parent=31 // pred_check
        %p894 = pneg %p135
      $region42: #{unet_forward.74} parent=31 // pred_check_branch
        %896 = sbr.rel (%p894) target = $region44
      $region43: #{unet_forward.74} parent=31 // pred_region
        %s897 = smul.u32 32, %s19
      $region44: #{unet_forward.74} parent=31 // pred_fallthru
        _
    $region32: #{unet_forward.74} parent=5 // pred_fallthru
      _
    %p898 = scmp.le.s32.totalorder 2, %s9
    // Predicated region
    $region45: #{unet_forward.74} parent=5 // pred_check
      %p899 = pneg %p898
    $region46: #{unet_forward.74} parent=5 // pred_check_branch
      %901 = sbr.rel (%p899) target = $region48
    $region47: #{unet_forward.74} parent=5 // pred_region
      %s902 = ssub.s32 %s9, 2
      // Predicated region
      $region49: #{unet_forward.74} parent=47 // pred_check
        %p903 = pneg %p141
      $region50: #{unet_forward.74} parent=47 // pred_check_branch
        %905 = sbr.rel (%p903) target = $region52
      $region51: #{unet_forward.74} parent=47 // pred_region
        %s906 = smul.u32 32, %s22
        %p907 = scmp.lt.s32.totalorder %s906, 63
        %s908 = scalar_select %p907, %s906, 63
        %p909 = scmp.lt.s32.totalorder %s23, 0
        %s910 = scalar_select %p909, %s23, 0
        %s911 = sadd.s32 %s910, %s908
        %s912 = smul.addr %s911, 8
        %s913 = scalar_lea.vmem %s3, %s912
      $region52: #{unet_forward.74} parent=47 // pred_fallthru
        _
    $region48: #{unet_forward.74} parent=5 // pred_fallthru
      _
  $region6: #{unet_forward.74} parent=0 // loop_footer
    %s13 = sadd.s32 1, %s9
  $region7: #{unet_forward.74} parent=0 // loop_footer_branch
    %8 = sbr.rel target = $region3
  $region8: #{unet_forward.74} parent=0 // loop_exit
    _

</llo_original>
